<compile_context>
chip_gen: v7x
topology: tpu7x:2x2x1
jax: 0.10.0
libtpu: 0.0.40
codegen_flags: <defaults>
</compile_context>

<pallas_src>
import functools

import jax
import jax.numpy as jnp
from jax.experimental import pallas as pl
from jax.experimental.pallas import tpu as pltpu

C = 128                        # conv channels (lane axis)
L0 = 85                        # input length -> 85-2-2-2 = 79, 79*128 = 10112
L1, L2, L3 = L0 - 2, L0 - 4, L0 - 6      # 83, 81, 79
L0P = 96                       # zero-padded input rows (sublane aligned, >= L1C + 2)
L1C = 90                       # conv1 rows computed per element (>= L2P + 2)
L2P = 88                       # aligned per-element row segment for conv2 (81 -> 88)
L3P = 80                       # aligned per-element row segment for conv3 / flatten
FLAT = C * L3                  # 10112 (PyTorch flatten size)
FLATP = C * L3P                # 10240 (padded, lane-dense flatten fed to the FC kernel)
H1, H2, NOUT = 512, 64, 4
TK = 5120                      # FC1 K-tile (2 grid steps over 10240)
H1B = H1 // 2                  # FC1 column half per core (v7x second TensorCore)
BN_EPS = 1e-5


# ----------------------------------------------------------------------------
# Kernel 1: conv stack (Conv1d + BN + ReLU) x 3 in (L, C) layout, bb batch
# elements per grid step, tap-stacked MXU matmuls for conv2/conv3.
# ----------------------------------------------------------------------------
def conv_stack_kernel(x_ref, w1_ref, s1_ref, w2_ref, s2_ref, w3_ref, s3_ref,
                      o_ref, lhs2_ref, h2_ref, lhs3_ref, *, bb):
    # conv1 (C_in = 1): one lane-splat of the input per element, 3 VPU FMAs,
    # folded BN + ReLU, then tap-stacked rows written straight into the lhs2
    # scratch at sublane-aligned offsets (b * L2P).
    for b in range(bb):
        xb = jnp.broadcast_to(x_ref[b], (L0P, C))            # single splat / element
        h = xb[0:L1C] * w1_ref[0]
        h = h + xb[1:1 + L1C] * w1_ref[1]
        h = h + xb[2:2 + L1C] * w1_ref[2]
        h = jnp.maximum(h * s1_ref[0] + s1_ref[1], 0.0)      # (L1C, C)
        base = b * L2P
        for k in range(3):
            lhs2_ref[base:base + L2P, k * C:(k + 1) * C] = h[k:k + L2P]

    # conv2: one tap-stacked matmul (K = 3C = 384) for all bb elements.
    h2 = jnp.dot(lhs2_ref[...], w2_ref[...], preferred_element_type=jnp.float32)
    h2_ref[...] = jnp.maximum(h2 * s2_ref[0] + s2_ref[1], 0.0)

    # tap-stack for conv3: aligned (multiple-of-8) source/dest row offsets,
    # full-width lane-dense stores, all rows of lhs3 written every step.
    for b in range(bb):
        src = b * L2P
        dst = b * L3P
        for k in range(3):
            lhs3_ref[dst:dst + L3P, k * C:(k + 1) * C] = \
                h2_ref[src + k:src + k + L3P, :]

    # conv3 + folded BN + ReLU; output stored lane-dense as bf16 in one full-block
    # store.  Row 79 of each 80-row segment is a pad row (finite garbage); it is
    # cancelled by the zero rows of fw1t (invariant: those rows must stay zero).
    h3 = jnp.dot(lhs3_ref[...], w3_ref[...], preferred_element_type=jnp.float32)
    o_ref[...] = jnp.maximum(h3 * s3_ref[0] + s3_ref[1], 0.0).astype(o_ref.dtype)


def conv_stack(x_lc, w1, s1, w2s, s2, w3s, s3, *, bb):
    b_pad = x_lc.shape[0]
    n_steps = b_pad // bb
    const3 = lambda i: (0, 0, 0)
    const2 = lambda i: (0, 0)
    return pl.pallas_call(
        functools.partial(conv_stack_kernel, bb=bb),
        out_shape=jax.ShapeDtypeStruct((b_pad * L3P, C), jnp.bfloat16),
        grid_spec=pltpu.PrefetchScalarGridSpec(
            num_scalar_prefetch=0,
            grid=(n_steps,),
            in_specs=[
                pl.BlockSpec((bb, L0P, 1), lambda i: (i, 0, 0)),
                pl.BlockSpec((3, 1, C), const3),      # conv1 taps
                pl.BlockSpec((2, 1, C), const3),      # BN1 scale/shift
                pl.BlockSpec((3 * C, C), const2),     # conv2 tap-stacked
                pl.BlockSpec((2, 1, C), const3),
                pl.BlockSpec((3 * C, C), const2),     # conv3 tap-stacked
                pl.BlockSpec((2, 1, C), const3),
            ],
            out_specs=pl.BlockSpec((bb * L3P, C), lambda i: (i, 0)),
            scratch_shapes=[
                pltpu.VMEM((bb * L2P, 3 * C), jnp.float32),   # lhs2 (tap-stacked h1)
                pltpu.VMEM((bb * L2P, C), jnp.float32),       # h2
                pltpu.VMEM((bb * L3P, 3 * C), jnp.float32),   # lhs3 (tap-stacked h2)
            ],
        ),
        compiler_params=pltpu.CompilerParams(
            dimension_semantics=("parallel",),
            vmem_limit_bytes=32 * 1024 * 1024),
    )(x_lc, w1, s1, w2s, s2, w3s, s3)


# ----------------------------------------------------------------------------
# Kernel 2: FC1.  Grid = (2 column halves [parallel], 2 K-tiles [arbitrary]),
# bf16 weight stream, f32 VMEM accumulator, bias+ReLU at the last K step.
# The 512->64->4 tail runs in plain XLA afterwards.
# ----------------------------------------------------------------------------
def fc1_kernel(x_ref, w1_ref, b1_ref, o_ref, acc_ref):
    k = pl.program_id(1)

    @pl.when(k == 0)
    def _():
        acc_ref[...] = jnp.zeros_like(acc_ref)

    acc_ref[...] += jnp.dot(x_ref[...], w1_ref[...],
                            preferred_element_type=jnp.float32)

    @pl.when(k == pl.num_programs(1) - 1)
    def _():
        o_ref[...] = jnp.maximum(acc_ref[...] + b1_ref[...], 0.0)


def fc1_stack(x, w1t, b1):
    B = x.shape[0]
    nk = FLATP // TK
    return pl.pallas_call(
        fc1_kernel,
        out_shape=jax.ShapeDtypeStruct((B, H1), jnp.float32),
        grid_spec=pltpu.PrefetchScalarGridSpec(
            num_scalar_prefetch=0,
            grid=(2, nk),                                   # (H1 halves, K tiles)
            in_specs=[
                pl.BlockSpec((B, TK), lambda j, k: (0, k)),
                pl.BlockSpec((TK, H1B), lambda j, k: (k, j)),   # bf16 weight stream
                pl.BlockSpec((1, H1B), lambda j, k: (0, j)),
            ],
            out_specs=pl.BlockSpec((B, H1B), lambda j, k: (0, j)),
            scratch_shapes=[pltpu.VMEM((B, H1B), jnp.float32)],
        ),
        compiler_params=pltpu.CompilerParams(
            dimension_semantics=("parallel", "arbitrary"),
            vmem_limit_bytes=32 * 1024 * 1024),
    )(x, w1t, b1)


# ----------------------------------------------------------------------------
# Parameter setup (deterministic, synthetic) and one-time kernel-layout prep.
# ----------------------------------------------------------------------------
def make_params():
    key = jax.random.PRNGKey(0)
    ks = jax.random.split(key, 24)
    n = lambda i, shape, scale: (scale * jax.random.normal(ks[i], shape)
                                 ).astype(jnp.float32)

    p = {}
    # Conv1d weights: (C_out, C_in, 3).
    p["cw1"] = n(0, (C, 1, 3), (2.0 / 3) ** 0.5)
    p["cb1"] = n(1, (C,), 0.05)
    p["cw2"] = n(2, (C, C, 3), (2.0 / (C * 3)) ** 0.5)
    p["cb2"] = n(3, (C,), 0.05)
    p["cw3"] = n(4, (C, C, 3), (2.0 / (C * 3)) ** 0.5)
    p["cb3"] = n(5, (C,), 0.05)
    # BatchNorm1d params + running stats (inference mode).
    for li, base in zip((1, 2, 3), (6, 10, 14)):
        p[f"g{li}"] = (1.0 + 0.1 * jax.random.normal(ks[base], (C,))
                       ).astype(jnp.float32)
        p[f"be{li}"] = n(base + 1, (C,), 0.1)
        p[f"m{li}"] = n(base + 2, (C,), 0.1)
        p[f"v{li}"] = (0.9 + 0.2 * jnp.abs(jax.random.normal(ks[base + 3], (C,)))
                       ).astype(jnp.float32)
    # Linear weights (out, in) + biases.
    p["fw1"] = n(18, (H1, FLAT), (2.0 / FLAT) ** 0.5)
    p["fb1"] = n(19, (H1,), 0.05)
    p["fw2"] = n(20, (H2, H1), (2.0 / H1) ** 0.5)
    p["fb2"] = n(21, (H2,), 0.05)
    p["fw3"] = n(22, (NOUT, H2), (2.0 / H2) ** 0.5)
    p["fb3"] = n(23, (NOUT,), 0.05)
    return p


def bn_fold(conv_bias, gamma, beta, mean, var):
    scale = gamma / jnp.sqrt(var + BN_EPS)
    shift = beta + (conv_bias - mean) * scale
    return jnp.stack([scale, shift]).astype(jnp.float32)[:, None, :]   # (2, 1, C)


def prepare_kernel_params(p):
    """One-time (outside the jitted forward) re-layout of the weights."""
    kp = {}
    # conv taps rearranged so the C_out axis is on lanes: w[k, c_in, c_out].
    kp["w1"] = jnp.transpose(p["cw1"], (2, 1, 0))                       # (3, 1, C)
    kp["w2"] = jnp.transpose(p["cw2"], (2, 1, 0)).reshape(3 * C, C)     # (3C, C)
    kp["w3"] = jnp.transpose(p["cw3"], (2, 1, 0)).reshape(3 * C, C)
    kp["s1"] = bn_fold(p["cb1"], p["g1"], p["be1"], p["m1"], p["v1"])
    kp["s2"] = bn_fold(p["cb2"], p["g2"], p["be2"], p["m2"], p["v2"])
    kp["s3"] = bn_fold(p["cb3"], p["g3"], p["be3"], p["m3"], p["v3"])
    # fc1: permute input dim from C-major (torch .view of (C, L3)) to the kernel's
    # L-major order, zero-pad L3 -> L3P, store as (FLATP, H1) bf16.
    # INVARIANT: the padded rows (l == 79) must stay exactly zero; they cancel the
    # (finite but arbitrary) activation pad rows emitted by the conv kernel.
    w = p["fw1"].reshape(H1, C, L3)
    w = jnp.transpose(w, (2, 1, 0))                                     # (L3, C, H1)
    w = jnp.pad(w, ((0, L3P - L3), (0, 0), (0, 0)))
    kp["fw1t"] = w.reshape(FLATP, H1).astype(jnp.bfloat16)
    kp["fb1"] = p["fb1"][None, :]
    kp["fw2t"] = p["fw2"].T
    kp["fb2"] = p["fb2"][None, :]
    kp["fw3t"] = p["fw3"].T
    kp["fb3"] = p["fb3"][None, :]
    return kp


@jax.jit
def deep_cnn_forward(x, kp):
    B = x.shape[0]
    # Pick bb so that, when batched, the conv grid has >= 2 steps (lets the
    # "parallel" axis shard across both TensorCores on v7x).
    if B <= 4:
        bb = B
    elif B <= 8:
        bb = 4
    else:
        bb = 8
    b_pad = ((B + bb - 1) // bb) * bb

    x_lc = jnp.transpose(x, (0, 2, 1))                  # (B, L0, 1): L on sublanes
    x_lc = jnp.pad(x_lc, ((0, b_pad - B), (0, L0P - L0), (0, 0)))

    h = conv_stack(x_lc, kp["w1"], kp["s1"], kp["w2"], kp["s2"],
                   kp["w3"], kp["s3"], bb=bb)           # (b_pad*80, 128) bf16
    h = h.reshape(b_pad, FLATP)                         # L-major flatten (padded)

    a1 = fc1_stack(h, kp["fw1t"], kp["fb1"])            # (b_pad, 512) f32, post-ReLU
    # Tiny 512->64->4 tail in plain XLA (negligible; keeps the Pallas FC kernel a
    # pure fw1 weight stream that both v7x TensorCores can split).
    a2 = jnp.maximum(a1 @ kp["fw2t"] + kp["fb2"], 0.0)
    out = a2 @ kp["fw3t"] + kp["fb3"]
    return out[:B]


# ----------------------------------------------------------------------------
# Pure-JAX reference (PyTorch semantics, f32) for validation.
# ----------------------------------------------------------------------------
def reference_forward(x, p):
    def conv1d(h, w, b):
        lout = h.shape[-1] - 2
        out = jnp.zeros((h.shape[0], w.shape[0], lout), jnp.float32)
        for k in range(3):
            out = out + jnp.einsum("oi,bil->bol", w[:, :, k], h[:, :, k:k + lout])
        return out + b[None, :, None]

    def bn_relu(h, g, be, m, v):
        h = (h - m[None, :, None]) / jnp.sqrt(v[None, :, None] + BN_EPS)
        return jnp.maximum(h * g[None, :, None] + be[None, :, None], 0.0)

    h = bn_relu(conv1d(x, p["cw1"], p["cb1"]), p["g1"], p["be1"], p["m1"], p["v1"])
    h = bn_relu(conv1d(h, p["cw2"], p["cb2"]), p["g2"], p["be2"], p["m2"], p["v2"])
    h = bn_relu(conv1d(h, p["cw3"], p["cb3"]), p["g3"], p["be3"], p["m3"], p["v3"])
    h = h.reshape(h.shape[0], -1)                       # C-major flatten, as in torch
    h = jnp.maximum(h @ p["fw1"].T + p["fb1"], 0.0)
    h = jnp.maximum(h @ p["fw2"].T + p["fb2"], 0.0)
    return h @ p["fw3"].T + p["fb3"]


if __name__ == "__main__":
    B = 2
    key = jax.random.PRNGKey(0)
    x = jax.random.normal(key, (B, 1, L0), dtype=jnp.float32)   # (batch, 1, 85)

    params = make_params()
    kparams = prepare_kernel_params(params)

    out = deep_cnn_forward(x, kparams)
    out = jax.block_until_ready(out)

    ref = reference_forward(x, params)
    assert out.shape == (B, NOUT), out.shape
    # fw1 and the conv->FC intermediate are streamed as bf16 (f32 accumulation), so the
    # tolerance is deliberately looser than a pure-f32 check (inference precision choice).
    assert jnp.allclose(out, ref, rtol=2e-2, atol=2e-2), (out, ref)

    print("KERNEL_OK")
</pallas_src>

<mosaic_0001>
module attributes {stable_mosaic.version = 11 : i64} {
  func.func @conv_stack_kernel(%arg0: i32, %arg1: memref<2x96x1xf32, #tpu.memory_space<vmem>>, %arg2: memref<3x1x128xf32, #tpu.memory_space<vmem>>, %arg3: memref<2x1x128xf32, #tpu.memory_space<vmem>>, %arg4: memref<384x128xf32, #tpu.memory_space<vmem>>, %arg5: memref<2x1x128xf32, #tpu.memory_space<vmem>>, %arg6: memref<384x128xf32, #tpu.memory_space<vmem>>, %arg7: memref<2x1x128xf32, #tpu.memory_space<vmem>>, %arg8: memref<160x128xbf16, #tpu.memory_space<vmem>>, %arg9: memref<176x384xf32, #tpu.memory_space<vmem>>, %arg10: memref<176x128xf32, #tpu.memory_space<vmem>>, %arg11: memref<160x384xf32, #tpu.memory_space<vmem>>) attributes {dimension_semantics = [#tpu.dimension_semantics<parallel>], iteration_bounds = array<i64: 1>, scalar_prefetch = 0 : i64, scratch_operands = 3 : i64, tpu.core_type = #tpu.core_type<tc>, window_params = [{transform_indices = @transform_0, window_bounds = array<i64: 2, 96, 1>}, {pipeline_mode = #tpu.pipeline_mode<synchronous>, transform_indices = @transform_1, window_bounds = array<i64: 3, 1, 128>}, {pipeline_mode = #tpu.pipeline_mode<synchronous>, transform_indices = @transform_2, window_bounds = array<i64: 2, 1, 128>}, {pipeline_mode = #tpu.pipeline_mode<synchronous>, transform_indices = @transform_3, window_bounds = array<i64: 384, 128>}, {pipeline_mode = #tpu.pipeline_mode<synchronous>, transform_indices = @transform_4, window_bounds = array<i64: 2, 1, 128>}, {pipeline_mode = #tpu.pipeline_mode<synchronous>, transform_indices = @transform_5, window_bounds = array<i64: 384, 128>}, {pipeline_mode = #tpu.pipeline_mode<synchronous>, transform_indices = @transform_6, window_bounds = array<i64: 2, 1, 128>}, {transform_indices = @transform_7, window_bounds = array<i64: 160, 128>}]} {
    %c0 = arith.constant 0 : index
    %c0_0 = arith.constant 0 : index
    %c0_1 = arith.constant 0 : index
    %0 = vector.load %arg1[%c0, %c0_0, %c0_1] : memref<2x96x1xf32, #tpu.memory_space<vmem>>, vector<1x96x1xf32>
    %1 = vector.shape_cast %0 : vector<1x96x1xf32> to vector<96x1xf32>
    %2 = vector.shape_cast %1 : vector<96x1xf32> to vector<96x1xf32>
    %3 = vector.broadcast %2 : vector<96x1xf32> to vector<96x128xf32>
    %4 = vector.extract_strided_slice %3 {offsets = [0, 0], sizes = [90, 128], strides = [1, 1]} : vector<96x128xf32> to vector<90x128xf32>
    %c0_2 = arith.constant 0 : index
    %c0_3 = arith.constant 0 : index
    %c0_4 = arith.constant 0 : index
    %5 = vector.load %arg2[%c0_2, %c0_3, %c0_4] : memref<3x1x128xf32, #tpu.memory_space<vmem>>, vector<1x1x128xf32>
    %6 = vector.shape_cast %5 : vector<1x1x128xf32> to vector<1x128xf32>
    %7 = vector.broadcast %6 : vector<1x128xf32> to vector<90x128xf32>
    %8 = arith.mulf %4, %7 : vector<90x128xf32>
    %9 = vector.extract_strided_slice %3 {offsets = [1, 0], sizes = [90, 128], strides = [1, 1]} : vector<96x128xf32> to vector<90x128xf32>
    %c1 = arith.constant 1 : index
    %c0_5 = arith.constant 0 : index
    %c0_6 = arith.constant 0 : index
    %10 = vector.load %arg2[%c1, %c0_5, %c0_6] : memref<3x1x128xf32, #tpu.memory_space<vmem>>, vector<1x1x128xf32>
    %11 = vector.shape_cast %10 : vector<1x1x128xf32> to vector<1x128xf32>
    %12 = vector.broadcast %11 : vector<1x128xf32> to vector<90x128xf32>
    %13 = arith.mulf %9, %12 : vector<90x128xf32>
    %14 = arith.addf %8, %13 : vector<90x128xf32>
    %15 = vector.extract_strided_slice %3 {offsets = [2, 0], sizes = [90, 128], strides = [1, 1]} : vector<96x128xf32> to vector<90x128xf32>
    %c2 = arith.constant 2 : index
    %c0_7 = arith.constant 0 : index
    %c0_8 = arith.constant 0 : index
    %16 = vector.load %arg2[%c2, %c0_7, %c0_8] : memref<3x1x128xf32, #tpu.memory_space<vmem>>, vector<1x1x128xf32>
    %17 = vector.shape_cast %16 : vector<1x1x128xf32> to vector<1x128xf32>
    %18 = vector.broadcast %17 : vector<1x128xf32> to vector<90x128xf32>
    %19 = arith.mulf %15, %18 : vector<90x128xf32>
    %20 = arith.addf %14, %19 : vector<90x128xf32>
    %c0_9 = arith.constant 0 : index
    %c0_10 = arith.constant 0 : index
    %c0_11 = arith.constant 0 : index
    %21 = vector.load %arg3[%c0_9, %c0_10, %c0_11] : memref<2x1x128xf32, #tpu.memory_space<vmem>>, vector<1x1x128xf32>
    %22 = vector.shape_cast %21 : vector<1x1x128xf32> to vector<1x128xf32>
    %23 = vector.broadcast %22 : vector<1x128xf32> to vector<90x128xf32>
    %24 = arith.mulf %20, %23 : vector<90x128xf32>
    %c1_12 = arith.constant 1 : index
    %c0_13 = arith.constant 0 : index
    %c0_14 = arith.constant 0 : index
    %25 = vector.load %arg3[%c1_12, %c0_13, %c0_14] : memref<2x1x128xf32, #tpu.memory_space<vmem>>, vector<1x1x128xf32>
    %26 = vector.shape_cast %25 : vector<1x1x128xf32> to vector<1x128xf32>
    %27 = vector.broadcast %26 : vector<1x128xf32> to vector<90x128xf32>
    %28 = arith.addf %24, %27 : vector<90x128xf32>
    %cst = arith.constant 0.000000e+00 : f32
    %29 = vector.broadcast %cst : f32 to vector<90x128xf32>
    %30 = arith.maximumf %28, %29 : vector<90x128xf32>
    %31 = vector.extract_strided_slice %30 {offsets = [0, 0], sizes = [88, 128], strides = [1, 1]} : vector<90x128xf32> to vector<88x128xf32>
    %c0_15 = arith.constant 0 : index
    %c0_16 = arith.constant 0 : index
    %32 = vector.load %arg9[%c0_15, %c0_16] : memref<176x384xf32, #tpu.memory_space<vmem>>, vector<88x128xf32>
    tpu.vector_store %arg9[%c0_15, %c0_16], %31 {strides = array<i32>} : memref<176x384xf32, #tpu.memory_space<vmem>>, vector<88x128xf32>,
    %33 = vector.extract_strided_slice %30 {offsets = [1, 0], sizes = [88, 128], strides = [1, 1]} : vector<90x128xf32> to vector<88x128xf32>
    %c0_17 = arith.constant 0 : index
    %c128 = arith.constant 128 : index
    %34 = vector.load %arg9[%c0_17, %c128] : memref<176x384xf32, #tpu.memory_space<vmem>>, vector<88x128xf32>
    tpu.vector_store %arg9[%c0_17, %c128], %33 {strides = array<i32>} : memref<176x384xf32, #tpu.memory_space<vmem>>, vector<88x128xf32>,
    %35 = vector.extract_strided_slice %30 {offsets = [2, 0], sizes = [88, 128], strides = [1, 1]} : vector<90x128xf32> to vector<88x128xf32>
    %c0_18 = arith.constant 0 : index
    %c256 = arith.constant 256 : index
    %36 = vector.load %arg9[%c0_18, %c256] : memref<176x384xf32, #tpu.memory_space<vmem>>, vector<88x128xf32>
    tpu.vector_store %arg9[%c0_18, %c256], %35 {strides = array<i32>} : memref<176x384xf32, #tpu.memory_space<vmem>>, vector<88x128xf32>,
    %c1_19 = arith.constant 1 : index
    %c0_20 = arith.constant 0 : index
    %c0_21 = arith.constant 0 : index
    %37 = vector.load %arg1[%c1_19, %c0_20, %c0_21] : memref<2x96x1xf32, #tpu.memory_space<vmem>>, vector<1x96x1xf32>
    %38 = vector.shape_cast %37 : vector<1x96x1xf32> to vector<96x1xf32>
    %39 = vector.shape_cast %38 : vector<96x1xf32> to vector<96x1xf32>
    %40 = vector.broadcast %39 : vector<96x1xf32> to vector<96x128xf32>
    %41 = vector.extract_strided_slice %40 {offsets = [0, 0], sizes = [90, 128], strides = [1, 1]} : vector<96x128xf32> to vector<90x128xf32>
    %c0_22 = arith.constant 0 : index
    %c0_23 = arith.constant 0 : index
    %c0_24 = arith.constant 0 : index
    %42 = vector.load %arg2[%c0_22, %c0_23, %c0_24] : memref<3x1x128xf32, #tpu.memory_space<vmem>>, vector<1x1x128xf32>
    %43 = vector.shape_cast %42 : vector<1x1x128xf32> to vector<1x128xf32>
    %44 = vector.broadcast %43 : vector<1x128xf32> to vector<90x128xf32>
    %45 = arith.mulf %41, %44 : vector<90x128xf32>
    %46 = vector.extract_strided_slice %40 {offsets = [1, 0], sizes = [90, 128], strides = [1, 1]} : vector<96x128xf32> to vector<90x128xf32>
    %c1_25 = arith.constant 1 : index
    %c0_26 = arith.constant 0 : index
    %c0_27 = arith.constant 0 : index
    %47 = vector.load %arg2[%c1_25, %c0_26, %c0_27] : memref<3x1x128xf32, #tpu.memory_space<vmem>>, vector<1x1x128xf32>
    %48 = vector.shape_cast %47 : vector<1x1x128xf32> to vector<1x128xf32>
    %49 = vector.broadcast %48 : vector<1x128xf32> to vector<90x128xf32>
    %50 = arith.mulf %46, %49 : vector<90x128xf32>
    %51 = arith.addf %45, %50 : vector<90x128xf32>
    %52 = vector.extract_strided_slice %40 {offsets = [2, 0], sizes = [90, 128], strides = [1, 1]} : vector<96x128xf32> to vector<90x128xf32>
    %c2_28 = arith.constant 2 : index
    %c0_29 = arith.constant 0 : index
    %c0_30 = arith.constant 0 : index
    %53 = vector.load %arg2[%c2_28, %c0_29, %c0_30] : memref<3x1x128xf32, #tpu.memory_space<vmem>>, vector<1x1x128xf32>
    %54 = vector.shape_cast %53 : vector<1x1x128xf32> to vector<1x128xf32>
    %55 = vector.broadcast %54 : vector<1x128xf32> to vector<90x128xf32>
    %56 = arith.mulf %52, %55 : vector<90x128xf32>
    %57 = arith.addf %51, %56 : vector<90x128xf32>
    %c0_31 = arith.constant 0 : index
    %c0_32 = arith.constant 0 : index
    %c0_33 = arith.constant 0 : index
    %58 = vector.load %arg3[%c0_31, %c0_32, %c0_33] : memref<2x1x128xf32, #tpu.memory_space<vmem>>, vector<1x1x128xf32>
    %59 = vector.shape_cast %58 : vector<1x1x128xf32> to vector<1x128xf32>
    %60 = vector.broadcast %59 : vector<1x128xf32> to vector<90x128xf32>
    %61 = arith.mulf %57, %60 : vector<90x128xf32>
    %c1_34 = arith.constant 1 : index
    %c0_35 = arith.constant 0 : index
    %c0_36 = arith.constant 0 : index
    %62 = vector.load %arg3[%c1_34, %c0_35, %c0_36] : memref<2x1x128xf32, #tpu.memory_space<vmem>>, vector<1x1x128xf32>
    %63 = vector.shape_cast %62 : vector<1x1x128xf32> to vector<1x128xf32>
    %64 = vector.broadcast %63 : vector<1x128xf32> to vector<90x128xf32>
    %65 = arith.addf %61, %64 : vector<90x128xf32>
    %cst_37 = arith.constant 0.000000e+00 : f32
    %66 = vector.broadcast %cst_37 : f32 to vector<90x128xf32>
    %67 = arith.maximumf %65, %66 : vector<90x128xf32>
    %68 = vector.extract_strided_slice %67 {offsets = [0, 0], sizes = [88, 128], strides = [1, 1]} : vector<90x128xf32> to vector<88x128xf32>
    %c88 = arith.constant 88 : index
    %c0_38 = arith.constant 0 : index
    %69 = vector.load %arg9[%c88, %c0_38] : memref<176x384xf32, #tpu.memory_space<vmem>>, vector<88x128xf32>
    tpu.vector_store %arg9[%c88, %c0_38], %68 {strides = array<i32>} : memref<176x384xf32, #tpu.memory_space<vmem>>, vector<88x128xf32>,
    %70 = vector.extract_strided_slice %67 {offsets = [1, 0], sizes = [88, 128], strides = [1, 1]} : vector<90x128xf32> to vector<88x128xf32>
    %c88_39 = arith.constant 88 : index
    %c128_40 = arith.constant 128 : index
    %71 = vector.load %arg9[%c88_39, %c128_40] : memref<176x384xf32, #tpu.memory_space<vmem>>, vector<88x128xf32>
    tpu.vector_store %arg9[%c88_39, %c128_40], %70 {strides = array<i32>} : memref<176x384xf32, #tpu.memory_space<vmem>>, vector<88x128xf32>,
    %72 = vector.extract_strided_slice %67 {offsets = [2, 0], sizes = [88, 128], strides = [1, 1]} : vector<90x128xf32> to vector<88x128xf32>
    %c88_41 = arith.constant 88 : index
    %c256_42 = arith.constant 256 : index
    %73 = vector.load %arg9[%c88_41, %c256_42] : memref<176x384xf32, #tpu.memory_space<vmem>>, vector<88x128xf32>
    tpu.vector_store %arg9[%c88_41, %c256_42], %72 {strides = array<i32>} : memref<176x384xf32, #tpu.memory_space<vmem>>, vector<88x128xf32>,
    %c0_43 = arith.constant 0 : index
    %c0_44 = arith.constant 0 : index
    %74 = vector.load %arg9[%c0_43, %c0_44] : memref<176x384xf32, #tpu.memory_space<vmem>>, vector<176x384xf32>
    %c0_45 = arith.constant 0 : index
    %c0_46 = arith.constant 0 : index
    %75 = vector.load %arg4[%c0_45, %c0_46] : memref<384x128xf32, #tpu.memory_space<vmem>>, vector<384x128xf32>
    %cst_47 = arith.constant dense<0.000000e+00> : vector<176x128xf32>
    %76 = tpu.matmul %74, %75, %cst_47 {dimension_numbers = #tpu.dot_dimension_numbers<[1], [0], [0], [1], [0, 0, 1, 1], [], []>} : vector<176x384xf32>, vector<384x128xf32>, vector<176x128xf32> -> vector<176x128xf32>
    %c0_48 = arith.constant 0 : index
    %c0_49 = arith.constant 0 : index
    %c0_50 = arith.constant 0 : index
    %77 = vector.load %arg5[%c0_48, %c0_49, %c0_50] : memref<2x1x128xf32, #tpu.memory_space<vmem>>, vector<1x1x128xf32>
    %78 = vector.shape_cast %77 : vector<1x1x128xf32> to vector<1x128xf32>
    %79 = vector.broadcast %78 : vector<1x128xf32> to vector<176x128xf32>
    %80 = arith.mulf %76, %79 : vector<176x128xf32>
    %c1_51 = arith.constant 1 : index
    %c0_52 = arith.constant 0 : index
    %c0_53 = arith.constant 0 : index
    %81 = vector.load %arg5[%c1_51, %c0_52, %c0_53] : memref<2x1x128xf32, #tpu.memory_space<vmem>>, vector<1x1x128xf32>
    %82 = vector.shape_cast %81 : vector<1x1x128xf32> to vector<1x128xf32>
    %83 = vector.broadcast %82 : vector<1x128xf32> to vector<176x128xf32>
    %84 = arith.addf %80, %83 : vector<176x128xf32>
    %cst_54 = arith.constant 0.000000e+00 : f32
    %85 = vector.broadcast %cst_54 : f32 to vector<176x128xf32>
    %86 = arith.maximumf %84, %85 : vector<176x128xf32>
    %c0_55 = arith.constant 0 : index
    %c0_56 = arith.constant 0 : index
    %87 = vector.load %arg10[%c0_55, %c0_56] : memref<176x128xf32, #tpu.memory_space<vmem>>, vector<176x128xf32>
    tpu.vector_store %arg10[%c0_55, %c0_56], %86 {strides = array<i32>} : memref<176x128xf32, #tpu.memory_space<vmem>>, vector<176x128xf32>,
    %c0_57 = arith.constant 0 : index
    %c0_58 = arith.constant 0 : index
    %88 = vector.load %arg10[%c0_57, %c0_58] : memref<176x128xf32, #tpu.memory_space<vmem>>, vector<80x128xf32>
    %c0_59 = arith.constant 0 : index
    %c0_60 = arith.constant 0 : index
    %89 = vector.load %arg11[%c0_59, %c0_60] : memref<160x384xf32, #tpu.memory_space<vmem>>, vector<80x128xf32>
    tpu.vector_store %arg11[%c0_59, %c0_60], %88 {strides = array<i32>} : memref<160x384xf32, #tpu.memory_space<vmem>>, vector<80x128xf32>,
    %c1_61 = arith.constant 1 : index
    %c0_62 = arith.constant 0 : index
    %90 = vector.load %arg10[%c1_61, %c0_62] : memref<176x128xf32, #tpu.memory_space<vmem>>, vector<80x128xf32>
    %c0_63 = arith.constant 0 : index
    %c128_64 = arith.constant 128 : index
    %91 = vector.load %arg11[%c0_63, %c128_64] : memref<160x384xf32, #tpu.memory_space<vmem>>, vector<80x128xf32>
    tpu.vector_store %arg11[%c0_63, %c128_64], %90 {strides = array<i32>} : memref<160x384xf32, #tpu.memory_space<vmem>>, vector<80x128xf32>,
    %c2_65 = arith.constant 2 : index
    %c0_66 = arith.constant 0 : index
    %92 = vector.load %arg10[%c2_65, %c0_66] : memref<176x128xf32, #tpu.memory_space<vmem>>, vector<80x128xf32>
    %c0_67 = arith.constant 0 : index
    %c256_68 = arith.constant 256 : index
    %93 = vector.load %arg11[%c0_67, %c256_68] : memref<160x384xf32, #tpu.memory_space<vmem>>, vector<80x128xf32>
    tpu.vector_store %arg11[%c0_67, %c256_68], %92 {strides = array<i32>} : memref<160x384xf32, #tpu.memory_space<vmem>>, vector<80x128xf32>,
    %c88_69 = arith.constant 88 : index
    %c0_70 = arith.constant 0 : index
    %94 = vector.load %arg10[%c88_69, %c0_70] : memref<176x128xf32, #tpu.memory_space<vmem>>, vector<80x128xf32>
    %c80 = arith.constant 80 : index
    %c0_71 = arith.constant 0 : index
    %95 = vector.load %arg11[%c80, %c0_71] : memref<160x384xf32, #tpu.memory_space<vmem>>, vector<80x128xf32>
    tpu.vector_store %arg11[%c80, %c0_71], %94 {strides = array<i32>} : memref<160x384xf32, #tpu.memory_space<vmem>>, vector<80x128xf32>,
    %c89 = arith.constant 89 : index
    %c0_72 = arith.constant 0 : index
    %96 = vector.load %arg10[%c89, %c0_72] : memref<176x128xf32, #tpu.memory_space<vmem>>, vector<80x128xf32>
    %c80_73 = arith.constant 80 : index
    %c128_74 = arith.constant 128 : index
    %97 = vector.load %arg11[%c80_73, %c128_74] : memref<160x384xf32, #tpu.memory_space<vmem>>, vector<80x128xf32>
    tpu.vector_store %arg11[%c80_73, %c128_74], %96 {strides = array<i32>} : memref<160x384xf32, #tpu.memory_space<vmem>>, vector<80x128xf32>,
    %c90 = arith.constant 90 : index
    %c0_75 = arith.constant 0 : index
    %98 = vector.load %arg10[%c90, %c0_75] : memref<176x128xf32, #tpu.memory_space<vmem>>, vector<80x128xf32>
    %c80_76 = arith.constant 80 : index
    %c256_77 = arith.constant 256 : index
    %99 = vector.load %arg11[%c80_76, %c256_77] : memref<160x384xf32, #tpu.memory_space<vmem>>, vector<80x128xf32>
    tpu.vector_store %arg11[%c80_76, %c256_77], %98 {strides = array<i32>} : memref<160x384xf32, #tpu.memory_space<vmem>>, vector<80x128xf32>,
    %c0_78 = arith.constant 0 : index
    %c0_79 = arith.constant 0 : index
    %100 = vector.load %arg11[%c0_78, %c0_79] : memref<160x384xf32, #tpu.memory_space<vmem>>, vector<160x384xf32>
    %c0_80 = arith.constant 0 : index
    %c0_81 = arith.constant 0 : index
    %101 = vector.load %arg6[%c0_80, %c0_81] : memref<384x128xf32, #tpu.memory_space<vmem>>, vector<384x128xf32>
    %cst_82 = arith.constant dense<0.000000e+00> : vector<160x128xf32>
    %102 = tpu.matmul %100, %101, %cst_82 {dimension_numbers = #tpu.dot_dimension_numbers<[1], [0], [0], [1], [0, 0, 1, 1], [], []>} : vector<160x384xf32>, vector<384x128xf32>, vector<160x128xf32> -> vector<160x128xf32>
    %c0_83 = arith.constant 0 : index
    %c0_84 = arith.constant 0 : index
    %c0_85 = arith.constant 0 : index
    %103 = vector.load %arg7[%c0_83, %c0_84, %c0_85] : memref<2x1x128xf32, #tpu.memory_space<vmem>>, vector<1x1x128xf32>
    %104 = vector.shape_cast %103 : vector<1x1x128xf32> to vector<1x128xf32>
    %105 = vector.broadcast %104 : vector<1x128xf32> to vector<160x128xf32>
    %106 = arith.mulf %102, %105 : vector<160x128xf32>
    %c1_86 = arith.constant 1 : index
    %c0_87 = arith.constant 0 : index
    %c0_88 = arith.constant 0 : index
    %107 = vector.load %arg7[%c1_86, %c0_87, %c0_88] : memref<2x1x128xf32, #tpu.memory_space<vmem>>, vector<1x1x128xf32>
    %108 = vector.shape_cast %107 : vector<1x1x128xf32> to vector<1x128xf32>
    %109 = vector.broadcast %108 : vector<1x128xf32> to vector<160x128xf32>
    %110 = arith.addf %106, %109 : vector<160x128xf32>
    %cst_89 = arith.constant 0.000000e+00 : f32
    %111 = vector.broadcast %cst_89 : f32 to vector<160x128xf32>
    %112 = arith.maximumf %110, %111 : vector<160x128xf32>
    %113 = arith.truncf %112 : vector<160x128xf32> to vector<160x128xbf16>
    %c0_90 = arith.constant 0 : index
    %c0_91 = arith.constant 0 : index
    %114 = vector.load %arg8[%c0_90, %c0_91] : memref<160x128xbf16, #tpu.memory_space<vmem>>, vector<160x128xbf16>
    tpu.vector_store %arg8[%c0_90, %c0_91], %113 {strides = array<i32>} : memref<160x128xbf16, #tpu.memory_space<vmem>>, vector<160x128xbf16>,
    return
  }
  func.func @transform_0(%arg0: i32) -> (i32, i32, i32) {
    %c0_i32 = arith.constant 0 : i32
    %c0_i32_0 = arith.constant 0 : i32
    %c0_i32_1 = arith.constant 0 : i32
    return %arg0, %c0_i32, %c0_i32_0 : i32, i32, i32
  }
  func.func @transform_1(%arg0: i32) -> (i32, i32, i32) {
    %c0_i32 = arith.constant 0 : i32
    %c0_i32_0 = arith.constant 0 : i32
    %c0_i32_1 = arith.constant 0 : i32
    %c0_i32_2 = arith.constant 0 : i32
    return %c0_i32, %c0_i32_0, %c0_i32_1 : i32, i32, i32
  }
  func.func @transform_2(%arg0: i32) -> (i32, i32, i32) {
    %c0_i32 = arith.constant 0 : i32
    %c0_i32_0 = arith.constant 0 : i32
    %c0_i32_1 = arith.constant 0 : i32
    %c0_i32_2 = arith.constant 0 : i32
    return %c0_i32, %c0_i32_0, %c0_i32_1 : i32, i32, i32
  }
  func.func @transform_3(%arg0: i32) -> (i32, i32) {
    %c0_i32 = arith.constant 0 : i32
    %c0_i32_0 = arith.constant 0 : i32
    %c0_i32_1 = arith.constant 0 : i32
    return %c0_i32, %c0_i32_0 : i32, i32
  }
  func.func @transform_4(%arg0: i32) -> (i32, i32, i32) {
    %c0_i32 = arith.constant 0 : i32
    %c0_i32_0 = arith.constant 0 : i32
    %c0_i32_1 = arith.constant 0 : i32
    %c0_i32_2 = arith.constant 0 : i32
    return %c0_i32, %c0_i32_0, %c0_i32_1 : i32, i32, i32
  }
  func.func @transform_5(%arg0: i32) -> (i32, i32) {
    %c0_i32 = arith.constant 0 : i32
    %c0_i32_0 = arith.constant 0 : i32
    %c0_i32_1 = arith.constant 0 : i32
    return %c0_i32, %c0_i32_0 : i32, i32
  }
  func.func @transform_6(%arg0: i32) -> (i32, i32, i32) {
    %c0_i32 = arith.constant 0 : i32
    %c0_i32_0 = arith.constant 0 : i32
    %c0_i32_1 = arith.constant 0 : i32
    %c0_i32_2 = arith.constant 0 : i32
    return %c0_i32, %c0_i32_0, %c0_i32_1 : i32, i32, i32
  }
  func.func @transform_7(%arg0: i32) -> (i32, i32) {
    %c0_i32 = arith.constant 0 : i32
    %c0_i32_0 = arith.constant 0 : i32
    return %arg0, %c0_i32 : i32, i32
  }
}

module attributes {stable_mosaic.version = 11 : i64} {
  func.func @fc1_kernel(%arg0: i32, %arg1: i32, %arg2: memref<2x5120xbf16, #tpu.memory_space<vmem>>, %arg3: memref<5120x256xbf16, #tpu.memory_space<vmem>>, %arg4: memref<1x256xf32, #tpu.memory_space<vmem>>, %arg5: memref<2x256xf32, #tpu.memory_space<vmem>>, %arg6: memref<2x256xf32, #tpu.memory_space<vmem>>) attributes {dimension_semantics = [#tpu.dimension_semantics<parallel>, #tpu.dimension_semantics<arbitrary>], iteration_bounds = array<i64: 2, 2>, scalar_prefetch = 0 : i64, scratch_operands = 1 : i64, tpu.core_type = #tpu.core_type<tc>, window_params = [{transform_indices = @transform_0, window_bounds = array<i64: 2, 5120>}, {transform_indices = @transform_1, window_bounds = array<i64: 5120, 256>}, {transform_indices = @transform_2, window_bounds = array<i64: 1, 256>}, {transform_indices = @transform_3, window_bounds = array<i64: 2, 256>}]} {
    %c0_i32 = arith.constant 0 : i32
    %0 = arith.cmpi eq, %arg1, %c0_i32 : i32
    %1 = arith.extui %0 : i1 to i32
    %c0_i32_0 = arith.constant 0 : i32
    %2 = arith.cmpi ne, %1, %c0_i32_0 : i32
    scf.if %2 {
      %cst_9 = arith.constant 0.000000e+00 : f32
      %12 = vector.broadcast %cst_9 : f32 to vector<2x256xf32>
      %c0_10 = arith.constant 0 : index
      %c0_11 = arith.constant 0 : index
      %13 = vector.load %arg6[%c0_10, %c0_11] : memref<2x256xf32, #tpu.memory_space<vmem>>, vector<2x256xf32>
      tpu.vector_store %arg6[%c0_10, %c0_11], %12 {strides = array<i32>} : memref<2x256xf32, #tpu.memory_space<vmem>>, vector<2x256xf32>,
    } else {
    }
    %c0 = arith.constant 0 : index
    %c0_1 = arith.constant 0 : index
    %3 = vector.load %arg6[%c0, %c0_1] : memref<2x256xf32, #tpu.memory_space<vmem>>, vector<2x256xf32>
    %c0_2 = arith.constant 0 : index
    %c0_3 = arith.constant 0 : index
    %4 = vector.load %arg2[%c0_2, %c0_3] : memref<2x5120xbf16, #tpu.memory_space<vmem>>, vector<2x5120xbf16>
    %c0_4 = arith.constant 0 : index
    %c0_5 = arith.constant 0 : index
    %5 = vector.load %arg3[%c0_4, %c0_5] : memref<5120x256xbf16, #tpu.memory_space<vmem>>, vector<5120x256xbf16>
    %cst = arith.constant dense<0.000000e+00> : vector<2x256xf32>
    %6 = tpu.matmul %4, %5, %cst {dimension_numbers = #tpu.dot_dimension_numbers<[1], [0], [0], [1], [0, 0, 1, 1], [], []>} : vector<2x5120xbf16>, vector<5120x256xbf16>, vector<2x256xf32> -> vector<2x256xf32>
    %7 = arith.addf %3, %6 : vector<2x256xf32>
    %c0_6 = arith.constant 0 : index
    %c0_7 = arith.constant 0 : index
    %8 = vector.load %arg6[%c0_6, %c0_7] : memref<2x256xf32, #tpu.memory_space<vmem>>, vector<2x256xf32>
    tpu.vector_store %arg6[%c0_6, %c0_7], %7 {strides = array<i32>} : memref<2x256xf32, #tpu.memory_space<vmem>>, vector<2x256xf32>,
    %c1_i32 = arith.constant 1 : i32
    %9 = arith.cmpi eq, %arg1, %c1_i32 : i32
    %10 = arith.extui %9 : i1 to i32
    %c0_i32_8 = arith.constant 0 : i32
    %11 = arith.cmpi ne, %10, %c0_i32_8 : i32
    scf.if %11 {
      %c0_9 = arith.constant 0 : index
      %c0_10 = arith.constant 0 : index
      %12 = vector.load %arg6[%c0_9, %c0_10] : memref<2x256xf32, #tpu.memory_space<vmem>>, vector<2x256xf32>
      %c0_11 = arith.constant 0 : index
      %c0_12 = arith.constant 0 : index
      %13 = vector.load %arg4[%c0_11, %c0_12] : memref<1x256xf32, #tpu.memory_space<vmem>>, vector<1x256xf32>
      %14 = vector.broadcast %13 : vector<1x256xf32> to vector<2x256xf32>
      %15 = arith.addf %12, %14 : vector<2x256xf32>
      %cst_13 = arith.constant 0.000000e+00 : f32
      %16 = vector.broadcast %cst_13 : f32 to vector<2x256xf32>
      %17 = arith.maximumf %15, %16 : vector<2x256xf32>
      %c0_14 = arith.constant 0 : index
      %c0_15 = arith.constant 0 : index
      %18 = vector.load %arg5[%c0_14, %c0_15] : memref<2x256xf32, #tpu.memory_space<vmem>>, vector<2x256xf32>
      tpu.vector_store %arg5[%c0_14, %c0_15], %17 {strides = array<i32>} : memref<2x256xf32, #tpu.memory_space<vmem>>, vector<2x256xf32>,
    } else {
    }
    return
  }
  func.func @transform_0(%arg0: i32, %arg1: i32) -> (i32, i32) {
    %c0_i32 = arith.constant 0 : i32
    %c0_i32_0 = arith.constant 0 : i32
    return %c0_i32, %arg1 : i32, i32
  }
  func.func @transform_1(%arg0: i32, %arg1: i32) -> (i32, i32) {
    %c0_i32 = arith.constant 0 : i32
    return %arg1, %arg0 : i32, i32
  }
  func.func @transform_2(%arg0: i32, %arg1: i32) -> (i32, i32) {
    %c0_i32 = arith.constant 0 : i32
    %c0_i32_0 = arith.constant 0 : i32
    return %c0_i32, %arg0 : i32, i32
  }
  func.func @transform_3(%arg0: i32, %arg1: i32) -> (i32, i32) {
    %c0_i32 = arith.constant 0 : i32
    %c0_i32_0 = arith.constant 0 : i32
    return %c0_i32, %arg0 : i32, i32
  }
}

</mosaic_0001>

<llo_original>
// kernel: deep_cnn_forward.2
$region0: #{deep_cnn_forward.2}
  #allocation0 [shape = 'u32[]', space=smem, size = 0x4, offset = 0x4, fixed_abs, tag = 'smem constant byte address 0x4 - core index']
  #allocation1 [shape = 'u32[144,128]{1,0:T(1,128)}', space=vmem, size = 0x12000, scoped, tag = 'internal scratch']
  #allocation2 [shape = 'f32[176,384]{1,0:T(8,128)}', space=vmem, size = 0x42000, scoped, tag = 'scratch operand']
  #allocation3 [shape = 'f32[176,128]{1,0:T(8,128)}', space=vmem, size = 0x16000, scoped, tag = 'scratch operand']
  #allocation4 [shape = 'f32[160,384]{1,0:T(8,128)}', space=vmem, size = 0x3c000, scoped, tag = 'scratch operand']
  %s0 = inlined_call_operand.vmem [shape: f32[2,96,1], index: 0, kind: input, shape index: {}]
  %s1 = inlined_call_operand.hbm [shape: f32[3,1,128], index: 1, kind: input, shape index: {}]
  %s2 = inlined_call_operand.hbm [shape: f32[2,1,128], index: 2, kind: input, shape index: {}]
  %s3 = inlined_call_operand.hbm [shape: f32[384,128], index: 3, kind: input, shape index: {}]
  %s4 = inlined_call_operand.hbm [shape: f32[2,1,128], index: 4, kind: input, shape index: {}]
  %s5 = inlined_call_operand.hbm [shape: f32[384,128], index: 5, kind: input, shape index: {}]
  %s6 = inlined_call_operand.hbm [shape: f32[2,1,128], index: 6, kind: input, shape index: {}]
  %s7 = inlined_call_operand.vmem [shape: bf16[160,128], index: 7, kind: output, shape index: {}]
  %s8 = sld [smem:[#allocation0]]
  $region62: #{deep_cnn_forward.2} parent=0
    _
  %s10 = ssub.s32 1, %s8
  %s11 = scalar_select 0, %s10, %s8
  $region1: #{deep_cnn_forward.2} parent=0
    #allocation5 [shape = 'u8[1536]{0}', space=vmem, size = 0x800, scoped, tag = 'input window, operand 1, single buffered']
    #allocation6 [shape = 's32[1]{0}', space=sflag, size = 0x4, scoped, tag = 'scoped memory for deep_cnn_forward.2']
    #allocation7 [shape = 'u8[1024]{0}', space=vmem, size = 0x400, scoped, tag = 'input window, operand 2, single buffered']
    #allocation8 [shape = 's32[1]{0}', space=sflag, size = 0x4, scoped, tag = 'scoped memory for deep_cnn_forward.2']
    #allocation9 [shape = 'u8[196608]{0}', space=vmem, size = 0x30000, scoped, tag = 'input window, operand 3, single buffered']
    #allocation10 [shape = 'u8[1024]{0}', space=vmem, size = 0x400, scoped, tag = 'input window, operand 4, single buffered']
    #allocation11 [shape = 's32[1]{0}', space=sflag, size = 0x4, scoped, tag = 'scoped memory for deep_cnn_forward.2']
    #allocation12 [shape = 'u8[196608]{0}', space=vmem, size = 0x30000, scoped, tag = 'input window, operand 5, single buffered']
    #allocation13 [shape = 'u8[1024]{0}', space=vmem, size = 0x400, scoped, tag = 'input window, operand 6, single buffered']
    #allocation14 [shape = 's32[1]{0}', space=sflag, size = 0x4, scoped, tag = 'scoped memory for deep_cnn_forward.2']
    %12 = vsyncpa [#allocation6], 0
    %13 = vsyncpa [#allocation8], 0
    %14 = vsyncpa [#allocation11], 0
    %15 = vsyncpa [#allocation14], 0
    // Predicated region
    $region2: #{deep_cnn_forward.2} parent=1 // pred_check
      _
    $region3: #{deep_cnn_forward.2} parent=1 // pred_check_branch
      %17 = sbr.rel (0) target = $region5
    $region4: #{deep_cnn_forward.2} parent=1 // pred_region
      _
    $region5: #{deep_cnn_forward.2} parent=1 // pred_fallthru
      _
    // Predicated region
    $region6: #{deep_cnn_forward.2} parent=1 // pred_check
      _
    $region7: #{deep_cnn_forward.2} parent=1 // pred_check_branch
      %19 = sbr.rel (0) target = $region9
    $region8: #{deep_cnn_forward.2} parent=1 // pred_region
      %s21 = ssub.s32 48, 48
      %22 = vsyncadd [#allocation6], %s21
      %s23 = sshll.u32 [#allocation5], 4
      %s24 = int_to_ptr.vmem [resolvable:$true] %s23
      %29 = dma.hbm_to_vmem [thread:$0]  %s1, 48, %s24, [#allocation6], 16, 16, 1
    $region9: #{deep_cnn_forward.2} parent=1 // pred_fallthru
      _
    // Predicated region
    $region10: #{deep_cnn_forward.2} parent=1 // pred_check
      _
    $region11: #{deep_cnn_forward.2} parent=1 // pred_check_branch
      %31 = sbr.rel (0) target = $region13
    $region12: #{deep_cnn_forward.2} parent=1 // pred_region
      %s33 = ssub.s32 32, 32
      %34 = vsyncadd [#allocation8], %s33
      %s35 = sshll.u32 [#allocation7], 4
      %s36 = int_to_ptr.vmem [resolvable:$true] %s35
      %41 = dma.hbm_to_vmem [thread:$0]  %s2, 32, %s36, [#allocation8], 16, 16, 1
    $region13: #{deep_cnn_forward.2} parent=1 // pred_fallthru
      _
    // Predicated region
    $region14: #{deep_cnn_forward.2} parent=1 // pred_check
      _
    $region15: #{deep_cnn_forward.2} parent=1 // pred_check_branch
      %43 = sbr.rel (0) target = $region17
    $region16: #{deep_cnn_forward.2} parent=1 // pred_region
      %s45 = ssub.s32 6144, 6144
      %46 = vsyncadd [#allocation8], %s45
      %s47 = sshll.u32 [#allocation9], 4
      %s48 = int_to_ptr.vmem [resolvable:$true] %s47
      %53 = dma.hbm_to_vmem [thread:$0]  %s3, 6144, %s48, [#allocation8], 128, 128, 8
    $region17: #{deep_cnn_forward.2} parent=1 // pred_fallthru
      _
    // Predicated region
    $region18: #{deep_cnn_forward.2} parent=1 // pred_check
      _
    $region19: #{deep_cnn_forward.2} parent=1 // pred_check_branch
      %55 = sbr.rel (0) target = $region21
    $region20: #{deep_cnn_forward.2} parent=1 // pred_region
      %s57 = ssub.s32 32, 32
      %58 = vsyncadd [#allocation11], %s57
      %s59 = sshll.u32 [#allocation10], 4
      %s60 = int_to_ptr.vmem [resolvable:$true] %s59
      %65 = dma.hbm_to_vmem [thread:$0]  %s4, 32, %s60, [#allocation11], 16, 16, 1
    $region21: #{deep_cnn_forward.2} parent=1 // pred_fallthru
      _
    // Predicated region
    $region22: #{deep_cnn_forward.2} parent=1 // pred_check
      _
    $region23: #{deep_cnn_forward.2} parent=1 // pred_check_branch
      %67 = sbr.rel (0) target = $region25
    $region24: #{deep_cnn_forward.2} parent=1 // pred_region
      %s69 = ssub.s32 6144, 6144
      %70 = vsyncadd [#allocation11], %s69
      %s71 = sshll.u32 [#allocation12], 4
      %s72 = int_to_ptr.vmem [resolvable:$true] %s71
      %77 = dma.hbm_to_vmem [thread:$0]  %s5, 6144, %s72, [#allocation11], 128, 128, 8
    $region25: #{deep_cnn_forward.2} parent=1 // pred_fallthru
      _
    // Predicated region
    $region26: #{deep_cnn_forward.2} parent=1 // pred_check
      _
    $region27: #{deep_cnn_forward.2} parent=1 // pred_check_branch
      %79 = sbr.rel (0) target = $region29
    $region28: #{deep_cnn_forward.2} parent=1 // pred_region
      %s81 = ssub.s32 32, 32
      %82 = vsyncadd [#allocation14], %s81
      %s83 = sshll.u32 [#allocation13], 4
      %s84 = int_to_ptr.vmem [resolvable:$true] %s83
      %89 = dma.hbm_to_vmem [thread:$0]  %s6, 32, %s84, [#allocation14], 16, 16, 1
    $region29: #{deep_cnn_forward.2} parent=1 // pred_fallthru
      _
    // Predicated region
    $region30: #{deep_cnn_forward.2} parent=1 // pred_check
      _
    $region31: #{deep_cnn_forward.2} parent=1 // pred_check_branch
      %91 = sbr.rel (0) target = $region33
    $region32: #{deep_cnn_forward.2} parent=1 // pred_region
      %92 = dma.done [#allocation6], 48
    $region33: #{deep_cnn_forward.2} parent=1 // pred_fallthru
      _
    // Predicated region
    $region34: #{deep_cnn_forward.2} parent=1 // pred_check
      _
    $region35: #{deep_cnn_forward.2} parent=1 // pred_check_branch
      %94 = sbr.rel (0) target = $region37
    $region36: #{deep_cnn_forward.2} parent=1 // pred_region
      %95 = dma.done [#allocation8], 32
    $region37: #{deep_cnn_forward.2} parent=1 // pred_fallthru
      _
    // Predicated region
    $region38: #{deep_cnn_forward.2} parent=1 // pred_check
      _
    $region39: #{deep_cnn_forward.2} parent=1 // pred_check_branch
      %97 = sbr.rel (0) target = $region41
    $region40: #{deep_cnn_forward.2} parent=1 // pred_region
      %98 = dma.done [#allocation8], 6144
    $region41: #{deep_cnn_forward.2} parent=1 // pred_fallthru
      _
    // Predicated region
    $region42: #{deep_cnn_forward.2} parent=1 // pred_check
      _
    $region43: #{deep_cnn_forward.2} parent=1 // pred_check_branch
      %100 = sbr.rel (0) target = $region45
    $region44: #{deep_cnn_forward.2} parent=1 // pred_region
      %101 = dma.done [#allocation11], 32
    $region45: #{deep_cnn_forward.2} parent=1 // pred_fallthru
      _
    // Predicated region
    $region46: #{deep_cnn_forward.2} parent=1 // pred_check
      _
    $region47: #{deep_cnn_forward.2} parent=1 // pred_check_branch
      %103 = sbr.rel (0) target = $region49
    $region48: #{deep_cnn_forward.2} parent=1 // pred_region
      %104 = dma.done [#allocation11], 6144
    $region49: #{deep_cnn_forward.2} parent=1 // pred_fallthru
      _
    // Predicated region
    $region50: #{deep_cnn_forward.2} parent=1 // pred_check
      _
    $region51: #{deep_cnn_forward.2} parent=1 // pred_check_branch
      %106 = sbr.rel (0) target = $region53
    $region52: #{deep_cnn_forward.2} parent=1 // pred_region
      %107 = dma.done [#allocation14], 32
    $region53: #{deep_cnn_forward.2} parent=1 // pred_fallthru
      _
    %v108 = vld [vmem:[%s0] sm:$0xff]
    %v109 = vld [vmem:[%s0 + $0x8] sm:$0xff]
    %v110 = vld [vmem:[%s0 + $0x10] sm:$0xff]
    %v111 = vld [vmem:[%s0 + $0x18] sm:$0xff]
    %v112 = vld [vmem:[%s0 + $0x20] sm:$0xff]
    %v113 = vld [vmem:[%s0 + $0x28] sm:$0xff]
    %v114 = vld [vmem:[%s0 + $0x30] sm:$0xff]
    %v115 = vld [vmem:[%s0 + $0x38] sm:$0xff]
    %v116 = vld [vmem:[%s0 + $0x40] sm:$0xff]
    %v117 = vld [vmem:[%s0 + $0x48] sm:$0xff]
    %v118 = vld [vmem:[%s0 + $0x50] sm:$0xff]
    %v119 = vld [vmem:[%s0 + $0x58] sm:$0xff]
    %121 = vset.pattern.permute.xlu0 0
    %122 = vperm.xlu0 %121, %v108
    %v123 = vpop.permute.xlu0 %122
    %126 = vset.pattern.permute.xlu0 0
    %127 = vperm.xlu0 %126, %v109
    %v128 = vpop.permute.xlu0 %127
    %131 = vset.pattern.permute.xlu0 0
    %132 = vperm.xlu0 %131, %v110
    %v133 = vpop.permute.xlu0 %132
    %136 = vset.pattern.permute.xlu0 0
    %137 = vperm.xlu0 %136, %v111
    %v138 = vpop.permute.xlu0 %137
    %141 = vset.pattern.permute.xlu0 0
    %142 = vperm.xlu0 %141, %v112
    %v143 = vpop.permute.xlu0 %142
    %146 = vset.pattern.permute.xlu0 0
    %147 = vperm.xlu0 %146, %v113
    %v148 = vpop.permute.xlu0 %147
    %151 = vset.pattern.permute.xlu0 0
    %152 = vperm.xlu0 %151, %v114
    %v153 = vpop.permute.xlu0 %152
    %156 = vset.pattern.permute.xlu0 0
    %157 = vperm.xlu0 %156, %v115
    %v158 = vpop.permute.xlu0 %157
    %161 = vset.pattern.permute.xlu0 0
    %162 = vperm.xlu0 %161, %v116
    %v163 = vpop.permute.xlu0 %162
    %166 = vset.pattern.permute.xlu0 0
    %167 = vperm.xlu0 %166, %v117
    %v168 = vpop.permute.xlu0 %167
    %171 = vset.pattern.permute.xlu0 0
    %172 = vperm.xlu0 %171, %v118
    %v173 = vpop.permute.xlu0 %172
    %176 = vset.pattern.permute.xlu0 0
    %177 = vperm.xlu0 %176, %v119
    %v178 = vpop.permute.xlu0 %177
    %v180 = vld [vmem:[#allocation5] sm:$0x1]
    %v182 = vlaneseq
    %v183 = vshrl.u32 %v182, 7
    %v184 = vsub.s32 0, %v183
    %v185 = vrot.slane %v180, %v184
    %v187 = vmul.f32 %v123, %v185
    %v188 = vmul.f32 %v128, %v185
    %v189 = vmul.f32 %v133, %v185
    %v190 = vmul.f32 %v138, %v185
    %v191 = vmul.f32 %v143, %v185
    %v192 = vmul.f32 %v148, %v185
    %v193 = vmul.f32 %v153, %v185
    %v194 = vmul.f32 %v158, %v185
    %v195 = vmul.f32 %v163, %v185
    %v196 = vmul.f32 %v168, %v185
    %v197 = vmul.f32 %v173, %v185
    %v198 = vmul.f32 %v178, %v185
    %s199 = scalar_lea.vmem [#allocation5], 1
    %v200 = vld [vmem:[%s199] sm:$0x1]
    %v202 = vlaneseq
    %v203 = vshrl.u32 %v202, 7
    %v204 = vsub.s32 0, %v203
    %v205 = vrot.slane %v200, %v204
    %v207 = vmul.f32 %v123, %v205
    %v208 = vmul.f32 %v128, %v205
    %v209 = vmul.f32 %v133, %v205
    %v210 = vmul.f32 %v138, %v205
    %v211 = vmul.f32 %v143, %v205
    %v212 = vmul.f32 %v148, %v205
    %v213 = vmul.f32 %v153, %v205
    %v214 = vmul.f32 %v158, %v205
    %v215 = vmul.f32 %v163, %v205
    %v216 = vmul.f32 %v168, %v205
    %v217 = vmul.f32 %v173, %v205
    %v218 = vmul.f32 %v178, %v205
    %vm231 = vcmask 1046528
    %v232 = vrot.slane %v207, 1
    %v233 = vrot.slane %v208, 1
    %v234 = vsel %vm231, %v232, %v233
    %v235 = vrot.slane %v209, 1
    %v236 = vsel %vm231, %v233, %v235
    %v237 = vrot.slane %v210, 1
    %v238 = vsel %vm231, %v235, %v237
    %v239 = vrot.slane %v211, 1
    %v240 = vsel %vm231, %v237, %v239
    %v241 = vrot.slane %v212, 1
    %v242 = vsel %vm231, %v239, %v241
    %v243 = vrot.slane %v213, 1
    %v244 = vsel %vm231, %v241, %v243
    %v245 = vrot.slane %v214, 1
    %v246 = vsel %vm231, %v243, %v245
    %v247 = vrot.slane %v215, 1
    %v248 = vsel %vm231, %v245, %v247
    %v249 = vrot.slane %v216, 1
    %v250 = vsel %vm231, %v247, %v249
    %v251 = vrot.slane %v217, 1
    %v252 = vsel %vm231, %v249, %v251
    %v253 = vrot.slane %v218, 1
    %v254 = vsel %vm231, %v251, %v253
    %v267 = vadd.f32 %v187, %v234
    %v268 = vadd.f32 %v188, %v236
    %v269 = vadd.f32 %v189, %v238
    %v270 = vadd.f32 %v190, %v240
    %v271 = vadd.f32 %v191, %v242
    %v272 = vadd.f32 %v192, %v244
    %v273 = vadd.f32 %v193, %v246
    %v274 = vadd.f32 %v194, %v248
    %v275 = vadd.f32 %v195, %v250
    %v276 = vadd.f32 %v196, %v252
    %v277 = vadd.f32 %v197, %v254
    %v278 = vadd.f32 %v198, %v253
    %s279 = scalar_lea.vmem [#allocation5], 2
    %v280 = vld [vmem:[%s279] sm:$0x1]
    %v282 = vlaneseq
    %v283 = vshrl.u32 %v282, 7
    %v284 = vsub.s32 0, %v283
    %v285 = vrot.slane %v280, %v284
    %v287 = vmul.f32 %v123, %v285
    %v288 = vmul.f32 %v128, %v285
    %v289 = vmul.f32 %v133, %v285
    %v290 = vmul.f32 %v138, %v285
    %v291 = vmul.f32 %v143, %v285
    %v292 = vmul.f32 %v148, %v285
    %v293 = vmul.f32 %v153, %v285
    %v294 = vmul.f32 %v158, %v285
    %v295 = vmul.f32 %v163, %v285
    %v296 = vmul.f32 %v168, %v285
    %v297 = vmul.f32 %v173, %v285
    %v298 = vmul.f32 %v178, %v285
    %vm311 = vcmask 1045504
    %v312 = vrot.slane %v287, 2
    %v313 = vrot.slane %v288, 2
    %v314 = vsel %vm311, %v312, %v313
    %v315 = vrot.slane %v289, 2
    %v316 = vsel %vm311, %v313, %v315
    %v317 = vrot.slane %v290, 2
    %v318 = vsel %vm311, %v315, %v317
    %v319 = vrot.slane %v291, 2
    %v320 = vsel %vm311, %v317, %v319
    %v321 = vrot.slane %v292, 2
    %v322 = vsel %vm311, %v319, %v321
    %v323 = vrot.slane %v293, 2
    %v324 = vsel %vm311, %v321, %v323
    %v325 = vrot.slane %v294, 2
    %v326 = vsel %vm311, %v323, %v325
    %v327 = vrot.slane %v295, 2
    %v328 = vsel %vm311, %v325, %v327
    %v329 = vrot.slane %v296, 2
    %v330 = vsel %vm311, %v327, %v329
    %v331 = vrot.slane %v297, 2
    %v332 = vsel %vm311, %v329, %v331
    %v333 = vrot.slane %v298, 2
    %v334 = vsel %vm311, %v331, %v333
    %v347 = vadd.f32 %v267, %v314
    %v348 = vadd.f32 %v268, %v316
    %v349 = vadd.f32 %v269, %v318
    %v350 = vadd.f32 %v270, %v320
    %v351 = vadd.f32 %v271, %v322
    %v352 = vadd.f32 %v272, %v324
    %v353 = vadd.f32 %v273, %v326
    %v354 = vadd.f32 %v274, %v328
    %v355 = vadd.f32 %v275, %v330
    %v356 = vadd.f32 %v276, %v332
    %v357 = vadd.f32 %v277, %v334
    %v358 = vadd.f32 %v278, %v333
    %v359 = vld [vmem:[#allocation7] sm:$0x1]
    %v361 = vlaneseq
    %v362 = vshrl.u32 %v361, 7
    %v363 = vsub.s32 0, %v362
    %v364 = vrot.slane %v359, %v363
    %v366 = vmul.f32 %v347, %v364
    %v367 = vmul.f32 %v348, %v364
    %v368 = vmul.f32 %v349, %v364
    %v369 = vmul.f32 %v350, %v364
    %v370 = vmul.f32 %v351, %v364
    %v371 = vmul.f32 %v352, %v364
    %v372 = vmul.f32 %v353, %v364
    %v373 = vmul.f32 %v354, %v364
    %v374 = vmul.f32 %v355, %v364
    %v375 = vmul.f32 %v356, %v364
    %v376 = vmul.f32 %v357, %v364
    %v377 = vmul.f32 %v358, %v364
    %s378 = scalar_lea.vmem [#allocation7], 1
    %v379 = vld [vmem:[%s378] sm:$0x1]
    %v381 = vlaneseq
    %v382 = vshrl.u32 %v381, 7
    %v383 = vsub.s32 0, %v382
    %v384 = vrot.slane %v379, %v383
    %v386 = vadd.f32 %v366, %v384
    %v387 = vadd.f32 %v367, %v384
    %v388 = vadd.f32 %v368, %v384
    %v389 = vadd.f32 %v369, %v384
    %v390 = vadd.f32 %v370, %v384
    %v391 = vadd.f32 %v371, %v384
    %v392 = vadd.f32 %v372, %v384
    %v393 = vadd.f32 %v373, %v384
    %v394 = vadd.f32 %v374, %v384
    %v395 = vadd.f32 %v375, %v384
    %v396 = vadd.f32 %v376, %v384
    %v397 = vadd.f32 %v377, %v384
    %v398 = vmax.f32 %v386, 0.0
    %v399 = vmax.f32 %v387, 0.0
    %v400 = vmax.f32 %v388, 0.0
    %v401 = vmax.f32 %v389, 0.0
    %v402 = vmax.f32 %v390, 0.0
    %v403 = vmax.f32 %v391, 0.0
    %v404 = vmax.f32 %v392, 0.0
    %v405 = vmax.f32 %v393, 0.0
    %v406 = vmax.f32 %v394, 0.0
    %v407 = vmax.f32 %v395, 0.0
    %v408 = vmax.f32 %v396, 0.0
    %v409 = vmax.f32 %v397, 0.0
    %410 = vst [vmem:[#allocation2] sm:$0xff] %v398
    %411 = vst [vmem:[#allocation2 + $0x18] sm:$0xff] %v399
    %412 = vst [vmem:[#allocation2 + $0x30] sm:$0xff] %v400
    %413 = vst [vmem:[#allocation2 + $0x48] sm:$0xff] %v401
    %414 = vst [vmem:[#allocation2 + $0x60] sm:$0xff] %v402
    %415 = vst [vmem:[#allocation2 + $0x78] sm:$0xff] %v403
    %416 = vst [vmem:[#allocation2 + $0x90] sm:$0xff] %v404
    %417 = vst [vmem:[#allocation2 + $0xa8] sm:$0xff] %v405
    %418 = vst [vmem:[#allocation2 + $0xc0] sm:$0xff] %v406
    %419 = vst [vmem:[#allocation2 + $0xd8] sm:$0xff] %v407
    %420 = vst [vmem:[#allocation2 + $0xf0] sm:$0xff] %v408
    %v433 = vrot.slane %v398, 1
    %v434 = vrot.slane %v399, 1
    %v435 = vsel %vm231, %v433, %v434
    %v436 = vrot.slane %v400, 1
    %v437 = vsel %vm231, %v434, %v436
    %v438 = vrot.slane %v401, 1
    %v439 = vsel %vm231, %v436, %v438
    %v440 = vrot.slane %v402, 1
    %v441 = vsel %vm231, %v438, %v440
    %v442 = vrot.slane %v403, 1
    %v443 = vsel %vm231, %v440, %v442
    %v444 = vrot.slane %v404, 1
    %v445 = vsel %vm231, %v442, %v444
    %v446 = vrot.slane %v405, 1
    %v447 = vsel %vm231, %v444, %v446
    %v448 = vrot.slane %v406, 1
    %v449 = vsel %vm231, %v446, %v448
    %v450 = vrot.slane %v407, 1
    %v451 = vsel %vm231, %v448, %v450
    %v452 = vrot.slane %v408, 1
    %v453 = vsel %vm231, %v450, %v452
    %v454 = vrot.slane %v409, 1
    %v455 = vsel %vm231, %v452, %v454
    %467 = vst [vmem:[#allocation2 + $0x8] sm:$0xff] %v435
    %468 = vst [vmem:[#allocation2 + $0x20] sm:$0xff] %v437
    %469 = vst [vmem:[#allocation2 + $0x38] sm:$0xff] %v439
    %470 = vst [vmem:[#allocation2 + $0x50] sm:$0xff] %v441
    %471 = vst [vmem:[#allocation2 + $0x68] sm:$0xff] %v443
    %472 = vst [vmem:[#allocation2 + $0x80] sm:$0xff] %v445
    %473 = vst [vmem:[#allocation2 + $0x98] sm:$0xff] %v447
    %474 = vst [vmem:[#allocation2 + $0xb0] sm:$0xff] %v449
    %475 = vst [vmem:[#allocation2 + $0xc8] sm:$0xff] %v451
    %476 = vst [vmem:[#allocation2 + $0xe0] sm:$0xff] %v453
    %477 = vst [vmem:[#allocation2 + $0xf8] sm:$0xff] %v455
    %v478 = vrot.slane %v398, 2
    %v479 = vrot.slane %v399, 2
    %v480 = vsel %vm311, %v478, %v479
    %v481 = vrot.slane %v400, 2
    %v482 = vsel %vm311, %v479, %v481
    %v483 = vrot.slane %v401, 2
    %v484 = vsel %vm311, %v481, %v483
    %v485 = vrot.slane %v402, 2
    %v486 = vsel %vm311, %v483, %v485
    %v487 = vrot.slane %v403, 2
    %v488 = vsel %vm311, %v485, %v487
    %v489 = vrot.slane %v404, 2
    %v490 = vsel %vm311, %v487, %v489
    %v491 = vrot.slane %v405, 2
    %v492 = vsel %vm311, %v489, %v491
    %v493 = vrot.slane %v406, 2
    %v494 = vsel %vm311, %v491, %v493
    %v495 = vrot.slane %v407, 2
    %v496 = vsel %vm311, %v493, %v495
    %v497 = vrot.slane %v408, 2
    %v498 = vsel %vm311, %v495, %v497
    %v499 = vrot.slane %v409, 2
    %v500 = vsel %vm311, %v497, %v499
    %512 = vst [vmem:[#allocation2 + $0x10] sm:$0xff] %v480
    %513 = vst [vmem:[#allocation2 + $0x28] sm:$0xff] %v482
    %514 = vst [vmem:[#allocation2 + $0x40] sm:$0xff] %v484
    %515 = vst [vmem:[#allocation2 + $0x58] sm:$0xff] %v486
    %516 = vst [vmem:[#allocation2 + $0x70] sm:$0xff] %v488
    %517 = vst [vmem:[#allocation2 + $0x88] sm:$0xff] %v490
    %518 = vst [vmem:[#allocation2 + $0xa0] sm:$0xff] %v492
    %519 = vst [vmem:[#allocation2 + $0xb8] sm:$0xff] %v494
    %520 = vst [vmem:[#allocation2 + $0xd0] sm:$0xff] %v496
    %521 = vst [vmem:[#allocation2 + $0xe8] sm:$0xff] %v498
    %522 = vst [vmem:[#allocation2 + $0x100] sm:$0xff] %v500
    %s523 = scalar_lea.vmem %s0, 96
    %v524 = vld [vmem:[%s523] sm:$0xff]
    %v525 = vld [vmem:[%s523 + $0x8] sm:$0xff]
    %v526 = vld [vmem:[%s523 + $0x10] sm:$0xff]
    %v527 = vld [vmem:[%s523 + $0x18] sm:$0xff]
    %v528 = vld [vmem:[%s523 + $0x20] sm:$0xff]
    %v529 = vld [vmem:[%s523 + $0x28] sm:$0xff]
    %v530 = vld [vmem:[%s523 + $0x30] sm:$0xff]
    %v531 = vld [vmem:[%s523 + $0x38] sm:$0xff]
    %v532 = vld [vmem:[%s523 + $0x40] sm:$0xff]
    %v533 = vld [vmem:[%s523 + $0x48] sm:$0xff]
    %v534 = vld [vmem:[%s523 + $0x50] sm:$0xff]
    %v535 = vld [vmem:[%s523 + $0x58] sm:$0xff]
    %537 = vset.pattern.permute.xlu0 0
    %538 = vperm.xlu0 %537, %v524
    %v539 = vpop.permute.xlu0 %538
    %542 = vset.pattern.permute.xlu0 0
    %543 = vperm.xlu0 %542, %v525
    %v544 = vpop.permute.xlu0 %543
    %547 = vset.pattern.permute.xlu0 0
    %548 = vperm.xlu0 %547, %v526
    %v549 = vpop.permute.xlu0 %548
    %552 = vset.pattern.permute.xlu0 0
    %553 = vperm.xlu0 %552, %v527
    %v554 = vpop.permute.xlu0 %553
    %557 = vset.pattern.permute.xlu0 0
    %558 = vperm.xlu0 %557, %v528
    %v559 = vpop.permute.xlu0 %558
    %562 = vset.pattern.permute.xlu0 0
    %563 = vperm.xlu0 %562, %v529
    %v564 = vpop.permute.xlu0 %563
    %567 = vset.pattern.permute.xlu0 0
    %568 = vperm.xlu0 %567, %v530
    %v569 = vpop.permute.xlu0 %568
    %572 = vset.pattern.permute.xlu0 0
    %573 = vperm.xlu0 %572, %v531
    %v574 = vpop.permute.xlu0 %573
    %577 = vset.pattern.permute.xlu0 0
    %578 = vperm.xlu0 %577, %v532
    %v579 = vpop.permute.xlu0 %578
    %582 = vset.pattern.permute.xlu0 0
    %583 = vperm.xlu0 %582, %v533
    %v584 = vpop.permute.xlu0 %583
    %587 = vset.pattern.permute.xlu0 0
    %588 = vperm.xlu0 %587, %v534
    %v589 = vpop.permute.xlu0 %588
    %592 = vset.pattern.permute.xlu0 0
    %593 = vperm.xlu0 %592, %v535
    %v594 = vpop.permute.xlu0 %593
    %v596 = vld [vmem:[#allocation5] sm:$0x1]
    %v598 = vlaneseq
    %v599 = vshrl.u32 %v598, 7
    %v600 = vsub.s32 0, %v599
    %v601 = vrot.slane %v596, %v600
    %v603 = vmul.f32 %v539, %v601
    %v604 = vmul.f32 %v544, %v601
    %v605 = vmul.f32 %v549, %v601
    %v606 = vmul.f32 %v554, %v601
    %v607 = vmul.f32 %v559, %v601
    %v608 = vmul.f32 %v564, %v601
    %v609 = vmul.f32 %v569, %v601
    %v610 = vmul.f32 %v574, %v601
    %v611 = vmul.f32 %v579, %v601
    %v612 = vmul.f32 %v584, %v601
    %v613 = vmul.f32 %v589, %v601
    %v614 = vmul.f32 %v594, %v601
    %v615 = vld [vmem:[%s199] sm:$0x1]
    %v617 = vlaneseq
    %v618 = vshrl.u32 %v617, 7
    %v619 = vsub.s32 0, %v618
    %v620 = vrot.slane %v615, %v619
    %v622 = vmul.f32 %v539, %v620
    %v623 = vmul.f32 %v544, %v620
    %v624 = vmul.f32 %v549, %v620
    %v625 = vmul.f32 %v554, %v620
    %v626 = vmul.f32 %v559, %v620
    %v627 = vmul.f32 %v564, %v620
    %v628 = vmul.f32 %v569, %v620
    %v629 = vmul.f32 %v574, %v620
    %v630 = vmul.f32 %v579, %v620
    %v631 = vmul.f32 %v584, %v620
    %v632 = vmul.f32 %v589, %v620
    %v633 = vmul.f32 %v594, %v620
    %v646 = vrot.slane %v622, 1
    %v647 = vrot.slane %v623, 1
    %v648 = vsel %vm231, %v646, %v647
    %v649 = vrot.slane %v624, 1
    %v650 = vsel %vm231, %v647, %v649
    %v651 = vrot.slane %v625, 1
    %v652 = vsel %vm231, %v649, %v651
    %v653 = vrot.slane %v626, 1
    %v654 = vsel %vm231, %v651, %v653
    %v655 = vrot.slane %v627, 1
    %v656 = vsel %vm231, %v653, %v655
    %v657 = vrot.slane %v628, 1
    %v658 = vsel %vm231, %v655, %v657
    %v659 = vrot.slane %v629, 1
    %v660 = vsel %vm231, %v657, %v659
    %v661 = vrot.slane %v630, 1
    %v662 = vsel %vm231, %v659, %v661
    %v663 = vrot.slane %v631, 1
    %v664 = vsel %vm231, %v661, %v663
    %v665 = vrot.slane %v632, 1
    %v666 = vsel %vm231, %v663, %v665
    %v667 = vrot.slane %v633, 1
    %v668 = vsel %vm231, %v665, %v667
    %v681 = vadd.f32 %v603, %v648
    %v682 = vadd.f32 %v604, %v650
    %v683 = vadd.f32 %v605, %v652
    %v684 = vadd.f32 %v606, %v654
    %v685 = vadd.f32 %v607, %v656
    %v686 = vadd.f32 %v608, %v658
    %v687 = vadd.f32 %v609, %v660
    %v688 = vadd.f32 %v610, %v662
    %v689 = vadd.f32 %v611, %v664
    %v690 = vadd.f32 %v612, %v666
    %v691 = vadd.f32 %v613, %v668
    %v692 = vadd.f32 %v614, %v667
    %v693 = vld [vmem:[%s279] sm:$0x1]
    %v695 = vlaneseq
    %v696 = vshrl.u32 %v695, 7
    %v697 = vsub.s32 0, %v696
    %v698 = vrot.slane %v693, %v697
    %v700 = vmul.f32 %v539, %v698
    %v701 = vmul.f32 %v544, %v698
    %v702 = vmul.f32 %v549, %v698
    %v703 = vmul.f32 %v554, %v698
    %v704 = vmul.f32 %v559, %v698
    %v705 = vmul.f32 %v564, %v698
    %v706 = vmul.f32 %v569, %v698
    %v707 = vmul.f32 %v574, %v698
    %v708 = vmul.f32 %v579, %v698
    %v709 = vmul.f32 %v584, %v698
    %v710 = vmul.f32 %v589, %v698
    %v711 = vmul.f32 %v594, %v698
    %v724 = vrot.slane %v700, 2
    %v725 = vrot.slane %v701, 2
    %v726 = vsel %vm311, %v724, %v725
    %v727 = vrot.slane %v702, 2
    %v728 = vsel %vm311, %v725, %v727
    %v729 = vrot.slane %v703, 2
    %v730 = vsel %vm311, %v727, %v729
    %v731 = vrot.slane %v704, 2
    %v732 = vsel %vm311, %v729, %v731
    %v733 = vrot.slane %v705, 2
    %v734 = vsel %vm311, %v731, %v733
    %v735 = vrot.slane %v706, 2
    %v736 = vsel %vm311, %v733, %v735
    %v737 = vrot.slane %v707, 2
    %v738 = vsel %vm311, %v735, %v737
    %v739 = vrot.slane %v708, 2
    %v740 = vsel %vm311, %v737, %v739
    %v741 = vrot.slane %v709, 2
    %v742 = vsel %vm311, %v739, %v741
    %v743 = vrot.slane %v710, 2
    %v744 = vsel %vm311, %v741, %v743
    %v745 = vrot.slane %v711, 2
    %v746 = vsel %vm311, %v743, %v745
    %v759 = vadd.f32 %v681, %v726
    %v760 = vadd.f32 %v682, %v728
    %v761 = vadd.f32 %v683, %v730
    %v762 = vadd.f32 %v684, %v732
    %v763 = vadd.f32 %v685, %v734
    %v764 = vadd.f32 %v686, %v736
    %v765 = vadd.f32 %v687, %v738
    %v766 = vadd.f32 %v688, %v740
    %v767 = vadd.f32 %v689, %v742
    %v768 = vadd.f32 %v690, %v744
    %v769 = vadd.f32 %v691, %v746
    %v770 = vadd.f32 %v692, %v745
    %v771 = vld [vmem:[#allocation7] sm:$0x1]
    %v773 = vlaneseq
    %v774 = vshrl.u32 %v773, 7
    %v775 = vsub.s32 0, %v774
    %v776 = vrot.slane %v771, %v775
    %v778 = vmul.f32 %v759, %v776
    %v779 = vmul.f32 %v760, %v776
    %v780 = vmul.f32 %v761, %v776
    %v781 = vmul.f32 %v762, %v776
    %v782 = vmul.f32 %v763, %v776
    %v783 = vmul.f32 %v764, %v776
    %v784 = vmul.f32 %v765, %v776
    %v785 = vmul.f32 %v766, %v776
    %v786 = vmul.f32 %v767, %v776
    %v787 = vmul.f32 %v768, %v776
    %v788 = vmul.f32 %v769, %v776
    %v789 = vmul.f32 %v770, %v776
    %v790 = vld [vmem:[%s378] sm:$0x1]
    %v792 = vlaneseq
    %v793 = vshrl.u32 %v792, 7
    %v794 = vsub.s32 0, %v793
    %v795 = vrot.slane %v790, %v794
    %v797 = vadd.f32 %v778, %v795
    %v798 = vadd.f32 %v779, %v795
    %v799 = vadd.f32 %v780, %v795
    %v800 = vadd.f32 %v781, %v795
    %v801 = vadd.f32 %v782, %v795
    %v802 = vadd.f32 %v783, %v795
    %v803 = vadd.f32 %v784, %v795
    %v804 = vadd.f32 %v785, %v795
    %v805 = vadd.f32 %v786, %v795
    %v806 = vadd.f32 %v787, %v795
    %v807 = vadd.f32 %v788, %v795
    %v808 = vadd.f32 %v789, %v795
    %v809 = vmax.f32 %v797, 0.0
    %v810 = vmax.f32 %v798, 0.0
    %v811 = vmax.f32 %v799, 0.0
    %v812 = vmax.f32 %v800, 0.0
    %v813 = vmax.f32 %v801, 0.0
    %v814 = vmax.f32 %v802, 0.0
    %v815 = vmax.f32 %v803, 0.0
    %v816 = vmax.f32 %v804, 0.0
    %v817 = vmax.f32 %v805, 0.0
    %v818 = vmax.f32 %v806, 0.0
    %v819 = vmax.f32 %v807, 0.0
    %v820 = vmax.f32 %v808, 0.0
    %821 = vst [vmem:[#allocation2 + $0x108] sm:$0xff] %v809
    %822 = vst [vmem:[#allocation2 + $0x120] sm:$0xff] %v810
    %823 = vst [vmem:[#allocation2 + $0x138] sm:$0xff] %v811
    %824 = vst [vmem:[#allocation2 + $0x150] sm:$0xff] %v812
    %825 = vst [vmem:[#allocation2 + $0x168] sm:$0xff] %v813
    %826 = vst [vmem:[#allocation2 + $0x180] sm:$0xff] %v814
    %827 = vst [vmem:[#allocation2 + $0x198] sm:$0xff] %v815
    %828 = vst [vmem:[#allocation2 + $0x1b0] sm:$0xff] %v816
    %829 = vst [vmem:[#allocation2 + $0x1c8] sm:$0xff] %v817
    %830 = vst [vmem:[#allocation2 + $0x1e0] sm:$0xff] %v818
    %831 = vst [vmem:[#allocation2 + $0x1f8] sm:$0xff] %v819
    %v844 = vrot.slane %v809, 1
    %v845 = vrot.slane %v810, 1
    %v846 = vsel %vm231, %v844, %v845
    %v847 = vrot.slane %v811, 1
    %v848 = vsel %vm231, %v845, %v847
    %v849 = vrot.slane %v812, 1
    %v850 = vsel %vm231, %v847, %v849
    %v851 = vrot.slane %v813, 1
    %v852 = vsel %vm231, %v849, %v851
    %v853 = vrot.slane %v814, 1
    %v854 = vsel %vm231, %v851, %v853
    %v855 = vrot.slane %v815, 1
    %v856 = vsel %vm231, %v853, %v855
    %v857 = vrot.slane %v816, 1
    %v858 = vsel %vm231, %v855, %v857
    %v859 = vrot.slane %v817, 1
    %v860 = vsel %vm231, %v857, %v859
    %v861 = vrot.slane %v818, 1
    %v862 = vsel %vm231, %v859, %v861
    %v863 = vrot.slane %v819, 1
    %v864 = vsel %vm231, %v861, %v863
    %v865 = vrot.slane %v820, 1
    %v866 = vsel %vm231, %v863, %v865
    %878 = vst [vmem:[#allocation2 + $0x110] sm:$0xff] %v846
    %879 = vst [vmem:[#allocation2 + $0x128] sm:$0xff] %v848
    %880 = vst [vmem:[#allocation2 + $0x140] sm:$0xff] %v850
    %881 = vst [vmem:[#allocation2 + $0x158] sm:$0xff] %v852
    %882 = vst [vmem:[#allocation2 + $0x170] sm:$0xff] %v854
    %883 = vst [vmem:[#allocation2 + $0x188] sm:$0xff] %v856
    %884 = vst [vmem:[#allocation2 + $0x1a0] sm:$0xff] %v858
    %885 = vst [vmem:[#allocation2 + $0x1b8] sm:$0xff] %v860
    %886 = vst [vmem:[#allocation2 + $0x1d0] sm:$0xff] %v862
    %887 = vst [vmem:[#allocation2 + $0x1e8] sm:$0xff] %v864
    %888 = vst [vmem:[#allocation2 + $0x200] sm:$0xff] %v866
    %v889 = vrot.slane %v809, 2
    %v890 = vrot.slane %v810, 2
    %v891 = vsel %vm311, %v889, %v890
    %v892 = vrot.slane %v811, 2
    %v893 = vsel %vm311, %v890, %v892
    %v894 = vrot.slane %v812, 2
    %v895 = vsel %vm311, %v892, %v894
    %v896 = vrot.slane %v813, 2
    %v897 = vsel %vm311, %v894, %v896
    %v898 = vrot.slane %v814, 2
    %v899 = vsel %vm311, %v896, %v898
    %v900 = vrot.slane %v815, 2
    %v901 = vsel %vm311, %v898, %v900
    %v902 = vrot.slane %v816, 2
    %v903 = vsel %vm311, %v900, %v902
    %v904 = vrot.slane %v817, 2
    %v905 = vsel %vm311, %v902, %v904
    %v906 = vrot.slane %v818, 2
    %v907 = vsel %vm311, %v904, %v906
    %v908 = vrot.slane %v819, 2
    %v909 = vsel %vm311, %v906, %v908
    %v910 = vrot.slane %v820, 2
    %v911 = vsel %vm311, %v908, %v910
    %923 = vst [vmem:[#allocation2 + $0x118] sm:$0xff] %v891
    %924 = vst [vmem:[#allocation2 + $0x130] sm:$0xff] %v893
    %925 = vst [vmem:[#allocation2 + $0x148] sm:$0xff] %v895
    %926 = vst [vmem:[#allocation2 + $0x160] sm:$0xff] %v897
    %927 = vst [vmem:[#allocation2 + $0x178] sm:$0xff] %v899
    %928 = vst [vmem:[#allocation2 + $0x190] sm:$0xff] %v901
    %929 = vst [vmem:[#allocation2 + $0x1a8] sm:$0xff] %v903
    %930 = vst [vmem:[#allocation2 + $0x1c0] sm:$0xff] %v905
    %931 = vst [vmem:[#allocation2 + $0x1d8] sm:$0xff] %v907
    %932 = vst [vmem:[#allocation2 + $0x1f0] sm:$0xff] %v909
    %933 = vst [vmem:[#allocation2 + $0x208] sm:$0xff] %v911
    %v934 = vld [vmem:[#allocation2] sm:$0xff]
    %v935 = vld [vmem:[#allocation2 + $0x8] sm:$0xff]
    %v936 = vld [vmem:[#allocation2 + $0x10] sm:$0xff]
    %v937 = vld [vmem:[#allocation2 + $0x18] sm:$0xff]
    %v938 = vld [vmem:[#allocation2 + $0x20] sm:$0xff]
    %v939 = vld [vmem:[#allocation2 + $0x28] sm:$0xff]
    %v940 = vld [vmem:[#allocation2 + $0x30] sm:$0xff]
    %v941 = vld [vmem:[#allocation2 + $0x38] sm:$0xff]
    %v942 = vld [vmem:[#allocation2 + $0x40] sm:$0xff]
    %v943 = vld [vmem:[#allocation2 + $0x48] sm:$0xff]
    %v944 = vld [vmem:[#allocation2 + $0x50] sm:$0xff]
    %v945 = vld [vmem:[#allocation2 + $0x58] sm:$0xff]
    %v946 = vld [vmem:[#allocation2 + $0x60] sm:$0xff]
    %v947 = vld [vmem:[#allocation2 + $0x68] sm:$0xff]
    %v948 = vld [vmem:[#allocation2 + $0x70] sm:$0xff]
    %v949 = vld [vmem:[#allocation2 + $0x78] sm:$0xff]
    %v950 = vld [vmem:[#allocation2 + $0x80] sm:$0xff]
    %v951 = vld [vmem:[#allocation2 + $0x88] sm:$0xff]
    %v952 = vld [vmem:[#allocation2 + $0x90] sm:$0xff]
    %v953 = vld [vmem:[#allocation2 + $0x98] sm:$0xff]
    %v954 = vld [vmem:[#allocation2 + $0xa0] sm:$0xff]
    %v955 = vld [vmem:[#allocation2 + $0xa8] sm:$0xff]
    %v956 = vld [vmem:[#allocation2 + $0xb0] sm:$0xff]
    %v957 = vld [vmem:[#allocation2 + $0xb8] sm:$0xff]
    %v958 = vld [vmem:[#allocation2 + $0xc0] sm:$0xff]
    %v959 = vld [vmem:[#allocation2 + $0xc8] sm:$0xff]
    %v960 = vld [vmem:[#allocation2 + $0xd0] sm:$0xff]
    %v961 = vld [vmem:[#allocation2 + $0xd8] sm:$0xff]
    %v962 = vld [vmem:[#allocation2 + $0xe0] sm:$0xff]
    %v963 = vld [vmem:[#allocation2 + $0xe8] sm:$0xff]
    %v964 = vld [vmem:[#allocation2 + $0xf0] sm:$0xff]
    %v965 = vld [vmem:[#allocation2 + $0xf8] sm:$0xff]
    %v966 = vld [vmem:[#allocation2 + $0x100] sm:$0xff]
    %v967 = vld [vmem:[#allocation2 + $0x108] sm:$0xff]
    %v968 = vld [vmem:[#allocation2 + $0x110] sm:$0xff]
    %v969 = vld [vmem:[#allocation2 + $0x118] sm:$0xff]
    %v970 = vld [vmem:[#allocation2 + $0x120] sm:$0xff]
    %v971 = vld [vmem:[#allocation2 + $0x128] sm:$0xff]
    %v972 = vld [vmem:[#allocation2 + $0x130] sm:$0xff]
    %v973 = vld [vmem:[#allocation2 + $0x138] sm:$0xff]
    %v974 = vld [vmem:[#allocation2 + $0x140] sm:$0xff]
    %v975 = vld [vmem:[#allocation2 + $0x148] sm:$0xff]
    %v976 = vld [vmem:[#allocation2 + $0x150] sm:$0xff]
    %v977 = vld [vmem:[#allocation2 + $0x158] sm:$0xff]
    %v978 = vld [vmem:[#allocation2 + $0x160] sm:$0xff]
    %v979 = vld [vmem:[#allocation2 + $0x168] sm:$0xff]
    %v980 = vld [vmem:[#allocation2 + $0x170] sm:$0xff]
    %v981 = vld [vmem:[#allocation2 + $0x178] sm:$0xff]
    %v982 = vld [vmem:[#allocation2 + $0x180] sm:$0xff]
    %v983 = vld [vmem:[#allocation2 + $0x188] sm:$0xff]
    %v984 = vld [vmem:[#allocation2 + $0x190] sm:$0xff]
    %v985 = vld [vmem:[#allocation2 + $0x198] sm:$0xff]
    %v986 = vld [vmem:[#allocation2 + $0x1a0] sm:$0xff]
    %v987 = vld [vmem:[#allocation2 + $0x1a8] sm:$0xff]
    %v988 = vld [vmem:[#allocation2 + $0x1b0] sm:$0xff]
    %v989 = vld [vmem:[#allocation2 + $0x1b8] sm:$0xff]
    %v990 = vld [vmem:[#allocation2 + $0x1c0] sm:$0xff]
    %v991 = vld [vmem:[#allocation2 + $0x1c8] sm:$0xff]
    %v992 = vld [vmem:[#allocation2 + $0x1d0] sm:$0xff]
    %v993 = vld [vmem:[#allocation2 + $0x1d8] sm:$0xff]
    %v994 = vld [vmem:[#allocation2 + $0x1e0] sm:$0xff]
    %v995 = vld [vmem:[#allocation2 + $0x1e8] sm:$0xff]
    %v996 = vld [vmem:[#allocation2 + $0x1f0] sm:$0xff]
    %v997 = vld [vmem:[#allocation2 + $0x1f8] sm:$0xff]
    %v998 = vld [vmem:[#allocation2 + $0x200] sm:$0xff]
    %v999 = vld [vmem:[#allocation2 + $0x208] sm:$0xff]
    %v1000 = vld [vmem:[#allocation9] sm:$0xff]
    %v1001 = vld [vmem:[#allocation9 + $0x8] sm:$0xff]
    %v1002 = vld [vmem:[#allocation9 + $0x10] sm:$0xff]
    %v1003 = vld [vmem:[#allocation9 + $0x18] sm:$0xff]
    %v1004 = vld [vmem:[#allocation9 + $0x20] sm:$0xff]
    %v1005 = vld [vmem:[#allocation9 + $0x28] sm:$0xff]
    %v1006 = vld [vmem:[#allocation9 + $0x30] sm:$0xff]
    %v1007 = vld [vmem:[#allocation9 + $0x38] sm:$0xff]
    %v1008 = vld [vmem:[#allocation9 + $0x40] sm:$0xff]
    %v1009 = vld [vmem:[#allocation9 + $0x48] sm:$0xff]
    %v1010 = vld [vmem:[#allocation9 + $0x50] sm:$0xff]
    %v1011 = vld [vmem:[#allocation9 + $0x58] sm:$0xff]
    %v1012 = vld [vmem:[#allocation9 + $0x60] sm:$0xff]
    %v1013 = vld [vmem:[#allocation9 + $0x68] sm:$0xff]
    %v1014 = vld [vmem:[#allocation9 + $0x70] sm:$0xff]
    %v1015 = vld [vmem:[#allocation9 + $0x78] sm:$0xff]
    %v1016 = vld [vmem:[#allocation9 + $0x80] sm:$0xff]
    %v1017 = vld [vmem:[#allocation9 + $0x88] sm:$0xff]
    %v1018 = vld [vmem:[#allocation9 + $0x90] sm:$0xff]
    %v1019 = vld [vmem:[#allocation9 + $0x98] sm:$0xff]
    %v1020 = vld [vmem:[#allocation9 + $0xa0] sm:$0xff]
    %v1021 = vld [vmem:[#allocation9 + $0xa8] sm:$0xff]
    %v1022 = vld [vmem:[#allocation9 + $0xb0] sm:$0xff]
    %v1023 = vld [vmem:[#allocation9 + $0xb8] sm:$0xff]
    %v1024 = vld [vmem:[#allocation9 + $0xc0] sm:$0xff]
    %v1025 = vld [vmem:[#allocation9 + $0xc8] sm:$0xff]
    %v1026 = vld [vmem:[#allocation9 + $0xd0] sm:$0xff]
    %v1027 = vld [vmem:[#allocation9 + $0xd8] sm:$0xff]
    %v1028 = vld [vmem:[#allocation9 + $0xe0] sm:$0xff]
    %v1029 = vld [vmem:[#allocation9 + $0xe8] sm:$0xff]
    %v1030 = vld [vmem:[#allocation9 + $0xf0] sm:$0xff]
    %v1031 = vld [vmem:[#allocation9 + $0xf8] sm:$0xff]
    %v1032 = vld [vmem:[#allocation9 + $0x100] sm:$0xff]
    %v1033 = vld [vmem:[#allocation9 + $0x108] sm:$0xff]
    %v1034 = vld [vmem:[#allocation9 + $0x110] sm:$0xff]
    %v1035 = vld [vmem:[#allocation9 + $0x118] sm:$0xff]
    %v1036 = vld [vmem:[#allocation9 + $0x120] sm:$0xff]
    %v1037 = vld [vmem:[#allocation9 + $0x128] sm:$0xff]
    %v1038 = vld [vmem:[#allocation9 + $0x130] sm:$0xff]
    %v1039 = vld [vmem:[#allocation9 + $0x138] sm:$0xff]
    %v1040 = vld [vmem:[#allocation9 + $0x140] sm:$0xff]
    %v1041 = vld [vmem:[#allocation9 + $0x148] sm:$0xff]
    %v1042 = vld [vmem:[#allocation9 + $0x150] sm:$0xff]
    %v1043 = vld [vmem:[#allocation9 + $0x158] sm:$0xff]
    %v1044 = vld [vmem:[#allocation9 + $0x160] sm:$0xff]
    %v1045 = vld [vmem:[#allocation9 + $0x168] sm:$0xff]
    %v1046 = vld [vmem:[#allocation9 + $0x170] sm:$0xff]
    %v1047 = vld [vmem:[#allocation9 + $0x178] sm:$0xff]
    %1048 = vmatprep.subr.mxu0 0.0
    %1049 = vmatpush1.msra.mxu0 %v1000
    %1050 = vmatprep.subr.mxu0 0.0
    %1051 = vmatpush1.msra.mxu0 %v1001
    %1052 = vmatprep.subr.mxu0 0.0
    %1053 = vmatpush1.msra.mxu0 %v1002
    %1054 = vmatprep.subr.mxu0 0.0
    %1055 = vmatpush1.msra.mxu0 %v1003
    %1056 = vmatprep.subr.mxu0 0.0
    %1057 = vmatpush1.msra.mxu0 %v1004
    %1058 = vmatprep.subr.mxu0 0.0
    %1059 = vmatpush1.msra.mxu0 %v1005
    %1060 = vmatprep.subr.mxu0 0.0
    %1061 = vmatpush1.msra.mxu0 %v1006
    %1062 = vmatprep.subr.mxu0 0.0
    %1063 = vmatpush1.msra.mxu0 %v1007
    %1064 = vmatprep.subr.mxu0 0.0
    %1065 = vmatpush1.msra.mxu0 %v1008
    %1066 = vmatprep.subr.mxu0 0.0
    %1067 = vmatpush1.msra.mxu0 %v1009
    %1068 = vmatprep.subr.mxu0 0.0
    %1069 = vmatpush1.msra.mxu0 %v1010
    %1070 = vmatprep.subr.mxu0 0.0
    %1071 = vmatpush1.msra.mxu0 %v1011
    %1072 = vmatprep.subr.mxu0 0.0
    %1073 = vmatpush1.msra.mxu0 %v1012
    %1074 = vmatprep.subr.mxu0 0.0
    %1075 = vmatpush1.msra.mxu0 %v1013
    %1076 = vmatprep.subr.mxu0 0.0
    %1077 = vmatpush1.msra.mxu0 %v1014
    %1078 = vmatprep.subr.mxu0 0.0
    %1079 = vmatpush1.msra.mxu0 %v1015
    %1080 = vmatprep.subr.mxu0 0.0
    %1081 = vmatpush1.msra.mxu0 %v1016
    %1082 = vmatprep.subr.mxu0 0.0
    %1083 = vmatpush1.msra.mxu0 %v1017
    %1084 = vmatprep.subr.mxu0 0.0
    %1085 = vmatpush1.msra.mxu0 %v1018
    %1086 = vmatprep.subr.mxu0 0.0
    %1087 = vmatpush1.msra.mxu0 %v1019
    %1088 = vmatprep.subr.mxu0 0.0
    %1089 = vmatpush1.msra.mxu0 %v1020
    %1090 = vmatprep.subr.mxu0 0.0
    %1091 = vmatpush1.msra.mxu0 %v1021
    %1092 = vmatprep.subr.mxu0 0.0
    %1093 = vmatpush1.msra.mxu0 %v1022
    %1094 = vmatprep.subr.mxu0 0.0
    %1095 = vmatpush1.msra.mxu0 %v1023
    %1096 = vmatprep.subr.mxu0 0.0
    %1097 = vmatpush1.msra.mxu0 %v1024
    %1098 = vmatprep.subr.mxu0 0.0
    %1099 = vmatpush1.msra.mxu0 %v1025
    %1100 = vmatprep.subr.mxu0 0.0
    %1101 = vmatpush1.msra.mxu0 %v1026
    %1102 = vmatprep.subr.mxu0 0.0
    %1103 = vmatpush1.msra.mxu0 %v1027
    %1104 = vmatprep.subr.mxu0 0.0
    %1105 = vmatpush1.msra.mxu0 %v1028
    %1106 = vmatprep.subr.mxu0 0.0
    %1107 = vmatpush1.msra.mxu0 %v1029
    %1108 = vmatprep.subr.mxu0 0.0
    %1109 = vmatpush1.msra.mxu0 %v1030
    %1110 = vmatprep.subr.mxu0 0.0
    %1111 = vmatpush1.msra.mxu0 %v1031
    %1112 = vmatprep.mubr.f32.mxu0 %v935
    %1113 = vmatmul.mubr.f32.gmra.mrb[0].mxu0 %v934
    %v1114 = vpop.f32.mrb[0].mxu0
    %v1115 = vadd.f32 0.0, %v1114
    %v1116 = vpop.f32.mrb[0].mxu0
    %1117 = vmatprep.mubr.f32.mxu0 %v938
    %1118 = vmatmul.mubr.f32.gmra.mrb[0].mxu0 %v937
    %v1119 = vpop.f32.mrb[0].mxu0
    %v1120 = vadd.f32 0.0, %v1119
    %v1121 = vpop.f32.mrb[0].mxu0
    %1122 = vmatprep.mubr.f32.mxu0 %v941
    %1123 = vmatmul.mubr.f32.gmra.mrb[0].mxu0 %v940
    %v1124 = vpop.f32.mrb[0].mxu0
    %v1125 = vadd.f32 0.0, %v1124
    %v1126 = vpop.f32.mrb[0].mxu0
    %1127 = vmatprep.mubr.f32.mxu0 %v944
    %1128 = vmatmul.mubr.f32.gmra.mrb[0].mxu0 %v943
    %v1129 = vpop.f32.mrb[0].mxu0
    %v1130 = vadd.f32 0.0, %v1129
    %v1131 = vpop.f32.mrb[0].mxu0
    %1132 = vmatprep.mubr.f32.mxu0 %v947
    %1133 = vmatmul.mubr.f32.gmra.mrb[0].mxu0 %v946
    %v1134 = vpop.f32.mrb[0].mxu0
    %v1135 = vadd.f32 0.0, %v1134
    %v1136 = vpop.f32.mrb[0].mxu0
    %1137 = vmatprep.mubr.f32.mxu0 %v950
    %1138 = vmatmul.mubr.f32.gmra.mrb[0].mxu0 %v949
    %v1139 = vpop.f32.mrb[0].mxu0
    %v1140 = vadd.f32 0.0, %v1139
    %v1141 = vpop.f32.mrb[0].mxu0
    %1142 = vmatprep.mubr.f32.mxu0 %v953
    %1143 = vmatmul.mubr.f32.gmra.mrb[0].mxu0 %v952
    %v1144 = vpop.f32.mrb[0].mxu0
    %v1145 = vadd.f32 0.0, %v1144
    %v1146 = vpop.f32.mrb[0].mxu0
    %1147 = vmatprep.mubr.f32.mxu0 %v956
    %1148 = vmatmul.mubr.f32.gmra.mrb[0].mxu0 %v955
    %v1149 = vpop.f32.mrb[0].mxu0
    %v1150 = vadd.f32 0.0, %v1149
    %v1151 = vpop.f32.mrb[0].mxu0
    %1152 = vmatprep.mubr.f32.mxu0 %v959
    %1153 = vmatmul.mubr.f32.gmra.mrb[0].mxu0 %v958
    %v1154 = vpop.f32.mrb[0].mxu0
    %v1155 = vadd.f32 0.0, %v1154
    %v1156 = vpop.f32.mrb[0].mxu0
    %1157 = vmatprep.mubr.f32.mxu0 %v962
    %1158 = vmatmul.mubr.f32.gmra.mrb[0].mxu0 %v961
    %v1159 = vpop.f32.mrb[0].mxu0
    %v1160 = vadd.f32 0.0, %v1159
    %v1161 = vpop.f32.mrb[0].mxu0
    %1162 = vmatprep.mubr.f32.mxu0 %v965
    %1163 = vmatmul.mubr.f32.gmra.mrb[0].mxu0 %v964
    %v1164 = vpop.f32.mrb[0].mxu0
    %v1165 = vadd.f32 0.0, %v1164
    %v1166 = vpop.f32.mrb[0].mxu0
    %1167 = vmatprep.mubr.f32.mxu0 %v968
    %1168 = vmatmul.mubr.f32.gmra.mrb[0].mxu0 %v967
    %v1169 = vpop.f32.mrb[0].mxu0
    %v1170 = vadd.f32 0.0, %v1169
    %v1171 = vpop.f32.mrb[0].mxu0
    %1172 = vmatprep.mubr.f32.mxu0 %v971
    %1173 = vmatmul.mubr.f32.gmra.mrb[0].mxu0 %v970
    %v1174 = vpop.f32.mrb[0].mxu0
    %v1175 = vadd.f32 0.0, %v1174
    %v1176 = vpop.f32.mrb[0].mxu0
    %1177 = vmatprep.mubr.f32.mxu0 %v974
    %1178 = vmatmul.mubr.f32.gmra.mrb[0].mxu0 %v973
    %v1179 = vpop.f32.mrb[0].mxu0
    %v1180 = vadd.f32 0.0, %v1179
    %v1181 = vpop.f32.mrb[0].mxu0
    %1182 = vmatprep.mubr.f32.mxu0 %v977
    %1183 = vmatmul.mubr.f32.gmra.mrb[0].mxu0 %v976
    %v1184 = vpop.f32.mrb[0].mxu0
    %v1185 = vadd.f32 0.0, %v1184
    %v1186 = vpop.f32.mrb[0].mxu0
    %1187 = vmatprep.mubr.f32.mxu0 %v980
    %1188 = vmatmul.mubr.f32.gmra.mrb[0].mxu0 %v979
    %v1189 = vpop.f32.mrb[0].mxu0
    %v1190 = vadd.f32 0.0, %v1189
    %v1191 = vpop.f32.mrb[0].mxu0
    %1192 = vmatprep.mubr.f32.mxu0 %v983
    %1193 = vmatmul.mubr.f32.gmra.mrb[0].mxu0 %v982
    %v1194 = vpop.f32.mrb[0].mxu0
    %v1195 = vadd.f32 0.0, %v1194
    %v1196 = vpop.f32.mrb[0].mxu0
    %1197 = vmatprep.mubr.f32.mxu0 %v986
    %1198 = vmatmul.mubr.f32.gmra.mrb[0].mxu0 %v985
    %v1199 = vpop.f32.mrb[0].mxu0
    %v1200 = vadd.f32 0.0, %v1199
    %v1201 = vpop.f32.mrb[0].mxu0
    %1202 = vmatprep.mubr.f32.mxu0 %v989
    %1203 = vmatmul.mubr.f32.gmra.mrb[0].mxu0 %v988
    %v1204 = vpop.f32.mrb[0].mxu0
    %v1205 = vadd.f32 0.0, %v1204
    %v1206 = vpop.f32.mrb[0].mxu0
    %1207 = vmatprep.mubr.f32.mxu0 %v992
    %1208 = vmatmul.mubr.f32.gmra.mrb[0].mxu0 %v991
    %v1209 = vpop.f32.mrb[0].mxu0
    %v1210 = vadd.f32 0.0, %v1209
    %v1211 = vpop.f32.mrb[0].mxu0
    %1212 = vmatprep.mubr.f32.mxu0 %v995
    %1213 = vmatmul.mubr.f32.gmra.mrb[0].mxu0 %v994
    %v1214 = vpop.f32.mrb[0].mxu0
    %v1215 = vadd.f32 0.0, %v1214
    %v1216 = vpop.f32.mrb[0].mxu0
    %1217 = vmatprep.mubr.f32.mxu0 %v998
    %1218 = vmatmul.mubr.f32.gmra.mrb[0].mxu0 %v997
    %v1219 = vpop.f32.mrb[0].mxu0
    %v1220 = vadd.f32 0.0, %v1219
    %v1221 = vpop.f32.mrb[0].mxu0
    %1222 = vdwg.mxu0
    %1223 = vmatprep.subr.mxu0 0.0
    %1224 = vmatpush1.msra.mxu0 %v1032
    %1225 = vmatprep.subr.mxu0 0.0
    %1226 = vmatpush1.msra.mxu0 %v1033
    %1227 = vmatprep.subr.mxu0 0.0
    %1228 = vmatpush1.msra.mxu0 %v1034
    %1229 = vmatprep.subr.mxu0 0.0
    %1230 = vmatpush1.msra.mxu0 %v1035
    %1231 = vmatprep.subr.mxu0 0.0
    %1232 = vmatpush1.msra.mxu0 %v1036
    %1233 = vmatprep.subr.mxu0 0.0
    %1234 = vmatpush1.msra.mxu0 %v1037
    %1235 = vmatprep.subr.mxu0 0.0
    %1236 = vmatpush1.msra.mxu0 %v1038
    %1237 = vmatprep.subr.mxu0 0.0
    %1238 = vmatpush1.msra.mxu0 %v1039
    %1239 = vmatprep.subr.mxu0 0.0
    %1240 = vmatpush1.msra.mxu0 %v1040
    %1241 = vmatprep.subr.mxu0 0.0
    %1242 = vmatpush1.msra.mxu0 %v1041
    %1243 = vmatprep.subr.mxu0 0.0
    %1244 = vmatpush1.msra.mxu0 %v1042
    %1245 = vmatprep.subr.mxu0 0.0
    %1246 = vmatpush1.msra.mxu0 %v1043
    %1247 = vmatprep.subr.mxu0 0.0
    %1248 = vmatpush1.msra.mxu0 %v1044
    %1249 = vmatprep.subr.mxu0 0.0
    %1250 = vmatpush1.msra.mxu0 %v1045
    %1251 = vmatprep.subr.mxu0 0.0
    %1252 = vmatpush1.msra.mxu0 %v1046
    %1253 = vmatprep.subr.mxu0 0.0
    %1254 = vmatpush1.msra.mxu0 %v1047
    %1255 = vmatprep.subr.mxu0 0.0
    %1256 = vmatpush1.msra.mxu0 0.0
    %1257 = vmatprep.subr.mxu0 0.0
    %1258 = vmatpush1.msra.mxu0 0.0
    %1259 = vmatprep.subr.mxu0 0.0
    %1260 = vmatpush1.msra.mxu0 0.0
    %1261 = vmatprep.subr.mxu0 0.0
    %1262 = vmatpush1.msra.mxu0 0.0
    %1263 = vmatprep.subr.mxu0 0.0
    %1264 = vmatpush1.msra.mxu0 0.0
    %1265 = vmatprep.subr.mxu0 0.0
    %1266 = vmatpush1.msra.mxu0 0.0
    %1267 = vmatprep.subr.mxu0 0.0
    %1268 = vmatpush1.msra.mxu0 0.0
    %1269 = vmatprep.subr.mxu0 0.0
    %1270 = vmatpush1.msra.mxu0 0.0
    %1271 = vmatprep.subr.mxu0 0.0
    %1272 = vmatpush1.msra.mxu0 0.0
    %1273 = vmatprep.subr.mxu0 0.0
    %1274 = vmatpush1.msra.mxu0 0.0
    %1275 = vmatprep.subr.mxu0 0.0
    %1276 = vmatpush1.msra.mxu0 0.0
    %1277 = vmatprep.subr.mxu0 0.0
    %1278 = vmatpush1.msra.mxu0 0.0
    %1279 = vmatprep.subr.mxu0 0.0
    %1280 = vmatpush1.msra.mxu0 0.0
    %1281 = vmatprep.subr.mxu0 0.0
    %1282 = vmatpush1.msra.mxu0 0.0
    %1283 = vmatprep.subr.mxu0 0.0
    %1284 = vmatpush1.msra.mxu0 0.0
    %1285 = vmatprep.subr.mxu0 0.0
    %1286 = vmatpush1.msra.mxu0 0.0
    %1287 = vmatprep.mubr.f32.mxu0 0.0
    %1288 = vmatmul.mubr.f32.gmra.mrb[0].mxu0 %v936
    %v1289 = vpop.f32.mrb[0].mxu0
    %v1290 = vadd.f32 %v1115, %v1289
    %v1291 = vpop.f32.mrb[0].mxu0
    %1292 = vmatprep.mubr.f32.mxu0 0.0
    %1293 = vmatmul.mubr.f32.gmra.mrb[0].mxu0 %v939
    %v1294 = vpop.f32.mrb[0].mxu0
    %v1295 = vadd.f32 %v1120, %v1294
    %v1296 = vpop.f32.mrb[0].mxu0
    %1297 = vmatprep.mubr.f32.mxu0 0.0
    %1298 = vmatmul.mubr.f32.gmra.mrb[0].mxu0 %v942
    %v1299 = vpop.f32.mrb[0].mxu0
    %v1300 = vadd.f32 %v1125, %v1299
    %v1301 = vpop.f32.mrb[0].mxu0
    %1302 = vmatprep.mubr.f32.mxu0 0.0
    %1303 = vmatmul.mubr.f32.gmra.mrb[0].mxu0 %v945
    %v1304 = vpop.f32.mrb[0].mxu0
    %v1305 = vadd.f32 %v1130, %v1304
    %v1306 = vpop.f32.mrb[0].mxu0
    %1307 = vmatprep.mubr.f32.mxu0 0.0
    %1308 = vmatmul.mubr.f32.gmra.mrb[0].mxu0 %v948
    %v1309 = vpop.f32.mrb[0].mxu0
    %v1310 = vadd.f32 %v1135, %v1309
    %v1311 = vpop.f32.mrb[0].mxu0
    %1312 = vmatprep.mubr.f32.mxu0 0.0
    %1313 = vmatmul.mubr.f32.gmra.mrb[0].mxu0 %v951
    %v1314 = vpop.f32.mrb[0].mxu0
    %v1315 = vadd.f32 %v1140, %v1314
    %v1316 = vpop.f32.mrb[0].mxu0
    %1317 = vmatprep.mubr.f32.mxu0 0.0
    %1318 = vmatmul.mubr.f32.gmra.mrb[0].mxu0 %v954
    %v1319 = vpop.f32.mrb[0].mxu0
    %v1320 = vadd.f32 %v1145, %v1319
    %v1321 = vpop.f32.mrb[0].mxu0
    %1322 = vmatprep.mubr.f32.mxu0 0.0
    %1323 = vmatmul.mubr.f32.gmra.mrb[0].mxu0 %v957
    %v1324 = vpop.f32.mrb[0].mxu0
    %v1325 = vadd.f32 %v1150, %v1324
    %v1326 = vpop.f32.mrb[0].mxu0
    %1327 = vmatprep.mubr.f32.mxu0 0.0
    %1328 = vmatmul.mubr.f32.gmra.mrb[0].mxu0 %v960
    %v1329 = vpop.f32.mrb[0].mxu0
    %v1330 = vadd.f32 %v1155, %v1329
    %v1331 = vpop.f32.mrb[0].mxu0
    %1332 = vmatprep.mubr.f32.mxu0 0.0
    %1333 = vmatmul.mubr.f32.gmra.mrb[0].mxu0 %v963
    %v1334 = vpop.f32.mrb[0].mxu0
    %v1335 = vadd.f32 %v1160, %v1334
    %v1336 = vpop.f32.mrb[0].mxu0
    %1337 = vmatprep.mubr.f32.mxu0 0.0
    %1338 = vmatmul.mubr.f32.gmra.mrb[0].mxu0 %v966
    %v1339 = vpop.f32.mrb[0].mxu0
    %v1340 = vadd.f32 %v1165, %v1339
    %v1341 = vpop.f32.mrb[0].mxu0
    %1342 = vmatprep.mubr.f32.mxu0 0.0
    %1343 = vmatmul.mubr.f32.gmra.mrb[0].mxu0 %v969
    %v1344 = vpop.f32.mrb[0].mxu0
    %v1345 = vadd.f32 %v1170, %v1344
    %v1346 = vpop.f32.mrb[0].mxu0
    %1347 = vmatprep.mubr.f32.mxu0 0.0
    %1348 = vmatmul.mubr.f32.gmra.mrb[0].mxu0 %v972
    %v1349 = vpop.f32.mrb[0].mxu0
    %v1350 = vadd.f32 %v1175, %v1349
    %v1351 = vpop.f32.mrb[0].mxu0
    %1352 = vmatprep.mubr.f32.mxu0 0.0
    %1353 = vmatmul.mubr.f32.gmra.mrb[0].mxu0 %v975
    %v1354 = vpop.f32.mrb[0].mxu0
    %v1355 = vadd.f32 %v1180, %v1354
    %v1356 = vpop.f32.mrb[0].mxu0
    %1357 = vmatprep.mubr.f32.mxu0 0.0
    %1358 = vmatmul.mubr.f32.gmra.mrb[0].mxu0 %v978
    %v1359 = vpop.f32.mrb[0].mxu0
    %v1360 = vadd.f32 %v1185, %v1359
    %v1361 = vpop.f32.mrb[0].mxu0
    %1362 = vmatprep.mubr.f32.mxu0 0.0
    %1363 = vmatmul.mubr.f32.gmra.mrb[0].mxu0 %v981
    %v1364 = vpop.f32.mrb[0].mxu0
    %v1365 = vadd.f32 %v1190, %v1364
    %v1366 = vpop.f32.mrb[0].mxu0
    %1367 = vmatprep.mubr.f32.mxu0 0.0
    %1368 = vmatmul.mubr.f32.gmra.mrb[0].mxu0 %v984
    %v1369 = vpop.f32.mrb[0].mxu0
    %v1370 = vadd.f32 %v1195, %v1369
    %v1371 = vpop.f32.mrb[0].mxu0
    %1372 = vmatprep.mubr.f32.mxu0 0.0
    %1373 = vmatmul.mubr.f32.gmra.mrb[0].mxu0 %v987
    %v1374 = vpop.f32.mrb[0].mxu0
    %v1375 = vadd.f32 %v1200, %v1374
    %v1376 = vpop.f32.mrb[0].mxu0
    %1377 = vmatprep.mubr.f32.mxu0 0.0
    %1378 = vmatmul.mubr.f32.gmra.mrb[0].mxu0 %v990
    %v1379 = vpop.f32.mrb[0].mxu0
    %v1380 = vadd.f32 %v1205, %v1379
    %v1381 = vpop.f32.mrb[0].mxu0
    %1382 = vmatprep.mubr.f32.mxu0 0.0
    %1383 = vmatmul.mubr.f32.gmra.mrb[0].mxu0 %v993
    %v1384 = vpop.f32.mrb[0].mxu0
    %v1385 = vadd.f32 %v1210, %v1384
    %v1386 = vpop.f32.mrb[0].mxu0
    %1387 = vmatprep.mubr.f32.mxu0 0.0
    %1388 = vmatmul.mubr.f32.gmra.mrb[0].mxu0 %v996
    %v1389 = vpop.f32.mrb[0].mxu0
    %v1390 = vadd.f32 %v1215, %v1389
    %v1391 = vpop.f32.mrb[0].mxu0
    %1392 = vmatprep.mubr.f32.mxu0 0.0
    %1393 = vmatmul.mubr.f32.gmra.mrb[0].mxu0 %v999
    %v1394 = vpop.f32.mrb[0].mxu0
    %v1395 = vadd.f32 %v1220, %v1394
    %v1396 = vpop.f32.mrb[0].mxu0
    %1397 = vdwg.mxu0
    %v1398 = vld [vmem:[#allocation10] sm:$0x1]
    %v1400 = vlaneseq
    %v1401 = vshrl.u32 %v1400, 7
    %v1402 = vsub.s32 0, %v1401
    %v1403 = vrot.slane %v1398, %v1402
    %v1405 = vmul.f32 %v1290, %v1403
    %v1406 = vmul.f32 %v1295, %v1403
    %v1407 = vmul.f32 %v1300, %v1403
    %v1408 = vmul.f32 %v1305, %v1403
    %v1409 = vmul.f32 %v1310, %v1403
    %v1410 = vmul.f32 %v1315, %v1403
    %v1411 = vmul.f32 %v1320, %v1403
    %v1412 = vmul.f32 %v1325, %v1403
    %v1413 = vmul.f32 %v1330, %v1403
    %v1414 = vmul.f32 %v1335, %v1403
    %v1415 = vmul.f32 %v1340, %v1403
    %v1416 = vmul.f32 %v1345, %v1403
    %v1417 = vmul.f32 %v1350, %v1403
    %v1418 = vmul.f32 %v1355, %v1403
    %v1419 = vmul.f32 %v1360, %v1403
    %v1420 = vmul.f32 %v1365, %v1403
    %v1421 = vmul.f32 %v1370, %v1403
    %v1422 = vmul.f32 %v1375, %v1403
    %v1423 = vmul.f32 %v1380, %v1403
    %v1424 = vmul.f32 %v1385, %v1403
    %v1425 = vmul.f32 %v1390, %v1403
    %v1426 = vmul.f32 %v1395, %v1403
    %s1427 = scalar_lea.vmem [#allocation10], 1
    %v1428 = vld [vmem:[%s1427] sm:$0x1]
    %v1430 = vlaneseq
    %v1431 = vshrl.u32 %v1430, 7
    %v1432 = vsub.s32 0, %v1431
    %v1433 = vrot.slane %v1428, %v1432
    %v1435 = vadd.f32 %v1405, %v1433
    %v1436 = vadd.f32 %v1406, %v1433
    %v1437 = vadd.f32 %v1407, %v1433
    %v1438 = vadd.f32 %v1408, %v1433
    %v1439 = vadd.f32 %v1409, %v1433
    %v1440 = vadd.f32 %v1410, %v1433
    %v1441 = vadd.f32 %v1411, %v1433
    %v1442 = vadd.f32 %v1412, %v1433
    %v1443 = vadd.f32 %v1413, %v1433
    %v1444 = vadd.f32 %v1414, %v1433
    %v1445 = vadd.f32 %v1415, %v1433
    %v1446 = vadd.f32 %v1416, %v1433
    %v1447 = vadd.f32 %v1417, %v1433
    %v1448 = vadd.f32 %v1418, %v1433
    %v1449 = vadd.f32 %v1419, %v1433
    %v1450 = vadd.f32 %v1420, %v1433
    %v1451 = vadd.f32 %v1421, %v1433
    %v1452 = vadd.f32 %v1422, %v1433
    %v1453 = vadd.f32 %v1423, %v1433
    %v1454 = vadd.f32 %v1424, %v1433
    %v1455 = vadd.f32 %v1425, %v1433
    %v1456 = vadd.f32 %v1426, %v1433
    %v1457 = vmax.f32 %v1435, 0.0
    %v1458 = vmax.f32 %v1436, 0.0
    %v1459 = vmax.f32 %v1437, 0.0
    %v1460 = vmax.f32 %v1438, 0.0
    %v1461 = vmax.f32 %v1439, 0.0
    %v1462 = vmax.f32 %v1440, 0.0
    %v1463 = vmax.f32 %v1441, 0.0
    %v1464 = vmax.f32 %v1442, 0.0
    %v1465 = vmax.f32 %v1443, 0.0
    %v1466 = vmax.f32 %v1444, 0.0
    %v1467 = vmax.f32 %v1445, 0.0
    %v1468 = vmax.f32 %v1446, 0.0
    %v1469 = vmax.f32 %v1447, 0.0
    %v1470 = vmax.f32 %v1448, 0.0
    %v1471 = vmax.f32 %v1449, 0.0
    %v1472 = vmax.f32 %v1450, 0.0
    %v1473 = vmax.f32 %v1451, 0.0
    %v1474 = vmax.f32 %v1452, 0.0
    %v1475 = vmax.f32 %v1453, 0.0
    %v1476 = vmax.f32 %v1454, 0.0
    %v1477 = vmax.f32 %v1455, 0.0
    %v1478 = vmax.f32 %v1456, 0.0
    %1479 = vst [vmem:[#allocation3] sm:$0xff] %v1457
    %1480 = vst [vmem:[#allocation3 + $0x8] sm:$0xff] %v1458
    %1481 = vst [vmem:[#allocation3 + $0x10] sm:$0xff] %v1459
    %1482 = vst [vmem:[#allocation3 + $0x18] sm:$0xff] %v1460
    %1483 = vst [vmem:[#allocation3 + $0x20] sm:$0xff] %v1461
    %1484 = vst [vmem:[#allocation3 + $0x28] sm:$0xff] %v1462
    %1485 = vst [vmem:[#allocation3 + $0x30] sm:$0xff] %v1463
    %1486 = vst [vmem:[#allocation3 + $0x38] sm:$0xff] %v1464
    %1487 = vst [vmem:[#allocation3 + $0x40] sm:$0xff] %v1465
    %1488 = vst [vmem:[#allocation3 + $0x48] sm:$0xff] %v1466
    %1489 = vst [vmem:[#allocation3 + $0x50] sm:$0xff] %v1467
    %1490 = vst [vmem:[#allocation3 + $0x58] sm:$0xff] %v1468
    %1491 = vst [vmem:[#allocation3 + $0x60] sm:$0xff] %v1469
    %1492 = vst [vmem:[#allocation3 + $0x68] sm:$0xff] %v1470
    %1493 = vst [vmem:[#allocation3 + $0x70] sm:$0xff] %v1471
    %1494 = vst [vmem:[#allocation3 + $0x78] sm:$0xff] %v1472
    %1495 = vst [vmem:[#allocation3 + $0x80] sm:$0xff] %v1473
    %1496 = vst [vmem:[#allocation3 + $0x88] sm:$0xff] %v1474
    %1497 = vst [vmem:[#allocation3 + $0x90] sm:$0xff] %v1475
    %1498 = vst [vmem:[#allocation3 + $0x98] sm:$0xff] %v1476
    %1499 = vst [vmem:[#allocation3 + $0xa0] sm:$0xff] %v1477
    %1500 = vst [vmem:[#allocation3 + $0xa8] sm:$0xff] %v1478
    %v1501 = vld [vmem:[#allocation3] sm:$0xff]
    %v1502 = vld [vmem:[#allocation3 + $0x8] sm:$0xff]
    %v1503 = vld [vmem:[#allocation3 + $0x10] sm:$0xff]
    %v1504 = vld [vmem:[#allocation3 + $0x18] sm:$0xff]
    %v1505 = vld [vmem:[#allocation3 + $0x20] sm:$0xff]
    %v1506 = vld [vmem:[#allocation3 + $0x28] sm:$0xff]
    %v1507 = vld [vmem:[#allocation3 + $0x30] sm:$0xff]
    %v1508 = vld [vmem:[#allocation3 + $0x38] sm:$0xff]
    %v1509 = vld [vmem:[#allocation3 + $0x40] sm:$0xff]
    %v1510 = vld [vmem:[#allocation3 + $0x48] sm:$0xff]
    %1511 = vst [vmem:[#allocation4] sm:$0xff] %v1501
    %1512 = vst [vmem:[#allocation4 + $0x18] sm:$0xff] %v1502
    %1513 = vst [vmem:[#allocation4 + $0x30] sm:$0xff] %v1503
    %1514 = vst [vmem:[#allocation4 + $0x48] sm:$0xff] %v1504
    %1515 = vst [vmem:[#allocation4 + $0x60] sm:$0xff] %v1505
    %1516 = vst [vmem:[#allocation4 + $0x78] sm:$0xff] %v1506
    %1517 = vst [vmem:[#allocation4 + $0x90] sm:$0xff] %v1507
    %1518 = vst [vmem:[#allocation4 + $0xa8] sm:$0xff] %v1508
    %1519 = vst [vmem:[#allocation4 + $0xc0] sm:$0xff] %v1509
    %1520 = vst [vmem:[#allocation4 + $0xd8] sm:$0xff] %v1510
    %v1521 = vld [vmem:[#allocation3 + $0x1] sm:$0xff]
    %v1522 = vld [vmem:[#allocation3 + $0x9] sm:$0xff]
    %v1523 = vld [vmem:[#allocation3 + $0x11] sm:$0xff]
    %v1524 = vld [vmem:[#allocation3 + $0x19] sm:$0xff]
    %v1525 = vld [vmem:[#allocation3 + $0x21] sm:$0xff]
    %v1526 = vld [vmem:[#allocation3 + $0x29] sm:$0xff]
    %v1527 = vld [vmem:[#allocation3 + $0x31] sm:$0xff]
    %v1528 = vld [vmem:[#allocation3 + $0x39] sm:$0xff]
    %v1529 = vld [vmem:[#allocation3 + $0x41] sm:$0xff]
    %v1530 = vld [vmem:[#allocation3 + $0x49] sm:$0xff]
    %1531 = vst [vmem:[#allocation4 + $0x8] sm:$0xff] %v1521
    %1532 = vst [vmem:[#allocation4 + $0x20] sm:$0xff] %v1522
    %1533 = vst [vmem:[#allocation4 + $0x38] sm:$0xff] %v1523
    %1534 = vst [vmem:[#allocation4 + $0x50] sm:$0xff] %v1524
    %1535 = vst [vmem:[#allocation4 + $0x68] sm:$0xff] %v1525
    %1536 = vst [vmem:[#allocation4 + $0x80] sm:$0xff] %v1526
    %1537 = vst [vmem:[#allocation4 + $0x98] sm:$0xff] %v1527
    %1538 = vst [vmem:[#allocation4 + $0xb0] sm:$0xff] %v1528
    %1539 = vst [vmem:[#allocation4 + $0xc8] sm:$0xff] %v1529
    %1540 = vst [vmem:[#allocation4 + $0xe0] sm:$0xff] %v1530
    %v1541 = vld [vmem:[#allocation3 + $0x2] sm:$0xff]
    %v1542 = vld [vmem:[#allocation3 + $0xa] sm:$0xff]
    %v1543 = vld [vmem:[#allocation3 + $0x12] sm:$0xff]
    %v1544 = vld [vmem:[#allocation3 + $0x1a] sm:$0xff]
    %v1545 = vld [vmem:[#allocation3 + $0x22] sm:$0xff]
    %v1546 = vld [vmem:[#allocation3 + $0x2a] sm:$0xff]
    %v1547 = vld [vmem:[#allocation3 + $0x32] sm:$0xff]
    %v1548 = vld [vmem:[#allocation3 + $0x3a] sm:$0xff]
    %v1549 = vld [vmem:[#allocation3 + $0x42] sm:$0xff]
    %v1550 = vld [vmem:[#allocation3 + $0x4a] sm:$0xff]
    %1551 = vst [vmem:[#allocation4 + $0x10] sm:$0xff] %v1541
    %1552 = vst [vmem:[#allocation4 + $0x28] sm:$0xff] %v1542
    %1553 = vst [vmem:[#allocation4 + $0x40] sm:$0xff] %v1543
    %1554 = vst [vmem:[#allocation4 + $0x58] sm:$0xff] %v1544
    %1555 = vst [vmem:[#allocation4 + $0x70] sm:$0xff] %v1545
    %1556 = vst [vmem:[#allocation4 + $0x88] sm:$0xff] %v1546
    %1557 = vst [vmem:[#allocation4 + $0xa0] sm:$0xff] %v1547
    %1558 = vst [vmem:[#allocation4 + $0xb8] sm:$0xff] %v1548
    %1559 = vst [vmem:[#allocation4 + $0xd0] sm:$0xff] %v1549
    %1560 = vst [vmem:[#allocation4 + $0xe8] sm:$0xff] %v1550
    %v1561 = vld [vmem:[#allocation3 + $0x58] sm:$0xff]
    %v1562 = vld [vmem:[#allocation3 + $0x60] sm:$0xff]
    %v1563 = vld [vmem:[#allocation3 + $0x68] sm:$0xff]
    %v1564 = vld [vmem:[#allocation3 + $0x70] sm:$0xff]
    %v1565 = vld [vmem:[#allocation3 + $0x78] sm:$0xff]
    %v1566 = vld [vmem:[#allocation3 + $0x80] sm:$0xff]
    %v1567 = vld [vmem:[#allocation3 + $0x88] sm:$0xff]
    %v1568 = vld [vmem:[#allocation3 + $0x90] sm:$0xff]
    %v1569 = vld [vmem:[#allocation3 + $0x98] sm:$0xff]
    %v1570 = vld [vmem:[#allocation3 + $0xa0] sm:$0xff]
    %1571 = vst [vmem:[#allocation4 + $0xf0] sm:$0xff] %v1561
    %1572 = vst [vmem:[#allocation4 + $0x108] sm:$0xff] %v1562
    %1573 = vst [vmem:[#allocation4 + $0x120] sm:$0xff] %v1563
    %1574 = vst [vmem:[#allocation4 + $0x138] sm:$0xff] %v1564
    %1575 = vst [vmem:[#allocation4 + $0x150] sm:$0xff] %v1565
    %1576 = vst [vmem:[#allocation4 + $0x168] sm:$0xff] %v1566
    %1577 = vst [vmem:[#allocation4 + $0x180] sm:$0xff] %v1567
    %1578 = vst [vmem:[#allocation4 + $0x198] sm:$0xff] %v1568
    %1579 = vst [vmem:[#allocation4 + $0x1b0] sm:$0xff] %v1569
    %1580 = vst [vmem:[#allocation4 + $0x1c8] sm:$0xff] %v1570
    %v1581 = vld [vmem:[#allocation3 + $0x59] sm:$0xff]
    %v1582 = vld [vmem:[#allocation3 + $0x61] sm:$0xff]
    %v1583 = vld [vmem:[#allocation3 + $0x69] sm:$0xff]
    %v1584 = vld [vmem:[#allocation3 + $0x71] sm:$0xff]
    %v1585 = vld [vmem:[#allocation3 + $0x79] sm:$0xff]
    %v1586 = vld [vmem:[#allocation3 + $0x81] sm:$0xff]
    %v1587 = vld [vmem:[#allocation3 + $0x89] sm:$0xff]
    %v1588 = vld [vmem:[#allocation3 + $0x91] sm:$0xff]
    %v1589 = vld [vmem:[#allocation3 + $0x99] sm:$0xff]
    %v1590 = vld [vmem:[#allocation3 + $0xa1] sm:$0xff]
    %1591 = vst [vmem:[#allocation4 + $0xf8] sm:$0xff] %v1581
    %1592 = vst [vmem:[#allocation4 + $0x110] sm:$0xff] %v1582
    %1593 = vst [vmem:[#allocation4 + $0x128] sm:$0xff] %v1583
    %1594 = vst [vmem:[#allocation4 + $0x140] sm:$0xff] %v1584
    %1595 = vst [vmem:[#allocation4 + $0x158] sm:$0xff] %v1585
    %1596 = vst [vmem:[#allocation4 + $0x170] sm:$0xff] %v1586
    %1597 = vst [vmem:[#allocation4 + $0x188] sm:$0xff] %v1587
    %1598 = vst [vmem:[#allocation4 + $0x1a0] sm:$0xff] %v1588
    %1599 = vst [vmem:[#allocation4 + $0x1b8] sm:$0xff] %v1589
    %1600 = vst [vmem:[#allocation4 + $0x1d0] sm:$0xff] %v1590
    %v1601 = vld [vmem:[#allocation3 + $0x5a] sm:$0xff]
    %v1602 = vld [vmem:[#allocation3 + $0x62] sm:$0xff]
    %v1603 = vld [vmem:[#allocation3 + $0x6a] sm:$0xff]
    %v1604 = vld [vmem:[#allocation3 + $0x72] sm:$0xff]
    %v1605 = vld [vmem:[#allocation3 + $0x7a] sm:$0xff]
    %v1606 = vld [vmem:[#allocation3 + $0x82] sm:$0xff]
    %v1607 = vld [vmem:[#allocation3 + $0x8a] sm:$0xff]
    %v1608 = vld [vmem:[#allocation3 + $0x92] sm:$0xff]
    %v1609 = vld [vmem:[#allocation3 + $0x9a] sm:$0xff]
    %v1610 = vld [vmem:[#allocation3 + $0xa2] sm:$0xff]
    %1611 = vst [vmem:[#allocation4 + $0x100] sm:$0xff] %v1601
    %1612 = vst [vmem:[#allocation4 + $0x118] sm:$0xff] %v1602
    %1613 = vst [vmem:[#allocation4 + $0x130] sm:$0xff] %v1603
    %1614 = vst [vmem:[#allocation4 + $0x148] sm:$0xff] %v1604
    %1615 = vst [vmem:[#allocation4 + $0x160] sm:$0xff] %v1605
    %1616 = vst [vmem:[#allocation4 + $0x178] sm:$0xff] %v1606
    %1617 = vst [vmem:[#allocation4 + $0x190] sm:$0xff] %v1607
    %1618 = vst [vmem:[#allocation4 + $0x1a8] sm:$0xff] %v1608
    %1619 = vst [vmem:[#allocation4 + $0x1c0] sm:$0xff] %v1609
    %1620 = vst [vmem:[#allocation4 + $0x1d8] sm:$0xff] %v1610
    %v1621 = vld [vmem:[#allocation4] sm:$0xff]
    %v1622 = vld [vmem:[#allocation4 + $0x8] sm:$0xff]
    %v1623 = vld [vmem:[#allocation4 + $0x10] sm:$0xff]
    %v1624 = vld [vmem:[#allocation4 + $0x18] sm:$0xff]
    %v1625 = vld [vmem:[#allocation4 + $0x20] sm:$0xff]
    %v1626 = vld [vmem:[#allocation4 + $0x28] sm:$0xff]
    %v1627 = vld [vmem:[#allocation4 + $0x30] sm:$0xff]
    %v1628 = vld [vmem:[#allocation4 + $0x38] sm:$0xff]
    %v1629 = vld [vmem:[#allocation4 + $0x40] sm:$0xff]
    %v1630 = vld [vmem:[#allocation4 + $0x48] sm:$0xff]
    %v1631 = vld [vmem:[#allocation4 + $0x50] sm:$0xff]
    %v1632 = vld [vmem:[#allocation4 + $0x58] sm:$0xff]
    %v1633 = vld [vmem:[#allocation4 + $0x60] sm:$0xff]
    %v1634 = vld [vmem:[#allocation4 + $0x68] sm:$0xff]
    %v1635 = vld [vmem:[#allocation4 + $0x70] sm:$0xff]
    %v1636 = vld [vmem:[#allocation4 + $0x78] sm:$0xff]
    %v1637 = vld [vmem:[#allocation4 + $0x80] sm:$0xff]
    %v1638 = vld [vmem:[#allocation4 + $0x88] sm:$0xff]
    %v1639 = vld [vmem:[#allocation4 + $0x90] sm:$0xff]
    %v1640 = vld [vmem:[#allocation4 + $0x98] sm:$0xff]
    %v1641 = vld [vmem:[#allocation4 + $0xa0] sm:$0xff]
    %v1642 = vld [vmem:[#allocation4 + $0xa8] sm:$0xff]
    %v1643 = vld [vmem:[#allocation4 + $0xb0] sm:$0xff]
    %v1644 = vld [vmem:[#allocation4 + $0xb8] sm:$0xff]
    %v1645 = vld [vmem:[#allocation4 + $0xc0] sm:$0xff]
    %v1646 = vld [vmem:[#allocation4 + $0xc8] sm:$0xff]
    %v1647 = vld [vmem:[#allocation4 + $0xd0] sm:$0xff]
    %v1648 = vld [vmem:[#allocation4 + $0xd8] sm:$0xff]
    %v1649 = vld [vmem:[#allocation4 + $0xe0] sm:$0xff]
    %v1650 = vld [vmem:[#allocation4 + $0xe8] sm:$0xff]
    %v1651 = vld [vmem:[#allocation4 + $0xf0] sm:$0xff]
    %v1652 = vld [vmem:[#allocation4 + $0xf8] sm:$0xff]
    %v1653 = vld [vmem:[#allocation4 + $0x100] sm:$0xff]
    %v1654 = vld [vmem:[#allocation4 + $0x108] sm:$0xff]
    %v1655 = vld [vmem:[#allocation4 + $0x110] sm:$0xff]
    %v1656 = vld [vmem:[#allocation4 + $0x118] sm:$0xff]
    %v1657 = vld [vmem:[#allocation4 + $0x120] sm:$0xff]
    %v1658 = vld [vmem:[#allocation4 + $0x128] sm:$0xff]
    %v1659 = vld [vmem:[#allocation4 + $0x130] sm:$0xff]
    %v1660 = vld [vmem:[#allocation4 + $0x138] sm:$0xff]
    %v1661 = vld [vmem:[#allocation4 + $0x140] sm:$0xff]
    %v1662 = vld [vmem:[#allocation4 + $0x148] sm:$0xff]
    %v1663 = vld [vmem:[#allocation4 + $0x150] sm:$0xff]
    %v1664 = vld [vmem:[#allocation4 + $0x158] sm:$0xff]
    %v1665 = vld [vmem:[#allocation4 + $0x160] sm:$0xff]
    %v1666 = vld [vmem:[#allocation4 + $0x168] sm:$0xff]
    %v1667 = vld [vmem:[#allocation4 + $0x170] sm:$0xff]
    %v1668 = vld [vmem:[#allocation4 + $0x178] sm:$0xff]
    %v1669 = vld [vmem:[#allocation4 + $0x180] sm:$0xff]
    %v1670 = vld [vmem:[#allocation4 + $0x188] sm:$0xff]
    %v1671 = vld [vmem:[#allocation4 + $0x190] sm:$0xff]
    %v1672 = vld [vmem:[#allocation4 + $0x198] sm:$0xff]
    %v1673 = vld [vmem:[#allocation4 + $0x1a0] sm:$0xff]
    %v1674 = vld [vmem:[#allocation4 + $0x1a8] sm:$0xff]
    %v1675 = vld [vmem:[#allocation4 + $0x1b0] sm:$0xff]
    %v1676 = vld [vmem:[#allocation4 + $0x1b8] sm:$0xff]
    %v1677 = vld [vmem:[#allocation4 + $0x1c0] sm:$0xff]
    %v1678 = vld [vmem:[#allocation4 + $0x1c8] sm:$0xff]
    %v1679 = vld [vmem:[#allocation4 + $0x1d0] sm:$0xff]
    %v1680 = vld [vmem:[#allocation4 + $0x1d8] sm:$0xff]
    %v1681 = vld [vmem:[#allocation12] sm:$0xff]
    %v1682 = vld [vmem:[#allocation12 + $0x8] sm:$0xff]
    %v1683 = vld [vmem:[#allocation12 + $0x10] sm:$0xff]
    %v1684 = vld [vmem:[#allocation12 + $0x18] sm:$0xff]
    %v1685 = vld [vmem:[#allocation12 + $0x20] sm:$0xff]
    %v1686 = vld [vmem:[#allocation12 + $0x28] sm:$0xff]
    %v1687 = vld [vmem:[#allocation12 + $0x30] sm:$0xff]
    %v1688 = vld [vmem:[#allocation12 + $0x38] sm:$0xff]
    %v1689 = vld [vmem:[#allocation12 + $0x40] sm:$0xff]
    %v1690 = vld [vmem:[#allocation12 + $0x48] sm:$0xff]
    %v1691 = vld [vmem:[#allocation12 + $0x50] sm:$0xff]
    %v1692 = vld [vmem:[#allocation12 + $0x58] sm:$0xff]
    %v1693 = vld [vmem:[#allocation12 + $0x60] sm:$0xff]
    %v1694 = vld [vmem:[#allocation12 + $0x68] sm:$0xff]
    %v1695 = vld [vmem:[#allocation12 + $0x70] sm:$0xff]
    %v1696 = vld [vmem:[#allocation12 + $0x78] sm:$0xff]
    %v1697 = vld [vmem:[#allocation12 + $0x80] sm:$0xff]
    %v1698 = vld [vmem:[#allocation12 + $0x88] sm:$0xff]
    %v1699 = vld [vmem:[#allocation12 + $0x90] sm:$0xff]
    %v1700 = vld [vmem:[#allocation12 + $0x98] sm:$0xff]
    %v1701 = vld [vmem:[#allocation12 + $0xa0] sm:$0xff]
    %v1702 = vld [vmem:[#allocation12 + $0xa8] sm:$0xff]
    %v1703 = vld [vmem:[#allocation12 + $0xb0] sm:$0xff]
    %v1704 = vld [vmem:[#allocation12 + $0xb8] sm:$0xff]
    %v1705 = vld [vmem:[#allocation12 + $0xc0] sm:$0xff]
    %v1706 = vld [vmem:[#allocation12 + $0xc8] sm:$0xff]
    %v1707 = vld [vmem:[#allocation12 + $0xd0] sm:$0xff]
    %v1708 = vld [vmem:[#allocation12 + $0xd8] sm:$0xff]
    %v1709 = vld [vmem:[#allocation12 + $0xe0] sm:$0xff]
    %v1710 = vld [vmem:[#allocation12 + $0xe8] sm:$0xff]
    %v1711 = vld [vmem:[#allocation12 + $0xf0] sm:$0xff]
    %v1712 = vld [vmem:[#allocation12 + $0xf8] sm:$0xff]
    %v1713 = vld [vmem:[#allocation12 + $0x100] sm:$0xff]
    %v1714 = vld [vmem:[#allocation12 + $0x108] sm:$0xff]
    %v1715 = vld [vmem:[#allocation12 + $0x110] sm:$0xff]
    %v1716 = vld [vmem:[#allocation12 + $0x118] sm:$0xff]
    %v1717 = vld [vmem:[#allocation12 + $0x120] sm:$0xff]
    %v1718 = vld [vmem:[#allocation12 + $0x128] sm:$0xff]
    %v1719 = vld [vmem:[#allocation12 + $0x130] sm:$0xff]
    %v1720 = vld [vmem:[#allocation12 + $0x138] sm:$0xff]
    %v1721 = vld [vmem:[#allocation12 + $0x140] sm:$0xff]
    %v1722 = vld [vmem:[#allocation12 + $0x148] sm:$0xff]
    %v1723 = vld [vmem:[#allocation12 + $0x150] sm:$0xff]
    %v1724 = vld [vmem:[#allocation12 + $0x158] sm:$0xff]
    %v1725 = vld [vmem:[#allocation12 + $0x160] sm:$0xff]
    %v1726 = vld [vmem:[#allocation12 + $0x168] sm:$0xff]
    %v1727 = vld [vmem:[#allocation12 + $0x170] sm:$0xff]
    %v1728 = vld [vmem:[#allocation12 + $0x178] sm:$0xff]
    %1729 = vmatprep.subr.mxu0 0.0
    %1730 = vmatpush1.msra.mxu0 %v1681
    %1731 = vmatprep.subr.mxu0 0.0
    %1732 = vmatpush1.msra.mxu0 %v1682
    %1733 = vmatprep.subr.mxu0 0.0
    %1734 = vmatpush1.msra.mxu0 %v1683
    %1735 = vmatprep.subr.mxu0 0.0
    %1736 = vmatpush1.msra.mxu0 %v1684
    %1737 = vmatprep.subr.mxu0 0.0
    %1738 = vmatpush1.msra.mxu0 %v1685
    %1739 = vmatprep.subr.mxu0 0.0
    %1740 = vmatpush1.msra.mxu0 %v1686
    %1741 = vmatprep.subr.mxu0 0.0
    %1742 = vmatpush1.msra.mxu0 %v1687
    %1743 = vmatprep.subr.mxu0 0.0
    %1744 = vmatpush1.msra.mxu0 %v1688
    %1745 = vmatprep.subr.mxu0 0.0
    %1746 = vmatpush1.msra.mxu0 %v1689
    %1747 = vmatprep.subr.mxu0 0.0
    %1748 = vmatpush1.msra.mxu0 %v1690
    %1749 = vmatprep.subr.mxu0 0.0
    %1750 = vmatpush1.msra.mxu0 %v1691
    %1751 = vmatprep.subr.mxu0 0.0
    %1752 = vmatpush1.msra.mxu0 %v1692
    %1753 = vmatprep.subr.mxu0 0.0
    %1754 = vmatpush1.msra.mxu0 %v1693
    %1755 = vmatprep.subr.mxu0 0.0
    %1756 = vmatpush1.msra.mxu0 %v1694
    %1757 = vmatprep.subr.mxu0 0.0
    %1758 = vmatpush1.msra.mxu0 %v1695
    %1759 = vmatprep.subr.mxu0 0.0
    %1760 = vmatpush1.msra.mxu0 %v1696
    %1761 = vmatprep.subr.mxu0 0.0
    %1762 = vmatpush1.msra.mxu0 %v1697
    %1763 = vmatprep.subr.mxu0 0.0
    %1764 = vmatpush1.msra.mxu0 %v1698
    %1765 = vmatprep.subr.mxu0 0.0
    %1766 = vmatpush1.msra.mxu0 %v1699
    %1767 = vmatprep.subr.mxu0 0.0
    %1768 = vmatpush1.msra.mxu0 %v1700
    %1769 = vmatprep.subr.mxu0 0.0
    %1770 = vmatpush1.msra.mxu0 %v1701
    %1771 = vmatprep.subr.mxu0 0.0
    %1772 = vmatpush1.msra.mxu0 %v1702
    %1773 = vmatprep.subr.mxu0 0.0
    %1774 = vmatpush1.msra.mxu0 %v1703
    %1775 = vmatprep.subr.mxu0 0.0
    %1776 = vmatpush1.msra.mxu0 %v1704
    %1777 = vmatprep.subr.mxu0 0.0
    %1778 = vmatpush1.msra.mxu0 %v1705
    %1779 = vmatprep.subr.mxu0 0.0
    %1780 = vmatpush1.msra.mxu0 %v1706
    %1781 = vmatprep.subr.mxu0 0.0
    %1782 = vmatpush1.msra.mxu0 %v1707
    %1783 = vmatprep.subr.mxu0 0.0
    %1784 = vmatpush1.msra.mxu0 %v1708
    %1785 = vmatprep.subr.mxu0 0.0
    %1786 = vmatpush1.msra.mxu0 %v1709
    %1787 = vmatprep.subr.mxu0 0.0
    %1788 = vmatpush1.msra.mxu0 %v1710
    %1789 = vmatprep.subr.mxu0 0.0
    %1790 = vmatpush1.msra.mxu0 %v1711
    %1791 = vmatprep.subr.mxu0 0.0
    %1792 = vmatpush1.msra.mxu0 %v1712
    %1793 = vmatprep.mubr.f32.mxu0 %v1622
    %1794 = vmatmul.mubr.f32.gmra.mrb[0].mxu0 %v1621
    %v1795 = vpop.f32.mrb[0].mxu0
    %v1796 = vadd.f32 0.0, %v1795
    %v1797 = vpop.f32.mrb[0].mxu0
    %1798 = vmatprep.mubr.f32.mxu0 %v1625
    %1799 = vmatmul.mubr.f32.gmra.mrb[0].mxu0 %v1624
    %v1800 = vpop.f32.mrb[0].mxu0
    %v1801 = vadd.f32 0.0, %v1800
    %v1802 = vpop.f32.mrb[0].mxu0
    %1803 = vmatprep.mubr.f32.mxu0 %v1628
    %1804 = vmatmul.mubr.f32.gmra.mrb[0].mxu0 %v1627
    %v1805 = vpop.f32.mrb[0].mxu0
    %v1806 = vadd.f32 0.0, %v1805
    %v1807 = vpop.f32.mrb[0].mxu0
    %1808 = vmatprep.mubr.f32.mxu0 %v1631
    %1809 = vmatmul.mubr.f32.gmra.mrb[0].mxu0 %v1630
    %v1810 = vpop.f32.mrb[0].mxu0
    %v1811 = vadd.f32 0.0, %v1810
    %v1812 = vpop.f32.mrb[0].mxu0
    %1813 = vmatprep.mubr.f32.mxu0 %v1634
    %1814 = vmatmul.mubr.f32.gmra.mrb[0].mxu0 %v1633
    %v1815 = vpop.f32.mrb[0].mxu0
    %v1816 = vadd.f32 0.0, %v1815
    %v1817 = vpop.f32.mrb[0].mxu0
    %1818 = vmatprep.mubr.f32.mxu0 %v1637
    %1819 = vmatmul.mubr.f32.gmra.mrb[0].mxu0 %v1636
    %v1820 = vpop.f32.mrb[0].mxu0
    %v1821 = vadd.f32 0.0, %v1820
    %v1822 = vpop.f32.mrb[0].mxu0
    %1823 = vmatprep.mubr.f32.mxu0 %v1640
    %1824 = vmatmul.mubr.f32.gmra.mrb[0].mxu0 %v1639
    %v1825 = vpop.f32.mrb[0].mxu0
    %v1826 = vadd.f32 0.0, %v1825
    %v1827 = vpop.f32.mrb[0].mxu0
    %1828 = vmatprep.mubr.f32.mxu0 %v1643
    %1829 = vmatmul.mubr.f32.gmra.mrb[0].mxu0 %v1642
    %v1830 = vpop.f32.mrb[0].mxu0
    %v1831 = vadd.f32 0.0, %v1830
    %v1832 = vpop.f32.mrb[0].mxu0
    %1833 = vmatprep.mubr.f32.mxu0 %v1646
    %1834 = vmatmul.mubr.f32.gmra.mrb[0].mxu0 %v1645
    %v1835 = vpop.f32.mrb[0].mxu0
    %v1836 = vadd.f32 0.0, %v1835
    %v1837 = vpop.f32.mrb[0].mxu0
    %1838 = vmatprep.mubr.f32.mxu0 %v1649
    %1839 = vmatmul.mubr.f32.gmra.mrb[0].mxu0 %v1648
    %v1840 = vpop.f32.mrb[0].mxu0
    %v1841 = vadd.f32 0.0, %v1840
    %v1842 = vpop.f32.mrb[0].mxu0
    %1843 = vmatprep.mubr.f32.mxu0 %v1652
    %1844 = vmatmul.mubr.f32.gmra.mrb[0].mxu0 %v1651
    %v1845 = vpop.f32.mrb[0].mxu0
    %v1846 = vadd.f32 0.0, %v1845
    %v1847 = vpop.f32.mrb[0].mxu0
    %1848 = vmatprep.mubr.f32.mxu0 %v1655
    %1849 = vmatmul.mubr.f32.gmra.mrb[0].mxu0 %v1654
    %v1850 = vpop.f32.mrb[0].mxu0
    %v1851 = vadd.f32 0.0, %v1850
    %v1852 = vpop.f32.mrb[0].mxu0
    %1853 = vmatprep.mubr.f32.mxu0 %v1658
    %1854 = vmatmul.mubr.f32.gmra.mrb[0].mxu0 %v1657
    %v1855 = vpop.f32.mrb[0].mxu0
    %v1856 = vadd.f32 0.0, %v1855
    %v1857 = vpop.f32.mrb[0].mxu0
    %1858 = vmatprep.mubr.f32.mxu0 %v1661
    %1859 = vmatmul.mubr.f32.gmra.mrb[0].mxu0 %v1660
    %v1860 = vpop.f32.mrb[0].mxu0
    %v1861 = vadd.f32 0.0, %v1860
    %v1862 = vpop.f32.mrb[0].mxu0
    %1863 = vmatprep.mubr.f32.mxu0 %v1664
    %1864 = vmatmul.mubr.f32.gmra.mrb[0].mxu0 %v1663
    %v1865 = vpop.f32.mrb[0].mxu0
    %v1866 = vadd.f32 0.0, %v1865
    %v1867 = vpop.f32.mrb[0].mxu0
    %1868 = vmatprep.mubr.f32.mxu0 %v1667
    %1869 = vmatmul.mubr.f32.gmra.mrb[0].mxu0 %v1666
    %v1870 = vpop.f32.mrb[0].mxu0
    %v1871 = vadd.f32 0.0, %v1870
    %v1872 = vpop.f32.mrb[0].mxu0
    %1873 = vmatprep.mubr.f32.mxu0 %v1670
    %1874 = vmatmul.mubr.f32.gmra.mrb[0].mxu0 %v1669
    %v1875 = vpop.f32.mrb[0].mxu0
    %v1876 = vadd.f32 0.0, %v1875
    %v1877 = vpop.f32.mrb[0].mxu0
    %1878 = vmatprep.mubr.f32.mxu0 %v1673
    %1879 = vmatmul.mubr.f32.gmra.mrb[0].mxu0 %v1672
    %v1880 = vpop.f32.mrb[0].mxu0
    %v1881 = vadd.f32 0.0, %v1880
    %v1882 = vpop.f32.mrb[0].mxu0
    %1883 = vmatprep.mubr.f32.mxu0 %v1676
    %1884 = vmatmul.mubr.f32.gmra.mrb[0].mxu0 %v1675
    %v1885 = vpop.f32.mrb[0].mxu0
    %v1886 = vadd.f32 0.0, %v1885
    %v1887 = vpop.f32.mrb[0].mxu0
    %1888 = vmatprep.mubr.f32.mxu0 %v1679
    %1889 = vmatmul.mubr.f32.gmra.mrb[0].mxu0 %v1678
    %v1890 = vpop.f32.mrb[0].mxu0
    %v1891 = vadd.f32 0.0, %v1890
    %v1892 = vpop.f32.mrb[0].mxu0
    %1893 = vdwg.mxu0
    %1894 = vmatprep.subr.mxu0 0.0
    %1895 = vmatpush1.msra.mxu0 %v1713
    %1896 = vmatprep.subr.mxu0 0.0
    %1897 = vmatpush1.msra.mxu0 %v1714
    %1898 = vmatprep.subr.mxu0 0.0
    %1899 = vmatpush1.msra.mxu0 %v1715
    %1900 = vmatprep.subr.mxu0 0.0
    %1901 = vmatpush1.msra.mxu0 %v1716
    %1902 = vmatprep.subr.mxu0 0.0
    %1903 = vmatpush1.msra.mxu0 %v1717
    %1904 = vmatprep.subr.mxu0 0.0
    %1905 = vmatpush1.msra.mxu0 %v1718
    %1906 = vmatprep.subr.mxu0 0.0
    %1907 = vmatpush1.msra.mxu0 %v1719
    %1908 = vmatprep.subr.mxu0 0.0
    %1909 = vmatpush1.msra.mxu0 %v1720
    %1910 = vmatprep.subr.mxu0 0.0
    %1911 = vmatpush1.msra.mxu0 %v1721
    %1912 = vmatprep.subr.mxu0 0.0
    %1913 = vmatpush1.msra.mxu0 %v1722
    %1914 = vmatprep.subr.mxu0 0.0
    %1915 = vmatpush1.msra.mxu0 %v1723
    %1916 = vmatprep.subr.mxu0 0.0
    %1917 = vmatpush1.msra.mxu0 %v1724
    %1918 = vmatprep.subr.mxu0 0.0
    %1919 = vmatpush1.msra.mxu0 %v1725
    %1920 = vmatprep.subr.mxu0 0.0
    %1921 = vmatpush1.msra.mxu0 %v1726
    %1922 = vmatprep.subr.mxu0 0.0
    %1923 = vmatpush1.msra.mxu0 %v1727
    %1924 = vmatprep.subr.mxu0 0.0
    %1925 = vmatpush1.msra.mxu0 %v1728
    %1926 = vmatprep.subr.mxu0 0.0
    %1927 = vmatpush1.msra.mxu0 0.0
    %1928 = vmatprep.subr.mxu0 0.0
    %1929 = vmatpush1.msra.mxu0 0.0
    %1930 = vmatprep.subr.mxu0 0.0
    %1931 = vmatpush1.msra.mxu0 0.0
    %1932 = vmatprep.subr.mxu0 0.0
    %1933 = vmatpush1.msra.mxu0 0.0
    %1934 = vmatprep.subr.mxu0 0.0
    %1935 = vmatpush1.msra.mxu0 0.0
    %1936 = vmatprep.subr.mxu0 0.0
    %1937 = vmatpush1.msra.mxu0 0.0
    %1938 = vmatprep.subr.mxu0 0.0
    %1939 = vmatpush1.msra.mxu0 0.0
    %1940 = vmatprep.subr.mxu0 0.0
    %1941 = vmatpush1.msra.mxu0 0.0
    %1942 = vmatprep.subr.mxu0 0.0
    %1943 = vmatpush1.msra.mxu0 0.0
    %1944 = vmatprep.subr.mxu0 0.0
    %1945 = vmatpush1.msra.mxu0 0.0
    %1946 = vmatprep.subr.mxu0 0.0
    %1947 = vmatpush1.msra.mxu0 0.0
    %1948 = vmatprep.subr.mxu0 0.0
    %1949 = vmatpush1.msra.mxu0 0.0
    %1950 = vmatprep.subr.mxu0 0.0
    %1951 = vmatpush1.msra.mxu0 0.0
    %1952 = vmatprep.subr.mxu0 0.0
    %1953 = vmatpush1.msra.mxu0 0.0
    %1954 = vmatprep.subr.mxu0 0.0
    %1955 = vmatpush1.msra.mxu0 0.0
    %1956 = vmatprep.subr.mxu0 0.0
    %1957 = vmatpush1.msra.mxu0 0.0
    %1958 = vmatprep.mubr.f32.mxu0 0.0
    %1959 = vmatmul.mubr.f32.gmra.mrb[0].mxu0 %v1623
    %v1960 = vpop.f32.mrb[0].mxu0
    %v1961 = vadd.f32 %v1796, %v1960
    %v1962 = vpop.f32.mrb[0].mxu0
    %1963 = vmatprep.mubr.f32.mxu0 0.0
    %1964 = vmatmul.mubr.f32.gmra.mrb[0].mxu0 %v1626
    %v1965 = vpop.f32.mrb[0].mxu0
    %v1966 = vadd.f32 %v1801, %v1965
    %v1967 = vpop.f32.mrb[0].mxu0
    %1968 = vmatprep.mubr.f32.mxu0 0.0
    %1969 = vmatmul.mubr.f32.gmra.mrb[0].mxu0 %v1629
    %v1970 = vpop.f32.mrb[0].mxu0
    %v1971 = vadd.f32 %v1806, %v1970
    %v1972 = vpop.f32.mrb[0].mxu0
    %1973 = vmatprep.mubr.f32.mxu0 0.0
    %1974 = vmatmul.mubr.f32.gmra.mrb[0].mxu0 %v1632
    %v1975 = vpop.f32.mrb[0].mxu0
    %v1976 = vadd.f32 %v1811, %v1975
    %v1977 = vpop.f32.mrb[0].mxu0
    %1978 = vmatprep.mubr.f32.mxu0 0.0
    %1979 = vmatmul.mubr.f32.gmra.mrb[0].mxu0 %v1635
    %v1980 = vpop.f32.mrb[0].mxu0
    %v1981 = vadd.f32 %v1816, %v1980
    %v1982 = vpop.f32.mrb[0].mxu0
    %1983 = vmatprep.mubr.f32.mxu0 0.0
    %1984 = vmatmul.mubr.f32.gmra.mrb[0].mxu0 %v1638
    %v1985 = vpop.f32.mrb[0].mxu0
    %v1986 = vadd.f32 %v1821, %v1985
    %v1987 = vpop.f32.mrb[0].mxu0
    %1988 = vmatprep.mubr.f32.mxu0 0.0
    %1989 = vmatmul.mubr.f32.gmra.mrb[0].mxu0 %v1641
    %v1990 = vpop.f32.mrb[0].mxu0
    %v1991 = vadd.f32 %v1826, %v1990
    %v1992 = vpop.f32.mrb[0].mxu0
    %1993 = vmatprep.mubr.f32.mxu0 0.0
    %1994 = vmatmul.mubr.f32.gmra.mrb[0].mxu0 %v1644
    %v1995 = vpop.f32.mrb[0].mxu0
    %v1996 = vadd.f32 %v1831, %v1995
    %v1997 = vpop.f32.mrb[0].mxu0
    %1998 = vmatprep.mubr.f32.mxu0 0.0
    %1999 = vmatmul.mubr.f32.gmra.mrb[0].mxu0 %v1647
    %v2000 = vpop.f32.mrb[0].mxu0
    %v2001 = vadd.f32 %v1836, %v2000
    %v2002 = vpop.f32.mrb[0].mxu0
    %2003 = vmatprep.mubr.f32.mxu0 0.0
    %2004 = vmatmul.mubr.f32.gmra.mrb[0].mxu0 %v1650
    %v2005 = vpop.f32.mrb[0].mxu0
    %v2006 = vadd.f32 %v1841, %v2005
    %v2007 = vpop.f32.mrb[0].mxu0
    %2008 = vmatprep.mubr.f32.mxu0 0.0
    %2009 = vmatmul.mubr.f32.gmra.mrb[0].mxu0 %v1653
    %v2010 = vpop.f32.mrb[0].mxu0
    %v2011 = vadd.f32 %v1846, %v2010
    %v2012 = vpop.f32.mrb[0].mxu0
    %2013 = vmatprep.mubr.f32.mxu0 0.0
    %2014 = vmatmul.mubr.f32.gmra.mrb[0].mxu0 %v1656
    %v2015 = vpop.f32.mrb[0].mxu0
    %v2016 = vadd.f32 %v1851, %v2015
    %v2017 = vpop.f32.mrb[0].mxu0
    %2018 = vmatprep.mubr.f32.mxu0 0.0
    %2019 = vmatmul.mubr.f32.gmra.mrb[0].mxu0 %v1659
    %v2020 = vpop.f32.mrb[0].mxu0
    %v2021 = vadd.f32 %v1856, %v2020
    %v2022 = vpop.f32.mrb[0].mxu0
    %2023 = vmatprep.mubr.f32.mxu0 0.0
    %2024 = vmatmul.mubr.f32.gmra.mrb[0].mxu0 %v1662
    %v2025 = vpop.f32.mrb[0].mxu0
    %v2026 = vadd.f32 %v1861, %v2025
    %v2027 = vpop.f32.mrb[0].mxu0
    %2028 = vmatprep.mubr.f32.mxu0 0.0
    %2029 = vmatmul.mubr.f32.gmra.mrb[0].mxu0 %v1665
    %v2030 = vpop.f32.mrb[0].mxu0
    %v2031 = vadd.f32 %v1866, %v2030
    %v2032 = vpop.f32.mrb[0].mxu0
    %2033 = vmatprep.mubr.f32.mxu0 0.0
    %2034 = vmatmul.mubr.f32.gmra.mrb[0].mxu0 %v1668
    %v2035 = vpop.f32.mrb[0].mxu0
    %v2036 = vadd.f32 %v1871, %v2035
    %v2037 = vpop.f32.mrb[0].mxu0
    %2038 = vmatprep.mubr.f32.mxu0 0.0
    %2039 = vmatmul.mubr.f32.gmra.mrb[0].mxu0 %v1671
    %v2040 = vpop.f32.mrb[0].mxu0
    %v2041 = vadd.f32 %v1876, %v2040
    %v2042 = vpop.f32.mrb[0].mxu0
    %2043 = vmatprep.mubr.f32.mxu0 0.0
    %2044 = vmatmul.mubr.f32.gmra.mrb[0].mxu0 %v1674
    %v2045 = vpop.f32.mrb[0].mxu0
    %v2046 = vadd.f32 %v1881, %v2045
    %v2047 = vpop.f32.mrb[0].mxu0
    %2048 = vmatprep.mubr.f32.mxu0 0.0
    %2049 = vmatmul.mubr.f32.gmra.mrb[0].mxu0 %v1677
    %v2050 = vpop.f32.mrb[0].mxu0
    %v2051 = vadd.f32 %v1886, %v2050
    %v2052 = vpop.f32.mrb[0].mxu0
    %2053 = vmatprep.mubr.f32.mxu0 0.0
    %2054 = vmatmul.mubr.f32.gmra.mrb[0].mxu0 %v1680
    %v2055 = vpop.f32.mrb[0].mxu0
    %v2056 = vadd.f32 %v1891, %v2055
    %v2057 = vpop.f32.mrb[0].mxu0
    %2058 = vdwg.mxu0
    %v2059 = vld [vmem:[#allocation13] sm:$0x1]
    %v2061 = vlaneseq
    %v2062 = vshrl.u32 %v2061, 7
    %v2063 = vsub.s32 0, %v2062
    %v2064 = vrot.slane %v2059, %v2063
    %v2066 = vmul.f32 %v1961, %v2064
    %v2067 = vmul.f32 %v1966, %v2064
    %v2068 = vmul.f32 %v1971, %v2064
    %v2069 = vmul.f32 %v1976, %v2064
    %v2070 = vmul.f32 %v1981, %v2064
    %v2071 = vmul.f32 %v1986, %v2064
    %v2072 = vmul.f32 %v1991, %v2064
    %v2073 = vmul.f32 %v1996, %v2064
    %v2074 = vmul.f32 %v2001, %v2064
    %v2075 = vmul.f32 %v2006, %v2064
    %v2076 = vmul.f32 %v2011, %v2064
    %v2077 = vmul.f32 %v2016, %v2064
    %v2078 = vmul.f32 %v2021, %v2064
    %v2079 = vmul.f32 %v2026, %v2064
    %v2080 = vmul.f32 %v2031, %v2064
    %v2081 = vmul.f32 %v2036, %v2064
    %v2082 = vmul.f32 %v2041, %v2064
    %v2083 = vmul.f32 %v2046, %v2064
    %v2084 = vmul.f32 %v2051, %v2064
    %v2085 = vmul.f32 %v2056, %v2064
    %s2086 = scalar_lea.vmem [#allocation13], 1
    %v2087 = vld [vmem:[%s2086] sm:$0x1]
    %v2089 = vlaneseq
    %v2090 = vshrl.u32 %v2089, 7
    %v2091 = vsub.s32 0, %v2090
    %v2092 = vrot.slane %v2087, %v2091
    %v2094 = vadd.f32 %v2066, %v2092
    %v2095 = vadd.f32 %v2067, %v2092
    %v2096 = vadd.f32 %v2068, %v2092
    %v2097 = vadd.f32 %v2069, %v2092
    %v2098 = vadd.f32 %v2070, %v2092
    %v2099 = vadd.f32 %v2071, %v2092
    %v2100 = vadd.f32 %v2072, %v2092
    %v2101 = vadd.f32 %v2073, %v2092
    %v2102 = vadd.f32 %v2074, %v2092
    %v2103 = vadd.f32 %v2075, %v2092
    %v2104 = vadd.f32 %v2076, %v2092
    %v2105 = vadd.f32 %v2077, %v2092
    %v2106 = vadd.f32 %v2078, %v2092
    %v2107 = vadd.f32 %v2079, %v2092
    %v2108 = vadd.f32 %v2080, %v2092
    %v2109 = vadd.f32 %v2081, %v2092
    %v2110 = vadd.f32 %v2082, %v2092
    %v2111 = vadd.f32 %v2083, %v2092
    %v2112 = vadd.f32 %v2084, %v2092
    %v2113 = vadd.f32 %v2085, %v2092
    %v2114 = vmax.f32 %v2094, 0.0
    %v2115 = vmax.f32 %v2095, 0.0
    %v2116 = vmax.f32 %v2096, 0.0
    %v2117 = vmax.f32 %v2097, 0.0
    %v2118 = vmax.f32 %v2098, 0.0
    %v2119 = vmax.f32 %v2099, 0.0
    %v2120 = vmax.f32 %v2100, 0.0
    %v2121 = vmax.f32 %v2101, 0.0
    %v2122 = vmax.f32 %v2102, 0.0
    %v2123 = vmax.f32 %v2103, 0.0
    %v2124 = vmax.f32 %v2104, 0.0
    %v2125 = vmax.f32 %v2105, 0.0
    %v2126 = vmax.f32 %v2106, 0.0
    %v2127 = vmax.f32 %v2107, 0.0
    %v2128 = vmax.f32 %v2108, 0.0
    %v2129 = vmax.f32 %v2109, 0.0
    %v2130 = vmax.f32 %v2110, 0.0
    %v2131 = vmax.f32 %v2111, 0.0
    %v2132 = vmax.f32 %v2112, 0.0
    %v2133 = vmax.f32 %v2113, 0.0
    %v2134 = vpack.c.bf16 %v2115, %v2114
    %v2135 = vpack.c.bf16 %v2117, %v2116
    %v2136 = vpack.c.bf16 %v2119, %v2118
    %v2137 = vpack.c.bf16 %v2121, %v2120
    %v2138 = vpack.c.bf16 %v2123, %v2122
    %v2139 = vpack.c.bf16 %v2125, %v2124
    %v2140 = vpack.c.bf16 %v2127, %v2126
    %v2141 = vpack.c.bf16 %v2129, %v2128
    %v2142 = vpack.c.bf16 %v2131, %v2130
    %v2143 = vpack.c.bf16 %v2133, %v2132
    %v2154 = vunpack.c.l.b16 %v2134
    %v2155 = vunpack.c.h.b16 %v2134
    %v2156 = vunpack.c.l.b16 %v2135
    %v2157 = vunpack.c.h.b16 %v2135
    %v2158 = vunpack.c.l.b16 %v2136
    %v2159 = vunpack.c.h.b16 %v2136
    %v2160 = vunpack.c.l.b16 %v2137
    %v2161 = vunpack.c.h.b16 %v2137
    %v2162 = vunpack.c.l.b16 %v2138
    %v2163 = vunpack.c.h.b16 %v2138
    %v2164 = vunpack.c.l.b16 %v2139
    %v2165 = vunpack.c.h.b16 %v2139
    %v2166 = vunpack.c.l.b16 %v2140
    %v2167 = vunpack.c.h.b16 %v2140
    %v2168 = vunpack.c.l.b16 %v2141
    %v2169 = vunpack.c.h.b16 %v2141
    %v2170 = vunpack.c.l.b16 %v2142
    %v2171 = vunpack.c.h.b16 %v2142
    %v2172 = vunpack.c.l.b16 %v2143
    %v2173 = vunpack.c.h.b16 %v2143
    %v2174 = vpack.c.b16 %v2154, %v2154
    %v2175 = vpack.c.b16 %v2155, %v2155
    %v2176 = vpack.c.b16 %v2156, %v2156
    %v2177 = vpack.c.b16 %v2157, %v2157
    %v2178 = vpack.c.b16 %v2158, %v2158
    %v2179 = vpack.c.b16 %v2159, %v2159
    %v2180 = vpack.c.b16 %v2160, %v2160
    %v2181 = vpack.c.b16 %v2161, %v2161
    %v2182 = vpack.c.b16 %v2162, %v2162
    %v2183 = vpack.c.b16 %v2163, %v2163
    %v2184 = vpack.c.b16 %v2164, %v2164
    %v2185 = vpack.c.b16 %v2165, %v2165
    %v2186 = vpack.c.b16 %v2166, %v2166
    %v2187 = vpack.c.b16 %v2167, %v2167
    %v2188 = vpack.c.b16 %v2168, %v2168
    %v2189 = vpack.c.b16 %v2169, %v2169
    %v2190 = vpack.c.b16 %v2170, %v2170
    %v2191 = vpack.c.b16 %v2171, %v2171
    %v2192 = vpack.c.b16 %v2172, %v2172
    %v2193 = vpack.c.b16 %v2173, %v2173
    %2214 = vst [vmem:[%s7] sm:$0xf] %v2174
    %2215 = vst [vmem:[%s7 + $0x4] sm:$0xf] %v2175
    %2216 = vst [vmem:[%s7 + $0x8] sm:$0xf] %v2176
    %2217 = vst [vmem:[%s7 + $0xc] sm:$0xf] %v2177
    %2218 = vst [vmem:[%s7 + $0x10] sm:$0xf] %v2178
    %2219 = vst [vmem:[%s7 + $0x14] sm:$0xf] %v2179
    %2220 = vst [vmem:[%s7 + $0x18] sm:$0xf] %v2180
    %2221 = vst [vmem:[%s7 + $0x1c] sm:$0xf] %v2181
    %2222 = vst [vmem:[%s7 + $0x20] sm:$0xf] %v2182
    %2223 = vst [vmem:[%s7 + $0x24] sm:$0xf] %v2183
    %2224 = vst [vmem:[%s7 + $0x28] sm:$0xf] %v2184
    %2225 = vst [vmem:[%s7 + $0x2c] sm:$0xf] %v2185
    %2226 = vst [vmem:[%s7 + $0x30] sm:$0xf] %v2186
    %2227 = vst [vmem:[%s7 + $0x34] sm:$0xf] %v2187
    %2228 = vst [vmem:[%s7 + $0x38] sm:$0xf] %v2188
    %2229 = vst [vmem:[%s7 + $0x3c] sm:$0xf] %v2189
    %2230 = vst [vmem:[%s7 + $0x40] sm:$0xf] %v2190
    %2231 = vst [vmem:[%s7 + $0x44] sm:$0xf] %v2191
    %2232 = vst [vmem:[%s7 + $0x48] sm:$0xf] %v2192
    %2233 = vst [vmem:[%s7 + $0x4c] sm:$0xf] %v2193
    // Predicated region
    $region54: #{deep_cnn_forward.2} parent=1 // pred_check
      _
    $region55: #{deep_cnn_forward.2} parent=1 // pred_check_branch
      %2235 = sbr.rel (0) target = $region57
    $region56: #{deep_cnn_forward.2} parent=1 // pred_region
      _
    $region57: #{deep_cnn_forward.2} parent=1 // pred_fallthru
      _
    // Predicated region
    $region58: #{deep_cnn_forward.2} parent=1 // pred_check
      _
    $region59: #{deep_cnn_forward.2} parent=1 // pred_check_branch
      %2237 = sbr.rel (0) target = $region61
    $region60: #{deep_cnn_forward.2} parent=1 // pred_region
      _
    $region61: #{deep_cnn_forward.2} parent=1 // pred_fallthru
      _
    %2238 = vsyncpa [#allocation6], 1
    %2239 = vsyncpa [#allocation8], 1
    %2240 = vsyncpa [#allocation11], 1
    %2241 = vsyncpa [#allocation14], 1

// kernel: deep_cnn_forward.3
$region0: #{deep_cnn_forward.3}
  #allocation0 [shape = 'u32[]', space=smem, size = 0x4, offset = 0x4, fixed_abs, tag = 'smem constant byte address 0x4 - core index']
  #allocation1 [shape = 'u32[144,128]{1,0:T(1,128)}', space=vmem, size = 0x12000, scoped, tag = 'internal scratch']
  #allocation2 [shape = 'f32[2,256]{1,0:T(2,128)}', space=vmem, size = 0x800, scoped, tag = 'scratch operand']
  %s0 = inlined_call_operand.vmem [shape: bf16[2,10240], index: 0, kind: input, shape index: {}]
  %s1 = inlined_call_operand.hbm [shape: bf16[10240,512], index: 1, kind: input, shape index: {}]
  %s2 = inlined_call_operand.hbm [shape: f32[1,512], index: 2, kind: input, shape index: {}]
  %s3 = inlined_call_operand.vmem [shape: f32[2,512], index: 3, kind: output, shape index: {}]
  %s4 = sld [smem:[#allocation0]]
  $region61: #{deep_cnn_forward.3} parent=0
    _
  %s6 = ssub.s32 1, %s4
  %s7 = scalar_select 0, %s6, %s4
  $region1: #{deep_cnn_forward.3} parent=0
    #allocation3 [shape = 'u8[5242880]{0}', space=vmem, size = 0x500000, scoped, tag = 'input window, operand 1']
    #allocation4 [shape = 's32[2]{0}', space=sflag, size = 0x8, scoped, tag = 'scoped memory for deep_cnn_forward.3']
    #allocation5 [shape = 'u8[2048]{0}', space=vmem, size = 0x800, scoped, tag = 'input window, operand 2']
    #allocation6 [shape = 's32[2]{0}', space=sflag, size = 0x8, scoped, tag = 'scoped memory for deep_cnn_forward.3']
    %8 = vsyncpa [#allocation4], 0
    %s9 = scalar_lea.sflag [#allocation4], 1
    %10 = vsyncpa %s9, 0
    %11 = vsyncpa [#allocation6], 0
    %s12 = scalar_lea.sflag [#allocation6], 1
    %13 = vsyncpa %s12, 0
    loop: start=0, step=1, limit=6
    $region2: #{deep_cnn_forward.3} parent=1 // loop_pre_header
      _
    $region3: #{deep_cnn_forward.3} parent=1 // loop_header
      %s15 = sphi 0, %s19
      %p16 = scmp.ge.s32.totalorder %s15, 6
      %s22 = sphi 0, %s34
      %s23 = sphi 0, %s30
      %s24 = sphi 0, %s22
      %s25 = sphi 0, %s23
      %s26 = sphi 0, %s24
      %s27 = sphi 0, %s25
      %s37 = sphi 0, %s39
      %s40 = sphi 0, %s37
      %s41 = sphi 0, %s40
      %s57 = sphi 0, %s41
      %s65 = sphi 0, %s67
      %s68 = sphi 0, %s65
      %s69 = sphi 0, %s68
      %s85 = sphi 0, %s69
      %s91 = sphi 0, %s93
      %s94 = sphi 0, %s91
      %s95 = sphi 0, %s94
      %s111 = sphi 0, %s95
      %s117 = sphi 0, %s119
      %s120 = sphi 0, %s117
      %s121 = sphi 0, %s120
      %s137 = sphi 0, %s121
    $region4: #{deep_cnn_forward.3} parent=1 // loop_header_branch
      %18 = sbr.rel (%p16) target = $region8
    $region5: #{deep_cnn_forward.3} parent=1 // loop_body
      %s20 = ssub.s32 %s15, 1
      %s21 = ssub.s32 %s15, 2
      %s28 = sadd.s32 1, %s23
      %p29 = scmp.ge.s32.totalorder %s28, 2
      %s30 = scalar_select %p29, 0, %s28
      %s31 = sadd.s32 1, %s22
      %s32 = scalar_select %p29, %s31, %s22
      %p33 = scmp.ge.s32.totalorder %s32, 2
      %s34 = scalar_select %p33, 0, %s32
      %s35 = ssub.s32 %s23, %s30
      %p36 = scmp.eq.s32.totalorder %s35, 0
      %s38 = sadd.s32 %s37, 1
      %s39 = scalar_select %p36, %s37, %s38
      %p42 = pneg %p36
      %p43 = scmp.eq.s32.totalorder %s15, 3
      %p44 = por %p42, %p43
      %p45 = scmp.ne.s32.totalorder %s37, %s40
      %p46 = scmp.eq.s32.totalorder %s15, 0
      %p47 = por %p45, %p46
      %p48 = scmp.ne.s32.totalorder %s37, %s40
      %p49 = scmp.eq.s32.totalorder %s20, 3
      %p50 = por %p48, %p49
      %p51 = scmp.ne.s32.totalorder %s40, %s41
      %p52 = scmp.eq.s32.totalorder %s20, 0
      %p53 = por %p51, %p52
      %p54 = scmp.ne.s32.totalorder %s40, %s41
      %p55 = scmp.eq.s32.totalorder %s21, 3
      %p56 = por %p54, %p55
      %p58 = scmp.ne.s32.totalorder %s41, %s57
      %p59 = scmp.eq.s32.totalorder %s21, 0
      %p60 = por %p58, %p59
      %s61 = ssub.s32 %s23, %s30
      %s62 = ssub.s32 %s22, %s34
      %s63 = sor.u32 %s61, %s62
      %p64 = scmp.eq.s32.totalorder %s63, 0
      %s66 = sadd.s32 %s65, 1
      %s67 = scalar_select %p64, %s65, %s66
      %p70 = pneg %p64
      %p71 = scmp.eq.s32.totalorder %s15, 3
      %p72 = por %p70, %p71
      %p73 = scmp.ne.s32.totalorder %s65, %s68
      %p74 = scmp.eq.s32.totalorder %s15, 0
      %p75 = por %p73, %p74
      %p76 = scmp.ne.s32.totalorder %s65, %s68
      %p77 = scmp.eq.s32.totalorder %s20, 3
      %p78 = por %p76, %p77
      %p79 = scmp.ne.s32.totalorder %s68, %s69
      %p80 = scmp.eq.s32.totalorder %s20, 0
      %p81 = por %p79, %p80
      %p82 = scmp.ne.s32.totalorder %s68, %s69
      %p83 = scmp.eq.s32.totalorder %s21, 3
      %p84 = por %p82, %p83
      %p86 = scmp.ne.s32.totalorder %s69, %s85
      %p87 = scmp.eq.s32.totalorder %s21, 0
      %p88 = por %p86, %p87
      %s89 = ssub.s32 %s22, %s34
      %p90 = scmp.eq.s32.totalorder %s89, 0
      %s92 = sadd.s32 %s91, 1
      %s93 = scalar_select %p90, %s91, %s92
      %p96 = pneg %p90
      %p97 = scmp.eq.s32.totalorder %s15, 3
      %p98 = por %p96, %p97
      %p99 = scmp.ne.s32.totalorder %s91, %s94
      %p100 = scmp.eq.s32.totalorder %s15, 0
      %p101 = por %p99, %p100
      %p102 = scmp.ne.s32.totalorder %s91, %s94
      %p103 = scmp.eq.s32.totalorder %s20, 3
      %p104 = por %p102, %p103
      %p105 = scmp.ne.s32.totalorder %s94, %s95
      %p106 = scmp.eq.s32.totalorder %s20, 0
      %p107 = por %p105, %p106
      %p108 = scmp.ne.s32.totalorder %s94, %s95
      %p109 = scmp.eq.s32.totalorder %s21, 3
      %p110 = por %p108, %p109
      %p112 = scmp.ne.s32.totalorder %s95, %s111
      %p113 = scmp.eq.s32.totalorder %s21, 0
      %p114 = por %p112, %p113
      %s115 = ssub.s32 %s22, %s34
      %p116 = scmp.eq.s32.totalorder %s115, 0
      %s118 = sadd.s32 %s117, 1
      %s119 = scalar_select %p116, %s117, %s118
      %p122 = pneg %p116
      %p123 = scmp.eq.s32.totalorder %s15, 3
      %p124 = por %p122, %p123
      %p125 = scmp.ne.s32.totalorder %s117, %s120
      %p126 = scmp.eq.s32.totalorder %s15, 0
      %p127 = por %p125, %p126
      %p128 = scmp.ne.s32.totalorder %s117, %s120
      %p129 = scmp.eq.s32.totalorder %s20, 3
      %p130 = por %p128, %p129
      %p131 = scmp.ne.s32.totalorder %s120, %s121
      %p132 = scmp.eq.s32.totalorder %s20, 0
      %p133 = por %p131, %p132
      %p134 = scmp.ne.s32.totalorder %s120, %s121
      %p135 = scmp.eq.s32.totalorder %s21, 3
      %p136 = por %p134, %p135
      %p138 = scmp.ne.s32.totalorder %s121, %s137
      %p139 = scmp.eq.s32.totalorder %s21, 0
      %p140 = por %p138, %p139
      %p141 = scmp.le.s32.totalorder 1, %s15
      %p142 = scmp.lt.s32.totalorder %s15, 5
      %p143 = pnand %p141, %p142
      %p144 = pneg %p143
      // Predicated region
      $region9: #{deep_cnn_forward.3} parent=5 // pred_check
        _
      $region10: #{deep_cnn_forward.3} parent=5 // pred_check_branch
        %146 = sbr.rel (%p143) target = $region12
      $region11: #{deep_cnn_forward.3} parent=5 // pred_region
        %s147 = ssub.s32 %s15, 1
      $region12: #{deep_cnn_forward.3} parent=5 // pred_fallthru
        _
      %p148 = scmp.lt.s32.totalorder %s15, 4
      // Predicated region
      $region13: #{deep_cnn_forward.3} parent=5 // pred_check
        %p149 = pneg %p148
      $region14: #{deep_cnn_forward.3} parent=5 // pred_check_branch
        %151 = sbr.rel (%p149) target = $region16
      $region15: #{deep_cnn_forward.3} parent=5 // pred_region
        // Predicated region
        $region17: #{deep_cnn_forward.3} parent=15 // pred_check
          %p152 = pneg %p47
        $region18: #{deep_cnn_forward.3} parent=15 // pred_check_branch
          %154 = sbr.rel (%p152) target = $region20
        $region19: #{deep_cnn_forward.3} parent=15 // pred_region
          %s155 = smul.u32 40, %s23
          %p156 = scmp.lt.s32.totalorder %s155, 79
          %s157 = scalar_select %p156, %s155, 79
          %s158 = scalar_lea.vmem %s0, %s157
          %s159 = smul.u32 40, %s23
        $region20: #{deep_cnn_forward.3} parent=15 // pred_fallthru
          _
        // Predicated region
        $region21: #{deep_cnn_forward.3} parent=15 // pred_check
          %p160 = pneg %p75
        $region22: #{deep_cnn_forward.3} parent=15 // pred_check_branch
          %162 = sbr.rel (%p160) target = $region24
        $region23: #{deep_cnn_forward.3} parent=15 // pred_region
          %s163 = sand.u32 %s65, 1
          %s164 = scalar_lea.sflag [#allocation4], %s163
          %s165 = sand.u32 %s65, 1
          %s166 = smul.addr %s165, 5120
          %s167 = scalar_lea.vmem [#allocation3], %s166
          %s168 = smul.u32 640, %s23
          %s169 = smul.u32 2, %s22
          %s171 = ssub.s32 81920, 81920
          %172 = vsyncadd %s164, %s171
          %s173 = smul.addr %s168, 4
          %s174 = sadd.s32 %s169, %s173
          %s175 = smul.addr %s174, 64
          %s176 = scalar_lea.hbm %s1, %s175
          %s177 = sshll.u32 %s167, 4
          %s178 = int_to_ptr.vmem [resolvable:$true] %s177
          %183 = dma.hbm_to_vmem [thread:$0]  %s176, 81920, %s178, %s164, 256, 128, 8
        $region24: #{deep_cnn_forward.3} parent=15 // pred_fallthru
          _
        // Predicated region
        $region25: #{deep_cnn_forward.3} parent=15 // pred_check
          %p184 = pneg %p101
        $region26: #{deep_cnn_forward.3} parent=15 // pred_check_branch
          %186 = sbr.rel (%p184) target = $region28
        $region27: #{deep_cnn_forward.3} parent=15 // pred_region
          %s187 = sand.u32 %s91, 1
          %s188 = scalar_lea.sflag [#allocation6], %s187
          %s189 = sand.u32 %s91, 1
          %s190 = smul.addr %s189, 2
          %s191 = scalar_lea.vmem [#allocation5], %s190
          %s192 = smul.u32 2, %s22
          %s194 = ssub.s32 32, 32
          %195 = vsyncadd %s188, %s194
          %s196 = smul.addr %s192, 16
          %s197 = scalar_lea.hbm %s2, %s196
          %s199 = sshll.u32 %s191, 4
          %s200 = int_to_ptr.vmem [resolvable:$true] %s199
          %202 = dma.hbm_to_vmem [thread:$0]  %s197, 32, %s200, %s188
        $region28: #{deep_cnn_forward.3} parent=15 // pred_fallthru
          _
      $region16: #{deep_cnn_forward.3} parent=5 // pred_fallthru
        _
      %p203 = scmp.le.s32.totalorder 1, %s15
      %p204 = scmp.lt.s32.totalorder %s15, 5
      %p205 = pnand %p203, %p204
      %p206 = pneg %p205
      // Predicated region
      $region29: #{deep_cnn_forward.3} parent=5 // pred_check
        _
      $region30: #{deep_cnn_forward.3} parent=5 // pred_check_branch
        %208 = sbr.rel (%p205) target = $region32
      $region31: #{deep_cnn_forward.3} parent=5 // pred_region
        %s209 = ssub.s32 %s15, 1
        %s210 = sand.u32 %s68, 1
        %s211 = scalar_lea.sflag [#allocation4], %s210
        %s212 = sand.u32 %s68, 1
        %s213 = smul.addr %s212, 5120
        %s214 = scalar_lea.vmem [#allocation3], %s213
        // Predicated region
        $region33: #{deep_cnn_forward.3} parent=31 // pred_check
          %p215 = pneg %p81
        $region34: #{deep_cnn_forward.3} parent=31 // pred_check_branch
          %217 = sbr.rel (%p215) target = $region36
        $region35: #{deep_cnn_forward.3} parent=31 // pred_region
          %218 = dma.done %s211, 81920
        $region36: #{deep_cnn_forward.3} parent=31 // pred_fallthru
          _
        %s219 = sand.u32 %s94, 1
        %s220 = scalar_lea.sflag [#allocation6], %s219
        %s221 = sand.u32 %s94, 1
        %s222 = smul.addr %s221, 2
        %s223 = scalar_lea.vmem [#allocation5], %s222
        // Predicated region
        $region37: #{deep_cnn_forward.3} parent=31 // pred_check
          %p224 = pneg %p107
        $region38: #{deep_cnn_forward.3} parent=31 // pred_check_branch
          %226 = sbr.rel (%p224) target = $region40
        $region39: #{deep_cnn_forward.3} parent=31 // pred_region
          %227 = dma.done %s220, 32
        $region40: #{deep_cnn_forward.3} parent=31 // pred_fallthru
          _
        %s228 = smul.u32 40, %s25
        %p229 = scmp.lt.s32.totalorder %s228, 79
        %s230 = scalar_select %p229, %s228, 79
        %s231 = scalar_lea.vmem %s0, %s230
        %p232 = pneg %p53
        %p233 = pneg %p50
        %s234 = sand.u32 %s68, 1
        %s235 = scalar_lea.sflag [#allocation4], %s234
        %s236 = sand.u32 %s68, 1
        %s237 = smul.addr %s236, 5120
        %s238 = scalar_lea.vmem [#allocation3], %s237
        %p239 = pneg %p81
        %p240 = pneg %p78
        %s241 = sand.u32 %s94, 1
        %s242 = scalar_lea.sflag [#allocation6], %s241
        %s243 = sand.u32 %s94, 1
        %s244 = smul.addr %s243, 2
        %s245 = scalar_lea.vmem [#allocation5], %s244
        %p246 = pneg %p107
        %p247 = pneg %p104
        %p248 = pneg %p133
        %p249 = pneg %p130
        %s250 = smul.u32 2, %s24
        %p251 = scmp.lt.s32.totalorder %s250, 3
        %s252 = scalar_select %p251, %s250, 3
        %s253 = smul.addr %s252, 2
        %s254 = scalar_lea.vmem %s3, %s253
        %s255 = smul.u32 40, %s25
        %p256 = scmp.lt.s32.totalorder %s255, 79
        %s257 = scalar_select %p256, %s255, 79
        %s258 = scalar_lea.vmem %s0, %s257
        %s259 = smul.u32 40, %s25
        %s260 = smul.u32 640, %s25
        %s261 = smul.u32 2, %s24
        %s262 = smul.u32 2, %s24
        %s263 = smul.u32 2, %s24
        %p264 = scmp.lt.s32.totalorder %s263, 3
        %s265 = scalar_select %p264, %s263, 3
        %s266 = smul.addr %s265, 2
        %s267 = scalar_lea.vmem %s3, %s266
        %s268 = smul.u32 2, %s24
        %p269 = scmp.eq.s32.totalorder %s25, 0
        // Predicated region
        $region41: #{deep_cnn_forward.3} parent=31 // pred_check
          %p270 = pneg %p269
        $region42: #{deep_cnn_forward.3} parent=31 // pred_check_branch
          %272 = sbr.rel (%p270) target = $region44
        $region43: #{deep_cnn_forward.3} parent=31 // pred_region
          %273 = vst [vmem:[#allocation2] sm:$0xf] 0.0
        $region44: #{deep_cnn_forward.3} parent=31 // pred_fallthru
          _
        %v274 = vld [vmem:[#allocation2] sm:$0xf]
        %v275 = vld [vmem:[%s258] sm:$0xff]
        %v276 = vld [vmem:[%s258 + $0x8] sm:$0xff]
        %v277 = vld [vmem:[%s258 + $0x10] sm:$0xff]
        %v278 = vld [vmem:[%s258 + $0x18] sm:$0xff]
        %v279 = vld [vmem:[%s258 + $0x20] sm:$0xff]
        %v280 = vld [vmem:[%s214] sm:$0xff]
        %v281 = vld [vmem:[%s214 + $0x8] sm:$0xff]
        %v282 = vld [vmem:[%s214 + $0x10] sm:$0xff]
        %v283 = vld [vmem:[%s214 + $0x18] sm:$0xff]
        %v284 = vld [vmem:[%s214 + $0x20] sm:$0xff]
        %v285 = vld [vmem:[%s214 + $0x28] sm:$0xff]
        %v286 = vld [vmem:[%s214 + $0x30] sm:$0xff]
        %v287 = vld [vmem:[%s214 + $0x38] sm:$0xff]
        %v288 = vld [vmem:[%s214 + $0x40] sm:$0xff]
        %v289 = vld [vmem:[%s214 + $0x48] sm:$0xff]
        %v290 = vld [vmem:[%s214 + $0x50] sm:$0xff]
        %v291 = vld [vmem:[%s214 + $0x58] sm:$0xff]
        %v292 = vld [vmem:[%s214 + $0x60] sm:$0xff]
        %v293 = vld [vmem:[%s214 + $0x68] sm:$0xff]
        %v294 = vld [vmem:[%s214 + $0x70] sm:$0xff]
        %v295 = vld [vmem:[%s214 + $0x78] sm:$0xff]
        %v296 = vld [vmem:[%s214 + $0x80] sm:$0xff]
        %v297 = vld [vmem:[%s214 + $0x88] sm:$0xff]
        %v298 = vld [vmem:[%s214 + $0x90] sm:$0xff]
        %v299 = vld [vmem:[%s214 + $0x98] sm:$0xff]
        %v300 = vld [vmem:[%s214 + $0xa0] sm:$0xff]
        %v301 = vld [vmem:[%s214 + $0xa8] sm:$0xff]
        %v302 = vld [vmem:[%s214 + $0xb0] sm:$0xff]
        %v303 = vld [vmem:[%s214 + $0xb8] sm:$0xff]
        %v304 = vld [vmem:[%s214 + $0xc0] sm:$0xff]
        %v305 = vld [vmem:[%s214 + $0xc8] sm:$0xff]
        %v306 = vld [vmem:[%s214 + $0xd0] sm:$0xff]
        %v307 = vld [vmem:[%s214 + $0xd8] sm:$0xff]
        %v308 = vld [vmem:[%s214 + $0xe0] sm:$0xff]
        %v309 = vld [vmem:[%s214 + $0xe8] sm:$0xff]
        %v310 = vld [vmem:[%s214 + $0xf0] sm:$0xff]
        %v311 = vld [vmem:[%s214 + $0xf8] sm:$0xff]
        %v312 = vld [vmem:[%s214 + $0x100] sm:$0xff]
        %v313 = vld [vmem:[%s214 + $0x108] sm:$0xff]
        %v314 = vld [vmem:[%s214 + $0x110] sm:$0xff]
        %v315 = vld [vmem:[%s214 + $0x118] sm:$0xff]
        %v316 = vld [vmem:[%s214 + $0x120] sm:$0xff]
        %v317 = vld [vmem:[%s214 + $0x128] sm:$0xff]
        %v318 = vld [vmem:[%s214 + $0x130] sm:$0xff]
        %v319 = vld [vmem:[%s214 + $0x138] sm:$0xff]
        %v320 = vld [vmem:[%s214 + $0x140] sm:$0xff]
        %v321 = vld [vmem:[%s214 + $0x148] sm:$0xff]
        %v322 = vld [vmem:[%s214 + $0x150] sm:$0xff]
        %v323 = vld [vmem:[%s214 + $0x158] sm:$0xff]
        %v324 = vld [vmem:[%s214 + $0x160] sm:$0xff]
        %v325 = vld [vmem:[%s214 + $0x168] sm:$0xff]
        %v326 = vld [vmem:[%s214 + $0x170] sm:$0xff]
        %v327 = vld [vmem:[%s214 + $0x178] sm:$0xff]
        %v328 = vld [vmem:[%s214 + $0x180] sm:$0xff]
        %v329 = vld [vmem:[%s214 + $0x188] sm:$0xff]
        %v330 = vld [vmem:[%s214 + $0x190] sm:$0xff]
        %v331 = vld [vmem:[%s214 + $0x198] sm:$0xff]
        %v332 = vld [vmem:[%s214 + $0x1a0] sm:$0xff]
        %v333 = vld [vmem:[%s214 + $0x1a8] sm:$0xff]
        %v334 = vld [vmem:[%s214 + $0x1b0] sm:$0xff]
        %v335 = vld [vmem:[%s214 + $0x1b8] sm:$0xff]
        %v336 = vld [vmem:[%s214 + $0x1c0] sm:$0xff]
        %v337 = vld [vmem:[%s214 + $0x1c8] sm:$0xff]
        %v338 = vld [vmem:[%s214 + $0x1d0] sm:$0xff]
        %v339 = vld [vmem:[%s214 + $0x1d8] sm:$0xff]
        %v340 = vld [vmem:[%s214 + $0x1e0] sm:$0xff]
        %v341 = vld [vmem:[%s214 + $0x1e8] sm:$0xff]
        %v342 = vld [vmem:[%s214 + $0x1f0] sm:$0xff]
        %v343 = vld [vmem:[%s214 + $0x1f8] sm:$0xff]
        %v344 = vld [vmem:[%s214 + $0x200] sm:$0xff]
        %v345 = vld [vmem:[%s214 + $0x208] sm:$0xff]
        %v346 = vld [vmem:[%s214 + $0x210] sm:$0xff]
        %v347 = vld [vmem:[%s214 + $0x218] sm:$0xff]
        %v348 = vld [vmem:[%s214 + $0x220] sm:$0xff]
        %v349 = vld [vmem:[%s214 + $0x228] sm:$0xff]
        %v350 = vld [vmem:[%s214 + $0x230] sm:$0xff]
        %v351 = vld [vmem:[%s214 + $0x238] sm:$0xff]
        %v352 = vld [vmem:[%s214 + $0x240] sm:$0xff]
        %v353 = vld [vmem:[%s214 + $0x248] sm:$0xff]
        %v354 = vld [vmem:[%s214 + $0x250] sm:$0xff]
        %v355 = vld [vmem:[%s214 + $0x258] sm:$0xff]
        %v356 = vld [vmem:[%s214 + $0x260] sm:$0xff]
        %v357 = vld [vmem:[%s214 + $0x268] sm:$0xff]
        %v358 = vld [vmem:[%s214 + $0x270] sm:$0xff]
        %v359 = vld [vmem:[%s214 + $0x278] sm:$0xff]
        %v360 = vld [vmem:[%s214 + $0x280] sm:$0xff]
        %v361 = vld [vmem:[%s214 + $0x288] sm:$0xff]
        %v362 = vld [vmem:[%s214 + $0x290] sm:$0xff]
        %v363 = vld [vmem:[%s214 + $0x298] sm:$0xff]
        %v364 = vld [vmem:[%s214 + $0x2a0] sm:$0xff]
        %v365 = vld [vmem:[%s214 + $0x2a8] sm:$0xff]
        %v366 = vld [vmem:[%s214 + $0x2b0] sm:$0xff]
        %v367 = vld [vmem:[%s214 + $0x2b8] sm:$0xff]
        %v368 = vld [vmem:[%s214 + $0x2c0] sm:$0xff]
        %v369 = vld [vmem:[%s214 + $0x2c8] sm:$0xff]
        %v370 = vld [vmem:[%s214 + $0x2d0] sm:$0xff]
        %v371 = vld [vmem:[%s214 + $0x2d8] sm:$0xff]
        %v372 = vld [vmem:[%s214 + $0x2e0] sm:$0xff]
        %v373 = vld [vmem:[%s214 + $0x2e8] sm:$0xff]
        %v374 = vld [vmem:[%s214 + $0x2f0] sm:$0xff]
        %v375 = vld [vmem:[%s214 + $0x2f8] sm:$0xff]
        %v376 = vld [vmem:[%s214 + $0x300] sm:$0xff]
        %v377 = vld [vmem:[%s214 + $0x308] sm:$0xff]
        %v378 = vld [vmem:[%s214 + $0x310] sm:$0xff]
        %v379 = vld [vmem:[%s214 + $0x318] sm:$0xff]
        %v380 = vld [vmem:[%s214 + $0x320] sm:$0xff]
        %v381 = vld [vmem:[%s214 + $0x328] sm:$0xff]
        %v382 = vld [vmem:[%s214 + $0x330] sm:$0xff]
        %v383 = vld [vmem:[%s214 + $0x338] sm:$0xff]
        %v384 = vld [vmem:[%s214 + $0x340] sm:$0xff]
        %v385 = vld [vmem:[%s214 + $0x348] sm:$0xff]
        %v386 = vld [vmem:[%s214 + $0x350] sm:$0xff]
        %v387 = vld [vmem:[%s214 + $0x358] sm:$0xff]
        %v388 = vld [vmem:[%s214 + $0x360] sm:$0xff]
        %v389 = vld [vmem:[%s214 + $0x368] sm:$0xff]
        %v390 = vld [vmem:[%s214 + $0x370] sm:$0xff]
        %v391 = vld [vmem:[%s214 + $0x378] sm:$0xff]
        %v392 = vld [vmem:[%s214 + $0x380] sm:$0xff]
        %v393 = vld [vmem:[%s214 + $0x388] sm:$0xff]
        %v394 = vld [vmem:[%s214 + $0x390] sm:$0xff]
        %v395 = vld [vmem:[%s214 + $0x398] sm:$0xff]
        %v396 = vld [vmem:[%s214 + $0x3a0] sm:$0xff]
        %v397 = vld [vmem:[%s214 + $0x3a8] sm:$0xff]
        %v398 = vld [vmem:[%s214 + $0x3b0] sm:$0xff]
        %v399 = vld [vmem:[%s214 + $0x3b8] sm:$0xff]
        %v400 = vld [vmem:[%s214 + $0x3c0] sm:$0xff]
        %v401 = vld [vmem:[%s214 + $0x3c8] sm:$0xff]
        %v402 = vld [vmem:[%s214 + $0x3d0] sm:$0xff]
        %v403 = vld [vmem:[%s214 + $0x3d8] sm:$0xff]
        %v404 = vld [vmem:[%s214 + $0x3e0] sm:$0xff]
        %v405 = vld [vmem:[%s214 + $0x3e8] sm:$0xff]
        %v406 = vld [vmem:[%s214 + $0x3f0] sm:$0xff]
        %v407 = vld [vmem:[%s214 + $0x3f8] sm:$0xff]
        %v408 = vld [vmem:[%s214 + $0x400] sm:$0xff]
        %v409 = vld [vmem:[%s214 + $0x408] sm:$0xff]
        %v410 = vld [vmem:[%s214 + $0x410] sm:$0xff]
        %v411 = vld [vmem:[%s214 + $0x418] sm:$0xff]
        %v412 = vld [vmem:[%s214 + $0x420] sm:$0xff]
        %v413 = vld [vmem:[%s214 + $0x428] sm:$0xff]
        %v414 = vld [vmem:[%s214 + $0x430] sm:$0xff]
        %v415 = vld [vmem:[%s214 + $0x438] sm:$0xff]
        %v416 = vld [vmem:[%s214 + $0x440] sm:$0xff]
        %v417 = vld [vmem:[%s214 + $0x448] sm:$0xff]
        %v418 = vld [vmem:[%s214 + $0x450] sm:$0xff]
        %v419 = vld [vmem:[%s214 + $0x458] sm:$0xff]
        %v420 = vld [vmem:[%s214 + $0x460] sm:$0xff]
        %v421 = vld [vmem:[%s214 + $0x468] sm:$0xff]
        %v422 = vld [vmem:[%s214 + $0x470] sm:$0xff]
        %v423 = vld [vmem:[%s214 + $0x478] sm:$0xff]
        %v424 = vld [vmem:[%s214 + $0x480] sm:$0xff]
        %v425 = vld [vmem:[%s214 + $0x488] sm:$0xff]
        %v426 = vld [vmem:[%s214 + $0x490] sm:$0xff]
        %v427 = vld [vmem:[%s214 + $0x498] sm:$0xff]
        %v428 = vld [vmem:[%s214 + $0x4a0] sm:$0xff]
        %v429 = vld [vmem:[%s214 + $0x4a8] sm:$0xff]
        %v430 = vld [vmem:[%s214 + $0x4b0] sm:$0xff]
        %v431 = vld [vmem:[%s214 + $0x4b8] sm:$0xff]
        %v432 = vld [vmem:[%s214 + $0x4c0] sm:$0xff]
        %v433 = vld [vmem:[%s214 + $0x4c8] sm:$0xff]
        %v434 = vld [vmem:[%s214 + $0x4d0] sm:$0xff]
        %v435 = vld [vmem:[%s214 + $0x4d8] sm:$0xff]
        %v436 = vld [vmem:[%s214 + $0x4e0] sm:$0xff]
        %v437 = vld [vmem:[%s214 + $0x4e8] sm:$0xff]
        %v438 = vld [vmem:[%s214 + $0x4f0] sm:$0xff]
        %v439 = vld [vmem:[%s214 + $0x4f8] sm:$0xff]
        %v440 = vld [vmem:[%s214 + $0x500] sm:$0xff]
        %v441 = vld [vmem:[%s214 + $0x508] sm:$0xff]
        %v442 = vld [vmem:[%s214 + $0x510] sm:$0xff]
        %v443 = vld [vmem:[%s214 + $0x518] sm:$0xff]
        %v444 = vld [vmem:[%s214 + $0x520] sm:$0xff]
        %v445 = vld [vmem:[%s214 + $0x528] sm:$0xff]
        %v446 = vld [vmem:[%s214 + $0x530] sm:$0xff]
        %v447 = vld [vmem:[%s214 + $0x538] sm:$0xff]
        %v448 = vld [vmem:[%s214 + $0x540] sm:$0xff]
        %v449 = vld [vmem:[%s214 + $0x548] sm:$0xff]
        %v450 = vld [vmem:[%s214 + $0x550] sm:$0xff]
        %v451 = vld [vmem:[%s214 + $0x558] sm:$0xff]
        %v452 = vld [vmem:[%s214 + $0x560] sm:$0xff]
        %v453 = vld [vmem:[%s214 + $0x568] sm:$0xff]
        %v454 = vld [vmem:[%s214 + $0x570] sm:$0xff]
        %v455 = vld [vmem:[%s214 + $0x578] sm:$0xff]
        %v456 = vld [vmem:[%s214 + $0x580] sm:$0xff]
        %v457 = vld [vmem:[%s214 + $0x588] sm:$0xff]
        %v458 = vld [vmem:[%s214 + $0x590] sm:$0xff]
        %v459 = vld [vmem:[%s214 + $0x598] sm:$0xff]
        %v460 = vld [vmem:[%s214 + $0x5a0] sm:$0xff]
        %v461 = vld [vmem:[%s214 + $0x5a8] sm:$0xff]
        %v462 = vld [vmem:[%s214 + $0x5b0] sm:$0xff]
        %v463 = vld [vmem:[%s214 + $0x5b8] sm:$0xff]
        %v464 = vld [vmem:[%s214 + $0x5c0] sm:$0xff]
        %v465 = vld [vmem:[%s214 + $0x5c8] sm:$0xff]
        %v466 = vld [vmem:[%s214 + $0x5d0] sm:$0xff]
        %v467 = vld [vmem:[%s214 + $0x5d8] sm:$0xff]
        %v468 = vld [vmem:[%s214 + $0x5e0] sm:$0xff]
        %v469 = vld [vmem:[%s214 + $0x5e8] sm:$0xff]
        %v470 = vld [vmem:[%s214 + $0x5f0] sm:$0xff]
        %v471 = vld [vmem:[%s214 + $0x5f8] sm:$0xff]
        %v472 = vld [vmem:[%s214 + $0x600] sm:$0xff]
        %v473 = vld [vmem:[%s214 + $0x608] sm:$0xff]
        %v474 = vld [vmem:[%s214 + $0x610] sm:$0xff]
        %v475 = vld [vmem:[%s214 + $0x618] sm:$0xff]
        %v476 = vld [vmem:[%s214 + $0x620] sm:$0xff]
        %v477 = vld [vmem:[%s214 + $0x628] sm:$0xff]
        %v478 = vld [vmem:[%s214 + $0x630] sm:$0xff]
        %v479 = vld [vmem:[%s214 + $0x638] sm:$0xff]
        %v480 = vld [vmem:[%s214 + $0x640] sm:$0xff]
        %v481 = vld [vmem:[%s214 + $0x648] sm:$0xff]
        %v482 = vld [vmem:[%s214 + $0x650] sm:$0xff]
        %v483 = vld [vmem:[%s214 + $0x658] sm:$0xff]
        %v484 = vld [vmem:[%s214 + $0x660] sm:$0xff]
        %v485 = vld [vmem:[%s214 + $0x668] sm:$0xff]
        %v486 = vld [vmem:[%s214 + $0x670] sm:$0xff]
        %v487 = vld [vmem:[%s214 + $0x678] sm:$0xff]
        %v488 = vld [vmem:[%s214 + $0x680] sm:$0xff]
        %v489 = vld [vmem:[%s214 + $0x688] sm:$0xff]
        %v490 = vld [vmem:[%s214 + $0x690] sm:$0xff]
        %v491 = vld [vmem:[%s214 + $0x698] sm:$0xff]
        %v492 = vld [vmem:[%s214 + $0x6a0] sm:$0xff]
        %v493 = vld [vmem:[%s214 + $0x6a8] sm:$0xff]
        %v494 = vld [vmem:[%s214 + $0x6b0] sm:$0xff]
        %v495 = vld [vmem:[%s214 + $0x6b8] sm:$0xff]
        %v496 = vld [vmem:[%s214 + $0x6c0] sm:$0xff]
        %v497 = vld [vmem:[%s214 + $0x6c8] sm:$0xff]
        %v498 = vld [vmem:[%s214 + $0x6d0] sm:$0xff]
        %v499 = vld [vmem:[%s214 + $0x6d8] sm:$0xff]
        %v500 = vld [vmem:[%s214 + $0x6e0] sm:$0xff]
        %v501 = vld [vmem:[%s214 + $0x6e8] sm:$0xff]
        %v502 = vld [vmem:[%s214 + $0x6f0] sm:$0xff]
        %v503 = vld [vmem:[%s214 + $0x6f8] sm:$0xff]
        %v504 = vld [vmem:[%s214 + $0x700] sm:$0xff]
        %v505 = vld [vmem:[%s214 + $0x708] sm:$0xff]
        %v506 = vld [vmem:[%s214 + $0x710] sm:$0xff]
        %v507 = vld [vmem:[%s214 + $0x718] sm:$0xff]
        %v508 = vld [vmem:[%s214 + $0x720] sm:$0xff]
        %v509 = vld [vmem:[%s214 + $0x728] sm:$0xff]
        %v510 = vld [vmem:[%s214 + $0x730] sm:$0xff]
        %v511 = vld [vmem:[%s214 + $0x738] sm:$0xff]
        %v512 = vld [vmem:[%s214 + $0x740] sm:$0xff]
        %v513 = vld [vmem:[%s214 + $0x748] sm:$0xff]
        %v514 = vld [vmem:[%s214 + $0x750] sm:$0xff]
        %v515 = vld [vmem:[%s214 + $0x758] sm:$0xff]
        %v516 = vld [vmem:[%s214 + $0x760] sm:$0xff]
        %v517 = vld [vmem:[%s214 + $0x768] sm:$0xff]
        %v518 = vld [vmem:[%s214 + $0x770] sm:$0xff]
        %v519 = vld [vmem:[%s214 + $0x778] sm:$0xff]
        %v520 = vld [vmem:[%s214 + $0x780] sm:$0xff]
        %v521 = vld [vmem:[%s214 + $0x788] sm:$0xff]
        %v522 = vld [vmem:[%s214 + $0x790] sm:$0xff]
        %v523 = vld [vmem:[%s214 + $0x798] sm:$0xff]
        %v524 = vld [vmem:[%s214 + $0x7a0] sm:$0xff]
        %v525 = vld [vmem:[%s214 + $0x7a8] sm:$0xff]
        %v526 = vld [vmem:[%s214 + $0x7b0] sm:$0xff]
        %v527 = vld [vmem:[%s214 + $0x7b8] sm:$0xff]
        %v528 = vld [vmem:[%s214 + $0x7c0] sm:$0xff]
        %v529 = vld [vmem:[%s214 + $0x7c8] sm:$0xff]
        %v530 = vld [vmem:[%s214 + $0x7d0] sm:$0xff]
        %v531 = vld [vmem:[%s214 + $0x7d8] sm:$0xff]
        %v532 = vld [vmem:[%s214 + $0x7e0] sm:$0xff]
        %v533 = vld [vmem:[%s214 + $0x7e8] sm:$0xff]
        %v534 = vld [vmem:[%s214 + $0x7f0] sm:$0xff]
        %v535 = vld [vmem:[%s214 + $0x7f8] sm:$0xff]
        %v536 = vld [vmem:[%s214 + $0x800] sm:$0xff]
        %v537 = vld [vmem:[%s214 + $0x808] sm:$0xff]
        %v538 = vld [vmem:[%s214 + $0x810] sm:$0xff]
        %v539 = vld [vmem:[%s214 + $0x818] sm:$0xff]
        %v540 = vld [vmem:[%s214 + $0x820] sm:$0xff]
        %v541 = vld [vmem:[%s214 + $0x828] sm:$0xff]
        %v542 = vld [vmem:[%s214 + $0x830] sm:$0xff]
        %v543 = vld [vmem:[%s214 + $0x838] sm:$0xff]
        %v544 = vld [vmem:[%s214 + $0x840] sm:$0xff]
        %v545 = vld [vmem:[%s214 + $0x848] sm:$0xff]
        %v546 = vld [vmem:[%s214 + $0x850] sm:$0xff]
        %v547 = vld [vmem:[%s214 + $0x858] sm:$0xff]
        %v548 = vld [vmem:[%s214 + $0x860] sm:$0xff]
        %v549 = vld [vmem:[%s214 + $0x868] sm:$0xff]
        %v550 = vld [vmem:[%s214 + $0x870] sm:$0xff]
        %v551 = vld [vmem:[%s214 + $0x878] sm:$0xff]
        %v552 = vld [vmem:[%s214 + $0x880] sm:$0xff]
        %v553 = vld [vmem:[%s214 + $0x888] sm:$0xff]
        %v554 = vld [vmem:[%s214 + $0x890] sm:$0xff]
        %v555 = vld [vmem:[%s214 + $0x898] sm:$0xff]
        %v556 = vld [vmem:[%s214 + $0x8a0] sm:$0xff]
        %v557 = vld [vmem:[%s214 + $0x8a8] sm:$0xff]
        %v558 = vld [vmem:[%s214 + $0x8b0] sm:$0xff]
        %v559 = vld [vmem:[%s214 + $0x8b8] sm:$0xff]
        %v560 = vld [vmem:[%s214 + $0x8c0] sm:$0xff]
        %v561 = vld [vmem:[%s214 + $0x8c8] sm:$0xff]
        %v562 = vld [vmem:[%s214 + $0x8d0] sm:$0xff]
        %v563 = vld [vmem:[%s214 + $0x8d8] sm:$0xff]
        %v564 = vld [vmem:[%s214 + $0x8e0] sm:$0xff]
        %v565 = vld [vmem:[%s214 + $0x8e8] sm:$0xff]
        %v566 = vld [vmem:[%s214 + $0x8f0] sm:$0xff]
        %v567 = vld [vmem:[%s214 + $0x8f8] sm:$0xff]
        %v568 = vld [vmem:[%s214 + $0x900] sm:$0xff]
        %v569 = vld [vmem:[%s214 + $0x908] sm:$0xff]
        %v570 = vld [vmem:[%s214 + $0x910] sm:$0xff]
        %v571 = vld [vmem:[%s214 + $0x918] sm:$0xff]
        %v572 = vld [vmem:[%s214 + $0x920] sm:$0xff]
        %v573 = vld [vmem:[%s214 + $0x928] sm:$0xff]
        %v574 = vld [vmem:[%s214 + $0x930] sm:$0xff]
        %v575 = vld [vmem:[%s214 + $0x938] sm:$0xff]
        %v576 = vld [vmem:[%s214 + $0x940] sm:$0xff]
        %v577 = vld [vmem:[%s214 + $0x948] sm:$0xff]
        %v578 = vld [vmem:[%s214 + $0x950] sm:$0xff]
        %v579 = vld [vmem:[%s214 + $0x958] sm:$0xff]
        %v580 = vld [vmem:[%s214 + $0x960] sm:$0xff]
        %v581 = vld [vmem:[%s214 + $0x968] sm:$0xff]
        %v582 = vld [vmem:[%s214 + $0x970] sm:$0xff]
        %v583 = vld [vmem:[%s214 + $0x978] sm:$0xff]
        %v584 = vld [vmem:[%s214 + $0x980] sm:$0xff]
        %v585 = vld [vmem:[%s214 + $0x988] sm:$0xff]
        %v586 = vld [vmem:[%s214 + $0x990] sm:$0xff]
        %v587 = vld [vmem:[%s214 + $0x998] sm:$0xff]
        %v588 = vld [vmem:[%s214 + $0x9a0] sm:$0xff]
        %v589 = vld [vmem:[%s214 + $0x9a8] sm:$0xff]
        %v590 = vld [vmem:[%s214 + $0x9b0] sm:$0xff]
        %v591 = vld [vmem:[%s214 + $0x9b8] sm:$0xff]
        %v592 = vld [vmem:[%s214 + $0x9c0] sm:$0xff]
        %v593 = vld [vmem:[%s214 + $0x9c8] sm:$0xff]
        %v594 = vld [vmem:[%s214 + $0x9d0] sm:$0xff]
        %v595 = vld [vmem:[%s214 + $0x9d8] sm:$0xff]
        %v596 = vld [vmem:[%s214 + $0x9e0] sm:$0xff]
        %v597 = vld [vmem:[%s214 + $0x9e8] sm:$0xff]
        %v598 = vld [vmem:[%s214 + $0x9f0] sm:$0xff]
        %v599 = vld [vmem:[%s214 + $0x9f8] sm:$0xff]
        %v600 = vld [vmem:[%s214 + $0xa00] sm:$0xff]
        %v601 = vld [vmem:[%s214 + $0xa08] sm:$0xff]
        %v602 = vld [vmem:[%s214 + $0xa10] sm:$0xff]
        %v603 = vld [vmem:[%s214 + $0xa18] sm:$0xff]
        %v604 = vld [vmem:[%s214 + $0xa20] sm:$0xff]
        %v605 = vld [vmem:[%s214 + $0xa28] sm:$0xff]
        %v606 = vld [vmem:[%s214 + $0xa30] sm:$0xff]
        %v607 = vld [vmem:[%s214 + $0xa38] sm:$0xff]
        %v608 = vld [vmem:[%s214 + $0xa40] sm:$0xff]
        %v609 = vld [vmem:[%s214 + $0xa48] sm:$0xff]
        %v610 = vld [vmem:[%s214 + $0xa50] sm:$0xff]
        %v611 = vld [vmem:[%s214 + $0xa58] sm:$0xff]
        %v612 = vld [vmem:[%s214 + $0xa60] sm:$0xff]
        %v613 = vld [vmem:[%s214 + $0xa68] sm:$0xff]
        %v614 = vld [vmem:[%s214 + $0xa70] sm:$0xff]
        %v615 = vld [vmem:[%s214 + $0xa78] sm:$0xff]
        %v616 = vld [vmem:[%s214 + $0xa80] sm:$0xff]
        %v617 = vld [vmem:[%s214 + $0xa88] sm:$0xff]
        %v618 = vld [vmem:[%s214 + $0xa90] sm:$0xff]
        %v619 = vld [vmem:[%s214 + $0xa98] sm:$0xff]
        %v620 = vld [vmem:[%s214 + $0xaa0] sm:$0xff]
        %v621 = vld [vmem:[%s214 + $0xaa8] sm:$0xff]
        %v622 = vld [vmem:[%s214 + $0xab0] sm:$0xff]
        %v623 = vld [vmem:[%s214 + $0xab8] sm:$0xff]
        %v624 = vld [vmem:[%s214 + $0xac0] sm:$0xff]
        %v625 = vld [vmem:[%s214 + $0xac8] sm:$0xff]
        %v626 = vld [vmem:[%s214 + $0xad0] sm:$0xff]
        %v627 = vld [vmem:[%s214 + $0xad8] sm:$0xff]
        %v628 = vld [vmem:[%s214 + $0xae0] sm:$0xff]
        %v629 = vld [vmem:[%s214 + $0xae8] sm:$0xff]
        %v630 = vld [vmem:[%s214 + $0xaf0] sm:$0xff]
        %v631 = vld [vmem:[%s214 + $0xaf8] sm:$0xff]
        %v632 = vld [vmem:[%s214 + $0xb00] sm:$0xff]
        %v633 = vld [vmem:[%s214 + $0xb08] sm:$0xff]
        %v634 = vld [vmem:[%s214 + $0xb10] sm:$0xff]
        %v635 = vld [vmem:[%s214 + $0xb18] sm:$0xff]
        %v636 = vld [vmem:[%s214 + $0xb20] sm:$0xff]
        %v637 = vld [vmem:[%s214 + $0xb28] sm:$0xff]
        %v638 = vld [vmem:[%s214 + $0xb30] sm:$0xff]
        %v639 = vld [vmem:[%s214 + $0xb38] sm:$0xff]
        %v640 = vld [vmem:[%s214 + $0xb40] sm:$0xff]
        %v641 = vld [vmem:[%s214 + $0xb48] sm:$0xff]
        %v642 = vld [vmem:[%s214 + $0xb50] sm:$0xff]
        %v643 = vld [vmem:[%s214 + $0xb58] sm:$0xff]
        %v644 = vld [vmem:[%s214 + $0xb60] sm:$0xff]
        %v645 = vld [vmem:[%s214 + $0xb68] sm:$0xff]
        %v646 = vld [vmem:[%s214 + $0xb70] sm:$0xff]
        %v647 = vld [vmem:[%s214 + $0xb78] sm:$0xff]
        %v648 = vld [vmem:[%s214 + $0xb80] sm:$0xff]
        %v649 = vld [vmem:[%s214 + $0xb88] sm:$0xff]
        %v650 = vld [vmem:[%s214 + $0xb90] sm:$0xff]
        %v651 = vld [vmem:[%s214 + $0xb98] sm:$0xff]
        %v652 = vld [vmem:[%s214 + $0xba0] sm:$0xff]
        %v653 = vld [vmem:[%s214 + $0xba8] sm:$0xff]
        %v654 = vld [vmem:[%s214 + $0xbb0] sm:$0xff]
        %v655 = vld [vmem:[%s214 + $0xbb8] sm:$0xff]
        %v656 = vld [vmem:[%s214 + $0xbc0] sm:$0xff]
        %v657 = vld [vmem:[%s214 + $0xbc8] sm:$0xff]
        %v658 = vld [vmem:[%s214 + $0xbd0] sm:$0xff]
        %v659 = vld [vmem:[%s214 + $0xbd8] sm:$0xff]
        %v660 = vld [vmem:[%s214 + $0xbe0] sm:$0xff]
        %v661 = vld [vmem:[%s214 + $0xbe8] sm:$0xff]
        %v662 = vld [vmem:[%s214 + $0xbf0] sm:$0xff]
        %v663 = vld [vmem:[%s214 + $0xbf8] sm:$0xff]
        %v664 = vld [vmem:[%s214 + $0xc00] sm:$0xff]
        %v665 = vld [vmem:[%s214 + $0xc08] sm:$0xff]
        %v666 = vld [vmem:[%s214 + $0xc10] sm:$0xff]
        %v667 = vld [vmem:[%s214 + $0xc18] sm:$0xff]
        %v668 = vld [vmem:[%s214 + $0xc20] sm:$0xff]
        %v669 = vld [vmem:[%s214 + $0xc28] sm:$0xff]
        %v670 = vld [vmem:[%s214 + $0xc30] sm:$0xff]
        %v671 = vld [vmem:[%s214 + $0xc38] sm:$0xff]
        %v672 = vld [vmem:[%s214 + $0xc40] sm:$0xff]
        %v673 = vld [vmem:[%s214 + $0xc48] sm:$0xff]
        %v674 = vld [vmem:[%s214 + $0xc50] sm:$0xff]
        %v675 = vld [vmem:[%s214 + $0xc58] sm:$0xff]
        %v676 = vld [vmem:[%s214 + $0xc60] sm:$0xff]
        %v677 = vld [vmem:[%s214 + $0xc68] sm:$0xff]
        %v678 = vld [vmem:[%s214 + $0xc70] sm:$0xff]
        %v679 = vld [vmem:[%s214 + $0xc78] sm:$0xff]
        %v680 = vld [vmem:[%s214 + $0xc80] sm:$0xff]
        %v681 = vld [vmem:[%s214 + $0xc88] sm:$0xff]
        %v682 = vld [vmem:[%s214 + $0xc90] sm:$0xff]
        %v683 = vld [vmem:[%s214 + $0xc98] sm:$0xff]
        %v684 = vld [vmem:[%s214 + $0xca0] sm:$0xff]
        %v685 = vld [vmem:[%s214 + $0xca8] sm:$0xff]
        %v686 = vld [vmem:[%s214 + $0xcb0] sm:$0xff]
        %v687 = vld [vmem:[%s214 + $0xcb8] sm:$0xff]
        %v688 = vld [vmem:[%s214 + $0xcc0] sm:$0xff]
        %v689 = vld [vmem:[%s214 + $0xcc8] sm:$0xff]
        %v690 = vld [vmem:[%s214 + $0xcd0] sm:$0xff]
        %v691 = vld [vmem:[%s214 + $0xcd8] sm:$0xff]
        %v692 = vld [vmem:[%s214 + $0xce0] sm:$0xff]
        %v693 = vld [vmem:[%s214 + $0xce8] sm:$0xff]
        %v694 = vld [vmem:[%s214 + $0xcf0] sm:$0xff]
        %v695 = vld [vmem:[%s214 + $0xcf8] sm:$0xff]
        %v696 = vld [vmem:[%s214 + $0xd00] sm:$0xff]
        %v697 = vld [vmem:[%s214 + $0xd08] sm:$0xff]
        %v698 = vld [vmem:[%s214 + $0xd10] sm:$0xff]
        %v699 = vld [vmem:[%s214 + $0xd18] sm:$0xff]
        %v700 = vld [vmem:[%s214 + $0xd20] sm:$0xff]
        %v701 = vld [vmem:[%s214 + $0xd28] sm:$0xff]
        %v702 = vld [vmem:[%s214 + $0xd30] sm:$0xff]
        %v703 = vld [vmem:[%s214 + $0xd38] sm:$0xff]
        %v704 = vld [vmem:[%s214 + $0xd40] sm:$0xff]
        %v705 = vld [vmem:[%s214 + $0xd48] sm:$0xff]
        %v706 = vld [vmem:[%s214 + $0xd50] sm:$0xff]
        %v707 = vld [vmem:[%s214 + $0xd58] sm:$0xff]
        %v708 = vld [vmem:[%s214 + $0xd60] sm:$0xff]
        %v709 = vld [vmem:[%s214 + $0xd68] sm:$0xff]
        %v710 = vld [vmem:[%s214 + $0xd70] sm:$0xff]
        %v711 = vld [vmem:[%s214 + $0xd78] sm:$0xff]
        %v712 = vld [vmem:[%s214 + $0xd80] sm:$0xff]
        %v713 = vld [vmem:[%s214 + $0xd88] sm:$0xff]
        %v714 = vld [vmem:[%s214 + $0xd90] sm:$0xff]
        %v715 = vld [vmem:[%s214 + $0xd98] sm:$0xff]
        %v716 = vld [vmem:[%s214 + $0xda0] sm:$0xff]
        %v717 = vld [vmem:[%s214 + $0xda8] sm:$0xff]
        %v718 = vld [vmem:[%s214 + $0xdb0] sm:$0xff]
        %v719 = vld [vmem:[%s214 + $0xdb8] sm:$0xff]
        %v720 = vld [vmem:[%s214 + $0xdc0] sm:$0xff]
        %v721 = vld [vmem:[%s214 + $0xdc8] sm:$0xff]
        %v722 = vld [vmem:[%s214 + $0xdd0] sm:$0xff]
        %v723 = vld [vmem:[%s214 + $0xdd8] sm:$0xff]
        %v724 = vld [vmem:[%s214 + $0xde0] sm:$0xff]
        %v725 = vld [vmem:[%s214 + $0xde8] sm:$0xff]
        %v726 = vld [vmem:[%s214 + $0xdf0] sm:$0xff]
        %v727 = vld [vmem:[%s214 + $0xdf8] sm:$0xff]
        %v728 = vld [vmem:[%s214 + $0xe00] sm:$0xff]
        %v729 = vld [vmem:[%s214 + $0xe08] sm:$0xff]
        %v730 = vld [vmem:[%s214 + $0xe10] sm:$0xff]
        %v731 = vld [vmem:[%s214 + $0xe18] sm:$0xff]
        %v732 = vld [vmem:[%s214 + $0xe20] sm:$0xff]
        %v733 = vld [vmem:[%s214 + $0xe28] sm:$0xff]
        %v734 = vld [vmem:[%s214 + $0xe30] sm:$0xff]
        %v735 = vld [vmem:[%s214 + $0xe38] sm:$0xff]
        %v736 = vld [vmem:[%s214 + $0xe40] sm:$0xff]
        %v737 = vld [vmem:[%s214 + $0xe48] sm:$0xff]
        %v738 = vld [vmem:[%s214 + $0xe50] sm:$0xff]
        %v739 = vld [vmem:[%s214 + $0xe58] sm:$0xff]
        %v740 = vld [vmem:[%s214 + $0xe60] sm:$0xff]
        %v741 = vld [vmem:[%s214 + $0xe68] sm:$0xff]
        %v742 = vld [vmem:[%s214 + $0xe70] sm:$0xff]
        %v743 = vld [vmem:[%s214 + $0xe78] sm:$0xff]
        %v744 = vld [vmem:[%s214 + $0xe80] sm:$0xff]
        %v745 = vld [vmem:[%s214 + $0xe88] sm:$0xff]
        %v746 = vld [vmem:[%s214 + $0xe90] sm:$0xff]
        %v747 = vld [vmem:[%s214 + $0xe98] sm:$0xff]
        %v748 = vld [vmem:[%s214 + $0xea0] sm:$0xff]
        %v749 = vld [vmem:[%s214 + $0xea8] sm:$0xff]
        %v750 = vld [vmem:[%s214 + $0xeb0] sm:$0xff]
        %v751 = vld [vmem:[%s214 + $0xeb8] sm:$0xff]
        %v752 = vld [vmem:[%s214 + $0xec0] sm:$0xff]
        %v753 = vld [vmem:[%s214 + $0xec8] sm:$0xff]
        %v754 = vld [vmem:[%s214 + $0xed0] sm:$0xff]
        %v755 = vld [vmem:[%s214 + $0xed8] sm:$0xff]
        %v756 = vld [vmem:[%s214 + $0xee0] sm:$0xff]
        %v757 = vld [vmem:[%s214 + $0xee8] sm:$0xff]
        %v758 = vld [vmem:[%s214 + $0xef0] sm:$0xff]
        %v759 = vld [vmem:[%s214 + $0xef8] sm:$0xff]
        %v760 = vld [vmem:[%s214 + $0xf00] sm:$0xff]
        %v761 = vld [vmem:[%s214 + $0xf08] sm:$0xff]
        %v762 = vld [vmem:[%s214 + $0xf10] sm:$0xff]
        %v763 = vld [vmem:[%s214 + $0xf18] sm:$0xff]
        %v764 = vld [vmem:[%s214 + $0xf20] sm:$0xff]
        %v765 = vld [vmem:[%s214 + $0xf28] sm:$0xff]
        %v766 = vld [vmem:[%s214 + $0xf30] sm:$0xff]
        %v767 = vld [vmem:[%s214 + $0xf38] sm:$0xff]
        %v768 = vld [vmem:[%s214 + $0xf40] sm:$0xff]
        %v769 = vld [vmem:[%s214 + $0xf48] sm:$0xff]
        %v770 = vld [vmem:[%s214 + $0xf50] sm:$0xff]
        %v771 = vld [vmem:[%s214 + $0xf58] sm:$0xff]
        %v772 = vld [vmem:[%s214 + $0xf60] sm:$0xff]
        %v773 = vld [vmem:[%s214 + $0xf68] sm:$0xff]
        %v774 = vld [vmem:[%s214 + $0xf70] sm:$0xff]
        %v775 = vld [vmem:[%s214 + $0xf78] sm:$0xff]
        %v776 = vld [vmem:[%s214 + $0xf80] sm:$0xff]
        %v777 = vld [vmem:[%s214 + $0xf88] sm:$0xff]
        %v778 = vld [vmem:[%s214 + $0xf90] sm:$0xff]
        %v779 = vld [vmem:[%s214 + $0xf98] sm:$0xff]
        %v780 = vld [vmem:[%s214 + $0xfa0] sm:$0xff]
        %v781 = vld [vmem:[%s214 + $0xfa8] sm:$0xff]
        %v782 = vld [vmem:[%s214 + $0xfb0] sm:$0xff]
        %v783 = vld [vmem:[%s214 + $0xfb8] sm:$0xff]
        %v784 = vld [vmem:[%s214 + $0xfc0] sm:$0xff]
        %v785 = vld [vmem:[%s214 + $0xfc8] sm:$0xff]
        %v786 = vld [vmem:[%s214 + $0xfd0] sm:$0xff]
        %v787 = vld [vmem:[%s214 + $0xfd8] sm:$0xff]
        %v788 = vld [vmem:[%s214 + $0xfe0] sm:$0xff]
        %v789 = vld [vmem:[%s214 + $0xfe8] sm:$0xff]
        %v790 = vld [vmem:[%s214 + $0xff0] sm:$0xff]
        %v791 = vld [vmem:[%s214 + $0xff8] sm:$0xff]
        %v792 = vld [vmem:[%s214 + $0x1000] sm:$0xff]
        %v793 = vld [vmem:[%s214 + $0x1008] sm:$0xff]
        %v794 = vld [vmem:[%s214 + $0x1010] sm:$0xff]
        %v795 = vld [vmem:[%s214 + $0x1018] sm:$0xff]
        %v796 = vld [vmem:[%s214 + $0x1020] sm:$0xff]
        %v797 = vld [vmem:[%s214 + $0x1028] sm:$0xff]
        %v798 = vld [vmem:[%s214 + $0x1030] sm:$0xff]
        %v799 = vld [vmem:[%s214 + $0x1038] sm:$0xff]
        %v800 = vld [vmem:[%s214 + $0x1040] sm:$0xff]
        %v801 = vld [vmem:[%s214 + $0x1048] sm:$0xff]
        %v802 = vld [vmem:[%s214 + $0x1050] sm:$0xff]
        %v803 = vld [vmem:[%s214 + $0x1058] sm:$0xff]
        %v804 = vld [vmem:[%s214 + $0x1060] sm:$0xff]
        %v805 = vld [vmem:[%s214 + $0x1068] sm:$0xff]
        %v806 = vld [vmem:[%s214 + $0x1070] sm:$0xff]
        %v807 = vld [vmem:[%s214 + $0x1078] sm:$0xff]
        %v808 = vld [vmem:[%s214 + $0x1080] sm:$0xff]
        %v809 = vld [vmem:[%s214 + $0x1088] sm:$0xff]
        %v810 = vld [vmem:[%s214 + $0x1090] sm:$0xff]
        %v811 = vld [vmem:[%s214 + $0x1098] sm:$0xff]
        %v812 = vld [vmem:[%s214 + $0x10a0] sm:$0xff]
        %v813 = vld [vmem:[%s214 + $0x10a8] sm:$0xff]
        %v814 = vld [vmem:[%s214 + $0x10b0] sm:$0xff]
        %v815 = vld [vmem:[%s214 + $0x10b8] sm:$0xff]
        %v816 = vld [vmem:[%s214 + $0x10c0] sm:$0xff]
        %v817 = vld [vmem:[%s214 + $0x10c8] sm:$0xff]
        %v818 = vld [vmem:[%s214 + $0x10d0] sm:$0xff]
        %v819 = vld [vmem:[%s214 + $0x10d8] sm:$0xff]
        %v820 = vld [vmem:[%s214 + $0x10e0] sm:$0xff]
        %v821 = vld [vmem:[%s214 + $0x10e8] sm:$0xff]
        %v822 = vld [vmem:[%s214 + $0x10f0] sm:$0xff]
        %v823 = vld [vmem:[%s214 + $0x10f8] sm:$0xff]
        %v824 = vld [vmem:[%s214 + $0x1100] sm:$0xff]
        %v825 = vld [vmem:[%s214 + $0x1108] sm:$0xff]
        %v826 = vld [vmem:[%s214 + $0x1110] sm:$0xff]
        %v827 = vld [vmem:[%s214 + $0x1118] sm:$0xff]
        %v828 = vld [vmem:[%s214 + $0x1120] sm:$0xff]
        %v829 = vld [vmem:[%s214 + $0x1128] sm:$0xff]
        %v830 = vld [vmem:[%s214 + $0x1130] sm:$0xff]
        %v831 = vld [vmem:[%s214 + $0x1138] sm:$0xff]
        %v832 = vld [vmem:[%s214 + $0x1140] sm:$0xff]
        %v833 = vld [vmem:[%s214 + $0x1148] sm:$0xff]
        %v834 = vld [vmem:[%s214 + $0x1150] sm:$0xff]
        %v835 = vld [vmem:[%s214 + $0x1158] sm:$0xff]
        %v836 = vld [vmem:[%s214 + $0x1160] sm:$0xff]
        %v837 = vld [vmem:[%s214 + $0x1168] sm:$0xff]
        %v838 = vld [vmem:[%s214 + $0x1170] sm:$0xff]
        %v839 = vld [vmem:[%s214 + $0x1178] sm:$0xff]
        %v840 = vld [vmem:[%s214 + $0x1180] sm:$0xff]
        %v841 = vld [vmem:[%s214 + $0x1188] sm:$0xff]
        %v842 = vld [vmem:[%s214 + $0x1190] sm:$0xff]
        %v843 = vld [vmem:[%s214 + $0x1198] sm:$0xff]
        %v844 = vld [vmem:[%s214 + $0x11a0] sm:$0xff]
        %v845 = vld [vmem:[%s214 + $0x11a8] sm:$0xff]
        %v846 = vld [vmem:[%s214 + $0x11b0] sm:$0xff]
        %v847 = vld [vmem:[%s214 + $0x11b8] sm:$0xff]
        %v848 = vld [vmem:[%s214 + $0x11c0] sm:$0xff]
        %v849 = vld [vmem:[%s214 + $0x11c8] sm:$0xff]
        %v850 = vld [vmem:[%s214 + $0x11d0] sm:$0xff]
        %v851 = vld [vmem:[%s214 + $0x11d8] sm:$0xff]
        %v852 = vld [vmem:[%s214 + $0x11e0] sm:$0xff]
        %v853 = vld [vmem:[%s214 + $0x11e8] sm:$0xff]
        %v854 = vld [vmem:[%s214 + $0x11f0] sm:$0xff]
        %v855 = vld [vmem:[%s214 + $0x11f8] sm:$0xff]
        %v856 = vld [vmem:[%s214 + $0x1200] sm:$0xff]
        %v857 = vld [vmem:[%s214 + $0x1208] sm:$0xff]
        %v858 = vld [vmem:[%s214 + $0x1210] sm:$0xff]
        %v859 = vld [vmem:[%s214 + $0x1218] sm:$0xff]
        %v860 = vld [vmem:[%s214 + $0x1220] sm:$0xff]
        %v861 = vld [vmem:[%s214 + $0x1228] sm:$0xff]
        %v862 = vld [vmem:[%s214 + $0x1230] sm:$0xff]
        %v863 = vld [vmem:[%s214 + $0x1238] sm:$0xff]
        %v864 = vld [vmem:[%s214 + $0x1240] sm:$0xff]
        %v865 = vld [vmem:[%s214 + $0x1248] sm:$0xff]
        %v866 = vld [vmem:[%s214 + $0x1250] sm:$0xff]
        %v867 = vld [vmem:[%s214 + $0x1258] sm:$0xff]
        %v868 = vld [vmem:[%s214 + $0x1260] sm:$0xff]
        %v869 = vld [vmem:[%s214 + $0x1268] sm:$0xff]
        %v870 = vld [vmem:[%s214 + $0x1270] sm:$0xff]
        %v871 = vld [vmem:[%s214 + $0x1278] sm:$0xff]
        %v872 = vld [vmem:[%s214 + $0x1280] sm:$0xff]
        %v873 = vld [vmem:[%s214 + $0x1288] sm:$0xff]
        %v874 = vld [vmem:[%s214 + $0x1290] sm:$0xff]
        %v875 = vld [vmem:[%s214 + $0x1298] sm:$0xff]
        %v876 = vld [vmem:[%s214 + $0x12a0] sm:$0xff]
        %v877 = vld [vmem:[%s214 + $0x12a8] sm:$0xff]
        %v878 = vld [vmem:[%s214 + $0x12b0] sm:$0xff]
        %v879 = vld [vmem:[%s214 + $0x12b8] sm:$0xff]
        %v880 = vld [vmem:[%s214 + $0x12c0] sm:$0xff]
        %v881 = vld [vmem:[%s214 + $0x12c8] sm:$0xff]
        %v882 = vld [vmem:[%s214 + $0x12d0] sm:$0xff]
        %v883 = vld [vmem:[%s214 + $0x12d8] sm:$0xff]
        %v884 = vld [vmem:[%s214 + $0x12e0] sm:$0xff]
        %v885 = vld [vmem:[%s214 + $0x12e8] sm:$0xff]
        %v886 = vld [vmem:[%s214 + $0x12f0] sm:$0xff]
        %v887 = vld [vmem:[%s214 + $0x12f8] sm:$0xff]
        %v888 = vld [vmem:[%s214 + $0x1300] sm:$0xff]
        %v889 = vld [vmem:[%s214 + $0x1308] sm:$0xff]
        %v890 = vld [vmem:[%s214 + $0x1310] sm:$0xff]
        %v891 = vld [vmem:[%s214 + $0x1318] sm:$0xff]
        %v892 = vld [vmem:[%s214 + $0x1320] sm:$0xff]
        %v893 = vld [vmem:[%s214 + $0x1328] sm:$0xff]
        %v894 = vld [vmem:[%s214 + $0x1330] sm:$0xff]
        %v895 = vld [vmem:[%s214 + $0x1338] sm:$0xff]
        %v896 = vld [vmem:[%s214 + $0x1340] sm:$0xff]
        %v897 = vld [vmem:[%s214 + $0x1348] sm:$0xff]
        %v898 = vld [vmem:[%s214 + $0x1350] sm:$0xff]
        %v899 = vld [vmem:[%s214 + $0x1358] sm:$0xff]
        %v900 = vld [vmem:[%s214 + $0x1360] sm:$0xff]
        %v901 = vld [vmem:[%s214 + $0x1368] sm:$0xff]
        %v902 = vld [vmem:[%s214 + $0x1370] sm:$0xff]
        %v903 = vld [vmem:[%s214 + $0x1378] sm:$0xff]
        %v904 = vld [vmem:[%s214 + $0x1380] sm:$0xff]
        %v905 = vld [vmem:[%s214 + $0x1388] sm:$0xff]
        %v906 = vld [vmem:[%s214 + $0x1390] sm:$0xff]
        %v907 = vld [vmem:[%s214 + $0x1398] sm:$0xff]
        %v908 = vld [vmem:[%s214 + $0x13a0] sm:$0xff]
        %v909 = vld [vmem:[%s214 + $0x13a8] sm:$0xff]
        %v910 = vld [vmem:[%s214 + $0x13b0] sm:$0xff]
        %v911 = vld [vmem:[%s214 + $0x13b8] sm:$0xff]
        %v912 = vld [vmem:[%s214 + $0x13c0] sm:$0xff]
        %v913 = vld [vmem:[%s214 + $0x13c8] sm:$0xff]
        %v914 = vld [vmem:[%s214 + $0x13d0] sm:$0xff]
        %v915 = vld [vmem:[%s214 + $0x13d8] sm:$0xff]
        %v916 = vld [vmem:[%s214 + $0x13e0] sm:$0xff]
        %v917 = vld [vmem:[%s214 + $0x13e8] sm:$0xff]
        %v918 = vld [vmem:[%s214 + $0x13f0] sm:$0xff]
        %v919 = vld [vmem:[%s214 + $0x13f8] sm:$0xff]
        %v925 = vcombine.high %v275, %v275
        %v927 = vunpack.c.l.s4 1966171168
        %v928 = vunpack.c.0.s8 %v927
        %v929 = vlaneseq
        %v930 = vshrl.u32 %v929, 7
        %v931 = vsub.s32 %v928, %v930
        %v932 = vrot.slane %v275, %v931
        %v934 = vunpack.c.l.s4 1966171168
        %v935 = vunpack.c.0.s8 %v934
        %v936 = vlaneseq
        %v937 = vshrl.u32 %v936, 7
        %v938 = vsub.s32 %v935, %v937
        %v939 = vrot.slane %v925, %v938
        %v940 = vcombine.high %v932, %v932
        %v941 = vcombine.high %v939, %v939
        %v943 = vunpack.c.l.s4 1966171168
        %v944 = vunpack.c.0.s8 %v943
        %v945 = vlaneseq
        %v946 = vshrl.u32 %v945, 7
        %v947 = vsub.s32 %v944, %v946
        %v948 = vrot.slane %v932, %v947
        %v950 = vunpack.c.l.s4 1966171168
        %v951 = vunpack.c.0.s8 %v950
        %v952 = vlaneseq
        %v953 = vshrl.u32 %v952, 7
        %v954 = vsub.s32 %v951, %v953
        %v955 = vrot.slane %v939, %v954
        %v957 = vunpack.c.l.s4 1966171168
        %v958 = vunpack.c.0.s8 %v957
        %v959 = vlaneseq
        %v960 = vshrl.u32 %v959, 7
        %v961 = vsub.s32 %v958, %v960
        %v962 = vrot.slane %v940, %v961
        %v964 = vunpack.c.l.s4 1966171168
        %v965 = vunpack.c.0.s8 %v964
        %v966 = vlaneseq
        %v967 = vshrl.u32 %v966, 7
        %v968 = vsub.s32 %v965, %v967
        %v969 = vrot.slane %v941, %v968
        %v970 = vcombine.high %v948, %v948
        %v971 = vcombine.high %v955, %v955
        %v972 = vcombine.high %v962, %v962
        %v973 = vcombine.high %v969, %v969
        %v974 = vcombine.high %v276, %v276
        %v976 = vunpack.c.l.s4 1966171168
        %v977 = vunpack.c.0.s8 %v976
        %v978 = vlaneseq
        %v979 = vshrl.u32 %v978, 7
        %v980 = vsub.s32 %v977, %v979
        %v981 = vrot.slane %v276, %v980
        %v983 = vunpack.c.l.s4 1966171168
        %v984 = vunpack.c.0.s8 %v983
        %v985 = vlaneseq
        %v986 = vshrl.u32 %v985, 7
        %v987 = vsub.s32 %v984, %v986
        %v988 = vrot.slane %v974, %v987
        %v989 = vcombine.high %v981, %v981
        %v990 = vcombine.high %v988, %v988
        %v992 = vunpack.c.l.s4 1966171168
        %v993 = vunpack.c.0.s8 %v992
        %v994 = vlaneseq
        %v995 = vshrl.u32 %v994, 7
        %v996 = vsub.s32 %v993, %v995
        %v997 = vrot.slane %v981, %v996
        %v999 = vunpack.c.l.s4 1966171168
        %v1000 = vunpack.c.0.s8 %v999
        %v1001 = vlaneseq
        %v1002 = vshrl.u32 %v1001, 7
        %v1003 = vsub.s32 %v1000, %v1002
        %v1004 = vrot.slane %v988, %v1003
        %v1006 = vunpack.c.l.s4 1966171168
        %v1007 = vunpack.c.0.s8 %v1006
        %v1008 = vlaneseq
        %v1009 = vshrl.u32 %v1008, 7
        %v1010 = vsub.s32 %v1007, %v1009
        %v1011 = vrot.slane %v989, %v1010
        %v1013 = vunpack.c.l.s4 1966171168
        %v1014 = vunpack.c.0.s8 %v1013
        %v1015 = vlaneseq
        %v1016 = vshrl.u32 %v1015, 7
        %v1017 = vsub.s32 %v1014, %v1016
        %v1018 = vrot.slane %v990, %v1017
        %v1019 = vcombine.high %v997, %v997
        %v1020 = vcombine.high %v1004, %v1004
        %v1021 = vcombine.high %v1011, %v1011
        %v1022 = vcombine.high %v1018, %v1018
        %v1023 = vcombine.high %v277, %v277
        %v1025 = vunpack.c.l.s4 1966171168
        %v1026 = vunpack.c.0.s8 %v1025
        %v1027 = vlaneseq
        %v1028 = vshrl.u32 %v1027, 7
        %v1029 = vsub.s32 %v1026, %v1028
        %v1030 = vrot.slane %v277, %v1029
        %v1032 = vunpack.c.l.s4 1966171168
        %v1033 = vunpack.c.0.s8 %v1032
        %v1034 = vlaneseq
        %v1035 = vshrl.u32 %v1034, 7
        %v1036 = vsub.s32 %v1033, %v1035
        %v1037 = vrot.slane %v1023, %v1036
        %v1038 = vcombine.high %v1030, %v1030
        %v1039 = vcombine.high %v1037, %v1037
        %v1041 = vunpack.c.l.s4 1966171168
        %v1042 = vunpack.c.0.s8 %v1041
        %v1043 = vlaneseq
        %v1044 = vshrl.u32 %v1043, 7
        %v1045 = vsub.s32 %v1042, %v1044
        %v1046 = vrot.slane %v1030, %v1045
        %v1048 = vunpack.c.l.s4 1966171168
        %v1049 = vunpack.c.0.s8 %v1048
        %v1050 = vlaneseq
        %v1051 = vshrl.u32 %v1050, 7
        %v1052 = vsub.s32 %v1049, %v1051
        %v1053 = vrot.slane %v1037, %v1052
        %v1055 = vunpack.c.l.s4 1966171168
        %v1056 = vunpack.c.0.s8 %v1055
        %v1057 = vlaneseq
        %v1058 = vshrl.u32 %v1057, 7
        %v1059 = vsub.s32 %v1056, %v1058
        %v1060 = vrot.slane %v1038, %v1059
        %v1062 = vunpack.c.l.s4 1966171168
        %v1063 = vunpack.c.0.s8 %v1062
        %v1064 = vlaneseq
        %v1065 = vshrl.u32 %v1064, 7
        %v1066 = vsub.s32 %v1063, %v1065
        %v1067 = vrot.slane %v1039, %v1066
        %v1068 = vcombine.high %v1046, %v1046
        %v1069 = vcombine.high %v1053, %v1053
        %v1070 = vcombine.high %v1060, %v1060
        %v1071 = vcombine.high %v1067, %v1067
        %v1072 = vcombine.high %v278, %v278
        %v1074 = vunpack.c.l.s4 1966171168
        %v1075 = vunpack.c.0.s8 %v1074
        %v1076 = vlaneseq
        %v1077 = vshrl.u32 %v1076, 7
        %v1078 = vsub.s32 %v1075, %v1077
        %v1079 = vrot.slane %v278, %v1078
        %v1081 = vunpack.c.l.s4 1966171168
        %v1082 = vunpack.c.0.s8 %v1081
        %v1083 = vlaneseq
        %v1084 = vshrl.u32 %v1083, 7
        %v1085 = vsub.s32 %v1082, %v1084
        %v1086 = vrot.slane %v1072, %v1085
        %v1087 = vcombine.high %v1079, %v1079
        %v1088 = vcombine.high %v1086, %v1086
        %v1090 = vunpack.c.l.s4 1966171168
        %v1091 = vunpack.c.0.s8 %v1090
        %v1092 = vlaneseq
        %v1093 = vshrl.u32 %v1092, 7
        %v1094 = vsub.s32 %v1091, %v1093
        %v1095 = vrot.slane %v1079, %v1094
        %v1097 = vunpack.c.l.s4 1966171168
        %v1098 = vunpack.c.0.s8 %v1097
        %v1099 = vlaneseq
        %v1100 = vshrl.u32 %v1099, 7
        %v1101 = vsub.s32 %v1098, %v1100
        %v1102 = vrot.slane %v1086, %v1101
        %v1104 = vunpack.c.l.s4 1966171168
        %v1105 = vunpack.c.0.s8 %v1104
        %v1106 = vlaneseq
        %v1107 = vshrl.u32 %v1106, 7
        %v1108 = vsub.s32 %v1105, %v1107
        %v1109 = vrot.slane %v1087, %v1108
        %v1111 = vunpack.c.l.s4 1966171168
        %v1112 = vunpack.c.0.s8 %v1111
        %v1113 = vlaneseq
        %v1114 = vshrl.u32 %v1113, 7
        %v1115 = vsub.s32 %v1112, %v1114
        %v1116 = vrot.slane %v1088, %v1115
        %v1117 = vcombine.high %v1095, %v1095
        %v1118 = vcombine.high %v1102, %v1102
        %v1119 = vcombine.high %v1109, %v1109
        %v1120 = vcombine.high %v1116, %v1116
        %v1121 = vcombine.high %v279, %v279
        %v1123 = vunpack.c.l.s4 1966171168
        %v1124 = vunpack.c.0.s8 %v1123
        %v1125 = vlaneseq
        %v1126 = vshrl.u32 %v1125, 7
        %v1127 = vsub.s32 %v1124, %v1126
        %v1128 = vrot.slane %v279, %v1127
        %v1130 = vunpack.c.l.s4 1966171168
        %v1131 = vunpack.c.0.s8 %v1130
        %v1132 = vlaneseq
        %v1133 = vshrl.u32 %v1132, 7
        %v1134 = vsub.s32 %v1131, %v1133
        %v1135 = vrot.slane %v1121, %v1134
        %v1136 = vcombine.high %v1128, %v1128
        %v1137 = vcombine.high %v1135, %v1135
        %v1139 = vunpack.c.l.s4 1966171168
        %v1140 = vunpack.c.0.s8 %v1139
        %v1141 = vlaneseq
        %v1142 = vshrl.u32 %v1141, 7
        %v1143 = vsub.s32 %v1140, %v1142
        %v1144 = vrot.slane %v1128, %v1143
        %v1146 = vunpack.c.l.s4 1966171168
        %v1147 = vunpack.c.0.s8 %v1146
        %v1148 = vlaneseq
        %v1149 = vshrl.u32 %v1148, 7
        %v1150 = vsub.s32 %v1147, %v1149
        %v1151 = vrot.slane %v1135, %v1150
        %v1153 = vunpack.c.l.s4 1966171168
        %v1154 = vunpack.c.0.s8 %v1153
        %v1155 = vlaneseq
        %v1156 = vshrl.u32 %v1155, 7
        %v1157 = vsub.s32 %v1154, %v1156
        %v1158 = vrot.slane %v1136, %v1157
        %v1160 = vunpack.c.l.s4 1966171168
        %v1161 = vunpack.c.0.s8 %v1160
        %v1162 = vlaneseq
        %v1163 = vshrl.u32 %v1162, 7
        %v1164 = vsub.s32 %v1161, %v1163
        %v1165 = vrot.slane %v1137, %v1164
        %v1166 = vcombine.high %v1144, %v1144
        %v1167 = vcombine.high %v1151, %v1151
        %v1168 = vcombine.high %v1158, %v1158
        %v1169 = vcombine.high %v1165, %v1165
        %v1850 = vunpack.c.l.b16 %v280
        %v1851 = vunpack.c.h.b16 %v280
        %v1852 = vunpack.c.l.b16 %v281
        %v1853 = vunpack.c.h.b16 %v281
        %v1854 = vunpack.c.l.b16 %v282
        %v1855 = vunpack.c.h.b16 %v282
        %v1856 = vunpack.c.l.b16 %v283
        %v1857 = vunpack.c.h.b16 %v283
        %v1858 = vunpack.c.l.b16 %v284
        %v1859 = vunpack.c.h.b16 %v284
        %v1860 = vunpack.c.l.b16 %v285
        %v1861 = vunpack.c.h.b16 %v285
        %v1862 = vunpack.c.l.b16 %v286
        %v1863 = vunpack.c.h.b16 %v286
        %v1864 = vunpack.c.l.b16 %v287
        %v1865 = vunpack.c.h.b16 %v287
        %v1866 = vunpack.c.l.b16 %v288
        %v1867 = vunpack.c.h.b16 %v288
        %v1868 = vunpack.c.l.b16 %v289
        %v1869 = vunpack.c.h.b16 %v289
        %v1870 = vunpack.c.l.b16 %v290
        %v1871 = vunpack.c.h.b16 %v290
        %v1872 = vunpack.c.l.b16 %v291
        %v1873 = vunpack.c.h.b16 %v291
        %v1874 = vunpack.c.l.b16 %v292
        %v1875 = vunpack.c.h.b16 %v292
        %v1876 = vunpack.c.l.b16 %v293
        %v1877 = vunpack.c.h.b16 %v293
        %v1878 = vunpack.c.l.b16 %v294
        %v1879 = vunpack.c.h.b16 %v294
        %v1880 = vunpack.c.l.b16 %v295
        %v1881 = vunpack.c.h.b16 %v295
        %v1882 = vunpack.c.l.b16 %v296
        %v1883 = vunpack.c.h.b16 %v296
        %v1884 = vunpack.c.l.b16 %v297
        %v1885 = vunpack.c.h.b16 %v297
        %v1886 = vunpack.c.l.b16 %v298
        %v1887 = vunpack.c.h.b16 %v298
        %v1888 = vunpack.c.l.b16 %v299
        %v1889 = vunpack.c.h.b16 %v299
        %v1890 = vunpack.c.l.b16 %v300
        %v1891 = vunpack.c.h.b16 %v300
        %v1892 = vunpack.c.l.b16 %v301
        %v1893 = vunpack.c.h.b16 %v301
        %v1894 = vunpack.c.l.b16 %v302
        %v1895 = vunpack.c.h.b16 %v302
        %v1896 = vunpack.c.l.b16 %v303
        %v1897 = vunpack.c.h.b16 %v303
        %v1898 = vunpack.c.l.b16 %v304
        %v1899 = vunpack.c.h.b16 %v304
        %v1900 = vunpack.c.l.b16 %v305
        %v1901 = vunpack.c.h.b16 %v305
        %v1902 = vunpack.c.l.b16 %v306
        %v1903 = vunpack.c.h.b16 %v306
        %v1904 = vunpack.c.l.b16 %v307
        %v1905 = vunpack.c.h.b16 %v307
        %v1906 = vunpack.c.l.b16 %v308
        %v1907 = vunpack.c.h.b16 %v308
        %v1908 = vunpack.c.l.b16 %v309
        %v1909 = vunpack.c.h.b16 %v309
        %v1910 = vunpack.c.l.b16 %v310
        %v1911 = vunpack.c.h.b16 %v310
        %v1912 = vunpack.c.l.b16 %v311
        %v1913 = vunpack.c.h.b16 %v311
        %v1914 = vunpack.c.l.b16 %v312
        %v1915 = vunpack.c.h.b16 %v312
        %v1916 = vunpack.c.l.b16 %v313
        %v1917 = vunpack.c.h.b16 %v313
        %v1918 = vunpack.c.l.b16 %v314
        %v1919 = vunpack.c.h.b16 %v314
        %v1920 = vunpack.c.l.b16 %v315
        %v1921 = vunpack.c.h.b16 %v315
        %v1922 = vunpack.c.l.b16 %v316
        %v1923 = vunpack.c.h.b16 %v316
        %v1924 = vunpack.c.l.b16 %v317
        %v1925 = vunpack.c.h.b16 %v317
        %v1926 = vunpack.c.l.b16 %v318
        %v1927 = vunpack.c.h.b16 %v318
        %v1928 = vunpack.c.l.b16 %v319
        %v1929 = vunpack.c.h.b16 %v319
        %v1930 = vunpack.c.l.b16 %v320
        %v1931 = vunpack.c.h.b16 %v320
        %v1932 = vunpack.c.l.b16 %v321
        %v1933 = vunpack.c.h.b16 %v321
        %v1934 = vunpack.c.l.b16 %v322
        %v1935 = vunpack.c.h.b16 %v322
        %v1936 = vunpack.c.l.b16 %v323
        %v1937 = vunpack.c.h.b16 %v323
        %v1938 = vunpack.c.l.b16 %v324
        %v1939 = vunpack.c.h.b16 %v324
        %v1940 = vunpack.c.l.b16 %v325
        %v1941 = vunpack.c.h.b16 %v325
        %v1942 = vunpack.c.l.b16 %v326
        %v1943 = vunpack.c.h.b16 %v326
        %v1944 = vunpack.c.l.b16 %v327
        %v1945 = vunpack.c.h.b16 %v327
        %v1946 = vunpack.c.l.b16 %v328
        %v1947 = vunpack.c.h.b16 %v328
        %v1948 = vunpack.c.l.b16 %v329
        %v1949 = vunpack.c.h.b16 %v329
        %v1950 = vunpack.c.l.b16 %v330
        %v1951 = vunpack.c.h.b16 %v330
        %v1952 = vunpack.c.l.b16 %v331
        %v1953 = vunpack.c.h.b16 %v331
        %v1954 = vunpack.c.l.b16 %v332
        %v1955 = vunpack.c.h.b16 %v332
        %v1956 = vunpack.c.l.b16 %v333
        %v1957 = vunpack.c.h.b16 %v333
        %v1958 = vunpack.c.l.b16 %v334
        %v1959 = vunpack.c.h.b16 %v334
        %v1960 = vunpack.c.l.b16 %v335
        %v1961 = vunpack.c.h.b16 %v335
        %v1962 = vunpack.c.l.b16 %v336
        %v1963 = vunpack.c.h.b16 %v336
        %v1964 = vunpack.c.l.b16 %v337
        %v1965 = vunpack.c.h.b16 %v337
        %v1966 = vunpack.c.l.b16 %v338
        %v1967 = vunpack.c.h.b16 %v338
        %v1968 = vunpack.c.l.b16 %v339
        %v1969 = vunpack.c.h.b16 %v339
        %v1970 = vunpack.c.l.b16 %v340
        %v1971 = vunpack.c.h.b16 %v340
        %v1972 = vunpack.c.l.b16 %v341
        %v1973 = vunpack.c.h.b16 %v341
        %v1974 = vunpack.c.l.b16 %v342
        %v1975 = vunpack.c.h.b16 %v342
        %v1976 = vunpack.c.l.b16 %v343
        %v1977 = vunpack.c.h.b16 %v343
        %v1978 = vunpack.c.l.b16 %v344
        %v1979 = vunpack.c.h.b16 %v344
        %v1980 = vunpack.c.l.b16 %v345
        %v1981 = vunpack.c.h.b16 %v345
        %v1982 = vunpack.c.l.b16 %v346
        %v1983 = vunpack.c.h.b16 %v346
        %v1984 = vunpack.c.l.b16 %v347
        %v1985 = vunpack.c.h.b16 %v347
        %v1986 = vunpack.c.l.b16 %v348
        %v1987 = vunpack.c.h.b16 %v348
        %v1988 = vunpack.c.l.b16 %v349
        %v1989 = vunpack.c.h.b16 %v349
        %v1990 = vunpack.c.l.b16 %v350
        %v1991 = vunpack.c.h.b16 %v350
        %v1992 = vunpack.c.l.b16 %v351
        %v1993 = vunpack.c.h.b16 %v351
        %v1994 = vunpack.c.l.b16 %v352
        %v1995 = vunpack.c.h.b16 %v352
        %v1996 = vunpack.c.l.b16 %v353
        %v1997 = vunpack.c.h.b16 %v353
        %v1998 = vunpack.c.l.b16 %v354
        %v1999 = vunpack.c.h.b16 %v354
        %v2000 = vunpack.c.l.b16 %v355
        %v2001 = vunpack.c.h.b16 %v355
        %v2002 = vunpack.c.l.b16 %v356
        %v2003 = vunpack.c.h.b16 %v356
        %v2004 = vunpack.c.l.b16 %v357
        %v2005 = vunpack.c.h.b16 %v357
        %v2006 = vunpack.c.l.b16 %v358
        %v2007 = vunpack.c.h.b16 %v358
        %v2008 = vunpack.c.l.b16 %v359
        %v2009 = vunpack.c.h.b16 %v359
        %v2010 = vunpack.c.l.b16 %v360
        %v2011 = vunpack.c.h.b16 %v360
        %v2012 = vunpack.c.l.b16 %v361
        %v2013 = vunpack.c.h.b16 %v361
        %v2014 = vunpack.c.l.b16 %v362
        %v2015 = vunpack.c.h.b16 %v362
        %v2016 = vunpack.c.l.b16 %v363
        %v2017 = vunpack.c.h.b16 %v363
        %v2018 = vunpack.c.l.b16 %v364
        %v2019 = vunpack.c.h.b16 %v364
        %v2020 = vunpack.c.l.b16 %v365
        %v2021 = vunpack.c.h.b16 %v365
        %v2022 = vunpack.c.l.b16 %v366
        %v2023 = vunpack.c.h.b16 %v366
        %v2024 = vunpack.c.l.b16 %v367
        %v2025 = vunpack.c.h.b16 %v367
        %v2026 = vunpack.c.l.b16 %v368
        %v2027 = vunpack.c.h.b16 %v368
        %v2028 = vunpack.c.l.b16 %v369
        %v2029 = vunpack.c.h.b16 %v369
        %v2030 = vunpack.c.l.b16 %v370
        %v2031 = vunpack.c.h.b16 %v370
        %v2032 = vunpack.c.l.b16 %v371
        %v2033 = vunpack.c.h.b16 %v371
        %v2034 = vunpack.c.l.b16 %v372
        %v2035 = vunpack.c.h.b16 %v372
        %v2036 = vunpack.c.l.b16 %v373
        %v2037 = vunpack.c.h.b16 %v373
        %v2038 = vunpack.c.l.b16 %v374
        %v2039 = vunpack.c.h.b16 %v374
        %v2040 = vunpack.c.l.b16 %v375
        %v2041 = vunpack.c.h.b16 %v375
        %v2042 = vunpack.c.l.b16 %v376
        %v2043 = vunpack.c.h.b16 %v376
        %v2044 = vunpack.c.l.b16 %v377
        %v2045 = vunpack.c.h.b16 %v377
        %v2046 = vunpack.c.l.b16 %v378
        %v2047 = vunpack.c.h.b16 %v378
        %v2048 = vunpack.c.l.b16 %v379
        %v2049 = vunpack.c.h.b16 %v379
        %v2050 = vunpack.c.l.b16 %v380
        %v2051 = vunpack.c.h.b16 %v380
        %v2052 = vunpack.c.l.b16 %v381
        %v2053 = vunpack.c.h.b16 %v381
        %v2054 = vunpack.c.l.b16 %v382
        %v2055 = vunpack.c.h.b16 %v382
        %v2056 = vunpack.c.l.b16 %v383
        %v2057 = vunpack.c.h.b16 %v383
        %v2058 = vunpack.c.l.b16 %v384
        %v2059 = vunpack.c.h.b16 %v384
        %v2060 = vunpack.c.l.b16 %v385
        %v2061 = vunpack.c.h.b16 %v385
        %v2062 = vunpack.c.l.b16 %v386
        %v2063 = vunpack.c.h.b16 %v386
        %v2064 = vunpack.c.l.b16 %v387
        %v2065 = vunpack.c.h.b16 %v387
        %v2066 = vunpack.c.l.b16 %v388
        %v2067 = vunpack.c.h.b16 %v388
        %v2068 = vunpack.c.l.b16 %v389
        %v2069 = vunpack.c.h.b16 %v389
        %v2070 = vunpack.c.l.b16 %v390
        %v2071 = vunpack.c.h.b16 %v390
        %v2072 = vunpack.c.l.b16 %v391
        %v2073 = vunpack.c.h.b16 %v391
        %v2074 = vunpack.c.l.b16 %v392
        %v2075 = vunpack.c.h.b16 %v392
        %v2076 = vunpack.c.l.b16 %v393
        %v2077 = vunpack.c.h.b16 %v393
        %v2078 = vunpack.c.l.b16 %v394
        %v2079 = vunpack.c.h.b16 %v394
        %v2080 = vunpack.c.l.b16 %v395
        %v2081 = vunpack.c.h.b16 %v395
        %v2082 = vunpack.c.l.b16 %v396
        %v2083 = vunpack.c.h.b16 %v396
        %v2084 = vunpack.c.l.b16 %v397
        %v2085 = vunpack.c.h.b16 %v397
        %v2086 = vunpack.c.l.b16 %v398
        %v2087 = vunpack.c.h.b16 %v398
        %v2088 = vunpack.c.l.b16 %v399
        %v2089 = vunpack.c.h.b16 %v399
        %v2090 = vunpack.c.l.b16 %v400
        %v2091 = vunpack.c.h.b16 %v400
        %v2092 = vunpack.c.l.b16 %v401
        %v2093 = vunpack.c.h.b16 %v401
        %v2094 = vunpack.c.l.b16 %v402
        %v2095 = vunpack.c.h.b16 %v402
        %v2096 = vunpack.c.l.b16 %v403
        %v2097 = vunpack.c.h.b16 %v403
        %v2098 = vunpack.c.l.b16 %v404
        %v2099 = vunpack.c.h.b16 %v404
        %v2100 = vunpack.c.l.b16 %v405
        %v2101 = vunpack.c.h.b16 %v405
        %v2102 = vunpack.c.l.b16 %v406
        %v2103 = vunpack.c.h.b16 %v406
        %v2104 = vunpack.c.l.b16 %v407
        %v2105 = vunpack.c.h.b16 %v407
        %v2106 = vunpack.c.l.b16 %v408
        %v2107 = vunpack.c.h.b16 %v408
        %v2108 = vunpack.c.l.b16 %v409
        %v2109 = vunpack.c.h.b16 %v409
        %v2110 = vunpack.c.l.b16 %v410
        %v2111 = vunpack.c.h.b16 %v410
        %v2112 = vunpack.c.l.b16 %v411
        %v2113 = vunpack.c.h.b16 %v411
        %v2114 = vunpack.c.l.b16 %v412
        %v2115 = vunpack.c.h.b16 %v412
        %v2116 = vunpack.c.l.b16 %v413
        %v2117 = vunpack.c.h.b16 %v413
        %v2118 = vunpack.c.l.b16 %v414
        %v2119 = vunpack.c.h.b16 %v414
        %v2120 = vunpack.c.l.b16 %v415
        %v2121 = vunpack.c.h.b16 %v415
        %v2122 = vunpack.c.l.b16 %v416
        %v2123 = vunpack.c.h.b16 %v416
        %v2124 = vunpack.c.l.b16 %v417
        %v2125 = vunpack.c.h.b16 %v417
        %v2126 = vunpack.c.l.b16 %v418
        %v2127 = vunpack.c.h.b16 %v418
        %v2128 = vunpack.c.l.b16 %v419
        %v2129 = vunpack.c.h.b16 %v419
        %v2130 = vunpack.c.l.b16 %v420
        %v2131 = vunpack.c.h.b16 %v420
        %v2132 = vunpack.c.l.b16 %v421
        %v2133 = vunpack.c.h.b16 %v421
        %v2134 = vunpack.c.l.b16 %v422
        %v2135 = vunpack.c.h.b16 %v422
        %v2136 = vunpack.c.l.b16 %v423
        %v2137 = vunpack.c.h.b16 %v423
        %v2138 = vunpack.c.l.b16 %v424
        %v2139 = vunpack.c.h.b16 %v424
        %v2140 = vunpack.c.l.b16 %v425
        %v2141 = vunpack.c.h.b16 %v425
        %v2142 = vunpack.c.l.b16 %v426
        %v2143 = vunpack.c.h.b16 %v426
        %v2144 = vunpack.c.l.b16 %v427
        %v2145 = vunpack.c.h.b16 %v427
        %v2146 = vunpack.c.l.b16 %v428
        %v2147 = vunpack.c.h.b16 %v428
        %v2148 = vunpack.c.l.b16 %v429
        %v2149 = vunpack.c.h.b16 %v429
        %v2150 = vunpack.c.l.b16 %v430
        %v2151 = vunpack.c.h.b16 %v430
        %v2152 = vunpack.c.l.b16 %v431
        %v2153 = vunpack.c.h.b16 %v431
        %v2154 = vunpack.c.l.b16 %v432
        %v2155 = vunpack.c.h.b16 %v432
        %v2156 = vunpack.c.l.b16 %v433
        %v2157 = vunpack.c.h.b16 %v433
        %v2158 = vunpack.c.l.b16 %v434
        %v2159 = vunpack.c.h.b16 %v434
        %v2160 = vunpack.c.l.b16 %v435
        %v2161 = vunpack.c.h.b16 %v435
        %v2162 = vunpack.c.l.b16 %v436
        %v2163 = vunpack.c.h.b16 %v436
        %v2164 = vunpack.c.l.b16 %v437
        %v2165 = vunpack.c.h.b16 %v437
        %v2166 = vunpack.c.l.b16 %v438
        %v2167 = vunpack.c.h.b16 %v438
        %v2168 = vunpack.c.l.b16 %v439
        %v2169 = vunpack.c.h.b16 %v439
        %v2170 = vunpack.c.l.b16 %v440
        %v2171 = vunpack.c.h.b16 %v440
        %v2172 = vunpack.c.l.b16 %v441
        %v2173 = vunpack.c.h.b16 %v441
        %v2174 = vunpack.c.l.b16 %v442
        %v2175 = vunpack.c.h.b16 %v442
        %v2176 = vunpack.c.l.b16 %v443
        %v2177 = vunpack.c.h.b16 %v443
        %v2178 = vunpack.c.l.b16 %v444
        %v2179 = vunpack.c.h.b16 %v444
        %v2180 = vunpack.c.l.b16 %v445
        %v2181 = vunpack.c.h.b16 %v445
        %v2182 = vunpack.c.l.b16 %v446
        %v2183 = vunpack.c.h.b16 %v446
        %v2184 = vunpack.c.l.b16 %v447
        %v2185 = vunpack.c.h.b16 %v447
        %v2186 = vunpack.c.l.b16 %v448
        %v2187 = vunpack.c.h.b16 %v448
        %v2188 = vunpack.c.l.b16 %v449
        %v2189 = vunpack.c.h.b16 %v449
        %v2190 = vunpack.c.l.b16 %v450
        %v2191 = vunpack.c.h.b16 %v450
        %v2192 = vunpack.c.l.b16 %v451
        %v2193 = vunpack.c.h.b16 %v451
        %v2194 = vunpack.c.l.b16 %v452
        %v2195 = vunpack.c.h.b16 %v452
        %v2196 = vunpack.c.l.b16 %v453
        %v2197 = vunpack.c.h.b16 %v453
        %v2198 = vunpack.c.l.b16 %v454
        %v2199 = vunpack.c.h.b16 %v454
        %v2200 = vunpack.c.l.b16 %v455
        %v2201 = vunpack.c.h.b16 %v455
        %v2202 = vunpack.c.l.b16 %v456
        %v2203 = vunpack.c.h.b16 %v456
        %v2204 = vunpack.c.l.b16 %v457
        %v2205 = vunpack.c.h.b16 %v457
        %v2206 = vunpack.c.l.b16 %v458
        %v2207 = vunpack.c.h.b16 %v458
        %v2208 = vunpack.c.l.b16 %v459
        %v2209 = vunpack.c.h.b16 %v459
        %v2210 = vunpack.c.l.b16 %v460
        %v2211 = vunpack.c.h.b16 %v460
        %v2212 = vunpack.c.l.b16 %v461
        %v2213 = vunpack.c.h.b16 %v461
        %v2214 = vunpack.c.l.b16 %v462
        %v2215 = vunpack.c.h.b16 %v462
        %v2216 = vunpack.c.l.b16 %v463
        %v2217 = vunpack.c.h.b16 %v463
        %v2218 = vunpack.c.l.b16 %v464
        %v2219 = vunpack.c.h.b16 %v464
        %v2220 = vunpack.c.l.b16 %v465
        %v2221 = vunpack.c.h.b16 %v465
        %v2222 = vunpack.c.l.b16 %v466
        %v2223 = vunpack.c.h.b16 %v466
        %v2224 = vunpack.c.l.b16 %v467
        %v2225 = vunpack.c.h.b16 %v467
        %v2226 = vunpack.c.l.b16 %v468
        %v2227 = vunpack.c.h.b16 %v468
        %v2228 = vunpack.c.l.b16 %v469
        %v2229 = vunpack.c.h.b16 %v469
        %v2230 = vunpack.c.l.b16 %v470
        %v2231 = vunpack.c.h.b16 %v470
        %v2232 = vunpack.c.l.b16 %v471
        %v2233 = vunpack.c.h.b16 %v471
        %v2234 = vunpack.c.l.b16 %v472
        %v2235 = vunpack.c.h.b16 %v472
        %v2236 = vunpack.c.l.b16 %v473
        %v2237 = vunpack.c.h.b16 %v473
        %v2238 = vunpack.c.l.b16 %v474
        %v2239 = vunpack.c.h.b16 %v474
        %v2240 = vunpack.c.l.b16 %v475
        %v2241 = vunpack.c.h.b16 %v475
        %v2242 = vunpack.c.l.b16 %v476
        %v2243 = vunpack.c.h.b16 %v476
        %v2244 = vunpack.c.l.b16 %v477
        %v2245 = vunpack.c.h.b16 %v477
        %v2246 = vunpack.c.l.b16 %v478
        %v2247 = vunpack.c.h.b16 %v478
        %v2248 = vunpack.c.l.b16 %v479
        %v2249 = vunpack.c.h.b16 %v479
        %v2250 = vunpack.c.l.b16 %v480
        %v2251 = vunpack.c.h.b16 %v480
        %v2252 = vunpack.c.l.b16 %v481
        %v2253 = vunpack.c.h.b16 %v481
        %v2254 = vunpack.c.l.b16 %v482
        %v2255 = vunpack.c.h.b16 %v482
        %v2256 = vunpack.c.l.b16 %v483
        %v2257 = vunpack.c.h.b16 %v483
        %v2258 = vunpack.c.l.b16 %v484
        %v2259 = vunpack.c.h.b16 %v484
        %v2260 = vunpack.c.l.b16 %v485
        %v2261 = vunpack.c.h.b16 %v485
        %v2262 = vunpack.c.l.b16 %v486
        %v2263 = vunpack.c.h.b16 %v486
        %v2264 = vunpack.c.l.b16 %v487
        %v2265 = vunpack.c.h.b16 %v487
        %v2266 = vunpack.c.l.b16 %v488
        %v2267 = vunpack.c.h.b16 %v488
        %v2268 = vunpack.c.l.b16 %v489
        %v2269 = vunpack.c.h.b16 %v489
        %v2270 = vunpack.c.l.b16 %v490
        %v2271 = vunpack.c.h.b16 %v490
        %v2272 = vunpack.c.l.b16 %v491
        %v2273 = vunpack.c.h.b16 %v491
        %v2274 = vunpack.c.l.b16 %v492
        %v2275 = vunpack.c.h.b16 %v492
        %v2276 = vunpack.c.l.b16 %v493
        %v2277 = vunpack.c.h.b16 %v493
        %v2278 = vunpack.c.l.b16 %v494
        %v2279 = vunpack.c.h.b16 %v494
        %v2280 = vunpack.c.l.b16 %v495
        %v2281 = vunpack.c.h.b16 %v495
        %v2282 = vunpack.c.l.b16 %v496
        %v2283 = vunpack.c.h.b16 %v496
        %v2284 = vunpack.c.l.b16 %v497
        %v2285 = vunpack.c.h.b16 %v497
        %v2286 = vunpack.c.l.b16 %v498
        %v2287 = vunpack.c.h.b16 %v498
        %v2288 = vunpack.c.l.b16 %v499
        %v2289 = vunpack.c.h.b16 %v499
        %v2290 = vunpack.c.l.b16 %v500
        %v2291 = vunpack.c.h.b16 %v500
        %v2292 = vunpack.c.l.b16 %v501
        %v2293 = vunpack.c.h.b16 %v501
        %v2294 = vunpack.c.l.b16 %v502
        %v2295 = vunpack.c.h.b16 %v502
        %v2296 = vunpack.c.l.b16 %v503
        %v2297 = vunpack.c.h.b16 %v503
        %v2298 = vunpack.c.l.b16 %v504
        %v2299 = vunpack.c.h.b16 %v504
        %v2300 = vunpack.c.l.b16 %v505
        %v2301 = vunpack.c.h.b16 %v505
        %v2302 = vunpack.c.l.b16 %v506
        %v2303 = vunpack.c.h.b16 %v506
        %v2304 = vunpack.c.l.b16 %v507
        %v2305 = vunpack.c.h.b16 %v507
        %v2306 = vunpack.c.l.b16 %v508
        %v2307 = vunpack.c.h.b16 %v508
        %v2308 = vunpack.c.l.b16 %v509
        %v2309 = vunpack.c.h.b16 %v509
        %v2310 = vunpack.c.l.b16 %v510
        %v2311 = vunpack.c.h.b16 %v510
        %v2312 = vunpack.c.l.b16 %v511
        %v2313 = vunpack.c.h.b16 %v511
        %v2314 = vunpack.c.l.b16 %v512
        %v2315 = vunpack.c.h.b16 %v512
        %v2316 = vunpack.c.l.b16 %v513
        %v2317 = vunpack.c.h.b16 %v513
        %v2318 = vunpack.c.l.b16 %v514
        %v2319 = vunpack.c.h.b16 %v514
        %v2320 = vunpack.c.l.b16 %v515
        %v2321 = vunpack.c.h.b16 %v515
        %v2322 = vunpack.c.l.b16 %v516
        %v2323 = vunpack.c.h.b16 %v516
        %v2324 = vunpack.c.l.b16 %v517
        %v2325 = vunpack.c.h.b16 %v517
        %v2326 = vunpack.c.l.b16 %v518
        %v2327 = vunpack.c.h.b16 %v518
        %v2328 = vunpack.c.l.b16 %v519
        %v2329 = vunpack.c.h.b16 %v519
        %v2330 = vunpack.c.l.b16 %v520
        %v2331 = vunpack.c.h.b16 %v520
        %v2332 = vunpack.c.l.b16 %v521
        %v2333 = vunpack.c.h.b16 %v521
        %v2334 = vunpack.c.l.b16 %v522
        %v2335 = vunpack.c.h.b16 %v522
        %v2336 = vunpack.c.l.b16 %v523
        %v2337 = vunpack.c.h.b16 %v523
        %v2338 = vunpack.c.l.b16 %v524
        %v2339 = vunpack.c.h.b16 %v524
        %v2340 = vunpack.c.l.b16 %v525
        %v2341 = vunpack.c.h.b16 %v525
        %v2342 = vunpack.c.l.b16 %v526
        %v2343 = vunpack.c.h.b16 %v526
        %v2344 = vunpack.c.l.b16 %v527
        %v2345 = vunpack.c.h.b16 %v527
        %v2346 = vunpack.c.l.b16 %v528
        %v2347 = vunpack.c.h.b16 %v528
        %v2348 = vunpack.c.l.b16 %v529
        %v2349 = vunpack.c.h.b16 %v529
        %v2350 = vunpack.c.l.b16 %v530
        %v2351 = vunpack.c.h.b16 %v530
        %v2352 = vunpack.c.l.b16 %v531
        %v2353 = vunpack.c.h.b16 %v531
        %v2354 = vunpack.c.l.b16 %v532
        %v2355 = vunpack.c.h.b16 %v532
        %v2356 = vunpack.c.l.b16 %v533
        %v2357 = vunpack.c.h.b16 %v533
        %v2358 = vunpack.c.l.b16 %v534
        %v2359 = vunpack.c.h.b16 %v534
        %v2360 = vunpack.c.l.b16 %v535
        %v2361 = vunpack.c.h.b16 %v535
        %v2362 = vunpack.c.l.b16 %v536
        %v2363 = vunpack.c.h.b16 %v536
        %v2364 = vunpack.c.l.b16 %v537
        %v2365 = vunpack.c.h.b16 %v537
        %v2366 = vunpack.c.l.b16 %v538
        %v2367 = vunpack.c.h.b16 %v538
        %v2368 = vunpack.c.l.b16 %v539
        %v2369 = vunpack.c.h.b16 %v539
        %v2370 = vunpack.c.l.b16 %v540
        %v2371 = vunpack.c.h.b16 %v540
        %v2372 = vunpack.c.l.b16 %v541
        %v2373 = vunpack.c.h.b16 %v541
        %v2374 = vunpack.c.l.b16 %v542
        %v2375 = vunpack.c.h.b16 %v542
        %v2376 = vunpack.c.l.b16 %v543
        %v2377 = vunpack.c.h.b16 %v543
        %v2378 = vunpack.c.l.b16 %v544
        %v2379 = vunpack.c.h.b16 %v544
        %v2380 = vunpack.c.l.b16 %v545
        %v2381 = vunpack.c.h.b16 %v545
        %v2382 = vunpack.c.l.b16 %v546
        %v2383 = vunpack.c.h.b16 %v546
        %v2384 = vunpack.c.l.b16 %v547
        %v2385 = vunpack.c.h.b16 %v547
        %v2386 = vunpack.c.l.b16 %v548
        %v2387 = vunpack.c.h.b16 %v548
        %v2388 = vunpack.c.l.b16 %v549
        %v2389 = vunpack.c.h.b16 %v549
        %v2390 = vunpack.c.l.b16 %v550
        %v2391 = vunpack.c.h.b16 %v550
        %v2392 = vunpack.c.l.b16 %v551
        %v2393 = vunpack.c.h.b16 %v551
        %v2394 = vunpack.c.l.b16 %v552
        %v2395 = vunpack.c.h.b16 %v552
        %v2396 = vunpack.c.l.b16 %v553
        %v2397 = vunpack.c.h.b16 %v553
        %v2398 = vunpack.c.l.b16 %v554
        %v2399 = vunpack.c.h.b16 %v554
        %v2400 = vunpack.c.l.b16 %v555
        %v2401 = vunpack.c.h.b16 %v555
        %v2402 = vunpack.c.l.b16 %v556
        %v2403 = vunpack.c.h.b16 %v556
        %v2404 = vunpack.c.l.b16 %v557
        %v2405 = vunpack.c.h.b16 %v557
        %v2406 = vunpack.c.l.b16 %v558
        %v2407 = vunpack.c.h.b16 %v558
        %v2408 = vunpack.c.l.b16 %v559
        %v2409 = vunpack.c.h.b16 %v559
        %v2410 = vunpack.c.l.b16 %v560
        %v2411 = vunpack.c.h.b16 %v560
        %v2412 = vunpack.c.l.b16 %v561
        %v2413 = vunpack.c.h.b16 %v561
        %v2414 = vunpack.c.l.b16 %v562
        %v2415 = vunpack.c.h.b16 %v562
        %v2416 = vunpack.c.l.b16 %v563
        %v2417 = vunpack.c.h.b16 %v563
        %v2418 = vunpack.c.l.b16 %v564
        %v2419 = vunpack.c.h.b16 %v564
        %v2420 = vunpack.c.l.b16 %v565
        %v2421 = vunpack.c.h.b16 %v565
        %v2422 = vunpack.c.l.b16 %v566
        %v2423 = vunpack.c.h.b16 %v566
        %v2424 = vunpack.c.l.b16 %v567
        %v2425 = vunpack.c.h.b16 %v567
        %v2426 = vunpack.c.l.b16 %v568
        %v2427 = vunpack.c.h.b16 %v568
        %v2428 = vunpack.c.l.b16 %v569
        %v2429 = vunpack.c.h.b16 %v569
        %v2430 = vunpack.c.l.b16 %v570
        %v2431 = vunpack.c.h.b16 %v570
        %v2432 = vunpack.c.l.b16 %v571
        %v2433 = vunpack.c.h.b16 %v571
        %v2434 = vunpack.c.l.b16 %v572
        %v2435 = vunpack.c.h.b16 %v572
        %v2436 = vunpack.c.l.b16 %v573
        %v2437 = vunpack.c.h.b16 %v573
        %v2438 = vunpack.c.l.b16 %v574
        %v2439 = vunpack.c.h.b16 %v574
        %v2440 = vunpack.c.l.b16 %v575
        %v2441 = vunpack.c.h.b16 %v575
        %v2442 = vunpack.c.l.b16 %v576
        %v2443 = vunpack.c.h.b16 %v576
        %v2444 = vunpack.c.l.b16 %v577
        %v2445 = vunpack.c.h.b16 %v577
        %v2446 = vunpack.c.l.b16 %v578
        %v2447 = vunpack.c.h.b16 %v578
        %v2448 = vunpack.c.l.b16 %v579
        %v2449 = vunpack.c.h.b16 %v579
        %v2450 = vunpack.c.l.b16 %v580
        %v2451 = vunpack.c.h.b16 %v580
        %v2452 = vunpack.c.l.b16 %v581
        %v2453 = vunpack.c.h.b16 %v581
        %v2454 = vunpack.c.l.b16 %v582
        %v2455 = vunpack.c.h.b16 %v582
        %v2456 = vunpack.c.l.b16 %v583
        %v2457 = vunpack.c.h.b16 %v583
        %v2458 = vunpack.c.l.b16 %v584
        %v2459 = vunpack.c.h.b16 %v584
        %v2460 = vunpack.c.l.b16 %v585
        %v2461 = vunpack.c.h.b16 %v585
        %v2462 = vunpack.c.l.b16 %v586
        %v2463 = vunpack.c.h.b16 %v586
        %v2464 = vunpack.c.l.b16 %v587
        %v2465 = vunpack.c.h.b16 %v587
        %v2466 = vunpack.c.l.b16 %v588
        %v2467 = vunpack.c.h.b16 %v588
        %v2468 = vunpack.c.l.b16 %v589
        %v2469 = vunpack.c.h.b16 %v589
        %v2470 = vunpack.c.l.b16 %v590
        %v2471 = vunpack.c.h.b16 %v590
        %v2472 = vunpack.c.l.b16 %v591
        %v2473 = vunpack.c.h.b16 %v591
        %v2474 = vunpack.c.l.b16 %v592
        %v2475 = vunpack.c.h.b16 %v592
        %v2476 = vunpack.c.l.b16 %v593
        %v2477 = vunpack.c.h.b16 %v593
        %v2478 = vunpack.c.l.b16 %v594
        %v2479 = vunpack.c.h.b16 %v594
        %v2480 = vunpack.c.l.b16 %v595
        %v2481 = vunpack.c.h.b16 %v595
        %v2482 = vunpack.c.l.b16 %v596
        %v2483 = vunpack.c.h.b16 %v596
        %v2484 = vunpack.c.l.b16 %v597
        %v2485 = vunpack.c.h.b16 %v597
        %v2486 = vunpack.c.l.b16 %v598
        %v2487 = vunpack.c.h.b16 %v598
        %v2488 = vunpack.c.l.b16 %v599
        %v2489 = vunpack.c.h.b16 %v599
        %v2490 = vunpack.c.l.b16 %v600
        %v2491 = vunpack.c.h.b16 %v600
        %v2492 = vunpack.c.l.b16 %v601
        %v2493 = vunpack.c.h.b16 %v601
        %v2494 = vunpack.c.l.b16 %v602
        %v2495 = vunpack.c.h.b16 %v602
        %v2496 = vunpack.c.l.b16 %v603
        %v2497 = vunpack.c.h.b16 %v603
        %v2498 = vunpack.c.l.b16 %v604
        %v2499 = vunpack.c.h.b16 %v604
        %v2500 = vunpack.c.l.b16 %v605
        %v2501 = vunpack.c.h.b16 %v605
        %v2502 = vunpack.c.l.b16 %v606
        %v2503 = vunpack.c.h.b16 %v606
        %v2504 = vunpack.c.l.b16 %v607
        %v2505 = vunpack.c.h.b16 %v607
        %v2506 = vunpack.c.l.b16 %v608
        %v2507 = vunpack.c.h.b16 %v608
        %v2508 = vunpack.c.l.b16 %v609
        %v2509 = vunpack.c.h.b16 %v609
        %v2510 = vunpack.c.l.b16 %v610
        %v2511 = vunpack.c.h.b16 %v610
        %v2512 = vunpack.c.l.b16 %v611
        %v2513 = vunpack.c.h.b16 %v611
        %v2514 = vunpack.c.l.b16 %v612
        %v2515 = vunpack.c.h.b16 %v612
        %v2516 = vunpack.c.l.b16 %v613
        %v2517 = vunpack.c.h.b16 %v613
        %v2518 = vunpack.c.l.b16 %v614
        %v2519 = vunpack.c.h.b16 %v614
        %v2520 = vunpack.c.l.b16 %v615
        %v2521 = vunpack.c.h.b16 %v615
        %v2522 = vunpack.c.l.b16 %v616
        %v2523 = vunpack.c.h.b16 %v616
        %v2524 = vunpack.c.l.b16 %v617
        %v2525 = vunpack.c.h.b16 %v617
        %v2526 = vunpack.c.l.b16 %v618
        %v2527 = vunpack.c.h.b16 %v618
        %v2528 = vunpack.c.l.b16 %v619
        %v2529 = vunpack.c.h.b16 %v619
        %v2530 = vunpack.c.l.b16 %v620
        %v2531 = vunpack.c.h.b16 %v620
        %v2532 = vunpack.c.l.b16 %v621
        %v2533 = vunpack.c.h.b16 %v621
        %v2534 = vunpack.c.l.b16 %v622
        %v2535 = vunpack.c.h.b16 %v622
        %v2536 = vunpack.c.l.b16 %v623
        %v2537 = vunpack.c.h.b16 %v623
        %v2538 = vunpack.c.l.b16 %v624
        %v2539 = vunpack.c.h.b16 %v624
        %v2540 = vunpack.c.l.b16 %v625
        %v2541 = vunpack.c.h.b16 %v625
        %v2542 = vunpack.c.l.b16 %v626
        %v2543 = vunpack.c.h.b16 %v626
        %v2544 = vunpack.c.l.b16 %v627
        %v2545 = vunpack.c.h.b16 %v627
        %v2546 = vunpack.c.l.b16 %v628
        %v2547 = vunpack.c.h.b16 %v628
        %v2548 = vunpack.c.l.b16 %v629
        %v2549 = vunpack.c.h.b16 %v629
        %v2550 = vunpack.c.l.b16 %v630
        %v2551 = vunpack.c.h.b16 %v630
        %v2552 = vunpack.c.l.b16 %v631
        %v2553 = vunpack.c.h.b16 %v631
        %v2554 = vunpack.c.l.b16 %v632
        %v2555 = vunpack.c.h.b16 %v632
        %v2556 = vunpack.c.l.b16 %v633
        %v2557 = vunpack.c.h.b16 %v633
        %v2558 = vunpack.c.l.b16 %v634
        %v2559 = vunpack.c.h.b16 %v634
        %v2560 = vunpack.c.l.b16 %v635
        %v2561 = vunpack.c.h.b16 %v635
        %v2562 = vunpack.c.l.b16 %v636
        %v2563 = vunpack.c.h.b16 %v636
        %v2564 = vunpack.c.l.b16 %v637
        %v2565 = vunpack.c.h.b16 %v637
        %v2566 = vunpack.c.l.b16 %v638
        %v2567 = vunpack.c.h.b16 %v638
        %v2568 = vunpack.c.l.b16 %v639
        %v2569 = vunpack.c.h.b16 %v639
        %v2570 = vunpack.c.l.b16 %v640
        %v2571 = vunpack.c.h.b16 %v640
        %v2572 = vunpack.c.l.b16 %v641
        %v2573 = vunpack.c.h.b16 %v641
        %v2574 = vunpack.c.l.b16 %v642
        %v2575 = vunpack.c.h.b16 %v642
        %v2576 = vunpack.c.l.b16 %v643
        %v2577 = vunpack.c.h.b16 %v643
        %v2578 = vunpack.c.l.b16 %v644
        %v2579 = vunpack.c.h.b16 %v644
        %v2580 = vunpack.c.l.b16 %v645
        %v2581 = vunpack.c.h.b16 %v645
        %v2582 = vunpack.c.l.b16 %v646
        %v2583 = vunpack.c.h.b16 %v646
        %v2584 = vunpack.c.l.b16 %v647
        %v2585 = vunpack.c.h.b16 %v647
        %v2586 = vunpack.c.l.b16 %v648
        %v2587 = vunpack.c.h.b16 %v648
        %v2588 = vunpack.c.l.b16 %v649
        %v2589 = vunpack.c.h.b16 %v649
        %v2590 = vunpack.c.l.b16 %v650
        %v2591 = vunpack.c.h.b16 %v650
        %v2592 = vunpack.c.l.b16 %v651
        %v2593 = vunpack.c.h.b16 %v651
        %v2594 = vunpack.c.l.b16 %v652
        %v2595 = vunpack.c.h.b16 %v652
        %v2596 = vunpack.c.l.b16 %v653
        %v2597 = vunpack.c.h.b16 %v653
        %v2598 = vunpack.c.l.b16 %v654
        %v2599 = vunpack.c.h.b16 %v654
        %v2600 = vunpack.c.l.b16 %v655
        %v2601 = vunpack.c.h.b16 %v655
        %v2602 = vunpack.c.l.b16 %v656
        %v2603 = vunpack.c.h.b16 %v656
        %v2604 = vunpack.c.l.b16 %v657
        %v2605 = vunpack.c.h.b16 %v657
        %v2606 = vunpack.c.l.b16 %v658
        %v2607 = vunpack.c.h.b16 %v658
        %v2608 = vunpack.c.l.b16 %v659
        %v2609 = vunpack.c.h.b16 %v659
        %v2610 = vunpack.c.l.b16 %v660
        %v2611 = vunpack.c.h.b16 %v660
        %v2612 = vunpack.c.l.b16 %v661
        %v2613 = vunpack.c.h.b16 %v661
        %v2614 = vunpack.c.l.b16 %v662
        %v2615 = vunpack.c.h.b16 %v662
        %v2616 = vunpack.c.l.b16 %v663
        %v2617 = vunpack.c.h.b16 %v663
        %v2618 = vunpack.c.l.b16 %v664
        %v2619 = vunpack.c.h.b16 %v664
        %v2620 = vunpack.c.l.b16 %v665
        %v2621 = vunpack.c.h.b16 %v665
        %v2622 = vunpack.c.l.b16 %v666
        %v2623 = vunpack.c.h.b16 %v666
        %v2624 = vunpack.c.l.b16 %v667
        %v2625 = vunpack.c.h.b16 %v667
        %v2626 = vunpack.c.l.b16 %v668
        %v2627 = vunpack.c.h.b16 %v668
        %v2628 = vunpack.c.l.b16 %v669
        %v2629 = vunpack.c.h.b16 %v669
        %v2630 = vunpack.c.l.b16 %v670
        %v2631 = vunpack.c.h.b16 %v670
        %v2632 = vunpack.c.l.b16 %v671
        %v2633 = vunpack.c.h.b16 %v671
        %v2634 = vunpack.c.l.b16 %v672
        %v2635 = vunpack.c.h.b16 %v672
        %v2636 = vunpack.c.l.b16 %v673
        %v2637 = vunpack.c.h.b16 %v673
        %v2638 = vunpack.c.l.b16 %v674
        %v2639 = vunpack.c.h.b16 %v674
        %v2640 = vunpack.c.l.b16 %v675
        %v2641 = vunpack.c.h.b16 %v675
        %v2642 = vunpack.c.l.b16 %v676
        %v2643 = vunpack.c.h.b16 %v676
        %v2644 = vunpack.c.l.b16 %v677
        %v2645 = vunpack.c.h.b16 %v677
        %v2646 = vunpack.c.l.b16 %v678
        %v2647 = vunpack.c.h.b16 %v678
        %v2648 = vunpack.c.l.b16 %v679
        %v2649 = vunpack.c.h.b16 %v679
        %v2650 = vunpack.c.l.b16 %v680
        %v2651 = vunpack.c.h.b16 %v680
        %v2652 = vunpack.c.l.b16 %v681
        %v2653 = vunpack.c.h.b16 %v681
        %v2654 = vunpack.c.l.b16 %v682
        %v2655 = vunpack.c.h.b16 %v682
        %v2656 = vunpack.c.l.b16 %v683
        %v2657 = vunpack.c.h.b16 %v683
        %v2658 = vunpack.c.l.b16 %v684
        %v2659 = vunpack.c.h.b16 %v684
        %v2660 = vunpack.c.l.b16 %v685
        %v2661 = vunpack.c.h.b16 %v685
        %v2662 = vunpack.c.l.b16 %v686
        %v2663 = vunpack.c.h.b16 %v686
        %v2664 = vunpack.c.l.b16 %v687
        %v2665 = vunpack.c.h.b16 %v687
        %v2666 = vunpack.c.l.b16 %v688
        %v2667 = vunpack.c.h.b16 %v688
        %v2668 = vunpack.c.l.b16 %v689
        %v2669 = vunpack.c.h.b16 %v689
        %v2670 = vunpack.c.l.b16 %v690
        %v2671 = vunpack.c.h.b16 %v690
        %v2672 = vunpack.c.l.b16 %v691
        %v2673 = vunpack.c.h.b16 %v691
        %v2674 = vunpack.c.l.b16 %v692
        %v2675 = vunpack.c.h.b16 %v692
        %v2676 = vunpack.c.l.b16 %v693
        %v2677 = vunpack.c.h.b16 %v693
        %v2678 = vunpack.c.l.b16 %v694
        %v2679 = vunpack.c.h.b16 %v694
        %v2680 = vunpack.c.l.b16 %v695
        %v2681 = vunpack.c.h.b16 %v695
        %v2682 = vunpack.c.l.b16 %v696
        %v2683 = vunpack.c.h.b16 %v696
        %v2684 = vunpack.c.l.b16 %v697
        %v2685 = vunpack.c.h.b16 %v697
        %v2686 = vunpack.c.l.b16 %v698
        %v2687 = vunpack.c.h.b16 %v698
        %v2688 = vunpack.c.l.b16 %v699
        %v2689 = vunpack.c.h.b16 %v699
        %v2690 = vunpack.c.l.b16 %v700
        %v2691 = vunpack.c.h.b16 %v700
        %v2692 = vunpack.c.l.b16 %v701
        %v2693 = vunpack.c.h.b16 %v701
        %v2694 = vunpack.c.l.b16 %v702
        %v2695 = vunpack.c.h.b16 %v702
        %v2696 = vunpack.c.l.b16 %v703
        %v2697 = vunpack.c.h.b16 %v703
        %v2698 = vunpack.c.l.b16 %v704
        %v2699 = vunpack.c.h.b16 %v704
        %v2700 = vunpack.c.l.b16 %v705
        %v2701 = vunpack.c.h.b16 %v705
        %v2702 = vunpack.c.l.b16 %v706
        %v2703 = vunpack.c.h.b16 %v706
        %v2704 = vunpack.c.l.b16 %v707
        %v2705 = vunpack.c.h.b16 %v707
        %v2706 = vunpack.c.l.b16 %v708
        %v2707 = vunpack.c.h.b16 %v708
        %v2708 = vunpack.c.l.b16 %v709
        %v2709 = vunpack.c.h.b16 %v709
        %v2710 = vunpack.c.l.b16 %v710
        %v2711 = vunpack.c.h.b16 %v710
        %v2712 = vunpack.c.l.b16 %v711
        %v2713 = vunpack.c.h.b16 %v711
        %v2714 = vunpack.c.l.b16 %v712
        %v2715 = vunpack.c.h.b16 %v712
        %v2716 = vunpack.c.l.b16 %v713
        %v2717 = vunpack.c.h.b16 %v713
        %v2718 = vunpack.c.l.b16 %v714
        %v2719 = vunpack.c.h.b16 %v714
        %v2720 = vunpack.c.l.b16 %v715
        %v2721 = vunpack.c.h.b16 %v715
        %v2722 = vunpack.c.l.b16 %v716
        %v2723 = vunpack.c.h.b16 %v716
        %v2724 = vunpack.c.l.b16 %v717
        %v2725 = vunpack.c.h.b16 %v717
        %v2726 = vunpack.c.l.b16 %v718
        %v2727 = vunpack.c.h.b16 %v718
        %v2728 = vunpack.c.l.b16 %v719
        %v2729 = vunpack.c.h.b16 %v719
        %v2730 = vunpack.c.l.b16 %v720
        %v2731 = vunpack.c.h.b16 %v720
        %v2732 = vunpack.c.l.b16 %v721
        %v2733 = vunpack.c.h.b16 %v721
        %v2734 = vunpack.c.l.b16 %v722
        %v2735 = vunpack.c.h.b16 %v722
        %v2736 = vunpack.c.l.b16 %v723
        %v2737 = vunpack.c.h.b16 %v723
        %v2738 = vunpack.c.l.b16 %v724
        %v2739 = vunpack.c.h.b16 %v724
        %v2740 = vunpack.c.l.b16 %v725
        %v2741 = vunpack.c.h.b16 %v725
        %v2742 = vunpack.c.l.b16 %v726
        %v2743 = vunpack.c.h.b16 %v726
        %v2744 = vunpack.c.l.b16 %v727
        %v2745 = vunpack.c.h.b16 %v727
        %v2746 = vunpack.c.l.b16 %v728
        %v2747 = vunpack.c.h.b16 %v728
        %v2748 = vunpack.c.l.b16 %v729
        %v2749 = vunpack.c.h.b16 %v729
        %v2750 = vunpack.c.l.b16 %v730
        %v2751 = vunpack.c.h.b16 %v730
        %v2752 = vunpack.c.l.b16 %v731
        %v2753 = vunpack.c.h.b16 %v731
        %v2754 = vunpack.c.l.b16 %v732
        %v2755 = vunpack.c.h.b16 %v732
        %v2756 = vunpack.c.l.b16 %v733
        %v2757 = vunpack.c.h.b16 %v733
        %v2758 = vunpack.c.l.b16 %v734
        %v2759 = vunpack.c.h.b16 %v734
        %v2760 = vunpack.c.l.b16 %v735
        %v2761 = vunpack.c.h.b16 %v735
        %v2762 = vunpack.c.l.b16 %v736
        %v2763 = vunpack.c.h.b16 %v736
        %v2764 = vunpack.c.l.b16 %v737
        %v2765 = vunpack.c.h.b16 %v737
        %v2766 = vunpack.c.l.b16 %v738
        %v2767 = vunpack.c.h.b16 %v738
        %v2768 = vunpack.c.l.b16 %v739
        %v2769 = vunpack.c.h.b16 %v739
        %v2770 = vunpack.c.l.b16 %v740
        %v2771 = vunpack.c.h.b16 %v740
        %v2772 = vunpack.c.l.b16 %v741
        %v2773 = vunpack.c.h.b16 %v741
        %v2774 = vunpack.c.l.b16 %v742
        %v2775 = vunpack.c.h.b16 %v742
        %v2776 = vunpack.c.l.b16 %v743
        %v2777 = vunpack.c.h.b16 %v743
        %v2778 = vunpack.c.l.b16 %v744
        %v2779 = vunpack.c.h.b16 %v744
        %v2780 = vunpack.c.l.b16 %v745
        %v2781 = vunpack.c.h.b16 %v745
        %v2782 = vunpack.c.l.b16 %v746
        %v2783 = vunpack.c.h.b16 %v746
        %v2784 = vunpack.c.l.b16 %v747
        %v2785 = vunpack.c.h.b16 %v747
        %v2786 = vunpack.c.l.b16 %v748
        %v2787 = vunpack.c.h.b16 %v748
        %v2788 = vunpack.c.l.b16 %v749
        %v2789 = vunpack.c.h.b16 %v749
        %v2790 = vunpack.c.l.b16 %v750
        %v2791 = vunpack.c.h.b16 %v750
        %v2792 = vunpack.c.l.b16 %v751
        %v2793 = vunpack.c.h.b16 %v751
        %v2794 = vunpack.c.l.b16 %v752
        %v2795 = vunpack.c.h.b16 %v752
        %v2796 = vunpack.c.l.b16 %v753
        %v2797 = vunpack.c.h.b16 %v753
        %v2798 = vunpack.c.l.b16 %v754
        %v2799 = vunpack.c.h.b16 %v754
        %v2800 = vunpack.c.l.b16 %v755
        %v2801 = vunpack.c.h.b16 %v755
        %v2802 = vunpack.c.l.b16 %v756
        %v2803 = vunpack.c.h.b16 %v756
        %v2804 = vunpack.c.l.b16 %v757
        %v2805 = vunpack.c.h.b16 %v757
        %v2806 = vunpack.c.l.b16 %v758
        %v2807 = vunpack.c.h.b16 %v758
        %v2808 = vunpack.c.l.b16 %v759
        %v2809 = vunpack.c.h.b16 %v759
        %v2810 = vunpack.c.l.b16 %v760
        %v2811 = vunpack.c.h.b16 %v760
        %v2812 = vunpack.c.l.b16 %v761
        %v2813 = vunpack.c.h.b16 %v761
        %v2814 = vunpack.c.l.b16 %v762
        %v2815 = vunpack.c.h.b16 %v762
        %v2816 = vunpack.c.l.b16 %v763
        %v2817 = vunpack.c.h.b16 %v763
        %v2818 = vunpack.c.l.b16 %v764
        %v2819 = vunpack.c.h.b16 %v764
        %v2820 = vunpack.c.l.b16 %v765
        %v2821 = vunpack.c.h.b16 %v765
        %v2822 = vunpack.c.l.b16 %v766
        %v2823 = vunpack.c.h.b16 %v766
        %v2824 = vunpack.c.l.b16 %v767
        %v2825 = vunpack.c.h.b16 %v767
        %v2826 = vunpack.c.l.b16 %v768
        %v2827 = vunpack.c.h.b16 %v768
        %v2828 = vunpack.c.l.b16 %v769
        %v2829 = vunpack.c.h.b16 %v769
        %v2830 = vunpack.c.l.b16 %v770
        %v2831 = vunpack.c.h.b16 %v770
        %v2832 = vunpack.c.l.b16 %v771
        %v2833 = vunpack.c.h.b16 %v771
        %v2834 = vunpack.c.l.b16 %v772
        %v2835 = vunpack.c.h.b16 %v772
        %v2836 = vunpack.c.l.b16 %v773
        %v2837 = vunpack.c.h.b16 %v773
        %v2838 = vunpack.c.l.b16 %v774
        %v2839 = vunpack.c.h.b16 %v774
        %v2840 = vunpack.c.l.b16 %v775
        %v2841 = vunpack.c.h.b16 %v775
        %v2842 = vunpack.c.l.b16 %v776
        %v2843 = vunpack.c.h.b16 %v776
        %v2844 = vunpack.c.l.b16 %v777
        %v2845 = vunpack.c.h.b16 %v777
        %v2846 = vunpack.c.l.b16 %v778
        %v2847 = vunpack.c.h.b16 %v778
        %v2848 = vunpack.c.l.b16 %v779
        %v2849 = vunpack.c.h.b16 %v779
        %v2850 = vunpack.c.l.b16 %v780
        %v2851 = vunpack.c.h.b16 %v780
        %v2852 = vunpack.c.l.b16 %v781
        %v2853 = vunpack.c.h.b16 %v781
        %v2854 = vunpack.c.l.b16 %v782
        %v2855 = vunpack.c.h.b16 %v782
        %v2856 = vunpack.c.l.b16 %v783
        %v2857 = vunpack.c.h.b16 %v783
        %v2858 = vunpack.c.l.b16 %v784
        %v2859 = vunpack.c.h.b16 %v784
        %v2860 = vunpack.c.l.b16 %v785
        %v2861 = vunpack.c.h.b16 %v785
        %v2862 = vunpack.c.l.b16 %v786
        %v2863 = vunpack.c.h.b16 %v786
        %v2864 = vunpack.c.l.b16 %v787
        %v2865 = vunpack.c.h.b16 %v787
        %v2866 = vunpack.c.l.b16 %v788
        %v2867 = vunpack.c.h.b16 %v788
        %v2868 = vunpack.c.l.b16 %v789
        %v2869 = vunpack.c.h.b16 %v789
        %v2870 = vunpack.c.l.b16 %v790
        %v2871 = vunpack.c.h.b16 %v790
        %v2872 = vunpack.c.l.b16 %v791
        %v2873 = vunpack.c.h.b16 %v791
        %v2874 = vunpack.c.l.b16 %v792
        %v2875 = vunpack.c.h.b16 %v792
        %v2876 = vunpack.c.l.b16 %v793
        %v2877 = vunpack.c.h.b16 %v793
        %v2878 = vunpack.c.l.b16 %v794
        %v2879 = vunpack.c.h.b16 %v794
        %v2880 = vunpack.c.l.b16 %v795
        %v2881 = vunpack.c.h.b16 %v795
        %v2882 = vunpack.c.l.b16 %v796
        %v2883 = vunpack.c.h.b16 %v796
        %v2884 = vunpack.c.l.b16 %v797
        %v2885 = vunpack.c.h.b16 %v797
        %v2886 = vunpack.c.l.b16 %v798
        %v2887 = vunpack.c.h.b16 %v798
        %v2888 = vunpack.c.l.b16 %v799
        %v2889 = vunpack.c.h.b16 %v799
        %v2890 = vunpack.c.l.b16 %v800
        %v2891 = vunpack.c.h.b16 %v800
        %v2892 = vunpack.c.l.b16 %v801
        %v2893 = vunpack.c.h.b16 %v801
        %v2894 = vunpack.c.l.b16 %v802
        %v2895 = vunpack.c.h.b16 %v802
        %v2896 = vunpack.c.l.b16 %v803
        %v2897 = vunpack.c.h.b16 %v803
        %v2898 = vunpack.c.l.b16 %v804
        %v2899 = vunpack.c.h.b16 %v804
        %v2900 = vunpack.c.l.b16 %v805
        %v2901 = vunpack.c.h.b16 %v805
        %v2902 = vunpack.c.l.b16 %v806
        %v2903 = vunpack.c.h.b16 %v806
        %v2904 = vunpack.c.l.b16 %v807
        %v2905 = vunpack.c.h.b16 %v807
        %v2906 = vunpack.c.l.b16 %v808
        %v2907 = vunpack.c.h.b16 %v808
        %v2908 = vunpack.c.l.b16 %v809
        %v2909 = vunpack.c.h.b16 %v809
        %v2910 = vunpack.c.l.b16 %v810
        %v2911 = vunpack.c.h.b16 %v810
        %v2912 = vunpack.c.l.b16 %v811
        %v2913 = vunpack.c.h.b16 %v811
        %v2914 = vunpack.c.l.b16 %v812
        %v2915 = vunpack.c.h.b16 %v812
        %v2916 = vunpack.c.l.b16 %v813
        %v2917 = vunpack.c.h.b16 %v813
        %v2918 = vunpack.c.l.b16 %v814
        %v2919 = vunpack.c.h.b16 %v814
        %v2920 = vunpack.c.l.b16 %v815
        %v2921 = vunpack.c.h.b16 %v815
        %v2922 = vunpack.c.l.b16 %v816
        %v2923 = vunpack.c.h.b16 %v816
        %v2924 = vunpack.c.l.b16 %v817
        %v2925 = vunpack.c.h.b16 %v817
        %v2926 = vunpack.c.l.b16 %v818
        %v2927 = vunpack.c.h.b16 %v818
        %v2928 = vunpack.c.l.b16 %v819
        %v2929 = vunpack.c.h.b16 %v819
        %v2930 = vunpack.c.l.b16 %v820
        %v2931 = vunpack.c.h.b16 %v820
        %v2932 = vunpack.c.l.b16 %v821
        %v2933 = vunpack.c.h.b16 %v821
        %v2934 = vunpack.c.l.b16 %v822
        %v2935 = vunpack.c.h.b16 %v822
        %v2936 = vunpack.c.l.b16 %v823
        %v2937 = vunpack.c.h.b16 %v823
        %v2938 = vunpack.c.l.b16 %v824
        %v2939 = vunpack.c.h.b16 %v824
        %v2940 = vunpack.c.l.b16 %v825
        %v2941 = vunpack.c.h.b16 %v825
        %v2942 = vunpack.c.l.b16 %v826
        %v2943 = vunpack.c.h.b16 %v826
        %v2944 = vunpack.c.l.b16 %v827
        %v2945 = vunpack.c.h.b16 %v827
        %v2946 = vunpack.c.l.b16 %v828
        %v2947 = vunpack.c.h.b16 %v828
        %v2948 = vunpack.c.l.b16 %v829
        %v2949 = vunpack.c.h.b16 %v829
        %v2950 = vunpack.c.l.b16 %v830
        %v2951 = vunpack.c.h.b16 %v830
        %v2952 = vunpack.c.l.b16 %v831
        %v2953 = vunpack.c.h.b16 %v831
        %v2954 = vunpack.c.l.b16 %v832
        %v2955 = vunpack.c.h.b16 %v832
        %v2956 = vunpack.c.l.b16 %v833
        %v2957 = vunpack.c.h.b16 %v833
        %v2958 = vunpack.c.l.b16 %v834
        %v2959 = vunpack.c.h.b16 %v834
        %v2960 = vunpack.c.l.b16 %v835
        %v2961 = vunpack.c.h.b16 %v835
        %v2962 = vunpack.c.l.b16 %v836
        %v2963 = vunpack.c.h.b16 %v836
        %v2964 = vunpack.c.l.b16 %v837
        %v2965 = vunpack.c.h.b16 %v837
        %v2966 = vunpack.c.l.b16 %v838
        %v2967 = vunpack.c.h.b16 %v838
        %v2968 = vunpack.c.l.b16 %v839
        %v2969 = vunpack.c.h.b16 %v839
        %v2970 = vunpack.c.l.b16 %v840
        %v2971 = vunpack.c.h.b16 %v840
        %v2972 = vunpack.c.l.b16 %v841
        %v2973 = vunpack.c.h.b16 %v841
        %v2974 = vunpack.c.l.b16 %v842
        %v2975 = vunpack.c.h.b16 %v842
        %v2976 = vunpack.c.l.b16 %v843
        %v2977 = vunpack.c.h.b16 %v843
        %v2978 = vunpack.c.l.b16 %v844
        %v2979 = vunpack.c.h.b16 %v844
        %v2980 = vunpack.c.l.b16 %v845
        %v2981 = vunpack.c.h.b16 %v845
        %v2982 = vunpack.c.l.b16 %v846
        %v2983 = vunpack.c.h.b16 %v846
        %v2984 = vunpack.c.l.b16 %v847
        %v2985 = vunpack.c.h.b16 %v847
        %v2986 = vunpack.c.l.b16 %v848
        %v2987 = vunpack.c.h.b16 %v848
        %v2988 = vunpack.c.l.b16 %v849
        %v2989 = vunpack.c.h.b16 %v849
        %v2990 = vunpack.c.l.b16 %v850
        %v2991 = vunpack.c.h.b16 %v850
        %v2992 = vunpack.c.l.b16 %v851
        %v2993 = vunpack.c.h.b16 %v851
        %v2994 = vunpack.c.l.b16 %v852
        %v2995 = vunpack.c.h.b16 %v852
        %v2996 = vunpack.c.l.b16 %v853
        %v2997 = vunpack.c.h.b16 %v853
        %v2998 = vunpack.c.l.b16 %v854
        %v2999 = vunpack.c.h.b16 %v854
        %v3000 = vunpack.c.l.b16 %v855
        %v3001 = vunpack.c.h.b16 %v855
        %v3002 = vunpack.c.l.b16 %v856
        %v3003 = vunpack.c.h.b16 %v856
        %v3004 = vunpack.c.l.b16 %v857
        %v3005 = vunpack.c.h.b16 %v857
        %v3006 = vunpack.c.l.b16 %v858
        %v3007 = vunpack.c.h.b16 %v858
        %v3008 = vunpack.c.l.b16 %v859
        %v3009 = vunpack.c.h.b16 %v859
        %v3010 = vunpack.c.l.b16 %v860
        %v3011 = vunpack.c.h.b16 %v860
        %v3012 = vunpack.c.l.b16 %v861
        %v3013 = vunpack.c.h.b16 %v861
        %v3014 = vunpack.c.l.b16 %v862
        %v3015 = vunpack.c.h.b16 %v862
        %v3016 = vunpack.c.l.b16 %v863
        %v3017 = vunpack.c.h.b16 %v863
        %v3018 = vunpack.c.l.b16 %v864
        %v3019 = vunpack.c.h.b16 %v864
        %v3020 = vunpack.c.l.b16 %v865
        %v3021 = vunpack.c.h.b16 %v865
        %v3022 = vunpack.c.l.b16 %v866
        %v3023 = vunpack.c.h.b16 %v866
        %v3024 = vunpack.c.l.b16 %v867
        %v3025 = vunpack.c.h.b16 %v867
        %v3026 = vunpack.c.l.b16 %v868
        %v3027 = vunpack.c.h.b16 %v868
        %v3028 = vunpack.c.l.b16 %v869
        %v3029 = vunpack.c.h.b16 %v869
        %v3030 = vunpack.c.l.b16 %v870
        %v3031 = vunpack.c.h.b16 %v870
        %v3032 = vunpack.c.l.b16 %v871
        %v3033 = vunpack.c.h.b16 %v871
        %v3034 = vunpack.c.l.b16 %v872
        %v3035 = vunpack.c.h.b16 %v872
        %v3036 = vunpack.c.l.b16 %v873
        %v3037 = vunpack.c.h.b16 %v873
        %v3038 = vunpack.c.l.b16 %v874
        %v3039 = vunpack.c.h.b16 %v874
        %v3040 = vunpack.c.l.b16 %v875
        %v3041 = vunpack.c.h.b16 %v875
        %v3042 = vunpack.c.l.b16 %v876
        %v3043 = vunpack.c.h.b16 %v876
        %v3044 = vunpack.c.l.b16 %v877
        %v3045 = vunpack.c.h.b16 %v877
        %v3046 = vunpack.c.l.b16 %v878
        %v3047 = vunpack.c.h.b16 %v878
        %v3048 = vunpack.c.l.b16 %v879
        %v3049 = vunpack.c.h.b16 %v879
        %v3050 = vunpack.c.l.b16 %v880
        %v3051 = vunpack.c.h.b16 %v880
        %v3052 = vunpack.c.l.b16 %v881
        %v3053 = vunpack.c.h.b16 %v881
        %v3054 = vunpack.c.l.b16 %v882
        %v3055 = vunpack.c.h.b16 %v882
        %v3056 = vunpack.c.l.b16 %v883
        %v3057 = vunpack.c.h.b16 %v883
        %v3058 = vunpack.c.l.b16 %v884
        %v3059 = vunpack.c.h.b16 %v884
        %v3060 = vunpack.c.l.b16 %v885
        %v3061 = vunpack.c.h.b16 %v885
        %v3062 = vunpack.c.l.b16 %v886
        %v3063 = vunpack.c.h.b16 %v886
        %v3064 = vunpack.c.l.b16 %v887
        %v3065 = vunpack.c.h.b16 %v887
        %v3066 = vunpack.c.l.b16 %v888
        %v3067 = vunpack.c.h.b16 %v888
        %v3068 = vunpack.c.l.b16 %v889
        %v3069 = vunpack.c.h.b16 %v889
        %v3070 = vunpack.c.l.b16 %v890
        %v3071 = vunpack.c.h.b16 %v890
        %v3072 = vunpack.c.l.b16 %v891
        %v3073 = vunpack.c.h.b16 %v891
        %v3074 = vunpack.c.l.b16 %v892
        %v3075 = vunpack.c.h.b16 %v892
        %v3076 = vunpack.c.l.b16 %v893
        %v3077 = vunpack.c.h.b16 %v893
        %v3078 = vunpack.c.l.b16 %v894
        %v3079 = vunpack.c.h.b16 %v894
        %v3080 = vunpack.c.l.b16 %v895
        %v3081 = vunpack.c.h.b16 %v895
        %v3082 = vunpack.c.l.b16 %v896
        %v3083 = vunpack.c.h.b16 %v896
        %v3084 = vunpack.c.l.b16 %v897
        %v3085 = vunpack.c.h.b16 %v897
        %v3086 = vunpack.c.l.b16 %v898
        %v3087 = vunpack.c.h.b16 %v898
        %v3088 = vunpack.c.l.b16 %v899
        %v3089 = vunpack.c.h.b16 %v899
        %v3090 = vunpack.c.l.b16 %v900
        %v3091 = vunpack.c.h.b16 %v900
        %v3092 = vunpack.c.l.b16 %v901
        %v3093 = vunpack.c.h.b16 %v901
        %v3094 = vunpack.c.l.b16 %v902
        %v3095 = vunpack.c.h.b16 %v902
        %v3096 = vunpack.c.l.b16 %v903
        %v3097 = vunpack.c.h.b16 %v903
        %v3098 = vunpack.c.l.b16 %v904
        %v3099 = vunpack.c.h.b16 %v904
        %v3100 = vunpack.c.l.b16 %v905
        %v3101 = vunpack.c.h.b16 %v905
        %v3102 = vunpack.c.l.b16 %v906
        %v3103 = vunpack.c.h.b16 %v906
        %v3104 = vunpack.c.l.b16 %v907
        %v3105 = vunpack.c.h.b16 %v907
        %v3106 = vunpack.c.l.b16 %v908
        %v3107 = vunpack.c.h.b16 %v908
        %v3108 = vunpack.c.l.b16 %v909
        %v3109 = vunpack.c.h.b16 %v909
        %v3110 = vunpack.c.l.b16 %v910
        %v3111 = vunpack.c.h.b16 %v910
        %v3112 = vunpack.c.l.b16 %v911
        %v3113 = vunpack.c.h.b16 %v911
        %v3114 = vunpack.c.l.b16 %v912
        %v3115 = vunpack.c.h.b16 %v912
        %v3116 = vunpack.c.l.b16 %v913
        %v3117 = vunpack.c.h.b16 %v913
        %v3118 = vunpack.c.l.b16 %v914
        %v3119 = vunpack.c.h.b16 %v914
        %v3120 = vunpack.c.l.b16 %v915
        %v3121 = vunpack.c.h.b16 %v915
        %v3122 = vunpack.c.l.b16 %v916
        %v3123 = vunpack.c.h.b16 %v916
        %v3124 = vunpack.c.l.b16 %v917
        %v3125 = vunpack.c.h.b16 %v917
        %v3126 = vunpack.c.l.b16 %v918
        %v3127 = vunpack.c.h.b16 %v918
        %v3128 = vunpack.c.l.b16 %v919
        %v3129 = vunpack.c.h.b16 %v919
        %v3130 = vpack.c.b16 %v1852, %v1850
        %v3131 = vpack.c.b16 %v1853, %v1851
        %v3132 = vpack.c.b16 %v1856, %v1854
        %v3133 = vpack.c.b16 %v1857, %v1855
        %v3134 = vpack.c.b16 %v1860, %v1858
        %v3135 = vpack.c.b16 %v1861, %v1859
        %v3136 = vpack.c.b16 %v1864, %v1862
        %v3137 = vpack.c.b16 %v1865, %v1863
        %v3138 = vpack.c.b16 %v1868, %v1866
        %v3139 = vpack.c.b16 %v1869, %v1867
        %v3140 = vpack.c.b16 %v1872, %v1870
        %v3141 = vpack.c.b16 %v1873, %v1871
        %v3142 = vpack.c.b16 %v1876, %v1874
        %v3143 = vpack.c.b16 %v1877, %v1875
        %v3144 = vpack.c.b16 %v1880, %v1878
        %v3145 = vpack.c.b16 %v1881, %v1879
        %v3146 = vpack.c.b16 %v1884, %v1882
        %v3147 = vpack.c.b16 %v1885, %v1883
        %v3148 = vpack.c.b16 %v1888, %v1886
        %v3149 = vpack.c.b16 %v1889, %v1887
        %v3150 = vpack.c.b16 %v1892, %v1890
        %v3151 = vpack.c.b16 %v1893, %v1891
        %v3152 = vpack.c.b16 %v1896, %v1894
        %v3153 = vpack.c.b16 %v1897, %v1895
        %v3154 = vpack.c.b16 %v1900, %v1898
        %v3155 = vpack.c.b16 %v1901, %v1899
        %v3156 = vpack.c.b16 %v1904, %v1902
        %v3157 = vpack.c.b16 %v1905, %v1903
        %v3158 = vpack.c.b16 %v1908, %v1906
        %v3159 = vpack.c.b16 %v1909, %v1907
        %v3160 = vpack.c.b16 %v1912, %v1910
        %v3161 = vpack.c.b16 %v1913, %v1911
        %v3162 = vpack.c.b16 %v1916, %v1914
        %v3163 = vpack.c.b16 %v1917, %v1915
        %v3164 = vpack.c.b16 %v1920, %v1918
        %v3165 = vpack.c.b16 %v1921, %v1919
        %v3166 = vpack.c.b16 %v1924, %v1922
        %v3167 = vpack.c.b16 %v1925, %v1923
        %v3168 = vpack.c.b16 %v1928, %v1926
        %v3169 = vpack.c.b16 %v1929, %v1927
        %v3170 = vpack.c.b16 %v1932, %v1930
        %v3171 = vpack.c.b16 %v1933, %v1931
        %v3172 = vpack.c.b16 %v1936, %v1934
        %v3173 = vpack.c.b16 %v1937, %v1935
        %v3174 = vpack.c.b16 %v1940, %v1938
        %v3175 = vpack.c.b16 %v1941, %v1939
        %v3176 = vpack.c.b16 %v1944, %v1942
        %v3177 = vpack.c.b16 %v1945, %v1943
        %v3178 = vpack.c.b16 %v1948, %v1946
        %v3179 = vpack.c.b16 %v1949, %v1947
        %v3180 = vpack.c.b16 %v1952, %v1950
        %v3181 = vpack.c.b16 %v1953, %v1951
        %v3182 = vpack.c.b16 %v1956, %v1954
        %v3183 = vpack.c.b16 %v1957, %v1955
        %v3184 = vpack.c.b16 %v1960, %v1958
        %v3185 = vpack.c.b16 %v1961, %v1959
        %v3186 = vpack.c.b16 %v1964, %v1962
        %v3187 = vpack.c.b16 %v1965, %v1963
        %v3188 = vpack.c.b16 %v1968, %v1966
        %v3189 = vpack.c.b16 %v1969, %v1967
        %v3190 = vpack.c.b16 %v1972, %v1970
        %v3191 = vpack.c.b16 %v1973, %v1971
        %v3192 = vpack.c.b16 %v1976, %v1974
        %v3193 = vpack.c.b16 %v1977, %v1975
        %v3194 = vpack.c.b16 %v1980, %v1978
        %v3195 = vpack.c.b16 %v1981, %v1979
        %v3196 = vpack.c.b16 %v1984, %v1982
        %v3197 = vpack.c.b16 %v1985, %v1983
        %v3198 = vpack.c.b16 %v1988, %v1986
        %v3199 = vpack.c.b16 %v1989, %v1987
        %v3200 = vpack.c.b16 %v1992, %v1990
        %v3201 = vpack.c.b16 %v1993, %v1991
        %v3202 = vpack.c.b16 %v1996, %v1994
        %v3203 = vpack.c.b16 %v1997, %v1995
        %v3204 = vpack.c.b16 %v2000, %v1998
        %v3205 = vpack.c.b16 %v2001, %v1999
        %v3206 = vpack.c.b16 %v2004, %v2002
        %v3207 = vpack.c.b16 %v2005, %v2003
        %v3208 = vpack.c.b16 %v2008, %v2006
        %v3209 = vpack.c.b16 %v2009, %v2007
        %v3210 = vpack.c.b16 %v2012, %v2010
        %v3211 = vpack.c.b16 %v2013, %v2011
        %v3212 = vpack.c.b16 %v2016, %v2014
        %v3213 = vpack.c.b16 %v2017, %v2015
        %v3214 = vpack.c.b16 %v2020, %v2018
        %v3215 = vpack.c.b16 %v2021, %v2019
        %v3216 = vpack.c.b16 %v2024, %v2022
        %v3217 = vpack.c.b16 %v2025, %v2023
        %v3218 = vpack.c.b16 %v2028, %v2026
        %v3219 = vpack.c.b16 %v2029, %v2027
        %v3220 = vpack.c.b16 %v2032, %v2030
        %v3221 = vpack.c.b16 %v2033, %v2031
        %v3222 = vpack.c.b16 %v2036, %v2034
        %v3223 = vpack.c.b16 %v2037, %v2035
        %v3224 = vpack.c.b16 %v2040, %v2038
        %v3225 = vpack.c.b16 %v2041, %v2039
        %v3226 = vpack.c.b16 %v2044, %v2042
        %v3227 = vpack.c.b16 %v2045, %v2043
        %v3228 = vpack.c.b16 %v2048, %v2046
        %v3229 = vpack.c.b16 %v2049, %v2047
        %v3230 = vpack.c.b16 %v2052, %v2050
        %v3231 = vpack.c.b16 %v2053, %v2051
        %v3232 = vpack.c.b16 %v2056, %v2054
        %v3233 = vpack.c.b16 %v2057, %v2055
        %v3234 = vpack.c.b16 %v2060, %v2058
        %v3235 = vpack.c.b16 %v2061, %v2059
        %v3236 = vpack.c.b16 %v2064, %v2062
        %v3237 = vpack.c.b16 %v2065, %v2063
        %v3238 = vpack.c.b16 %v2068, %v2066
        %v3239 = vpack.c.b16 %v2069, %v2067
        %v3240 = vpack.c.b16 %v2072, %v2070
        %v3241 = vpack.c.b16 %v2073, %v2071
        %v3242 = vpack.c.b16 %v2076, %v2074
        %v3243 = vpack.c.b16 %v2077, %v2075
        %v3244 = vpack.c.b16 %v2080, %v2078
        %v3245 = vpack.c.b16 %v2081, %v2079
        %v3246 = vpack.c.b16 %v2084, %v2082
        %v3247 = vpack.c.b16 %v2085, %v2083
        %v3248 = vpack.c.b16 %v2088, %v2086
        %v3249 = vpack.c.b16 %v2089, %v2087
        %v3250 = vpack.c.b16 %v2092, %v2090
        %v3251 = vpack.c.b16 %v2093, %v2091
        %v3252 = vpack.c.b16 %v2096, %v2094
        %v3253 = vpack.c.b16 %v2097, %v2095
        %v3254 = vpack.c.b16 %v2100, %v2098
        %v3255 = vpack.c.b16 %v2101, %v2099
        %v3256 = vpack.c.b16 %v2104, %v2102
        %v3257 = vpack.c.b16 %v2105, %v2103
        %v3258 = vpack.c.b16 %v2108, %v2106
        %v3259 = vpack.c.b16 %v2109, %v2107
        %v3260 = vpack.c.b16 %v2112, %v2110
        %v3261 = vpack.c.b16 %v2113, %v2111
        %v3262 = vpack.c.b16 %v2116, %v2114
        %v3263 = vpack.c.b16 %v2117, %v2115
        %v3264 = vpack.c.b16 %v2120, %v2118
        %v3265 = vpack.c.b16 %v2121, %v2119
        %v3266 = vpack.c.b16 %v2124, %v2122
        %v3267 = vpack.c.b16 %v2125, %v2123
        %v3268 = vpack.c.b16 %v2128, %v2126
        %v3269 = vpack.c.b16 %v2129, %v2127
        %v3270 = vpack.c.b16 %v2132, %v2130
        %v3271 = vpack.c.b16 %v2133, %v2131
        %v3272 = vpack.c.b16 %v2136, %v2134
        %v3273 = vpack.c.b16 %v2137, %v2135
        %v3274 = vpack.c.b16 %v2140, %v2138
        %v3275 = vpack.c.b16 %v2141, %v2139
        %v3276 = vpack.c.b16 %v2144, %v2142
        %v3277 = vpack.c.b16 %v2145, %v2143
        %v3278 = vpack.c.b16 %v2148, %v2146
        %v3279 = vpack.c.b16 %v2149, %v2147
        %v3280 = vpack.c.b16 %v2152, %v2150
        %v3281 = vpack.c.b16 %v2153, %v2151
        %v3282 = vpack.c.b16 %v2156, %v2154
        %v3283 = vpack.c.b16 %v2157, %v2155
        %v3284 = vpack.c.b16 %v2160, %v2158
        %v3285 = vpack.c.b16 %v2161, %v2159
        %v3286 = vpack.c.b16 %v2164, %v2162
        %v3287 = vpack.c.b16 %v2165, %v2163
        %v3288 = vpack.c.b16 %v2168, %v2166
        %v3289 = vpack.c.b16 %v2169, %v2167
        %v3290 = vpack.c.b16 %v2172, %v2170
        %v3291 = vpack.c.b16 %v2173, %v2171
        %v3292 = vpack.c.b16 %v2176, %v2174
        %v3293 = vpack.c.b16 %v2177, %v2175
        %v3294 = vpack.c.b16 %v2180, %v2178
        %v3295 = vpack.c.b16 %v2181, %v2179
        %v3296 = vpack.c.b16 %v2184, %v2182
        %v3297 = vpack.c.b16 %v2185, %v2183
        %v3298 = vpack.c.b16 %v2188, %v2186
        %v3299 = vpack.c.b16 %v2189, %v2187
        %v3300 = vpack.c.b16 %v2192, %v2190
        %v3301 = vpack.c.b16 %v2193, %v2191
        %v3302 = vpack.c.b16 %v2196, %v2194
        %v3303 = vpack.c.b16 %v2197, %v2195
        %v3304 = vpack.c.b16 %v2200, %v2198
        %v3305 = vpack.c.b16 %v2201, %v2199
        %v3306 = vpack.c.b16 %v2204, %v2202
        %v3307 = vpack.c.b16 %v2205, %v2203
        %v3308 = vpack.c.b16 %v2208, %v2206
        %v3309 = vpack.c.b16 %v2209, %v2207
        %v3310 = vpack.c.b16 %v2212, %v2210
        %v3311 = vpack.c.b16 %v2213, %v2211
        %v3312 = vpack.c.b16 %v2216, %v2214
        %v3313 = vpack.c.b16 %v2217, %v2215
        %v3314 = vpack.c.b16 %v2220, %v2218
        %v3315 = vpack.c.b16 %v2221, %v2219
        %v3316 = vpack.c.b16 %v2224, %v2222
        %v3317 = vpack.c.b16 %v2225, %v2223
        %v3318 = vpack.c.b16 %v2228, %v2226
        %v3319 = vpack.c.b16 %v2229, %v2227
        %v3320 = vpack.c.b16 %v2232, %v2230
        %v3321 = vpack.c.b16 %v2233, %v2231
        %v3322 = vpack.c.b16 %v2236, %v2234
        %v3323 = vpack.c.b16 %v2237, %v2235
        %v3324 = vpack.c.b16 %v2240, %v2238
        %v3325 = vpack.c.b16 %v2241, %v2239
        %v3326 = vpack.c.b16 %v2244, %v2242
        %v3327 = vpack.c.b16 %v2245, %v2243
        %v3328 = vpack.c.b16 %v2248, %v2246
        %v3329 = vpack.c.b16 %v2249, %v2247
        %v3330 = vpack.c.b16 %v2252, %v2250
        %v3331 = vpack.c.b16 %v2253, %v2251
        %v3332 = vpack.c.b16 %v2256, %v2254
        %v3333 = vpack.c.b16 %v2257, %v2255
        %v3334 = vpack.c.b16 %v2260, %v2258
        %v3335 = vpack.c.b16 %v2261, %v2259
        %v3336 = vpack.c.b16 %v2264, %v2262
        %v3337 = vpack.c.b16 %v2265, %v2263
        %v3338 = vpack.c.b16 %v2268, %v2266
        %v3339 = vpack.c.b16 %v2269, %v2267
        %v3340 = vpack.c.b16 %v2272, %v2270
        %v3341 = vpack.c.b16 %v2273, %v2271
        %v3342 = vpack.c.b16 %v2276, %v2274
        %v3343 = vpack.c.b16 %v2277, %v2275
        %v3344 = vpack.c.b16 %v2280, %v2278
        %v3345 = vpack.c.b16 %v2281, %v2279
        %v3346 = vpack.c.b16 %v2284, %v2282
        %v3347 = vpack.c.b16 %v2285, %v2283
        %v3348 = vpack.c.b16 %v2288, %v2286
        %v3349 = vpack.c.b16 %v2289, %v2287
        %v3350 = vpack.c.b16 %v2292, %v2290
        %v3351 = vpack.c.b16 %v2293, %v2291
        %v3352 = vpack.c.b16 %v2296, %v2294
        %v3353 = vpack.c.b16 %v2297, %v2295
        %v3354 = vpack.c.b16 %v2300, %v2298
        %v3355 = vpack.c.b16 %v2301, %v2299
        %v3356 = vpack.c.b16 %v2304, %v2302
        %v3357 = vpack.c.b16 %v2305, %v2303
        %v3358 = vpack.c.b16 %v2308, %v2306
        %v3359 = vpack.c.b16 %v2309, %v2307
        %v3360 = vpack.c.b16 %v2312, %v2310
        %v3361 = vpack.c.b16 %v2313, %v2311
        %v3362 = vpack.c.b16 %v2316, %v2314
        %v3363 = vpack.c.b16 %v2317, %v2315
        %v3364 = vpack.c.b16 %v2320, %v2318
        %v3365 = vpack.c.b16 %v2321, %v2319
        %v3366 = vpack.c.b16 %v2324, %v2322
        %v3367 = vpack.c.b16 %v2325, %v2323
        %v3368 = vpack.c.b16 %v2328, %v2326
        %v3369 = vpack.c.b16 %v2329, %v2327
        %v3370 = vpack.c.b16 %v2332, %v2330
        %v3371 = vpack.c.b16 %v2333, %v2331
        %v3372 = vpack.c.b16 %v2336, %v2334
        %v3373 = vpack.c.b16 %v2337, %v2335
        %v3374 = vpack.c.b16 %v2340, %v2338
        %v3375 = vpack.c.b16 %v2341, %v2339
        %v3376 = vpack.c.b16 %v2344, %v2342
        %v3377 = vpack.c.b16 %v2345, %v2343
        %v3378 = vpack.c.b16 %v2348, %v2346
        %v3379 = vpack.c.b16 %v2349, %v2347
        %v3380 = vpack.c.b16 %v2352, %v2350
        %v3381 = vpack.c.b16 %v2353, %v2351
        %v3382 = vpack.c.b16 %v2356, %v2354
        %v3383 = vpack.c.b16 %v2357, %v2355
        %v3384 = vpack.c.b16 %v2360, %v2358
        %v3385 = vpack.c.b16 %v2361, %v2359
        %v3386 = vpack.c.b16 %v2364, %v2362
        %v3387 = vpack.c.b16 %v2365, %v2363
        %v3388 = vpack.c.b16 %v2368, %v2366
        %v3389 = vpack.c.b16 %v2369, %v2367
        %v3390 = vpack.c.b16 %v2372, %v2370
        %v3391 = vpack.c.b16 %v2373, %v2371
        %v3392 = vpack.c.b16 %v2376, %v2374
        %v3393 = vpack.c.b16 %v2377, %v2375
        %v3394 = vpack.c.b16 %v2380, %v2378
        %v3395 = vpack.c.b16 %v2381, %v2379
        %v3396 = vpack.c.b16 %v2384, %v2382
        %v3397 = vpack.c.b16 %v2385, %v2383
        %v3398 = vpack.c.b16 %v2388, %v2386
        %v3399 = vpack.c.b16 %v2389, %v2387
        %v3400 = vpack.c.b16 %v2392, %v2390
        %v3401 = vpack.c.b16 %v2393, %v2391
        %v3402 = vpack.c.b16 %v2396, %v2394
        %v3403 = vpack.c.b16 %v2397, %v2395
        %v3404 = vpack.c.b16 %v2400, %v2398
        %v3405 = vpack.c.b16 %v2401, %v2399
        %v3406 = vpack.c.b16 %v2404, %v2402
        %v3407 = vpack.c.b16 %v2405, %v2403
        %v3408 = vpack.c.b16 %v2408, %v2406
        %v3409 = vpack.c.b16 %v2409, %v2407
        %v3410 = vpack.c.b16 %v2412, %v2410
        %v3411 = vpack.c.b16 %v2413, %v2411
        %v3412 = vpack.c.b16 %v2416, %v2414
        %v3413 = vpack.c.b16 %v2417, %v2415
        %v3414 = vpack.c.b16 %v2420, %v2418
        %v3415 = vpack.c.b16 %v2421, %v2419
        %v3416 = vpack.c.b16 %v2424, %v2422
        %v3417 = vpack.c.b16 %v2425, %v2423
        %v3418 = vpack.c.b16 %v2428, %v2426
        %v3419 = vpack.c.b16 %v2429, %v2427
        %v3420 = vpack.c.b16 %v2432, %v2430
        %v3421 = vpack.c.b16 %v2433, %v2431
        %v3422 = vpack.c.b16 %v2436, %v2434
        %v3423 = vpack.c.b16 %v2437, %v2435
        %v3424 = vpack.c.b16 %v2440, %v2438
        %v3425 = vpack.c.b16 %v2441, %v2439
        %v3426 = vpack.c.b16 %v2444, %v2442
        %v3427 = vpack.c.b16 %v2445, %v2443
        %v3428 = vpack.c.b16 %v2448, %v2446
        %v3429 = vpack.c.b16 %v2449, %v2447
        %v3430 = vpack.c.b16 %v2452, %v2450
        %v3431 = vpack.c.b16 %v2453, %v2451
        %v3432 = vpack.c.b16 %v2456, %v2454
        %v3433 = vpack.c.b16 %v2457, %v2455
        %v3434 = vpack.c.b16 %v2460, %v2458
        %v3435 = vpack.c.b16 %v2461, %v2459
        %v3436 = vpack.c.b16 %v2464, %v2462
        %v3437 = vpack.c.b16 %v2465, %v2463
        %v3438 = vpack.c.b16 %v2468, %v2466
        %v3439 = vpack.c.b16 %v2469, %v2467
        %v3440 = vpack.c.b16 %v2472, %v2470
        %v3441 = vpack.c.b16 %v2473, %v2471
        %v3442 = vpack.c.b16 %v2476, %v2474
        %v3443 = vpack.c.b16 %v2477, %v2475
        %v3444 = vpack.c.b16 %v2480, %v2478
        %v3445 = vpack.c.b16 %v2481, %v2479
        %v3446 = vpack.c.b16 %v2484, %v2482
        %v3447 = vpack.c.b16 %v2485, %v2483
        %v3448 = vpack.c.b16 %v2488, %v2486
        %v3449 = vpack.c.b16 %v2489, %v2487
        %v3450 = vpack.c.b16 %v2492, %v2490
        %v3451 = vpack.c.b16 %v2493, %v2491
        %v3452 = vpack.c.b16 %v2496, %v2494
        %v3453 = vpack.c.b16 %v2497, %v2495
        %v3454 = vpack.c.b16 %v2500, %v2498
        %v3455 = vpack.c.b16 %v2501, %v2499
        %v3456 = vpack.c.b16 %v2504, %v2502
        %v3457 = vpack.c.b16 %v2505, %v2503
        %v3458 = vpack.c.b16 %v2508, %v2506
        %v3459 = vpack.c.b16 %v2509, %v2507
        %v3460 = vpack.c.b16 %v2512, %v2510
        %v3461 = vpack.c.b16 %v2513, %v2511
        %v3462 = vpack.c.b16 %v2516, %v2514
        %v3463 = vpack.c.b16 %v2517, %v2515
        %v3464 = vpack.c.b16 %v2520, %v2518
        %v3465 = vpack.c.b16 %v2521, %v2519
        %v3466 = vpack.c.b16 %v2524, %v2522
        %v3467 = vpack.c.b16 %v2525, %v2523
        %v3468 = vpack.c.b16 %v2528, %v2526
        %v3469 = vpack.c.b16 %v2529, %v2527
        %v3470 = vpack.c.b16 %v2532, %v2530
        %v3471 = vpack.c.b16 %v2533, %v2531
        %v3472 = vpack.c.b16 %v2536, %v2534
        %v3473 = vpack.c.b16 %v2537, %v2535
        %v3474 = vpack.c.b16 %v2540, %v2538
        %v3475 = vpack.c.b16 %v2541, %v2539
        %v3476 = vpack.c.b16 %v2544, %v2542
        %v3477 = vpack.c.b16 %v2545, %v2543
        %v3478 = vpack.c.b16 %v2548, %v2546
        %v3479 = vpack.c.b16 %v2549, %v2547
        %v3480 = vpack.c.b16 %v2552, %v2550
        %v3481 = vpack.c.b16 %v2553, %v2551
        %v3482 = vpack.c.b16 %v2556, %v2554
        %v3483 = vpack.c.b16 %v2557, %v2555
        %v3484 = vpack.c.b16 %v2560, %v2558
        %v3485 = vpack.c.b16 %v2561, %v2559
        %v3486 = vpack.c.b16 %v2564, %v2562
        %v3487 = vpack.c.b16 %v2565, %v2563
        %v3488 = vpack.c.b16 %v2568, %v2566
        %v3489 = vpack.c.b16 %v2569, %v2567
        %v3490 = vpack.c.b16 %v2572, %v2570
        %v3491 = vpack.c.b16 %v2573, %v2571
        %v3492 = vpack.c.b16 %v2576, %v2574
        %v3493 = vpack.c.b16 %v2577, %v2575
        %v3494 = vpack.c.b16 %v2580, %v2578
        %v3495 = vpack.c.b16 %v2581, %v2579
        %v3496 = vpack.c.b16 %v2584, %v2582
        %v3497 = vpack.c.b16 %v2585, %v2583
        %v3498 = vpack.c.b16 %v2588, %v2586
        %v3499 = vpack.c.b16 %v2589, %v2587
        %v3500 = vpack.c.b16 %v2592, %v2590
        %v3501 = vpack.c.b16 %v2593, %v2591
        %v3502 = vpack.c.b16 %v2596, %v2594
        %v3503 = vpack.c.b16 %v2597, %v2595
        %v3504 = vpack.c.b16 %v2600, %v2598
        %v3505 = vpack.c.b16 %v2601, %v2599
        %v3506 = vpack.c.b16 %v2604, %v2602
        %v3507 = vpack.c.b16 %v2605, %v2603
        %v3508 = vpack.c.b16 %v2608, %v2606
        %v3509 = vpack.c.b16 %v2609, %v2607
        %v3510 = vpack.c.b16 %v2612, %v2610
        %v3511 = vpack.c.b16 %v2613, %v2611
        %v3512 = vpack.c.b16 %v2616, %v2614
        %v3513 = vpack.c.b16 %v2617, %v2615
        %v3514 = vpack.c.b16 %v2620, %v2618
        %v3515 = vpack.c.b16 %v2621, %v2619
        %v3516 = vpack.c.b16 %v2624, %v2622
        %v3517 = vpack.c.b16 %v2625, %v2623
        %v3518 = vpack.c.b16 %v2628, %v2626
        %v3519 = vpack.c.b16 %v2629, %v2627
        %v3520 = vpack.c.b16 %v2632, %v2630
        %v3521 = vpack.c.b16 %v2633, %v2631
        %v3522 = vpack.c.b16 %v2636, %v2634
        %v3523 = vpack.c.b16 %v2637, %v2635
        %v3524 = vpack.c.b16 %v2640, %v2638
        %v3525 = vpack.c.b16 %v2641, %v2639
        %v3526 = vpack.c.b16 %v2644, %v2642
        %v3527 = vpack.c.b16 %v2645, %v2643
        %v3528 = vpack.c.b16 %v2648, %v2646
        %v3529 = vpack.c.b16 %v2649, %v2647
        %v3530 = vpack.c.b16 %v2652, %v2650
        %v3531 = vpack.c.b16 %v2653, %v2651
        %v3532 = vpack.c.b16 %v2656, %v2654
        %v3533 = vpack.c.b16 %v2657, %v2655
        %v3534 = vpack.c.b16 %v2660, %v2658
        %v3535 = vpack.c.b16 %v2661, %v2659
        %v3536 = vpack.c.b16 %v2664, %v2662
        %v3537 = vpack.c.b16 %v2665, %v2663
        %v3538 = vpack.c.b16 %v2668, %v2666
        %v3539 = vpack.c.b16 %v2669, %v2667
        %v3540 = vpack.c.b16 %v2672, %v2670
        %v3541 = vpack.c.b16 %v2673, %v2671
        %v3542 = vpack.c.b16 %v2676, %v2674
        %v3543 = vpack.c.b16 %v2677, %v2675
        %v3544 = vpack.c.b16 %v2680, %v2678
        %v3545 = vpack.c.b16 %v2681, %v2679
        %v3546 = vpack.c.b16 %v2684, %v2682
        %v3547 = vpack.c.b16 %v2685, %v2683
        %v3548 = vpack.c.b16 %v2688, %v2686
        %v3549 = vpack.c.b16 %v2689, %v2687
        %v3550 = vpack.c.b16 %v2692, %v2690
        %v3551 = vpack.c.b16 %v2693, %v2691
        %v3552 = vpack.c.b16 %v2696, %v2694
        %v3553 = vpack.c.b16 %v2697, %v2695
        %v3554 = vpack.c.b16 %v2700, %v2698
        %v3555 = vpack.c.b16 %v2701, %v2699
        %v3556 = vpack.c.b16 %v2704, %v2702
        %v3557 = vpack.c.b16 %v2705, %v2703
        %v3558 = vpack.c.b16 %v2708, %v2706
        %v3559 = vpack.c.b16 %v2709, %v2707
        %v3560 = vpack.c.b16 %v2712, %v2710
        %v3561 = vpack.c.b16 %v2713, %v2711
        %v3562 = vpack.c.b16 %v2716, %v2714
        %v3563 = vpack.c.b16 %v2717, %v2715
        %v3564 = vpack.c.b16 %v2720, %v2718
        %v3565 = vpack.c.b16 %v2721, %v2719
        %v3566 = vpack.c.b16 %v2724, %v2722
        %v3567 = vpack.c.b16 %v2725, %v2723
        %v3568 = vpack.c.b16 %v2728, %v2726
        %v3569 = vpack.c.b16 %v2729, %v2727
        %v3570 = vpack.c.b16 %v2732, %v2730
        %v3571 = vpack.c.b16 %v2733, %v2731
        %v3572 = vpack.c.b16 %v2736, %v2734
        %v3573 = vpack.c.b16 %v2737, %v2735
        %v3574 = vpack.c.b16 %v2740, %v2738
        %v3575 = vpack.c.b16 %v2741, %v2739
        %v3576 = vpack.c.b16 %v2744, %v2742
        %v3577 = vpack.c.b16 %v2745, %v2743
        %v3578 = vpack.c.b16 %v2748, %v2746
        %v3579 = vpack.c.b16 %v2749, %v2747
        %v3580 = vpack.c.b16 %v2752, %v2750
        %v3581 = vpack.c.b16 %v2753, %v2751
        %v3582 = vpack.c.b16 %v2756, %v2754
        %v3583 = vpack.c.b16 %v2757, %v2755
        %v3584 = vpack.c.b16 %v2760, %v2758
        %v3585 = vpack.c.b16 %v2761, %v2759
        %v3586 = vpack.c.b16 %v2764, %v2762
        %v3587 = vpack.c.b16 %v2765, %v2763
        %v3588 = vpack.c.b16 %v2768, %v2766
        %v3589 = vpack.c.b16 %v2769, %v2767
        %v3590 = vpack.c.b16 %v2772, %v2770
        %v3591 = vpack.c.b16 %v2773, %v2771
        %v3592 = vpack.c.b16 %v2776, %v2774
        %v3593 = vpack.c.b16 %v2777, %v2775
        %v3594 = vpack.c.b16 %v2780, %v2778
        %v3595 = vpack.c.b16 %v2781, %v2779
        %v3596 = vpack.c.b16 %v2784, %v2782
        %v3597 = vpack.c.b16 %v2785, %v2783
        %v3598 = vpack.c.b16 %v2788, %v2786
        %v3599 = vpack.c.b16 %v2789, %v2787
        %v3600 = vpack.c.b16 %v2792, %v2790
        %v3601 = vpack.c.b16 %v2793, %v2791
        %v3602 = vpack.c.b16 %v2796, %v2794
        %v3603 = vpack.c.b16 %v2797, %v2795
        %v3604 = vpack.c.b16 %v2800, %v2798
        %v3605 = vpack.c.b16 %v2801, %v2799
        %v3606 = vpack.c.b16 %v2804, %v2802
        %v3607 = vpack.c.b16 %v2805, %v2803
        %v3608 = vpack.c.b16 %v2808, %v2806
        %v3609 = vpack.c.b16 %v2809, %v2807
        %v3610 = vpack.c.b16 %v2812, %v2810
        %v3611 = vpack.c.b16 %v2813, %v2811
        %v3612 = vpack.c.b16 %v2816, %v2814
        %v3613 = vpack.c.b16 %v2817, %v2815
        %v3614 = vpack.c.b16 %v2820, %v2818
        %v3615 = vpack.c.b16 %v2821, %v2819
        %v3616 = vpack.c.b16 %v2824, %v2822
        %v3617 = vpack.c.b16 %v2825, %v2823
        %v3618 = vpack.c.b16 %v2828, %v2826
        %v3619 = vpack.c.b16 %v2829, %v2827
        %v3620 = vpack.c.b16 %v2832, %v2830
        %v3621 = vpack.c.b16 %v2833, %v2831
        %v3622 = vpack.c.b16 %v2836, %v2834
        %v3623 = vpack.c.b16 %v2837, %v2835
        %v3624 = vpack.c.b16 %v2840, %v2838
        %v3625 = vpack.c.b16 %v2841, %v2839
        %v3626 = vpack.c.b16 %v2844, %v2842
        %v3627 = vpack.c.b16 %v2845, %v2843
        %v3628 = vpack.c.b16 %v2848, %v2846
        %v3629 = vpack.c.b16 %v2849, %v2847
        %v3630 = vpack.c.b16 %v2852, %v2850
        %v3631 = vpack.c.b16 %v2853, %v2851
        %v3632 = vpack.c.b16 %v2856, %v2854
        %v3633 = vpack.c.b16 %v2857, %v2855
        %v3634 = vpack.c.b16 %v2860, %v2858
        %v3635 = vpack.c.b16 %v2861, %v2859
        %v3636 = vpack.c.b16 %v2864, %v2862
        %v3637 = vpack.c.b16 %v2865, %v2863
        %v3638 = vpack.c.b16 %v2868, %v2866
        %v3639 = vpack.c.b16 %v2869, %v2867
        %v3640 = vpack.c.b16 %v2872, %v2870
        %v3641 = vpack.c.b16 %v2873, %v2871
        %v3642 = vpack.c.b16 %v2876, %v2874
        %v3643 = vpack.c.b16 %v2877, %v2875
        %v3644 = vpack.c.b16 %v2880, %v2878
        %v3645 = vpack.c.b16 %v2881, %v2879
        %v3646 = vpack.c.b16 %v2884, %v2882
        %v3647 = vpack.c.b16 %v2885, %v2883
        %v3648 = vpack.c.b16 %v2888, %v2886
        %v3649 = vpack.c.b16 %v2889, %v2887
        %v3650 = vpack.c.b16 %v2892, %v2890
        %v3651 = vpack.c.b16 %v2893, %v2891
        %v3652 = vpack.c.b16 %v2896, %v2894
        %v3653 = vpack.c.b16 %v2897, %v2895
        %v3654 = vpack.c.b16 %v2900, %v2898
        %v3655 = vpack.c.b16 %v2901, %v2899
        %v3656 = vpack.c.b16 %v2904, %v2902
        %v3657 = vpack.c.b16 %v2905, %v2903
        %v3658 = vpack.c.b16 %v2908, %v2906
        %v3659 = vpack.c.b16 %v2909, %v2907
        %v3660 = vpack.c.b16 %v2912, %v2910
        %v3661 = vpack.c.b16 %v2913, %v2911
        %v3662 = vpack.c.b16 %v2916, %v2914
        %v3663 = vpack.c.b16 %v2917, %v2915
        %v3664 = vpack.c.b16 %v2920, %v2918
        %v3665 = vpack.c.b16 %v2921, %v2919
        %v3666 = vpack.c.b16 %v2924, %v2922
        %v3667 = vpack.c.b16 %v2925, %v2923
        %v3668 = vpack.c.b16 %v2928, %v2926
        %v3669 = vpack.c.b16 %v2929, %v2927
        %v3670 = vpack.c.b16 %v2932, %v2930
        %v3671 = vpack.c.b16 %v2933, %v2931
        %v3672 = vpack.c.b16 %v2936, %v2934
        %v3673 = vpack.c.b16 %v2937, %v2935
        %v3674 = vpack.c.b16 %v2940, %v2938
        %v3675 = vpack.c.b16 %v2941, %v2939
        %v3676 = vpack.c.b16 %v2944, %v2942
        %v3677 = vpack.c.b16 %v2945, %v2943
        %v3678 = vpack.c.b16 %v2948, %v2946
        %v3679 = vpack.c.b16 %v2949, %v2947
        %v3680 = vpack.c.b16 %v2952, %v2950
        %v3681 = vpack.c.b16 %v2953, %v2951
        %v3682 = vpack.c.b16 %v2956, %v2954
        %v3683 = vpack.c.b16 %v2957, %v2955
        %v3684 = vpack.c.b16 %v2960, %v2958
        %v3685 = vpack.c.b16 %v2961, %v2959
        %v3686 = vpack.c.b16 %v2964, %v2962
        %v3687 = vpack.c.b16 %v2965, %v2963
        %v3688 = vpack.c.b16 %v2968, %v2966
        %v3689 = vpack.c.b16 %v2969, %v2967
        %v3690 = vpack.c.b16 %v2972, %v2970
        %v3691 = vpack.c.b16 %v2973, %v2971
        %v3692 = vpack.c.b16 %v2976, %v2974
        %v3693 = vpack.c.b16 %v2977, %v2975
        %v3694 = vpack.c.b16 %v2980, %v2978
        %v3695 = vpack.c.b16 %v2981, %v2979
        %v3696 = vpack.c.b16 %v2984, %v2982
        %v3697 = vpack.c.b16 %v2985, %v2983
        %v3698 = vpack.c.b16 %v2988, %v2986
        %v3699 = vpack.c.b16 %v2989, %v2987
        %v3700 = vpack.c.b16 %v2992, %v2990
        %v3701 = vpack.c.b16 %v2993, %v2991
        %v3702 = vpack.c.b16 %v2996, %v2994
        %v3703 = vpack.c.b16 %v2997, %v2995
        %v3704 = vpack.c.b16 %v3000, %v2998
        %v3705 = vpack.c.b16 %v3001, %v2999
        %v3706 = vpack.c.b16 %v3004, %v3002
        %v3707 = vpack.c.b16 %v3005, %v3003
        %v3708 = vpack.c.b16 %v3008, %v3006
        %v3709 = vpack.c.b16 %v3009, %v3007
        %v3710 = vpack.c.b16 %v3012, %v3010
        %v3711 = vpack.c.b16 %v3013, %v3011
        %v3712 = vpack.c.b16 %v3016, %v3014
        %v3713 = vpack.c.b16 %v3017, %v3015
        %v3714 = vpack.c.b16 %v3020, %v3018
        %v3715 = vpack.c.b16 %v3021, %v3019
        %v3716 = vpack.c.b16 %v3024, %v3022
        %v3717 = vpack.c.b16 %v3025, %v3023
        %v3718 = vpack.c.b16 %v3028, %v3026
        %v3719 = vpack.c.b16 %v3029, %v3027
        %v3720 = vpack.c.b16 %v3032, %v3030
        %v3721 = vpack.c.b16 %v3033, %v3031
        %v3722 = vpack.c.b16 %v3036, %v3034
        %v3723 = vpack.c.b16 %v3037, %v3035
        %v3724 = vpack.c.b16 %v3040, %v3038
        %v3725 = vpack.c.b16 %v3041, %v3039
        %v3726 = vpack.c.b16 %v3044, %v3042
        %v3727 = vpack.c.b16 %v3045, %v3043
        %v3728 = vpack.c.b16 %v3048, %v3046
        %v3729 = vpack.c.b16 %v3049, %v3047
        %v3730 = vpack.c.b16 %v3052, %v3050
        %v3731 = vpack.c.b16 %v3053, %v3051
        %v3732 = vpack.c.b16 %v3056, %v3054
        %v3733 = vpack.c.b16 %v3057, %v3055
        %v3734 = vpack.c.b16 %v3060, %v3058
        %v3735 = vpack.c.b16 %v3061, %v3059
        %v3736 = vpack.c.b16 %v3064, %v3062
        %v3737 = vpack.c.b16 %v3065, %v3063
        %v3738 = vpack.c.b16 %v3068, %v3066
        %v3739 = vpack.c.b16 %v3069, %v3067
        %v3740 = vpack.c.b16 %v3072, %v3070
        %v3741 = vpack.c.b16 %v3073, %v3071
        %v3742 = vpack.c.b16 %v3076, %v3074
        %v3743 = vpack.c.b16 %v3077, %v3075
        %v3744 = vpack.c.b16 %v3080, %v3078
        %v3745 = vpack.c.b16 %v3081, %v3079
        %v3746 = vpack.c.b16 %v3084, %v3082
        %v3747 = vpack.c.b16 %v3085, %v3083
        %v3748 = vpack.c.b16 %v3088, %v3086
        %v3749 = vpack.c.b16 %v3089, %v3087
        %v3750 = vpack.c.b16 %v3092, %v3090
        %v3751 = vpack.c.b16 %v3093, %v3091
        %v3752 = vpack.c.b16 %v3096, %v3094
        %v3753 = vpack.c.b16 %v3097, %v3095
        %v3754 = vpack.c.b16 %v3100, %v3098
        %v3755 = vpack.c.b16 %v3101, %v3099
        %v3756 = vpack.c.b16 %v3104, %v3102
        %v3757 = vpack.c.b16 %v3105, %v3103
        %v3758 = vpack.c.b16 %v3108, %v3106
        %v3759 = vpack.c.b16 %v3109, %v3107
        %v3760 = vpack.c.b16 %v3112, %v3110
        %v3761 = vpack.c.b16 %v3113, %v3111
        %v3762 = vpack.c.b16 %v3116, %v3114
        %v3763 = vpack.c.b16 %v3117, %v3115
        %v3764 = vpack.c.b16 %v3120, %v3118
        %v3765 = vpack.c.b16 %v3121, %v3119
        %v3766 = vpack.c.b16 %v3124, %v3122
        %v3767 = vpack.c.b16 %v3125, %v3123
        %v3768 = vpack.c.b16 %v3128, %v3126
        %v3769 = vpack.c.b16 %v3129, %v3127
        %4410 = vmatprep.subr.bf16.mxu0 %v3131
        %4411 = vmatpush1.bf16.msra.mxu0 %v3130
        %4412 = vmatprep.subr.bf16.mxu0 %v3133
        %4413 = vmatpush1.bf16.msra.mxu0 %v3132
        %4414 = vmatprep.subr.bf16.mxu0 %v3135
        %4415 = vmatpush1.bf16.msra.mxu0 %v3134
        %4416 = vmatprep.subr.bf16.mxu0 %v3137
        %4417 = vmatpush1.bf16.msra.mxu0 %v3136
        %4418 = vmatprep.subr.bf16.mxu0 %v3139
        %4419 = vmatpush1.bf16.msra.mxu0 %v3138
        %4420 = vmatprep.subr.bf16.mxu0 %v3141
        %4421 = vmatpush1.bf16.msra.mxu0 %v3140
        %4422 = vmatprep.subr.bf16.mxu0 %v3143
        %4423 = vmatpush1.bf16.msra.mxu0 %v3142
        %4424 = vmatprep.subr.bf16.mxu0 %v3145
        %4425 = vmatpush1.bf16.msra.mxu0 %v3144
        %4426 = vmatprep.subr.bf16.mxu0 %v3147
        %4427 = vmatpush1.bf16.msra.mxu0 %v3146
        %4428 = vmatprep.subr.bf16.mxu0 %v3149
        %4429 = vmatpush1.bf16.msra.mxu0 %v3148
        %4430 = vmatprep.subr.bf16.mxu0 %v3151
        %4431 = vmatpush1.bf16.msra.mxu0 %v3150
        %4432 = vmatprep.subr.bf16.mxu0 %v3153
        %4433 = vmatpush1.bf16.msra.mxu0 %v3152
        %4434 = vmatprep.subr.bf16.mxu0 %v3155
        %4435 = vmatpush1.bf16.msra.mxu0 %v3154
        %4436 = vmatprep.subr.bf16.mxu0 %v3157
        %4437 = vmatpush1.bf16.msra.mxu0 %v3156
        %4438 = vmatprep.subr.bf16.mxu0 %v3159
        %4439 = vmatpush1.bf16.msra.mxu0 %v3158
        %4440 = vmatprep.subr.bf16.mxu0 %v3161
        %4441 = vmatpush1.bf16.msra.mxu0 %v3160
        %4442 = vmatprep.mubr.bf16.mxu0 %v962
        %4443 = vmatmul.mubr.bf16.gmra.mrb[0].mxu0 %v948
        %v4444 = vpop.f32.mrb[0].mxu0
        %v4445 = vadd.f32 0.0, %v4444
        %v4446 = vpop.f32.mrb[0].mxu0
        %v4447 = vadd.f32 0.0, %v4446
        %v4448 = vpop.f32.mrb[0].mxu0
        %v4449 = vpop.f32.mrb[0].mxu0
        %4450 = vdwg.mxu0
        %4451 = vmatprep.subr.bf16.mxu0 %v3163
        %4452 = vmatpush1.bf16.msra.mxu0 %v3162
        %4453 = vmatprep.subr.bf16.mxu0 %v3165
        %4454 = vmatpush1.bf16.msra.mxu0 %v3164
        %4455 = vmatprep.subr.bf16.mxu0 %v3167
        %4456 = vmatpush1.bf16.msra.mxu0 %v3166
        %4457 = vmatprep.subr.bf16.mxu0 %v3169
        %4458 = vmatpush1.bf16.msra.mxu0 %v3168
        %4459 = vmatprep.subr.bf16.mxu0 %v3171
        %4460 = vmatpush1.bf16.msra.mxu0 %v3170
        %4461 = vmatprep.subr.bf16.mxu0 %v3173
        %4462 = vmatpush1.bf16.msra.mxu0 %v3172
        %4463 = vmatprep.subr.bf16.mxu0 %v3175
        %4464 = vmatpush1.bf16.msra.mxu0 %v3174
        %4465 = vmatprep.subr.bf16.mxu0 %v3177
        %4466 = vmatpush1.bf16.msra.mxu0 %v3176
        %4467 = vmatprep.subr.bf16.mxu0 %v3179
        %4468 = vmatpush1.bf16.msra.mxu0 %v3178
        %4469 = vmatprep.subr.bf16.mxu0 %v3181
        %4470 = vmatpush1.bf16.msra.mxu0 %v3180
        %4471 = vmatprep.subr.bf16.mxu0 %v3183
        %4472 = vmatpush1.bf16.msra.mxu0 %v3182
        %4473 = vmatprep.subr.bf16.mxu0 %v3185
        %4474 = vmatpush1.bf16.msra.mxu0 %v3184
        %4475 = vmatprep.subr.bf16.mxu0 %v3187
        %4476 = vmatpush1.bf16.msra.mxu0 %v3186
        %4477 = vmatprep.subr.bf16.mxu0 %v3189
        %4478 = vmatpush1.bf16.msra.mxu0 %v3188
        %4479 = vmatprep.subr.bf16.mxu0 %v3191
        %4480 = vmatpush1.bf16.msra.mxu0 %v3190
        %4481 = vmatprep.subr.bf16.mxu0 %v3193
        %4482 = vmatpush1.bf16.msra.mxu0 %v3192
        %4483 = vmatprep.mubr.bf16.mxu0 %v972
        %4484 = vmatmul.mubr.bf16.gmra.mrb[0].mxu0 %v970
        %v4485 = vpop.f32.mrb[0].mxu0
        %v4486 = vadd.f32 %v4445, %v4485
        %v4487 = vpop.f32.mrb[0].mxu0
        %v4488 = vadd.f32 %v4447, %v4487
        %v4489 = vpop.f32.mrb[0].mxu0
        %v4490 = vpop.f32.mrb[0].mxu0
        %4491 = vdwg.mxu0
        %4492 = vmatprep.subr.bf16.mxu0 %v3195
        %4493 = vmatpush1.bf16.msra.mxu0 %v3194
        %4494 = vmatprep.subr.bf16.mxu0 %v3197
        %4495 = vmatpush1.bf16.msra.mxu0 %v3196
        %4496 = vmatprep.subr.bf16.mxu0 %v3199
        %4497 = vmatpush1.bf16.msra.mxu0 %v3198
        %4498 = vmatprep.subr.bf16.mxu0 %v3201
        %4499 = vmatpush1.bf16.msra.mxu0 %v3200
        %4500 = vmatprep.subr.bf16.mxu0 %v3203
        %4501 = vmatpush1.bf16.msra.mxu0 %v3202
        %4502 = vmatprep.subr.bf16.mxu0 %v3205
        %4503 = vmatpush1.bf16.msra.mxu0 %v3204
        %4504 = vmatprep.subr.bf16.mxu0 %v3207
        %4505 = vmatpush1.bf16.msra.mxu0 %v3206
        %4506 = vmatprep.subr.bf16.mxu0 %v3209
        %4507 = vmatpush1.bf16.msra.mxu0 %v3208
        %4508 = vmatprep.subr.bf16.mxu0 %v3211
        %4509 = vmatpush1.bf16.msra.mxu0 %v3210
        %4510 = vmatprep.subr.bf16.mxu0 %v3213
        %4511 = vmatpush1.bf16.msra.mxu0 %v3212
        %4512 = vmatprep.subr.bf16.mxu0 %v3215
        %4513 = vmatpush1.bf16.msra.mxu0 %v3214
        %4514 = vmatprep.subr.bf16.mxu0 %v3217
        %4515 = vmatpush1.bf16.msra.mxu0 %v3216
        %4516 = vmatprep.subr.bf16.mxu0 %v3219
        %4517 = vmatpush1.bf16.msra.mxu0 %v3218
        %4518 = vmatprep.subr.bf16.mxu0 %v3221
        %4519 = vmatpush1.bf16.msra.mxu0 %v3220
        %4520 = vmatprep.subr.bf16.mxu0 %v3223
        %4521 = vmatpush1.bf16.msra.mxu0 %v3222
        %4522 = vmatprep.subr.bf16.mxu0 %v3225
        %4523 = vmatpush1.bf16.msra.mxu0 %v3224
        %4524 = vmatprep.mubr.bf16.mxu0 %v969
        %4525 = vmatmul.mubr.bf16.gmra.mrb[0].mxu0 %v955
        %v4526 = vpop.f32.mrb[0].mxu0
        %v4527 = vadd.f32 %v4486, %v4526
        %v4528 = vpop.f32.mrb[0].mxu0
        %v4529 = vadd.f32 %v4488, %v4528
        %v4530 = vpop.f32.mrb[0].mxu0
        %v4531 = vpop.f32.mrb[0].mxu0
        %4532 = vdwg.mxu0
        %4533 = vmatprep.subr.bf16.mxu0 %v3227
        %4534 = vmatpush1.bf16.msra.mxu0 %v3226
        %4535 = vmatprep.subr.bf16.mxu0 %v3229
        %4536 = vmatpush1.bf16.msra.mxu0 %v3228
        %4537 = vmatprep.subr.bf16.mxu0 %v3231
        %4538 = vmatpush1.bf16.msra.mxu0 %v3230
        %4539 = vmatprep.subr.bf16.mxu0 %v3233
        %4540 = vmatpush1.bf16.msra.mxu0 %v3232
        %4541 = vmatprep.subr.bf16.mxu0 %v3235
        %4542 = vmatpush1.bf16.msra.mxu0 %v3234
        %4543 = vmatprep.subr.bf16.mxu0 %v3237
        %4544 = vmatpush1.bf16.msra.mxu0 %v3236
        %4545 = vmatprep.subr.bf16.mxu0 %v3239
        %4546 = vmatpush1.bf16.msra.mxu0 %v3238
        %4547 = vmatprep.subr.bf16.mxu0 %v3241
        %4548 = vmatpush1.bf16.msra.mxu0 %v3240
        %4549 = vmatprep.subr.bf16.mxu0 %v3243
        %4550 = vmatpush1.bf16.msra.mxu0 %v3242
        %4551 = vmatprep.subr.bf16.mxu0 %v3245
        %4552 = vmatpush1.bf16.msra.mxu0 %v3244
        %4553 = vmatprep.subr.bf16.mxu0 %v3247
        %4554 = vmatpush1.bf16.msra.mxu0 %v3246
        %4555 = vmatprep.subr.bf16.mxu0 %v3249
        %4556 = vmatpush1.bf16.msra.mxu0 %v3248
        %4557 = vmatprep.subr.bf16.mxu0 %v3251
        %4558 = vmatpush1.bf16.msra.mxu0 %v3250
        %4559 = vmatprep.subr.bf16.mxu0 %v3253
        %4560 = vmatpush1.bf16.msra.mxu0 %v3252
        %4561 = vmatprep.subr.bf16.mxu0 %v3255
        %4562 = vmatpush1.bf16.msra.mxu0 %v3254
        %4563 = vmatprep.subr.bf16.mxu0 %v3257
        %4564 = vmatpush1.bf16.msra.mxu0 %v3256
        %4565 = vmatprep.mubr.bf16.mxu0 %v973
        %4566 = vmatmul.mubr.bf16.gmra.mrb[0].mxu0 %v971
        %v4567 = vpop.f32.mrb[0].mxu0
        %v4568 = vadd.f32 %v4527, %v4567
        %v4569 = vpop.f32.mrb[0].mxu0
        %v4570 = vadd.f32 %v4529, %v4569
        %v4571 = vpop.f32.mrb[0].mxu0
        %v4572 = vpop.f32.mrb[0].mxu0
        %4573 = vdwg.mxu0
        %4574 = vmatprep.subr.bf16.mxu0 %v3259
        %4575 = vmatpush1.bf16.msra.mxu0 %v3258
        %4576 = vmatprep.subr.bf16.mxu0 %v3261
        %4577 = vmatpush1.bf16.msra.mxu0 %v3260
        %4578 = vmatprep.subr.bf16.mxu0 %v3263
        %4579 = vmatpush1.bf16.msra.mxu0 %v3262
        %4580 = vmatprep.subr.bf16.mxu0 %v3265
        %4581 = vmatpush1.bf16.msra.mxu0 %v3264
        %4582 = vmatprep.subr.bf16.mxu0 %v3267
        %4583 = vmatpush1.bf16.msra.mxu0 %v3266
        %4584 = vmatprep.subr.bf16.mxu0 %v3269
        %4585 = vmatpush1.bf16.msra.mxu0 %v3268
        %4586 = vmatprep.subr.bf16.mxu0 %v3271
        %4587 = vmatpush1.bf16.msra.mxu0 %v3270
        %4588 = vmatprep.subr.bf16.mxu0 %v3273
        %4589 = vmatpush1.bf16.msra.mxu0 %v3272
        %4590 = vmatprep.subr.bf16.mxu0 %v3275
        %4591 = vmatpush1.bf16.msra.mxu0 %v3274
        %4592 = vmatprep.subr.bf16.mxu0 %v3277
        %4593 = vmatpush1.bf16.msra.mxu0 %v3276
        %4594 = vmatprep.subr.bf16.mxu0 %v3279
        %4595 = vmatpush1.bf16.msra.mxu0 %v3278
        %4596 = vmatprep.subr.bf16.mxu0 %v3281
        %4597 = vmatpush1.bf16.msra.mxu0 %v3280
        %4598 = vmatprep.subr.bf16.mxu0 %v3283
        %4599 = vmatpush1.bf16.msra.mxu0 %v3282
        %4600 = vmatprep.subr.bf16.mxu0 %v3285
        %4601 = vmatpush1.bf16.msra.mxu0 %v3284
        %4602 = vmatprep.subr.bf16.mxu0 %v3287
        %4603 = vmatpush1.bf16.msra.mxu0 %v3286
        %4604 = vmatprep.subr.bf16.mxu0 %v3289
        %4605 = vmatpush1.bf16.msra.mxu0 %v3288
        %4606 = vmatprep.mubr.bf16.mxu0 %v1011
        %4607 = vmatmul.mubr.bf16.gmra.mrb[0].mxu0 %v997
        %v4608 = vpop.f32.mrb[0].mxu0
        %v4609 = vadd.f32 %v4568, %v4608
        %v4610 = vpop.f32.mrb[0].mxu0
        %v4611 = vadd.f32 %v4570, %v4610
        %v4612 = vpop.f32.mrb[0].mxu0
        %v4613 = vpop.f32.mrb[0].mxu0
        %4614 = vdwg.mxu0
        %4615 = vmatprep.subr.bf16.mxu0 %v3291
        %4616 = vmatpush1.bf16.msra.mxu0 %v3290
        %4617 = vmatprep.subr.bf16.mxu0 %v3293
        %4618 = vmatpush1.bf16.msra.mxu0 %v3292
        %4619 = vmatprep.subr.bf16.mxu0 %v3295
        %4620 = vmatpush1.bf16.msra.mxu0 %v3294
        %4621 = vmatprep.subr.bf16.mxu0 %v3297
        %4622 = vmatpush1.bf16.msra.mxu0 %v3296
        %4623 = vmatprep.subr.bf16.mxu0 %v3299
        %4624 = vmatpush1.bf16.msra.mxu0 %v3298
        %4625 = vmatprep.subr.bf16.mxu0 %v3301
        %4626 = vmatpush1.bf16.msra.mxu0 %v3300
        %4627 = vmatprep.subr.bf16.mxu0 %v3303
        %4628 = vmatpush1.bf16.msra.mxu0 %v3302
        %4629 = vmatprep.subr.bf16.mxu0 %v3305
        %4630 = vmatpush1.bf16.msra.mxu0 %v3304
        %4631 = vmatprep.subr.bf16.mxu0 %v3307
        %4632 = vmatpush1.bf16.msra.mxu0 %v3306
        %4633 = vmatprep.subr.bf16.mxu0 %v3309
        %4634 = vmatpush1.bf16.msra.mxu0 %v3308
        %4635 = vmatprep.subr.bf16.mxu0 %v3311
        %4636 = vmatpush1.bf16.msra.mxu0 %v3310
        %4637 = vmatprep.subr.bf16.mxu0 %v3313
        %4638 = vmatpush1.bf16.msra.mxu0 %v3312
        %4639 = vmatprep.subr.bf16.mxu0 %v3315
        %4640 = vmatpush1.bf16.msra.mxu0 %v3314
        %4641 = vmatprep.subr.bf16.mxu0 %v3317
        %4642 = vmatpush1.bf16.msra.mxu0 %v3316
        %4643 = vmatprep.subr.bf16.mxu0 %v3319
        %4644 = vmatpush1.bf16.msra.mxu0 %v3318
        %4645 = vmatprep.subr.bf16.mxu0 %v3321
        %4646 = vmatpush1.bf16.msra.mxu0 %v3320
        %4647 = vmatprep.mubr.bf16.mxu0 %v1021
        %4648 = vmatmul.mubr.bf16.gmra.mrb[0].mxu0 %v1019
        %v4649 = vpop.f32.mrb[0].mxu0
        %v4650 = vadd.f32 %v4609, %v4649
        %v4651 = vpop.f32.mrb[0].mxu0
        %v4652 = vadd.f32 %v4611, %v4651
        %v4653 = vpop.f32.mrb[0].mxu0
        %v4654 = vpop.f32.mrb[0].mxu0
        %4655 = vdwg.mxu0
        %4656 = vmatprep.subr.bf16.mxu0 %v3323
        %4657 = vmatpush1.bf16.msra.mxu0 %v3322
        %4658 = vmatprep.subr.bf16.mxu0 %v3325
        %4659 = vmatpush1.bf16.msra.mxu0 %v3324
        %4660 = vmatprep.subr.bf16.mxu0 %v3327
        %4661 = vmatpush1.bf16.msra.mxu0 %v3326
        %4662 = vmatprep.subr.bf16.mxu0 %v3329
        %4663 = vmatpush1.bf16.msra.mxu0 %v3328
        %4664 = vmatprep.subr.bf16.mxu0 %v3331
        %4665 = vmatpush1.bf16.msra.mxu0 %v3330
        %4666 = vmatprep.subr.bf16.mxu0 %v3333
        %4667 = vmatpush1.bf16.msra.mxu0 %v3332
        %4668 = vmatprep.subr.bf16.mxu0 %v3335
        %4669 = vmatpush1.bf16.msra.mxu0 %v3334
        %4670 = vmatprep.subr.bf16.mxu0 %v3337
        %4671 = vmatpush1.bf16.msra.mxu0 %v3336
        %4672 = vmatprep.subr.bf16.mxu0 %v3339
        %4673 = vmatpush1.bf16.msra.mxu0 %v3338
        %4674 = vmatprep.subr.bf16.mxu0 %v3341
        %4675 = vmatpush1.bf16.msra.mxu0 %v3340
        %4676 = vmatprep.subr.bf16.mxu0 %v3343
        %4677 = vmatpush1.bf16.msra.mxu0 %v3342
        %4678 = vmatprep.subr.bf16.mxu0 %v3345
        %4679 = vmatpush1.bf16.msra.mxu0 %v3344
        %4680 = vmatprep.subr.bf16.mxu0 %v3347
        %4681 = vmatpush1.bf16.msra.mxu0 %v3346
        %4682 = vmatprep.subr.bf16.mxu0 %v3349
        %4683 = vmatpush1.bf16.msra.mxu0 %v3348
        %4684 = vmatprep.subr.bf16.mxu0 %v3351
        %4685 = vmatpush1.bf16.msra.mxu0 %v3350
        %4686 = vmatprep.subr.bf16.mxu0 %v3353
        %4687 = vmatpush1.bf16.msra.mxu0 %v3352
        %4688 = vmatprep.mubr.bf16.mxu0 %v1018
        %4689 = vmatmul.mubr.bf16.gmra.mrb[0].mxu0 %v1004
        %v4690 = vpop.f32.mrb[0].mxu0
        %v4691 = vadd.f32 %v4650, %v4690
        %v4692 = vpop.f32.mrb[0].mxu0
        %v4693 = vadd.f32 %v4652, %v4692
        %v4694 = vpop.f32.mrb[0].mxu0
        %v4695 = vpop.f32.mrb[0].mxu0
        %4696 = vdwg.mxu0
        %4697 = vmatprep.subr.bf16.mxu0 %v3355
        %4698 = vmatpush1.bf16.msra.mxu0 %v3354
        %4699 = vmatprep.subr.bf16.mxu0 %v3357
        %4700 = vmatpush1.bf16.msra.mxu0 %v3356
        %4701 = vmatprep.subr.bf16.mxu0 %v3359
        %4702 = vmatpush1.bf16.msra.mxu0 %v3358
        %4703 = vmatprep.subr.bf16.mxu0 %v3361
        %4704 = vmatpush1.bf16.msra.mxu0 %v3360
        %4705 = vmatprep.subr.bf16.mxu0 %v3363
        %4706 = vmatpush1.bf16.msra.mxu0 %v3362
        %4707 = vmatprep.subr.bf16.mxu0 %v3365
        %4708 = vmatpush1.bf16.msra.mxu0 %v3364
        %4709 = vmatprep.subr.bf16.mxu0 %v3367
        %4710 = vmatpush1.bf16.msra.mxu0 %v3366
        %4711 = vmatprep.subr.bf16.mxu0 %v3369
        %4712 = vmatpush1.bf16.msra.mxu0 %v3368
        %4713 = vmatprep.subr.bf16.mxu0 %v3371
        %4714 = vmatpush1.bf16.msra.mxu0 %v3370
        %4715 = vmatprep.subr.bf16.mxu0 %v3373
        %4716 = vmatpush1.bf16.msra.mxu0 %v3372
        %4717 = vmatprep.subr.bf16.mxu0 %v3375
        %4718 = vmatpush1.bf16.msra.mxu0 %v3374
        %4719 = vmatprep.subr.bf16.mxu0 %v3377
        %4720 = vmatpush1.bf16.msra.mxu0 %v3376
        %4721 = vmatprep.subr.bf16.mxu0 %v3379
        %4722 = vmatpush1.bf16.msra.mxu0 %v3378
        %4723 = vmatprep.subr.bf16.mxu0 %v3381
        %4724 = vmatpush1.bf16.msra.mxu0 %v3380
        %4725 = vmatprep.subr.bf16.mxu0 %v3383
        %4726 = vmatpush1.bf16.msra.mxu0 %v3382
        %4727 = vmatprep.subr.bf16.mxu0 %v3385
        %4728 = vmatpush1.bf16.msra.mxu0 %v3384
        %4729 = vmatprep.mubr.bf16.mxu0 %v1022
        %4730 = vmatmul.mubr.bf16.gmra.mrb[0].mxu0 %v1020
        %v4731 = vpop.f32.mrb[0].mxu0
        %v4732 = vadd.f32 %v4691, %v4731
        %v4733 = vpop.f32.mrb[0].mxu0
        %v4734 = vadd.f32 %v4693, %v4733
        %v4735 = vpop.f32.mrb[0].mxu0
        %v4736 = vpop.f32.mrb[0].mxu0
        %4737 = vdwg.mxu0
        %4738 = vmatprep.subr.bf16.mxu0 %v3387
        %4739 = vmatpush1.bf16.msra.mxu0 %v3386
        %4740 = vmatprep.subr.bf16.mxu0 %v3389
        %4741 = vmatpush1.bf16.msra.mxu0 %v3388
        %4742 = vmatprep.subr.bf16.mxu0 %v3391
        %4743 = vmatpush1.bf16.msra.mxu0 %v3390
        %4744 = vmatprep.subr.bf16.mxu0 %v3393
        %4745 = vmatpush1.bf16.msra.mxu0 %v3392
        %4746 = vmatprep.subr.bf16.mxu0 %v3395
        %4747 = vmatpush1.bf16.msra.mxu0 %v3394
        %4748 = vmatprep.subr.bf16.mxu0 %v3397
        %4749 = vmatpush1.bf16.msra.mxu0 %v3396
        %4750 = vmatprep.subr.bf16.mxu0 %v3399
        %4751 = vmatpush1.bf16.msra.mxu0 %v3398
        %4752 = vmatprep.subr.bf16.mxu0 %v3401
        %4753 = vmatpush1.bf16.msra.mxu0 %v3400
        %4754 = vmatprep.subr.bf16.mxu0 %v3403
        %4755 = vmatpush1.bf16.msra.mxu0 %v3402
        %4756 = vmatprep.subr.bf16.mxu0 %v3405
        %4757 = vmatpush1.bf16.msra.mxu0 %v3404
        %4758 = vmatprep.subr.bf16.mxu0 %v3407
        %4759 = vmatpush1.bf16.msra.mxu0 %v3406
        %4760 = vmatprep.subr.bf16.mxu0 %v3409
        %4761 = vmatpush1.bf16.msra.mxu0 %v3408
        %4762 = vmatprep.subr.bf16.mxu0 %v3411
        %4763 = vmatpush1.bf16.msra.mxu0 %v3410
        %4764 = vmatprep.subr.bf16.mxu0 %v3413
        %4765 = vmatpush1.bf16.msra.mxu0 %v3412
        %4766 = vmatprep.subr.bf16.mxu0 %v3415
        %4767 = vmatpush1.bf16.msra.mxu0 %v3414
        %4768 = vmatprep.subr.bf16.mxu0 %v3417
        %4769 = vmatpush1.bf16.msra.mxu0 %v3416
        %4770 = vmatprep.mubr.bf16.mxu0 %v1060
        %4771 = vmatmul.mubr.bf16.gmra.mrb[0].mxu0 %v1046
        %v4772 = vpop.f32.mrb[0].mxu0
        %v4773 = vadd.f32 %v4732, %v4772
        %v4774 = vpop.f32.mrb[0].mxu0
        %v4775 = vadd.f32 %v4734, %v4774
        %v4776 = vpop.f32.mrb[0].mxu0
        %v4777 = vpop.f32.mrb[0].mxu0
        %4778 = vdwg.mxu0
        %4779 = vmatprep.subr.bf16.mxu0 %v3419
        %4780 = vmatpush1.bf16.msra.mxu0 %v3418
        %4781 = vmatprep.subr.bf16.mxu0 %v3421
        %4782 = vmatpush1.bf16.msra.mxu0 %v3420
        %4783 = vmatprep.subr.bf16.mxu0 %v3423
        %4784 = vmatpush1.bf16.msra.mxu0 %v3422
        %4785 = vmatprep.subr.bf16.mxu0 %v3425
        %4786 = vmatpush1.bf16.msra.mxu0 %v3424
        %4787 = vmatprep.subr.bf16.mxu0 %v3427
        %4788 = vmatpush1.bf16.msra.mxu0 %v3426
        %4789 = vmatprep.subr.bf16.mxu0 %v3429
        %4790 = vmatpush1.bf16.msra.mxu0 %v3428
        %4791 = vmatprep.subr.bf16.mxu0 %v3431
        %4792 = vmatpush1.bf16.msra.mxu0 %v3430
        %4793 = vmatprep.subr.bf16.mxu0 %v3433
        %4794 = vmatpush1.bf16.msra.mxu0 %v3432
        %4795 = vmatprep.subr.bf16.mxu0 %v3435
        %4796 = vmatpush1.bf16.msra.mxu0 %v3434
        %4797 = vmatprep.subr.bf16.mxu0 %v3437
        %4798 = vmatpush1.bf16.msra.mxu0 %v3436
        %4799 = vmatprep.subr.bf16.mxu0 %v3439
        %4800 = vmatpush1.bf16.msra.mxu0 %v3438
        %4801 = vmatprep.subr.bf16.mxu0 %v3441
        %4802 = vmatpush1.bf16.msra.mxu0 %v3440
        %4803 = vmatprep.subr.bf16.mxu0 %v3443
        %4804 = vmatpush1.bf16.msra.mxu0 %v3442
        %4805 = vmatprep.subr.bf16.mxu0 %v3445
        %4806 = vmatpush1.bf16.msra.mxu0 %v3444
        %4807 = vmatprep.subr.bf16.mxu0 %v3447
        %4808 = vmatpush1.bf16.msra.mxu0 %v3446
        %4809 = vmatprep.subr.bf16.mxu0 %v3449
        %4810 = vmatpush1.bf16.msra.mxu0 %v3448
        %4811 = vmatprep.mubr.bf16.mxu0 %v1070
        %4812 = vmatmul.mubr.bf16.gmra.mrb[0].mxu0 %v1068
        %v4813 = vpop.f32.mrb[0].mxu0
        %v4814 = vadd.f32 %v4773, %v4813
        %v4815 = vpop.f32.mrb[0].mxu0
        %v4816 = vadd.f32 %v4775, %v4815
        %v4817 = vpop.f32.mrb[0].mxu0
        %v4818 = vpop.f32.mrb[0].mxu0
        %4819 = vdwg.mxu0
        %4820 = vmatprep.subr.bf16.mxu0 %v3451
        %4821 = vmatpush1.bf16.msra.mxu0 %v3450
        %4822 = vmatprep.subr.bf16.mxu0 %v3453
        %4823 = vmatpush1.bf16.msra.mxu0 %v3452
        %4824 = vmatprep.subr.bf16.mxu0 %v3455
        %4825 = vmatpush1.bf16.msra.mxu0 %v3454
        %4826 = vmatprep.subr.bf16.mxu0 %v3457
        %4827 = vmatpush1.bf16.msra.mxu0 %v3456
        %4828 = vmatprep.subr.bf16.mxu0 %v3459
        %4829 = vmatpush1.bf16.msra.mxu0 %v3458
        %4830 = vmatprep.subr.bf16.mxu0 %v3461
        %4831 = vmatpush1.bf16.msra.mxu0 %v3460
        %4832 = vmatprep.subr.bf16.mxu0 %v3463
        %4833 = vmatpush1.bf16.msra.mxu0 %v3462
        %4834 = vmatprep.subr.bf16.mxu0 %v3465
        %4835 = vmatpush1.bf16.msra.mxu0 %v3464
        %4836 = vmatprep.subr.bf16.mxu0 %v3467
        %4837 = vmatpush1.bf16.msra.mxu0 %v3466
        %4838 = vmatprep.subr.bf16.mxu0 %v3469
        %4839 = vmatpush1.bf16.msra.mxu0 %v3468
        %4840 = vmatprep.subr.bf16.mxu0 %v3471
        %4841 = vmatpush1.bf16.msra.mxu0 %v3470
        %4842 = vmatprep.subr.bf16.mxu0 %v3473
        %4843 = vmatpush1.bf16.msra.mxu0 %v3472
        %4844 = vmatprep.subr.bf16.mxu0 %v3475
        %4845 = vmatpush1.bf16.msra.mxu0 %v3474
        %4846 = vmatprep.subr.bf16.mxu0 %v3477
        %4847 = vmatpush1.bf16.msra.mxu0 %v3476
        %4848 = vmatprep.subr.bf16.mxu0 %v3479
        %4849 = vmatpush1.bf16.msra.mxu0 %v3478
        %4850 = vmatprep.subr.bf16.mxu0 %v3481
        %4851 = vmatpush1.bf16.msra.mxu0 %v3480
        %4852 = vmatprep.mubr.bf16.mxu0 %v1067
        %4853 = vmatmul.mubr.bf16.gmra.mrb[0].mxu0 %v1053
        %v4854 = vpop.f32.mrb[0].mxu0
        %v4855 = vadd.f32 %v4814, %v4854
        %v4856 = vpop.f32.mrb[0].mxu0
        %v4857 = vadd.f32 %v4816, %v4856
        %v4858 = vpop.f32.mrb[0].mxu0
        %v4859 = vpop.f32.mrb[0].mxu0
        %4860 = vdwg.mxu0
        %4861 = vmatprep.subr.bf16.mxu0 %v3483
        %4862 = vmatpush1.bf16.msra.mxu0 %v3482
        %4863 = vmatprep.subr.bf16.mxu0 %v3485
        %4864 = vmatpush1.bf16.msra.mxu0 %v3484
        %4865 = vmatprep.subr.bf16.mxu0 %v3487
        %4866 = vmatpush1.bf16.msra.mxu0 %v3486
        %4867 = vmatprep.subr.bf16.mxu0 %v3489
        %4868 = vmatpush1.bf16.msra.mxu0 %v3488
        %4869 = vmatprep.subr.bf16.mxu0 %v3491
        %4870 = vmatpush1.bf16.msra.mxu0 %v3490
        %4871 = vmatprep.subr.bf16.mxu0 %v3493
        %4872 = vmatpush1.bf16.msra.mxu0 %v3492
        %4873 = vmatprep.subr.bf16.mxu0 %v3495
        %4874 = vmatpush1.bf16.msra.mxu0 %v3494
        %4875 = vmatprep.subr.bf16.mxu0 %v3497
        %4876 = vmatpush1.bf16.msra.mxu0 %v3496
        %4877 = vmatprep.subr.bf16.mxu0 %v3499
        %4878 = vmatpush1.bf16.msra.mxu0 %v3498
        %4879 = vmatprep.subr.bf16.mxu0 %v3501
        %4880 = vmatpush1.bf16.msra.mxu0 %v3500
        %4881 = vmatprep.subr.bf16.mxu0 %v3503
        %4882 = vmatpush1.bf16.msra.mxu0 %v3502
        %4883 = vmatprep.subr.bf16.mxu0 %v3505
        %4884 = vmatpush1.bf16.msra.mxu0 %v3504
        %4885 = vmatprep.subr.bf16.mxu0 %v3507
        %4886 = vmatpush1.bf16.msra.mxu0 %v3506
        %4887 = vmatprep.subr.bf16.mxu0 %v3509
        %4888 = vmatpush1.bf16.msra.mxu0 %v3508
        %4889 = vmatprep.subr.bf16.mxu0 %v3511
        %4890 = vmatpush1.bf16.msra.mxu0 %v3510
        %4891 = vmatprep.subr.bf16.mxu0 %v3513
        %4892 = vmatpush1.bf16.msra.mxu0 %v3512
        %4893 = vmatprep.mubr.bf16.mxu0 %v1071
        %4894 = vmatmul.mubr.bf16.gmra.mrb[0].mxu0 %v1069
        %v4895 = vpop.f32.mrb[0].mxu0
        %v4896 = vadd.f32 %v4855, %v4895
        %v4897 = vpop.f32.mrb[0].mxu0
        %v4898 = vadd.f32 %v4857, %v4897
        %v4899 = vpop.f32.mrb[0].mxu0
        %v4900 = vpop.f32.mrb[0].mxu0
        %4901 = vdwg.mxu0
        %4902 = vmatprep.subr.bf16.mxu0 %v3515
        %4903 = vmatpush1.bf16.msra.mxu0 %v3514
        %4904 = vmatprep.subr.bf16.mxu0 %v3517
        %4905 = vmatpush1.bf16.msra.mxu0 %v3516
        %4906 = vmatprep.subr.bf16.mxu0 %v3519
        %4907 = vmatpush1.bf16.msra.mxu0 %v3518
        %4908 = vmatprep.subr.bf16.mxu0 %v3521
        %4909 = vmatpush1.bf16.msra.mxu0 %v3520
        %4910 = vmatprep.subr.bf16.mxu0 %v3523
        %4911 = vmatpush1.bf16.msra.mxu0 %v3522
        %4912 = vmatprep.subr.bf16.mxu0 %v3525
        %4913 = vmatpush1.bf16.msra.mxu0 %v3524
        %4914 = vmatprep.subr.bf16.mxu0 %v3527
        %4915 = vmatpush1.bf16.msra.mxu0 %v3526
        %4916 = vmatprep.subr.bf16.mxu0 %v3529
        %4917 = vmatpush1.bf16.msra.mxu0 %v3528
        %4918 = vmatprep.subr.bf16.mxu0 %v3531
        %4919 = vmatpush1.bf16.msra.mxu0 %v3530
        %4920 = vmatprep.subr.bf16.mxu0 %v3533
        %4921 = vmatpush1.bf16.msra.mxu0 %v3532
        %4922 = vmatprep.subr.bf16.mxu0 %v3535
        %4923 = vmatpush1.bf16.msra.mxu0 %v3534
        %4924 = vmatprep.subr.bf16.mxu0 %v3537
        %4925 = vmatpush1.bf16.msra.mxu0 %v3536
        %4926 = vmatprep.subr.bf16.mxu0 %v3539
        %4927 = vmatpush1.bf16.msra.mxu0 %v3538
        %4928 = vmatprep.subr.bf16.mxu0 %v3541
        %4929 = vmatpush1.bf16.msra.mxu0 %v3540
        %4930 = vmatprep.subr.bf16.mxu0 %v3543
        %4931 = vmatpush1.bf16.msra.mxu0 %v3542
        %4932 = vmatprep.subr.bf16.mxu0 %v3545
        %4933 = vmatpush1.bf16.msra.mxu0 %v3544
        %4934 = vmatprep.mubr.bf16.mxu0 %v1109
        %4935 = vmatmul.mubr.bf16.gmra.mrb[0].mxu0 %v1095
        %v4936 = vpop.f32.mrb[0].mxu0
        %v4937 = vadd.f32 %v4896, %v4936
        %v4938 = vpop.f32.mrb[0].mxu0
        %v4939 = vadd.f32 %v4898, %v4938
        %v4940 = vpop.f32.mrb[0].mxu0
        %v4941 = vpop.f32.mrb[0].mxu0
        %4942 = vdwg.mxu0
        %4943 = vmatprep.subr.bf16.mxu0 %v3547
        %4944 = vmatpush1.bf16.msra.mxu0 %v3546
        %4945 = vmatprep.subr.bf16.mxu0 %v3549
        %4946 = vmatpush1.bf16.msra.mxu0 %v3548
        %4947 = vmatprep.subr.bf16.mxu0 %v3551
        %4948 = vmatpush1.bf16.msra.mxu0 %v3550
        %4949 = vmatprep.subr.bf16.mxu0 %v3553
        %4950 = vmatpush1.bf16.msra.mxu0 %v3552
        %4951 = vmatprep.subr.bf16.mxu0 %v3555
        %4952 = vmatpush1.bf16.msra.mxu0 %v3554
        %4953 = vmatprep.subr.bf16.mxu0 %v3557
        %4954 = vmatpush1.bf16.msra.mxu0 %v3556
        %4955 = vmatprep.subr.bf16.mxu0 %v3559
        %4956 = vmatpush1.bf16.msra.mxu0 %v3558
        %4957 = vmatprep.subr.bf16.mxu0 %v3561
        %4958 = vmatpush1.bf16.msra.mxu0 %v3560
        %4959 = vmatprep.subr.bf16.mxu0 %v3563
        %4960 = vmatpush1.bf16.msra.mxu0 %v3562
        %4961 = vmatprep.subr.bf16.mxu0 %v3565
        %4962 = vmatpush1.bf16.msra.mxu0 %v3564
        %4963 = vmatprep.subr.bf16.mxu0 %v3567
        %4964 = vmatpush1.bf16.msra.mxu0 %v3566
        %4965 = vmatprep.subr.bf16.mxu0 %v3569
        %4966 = vmatpush1.bf16.msra.mxu0 %v3568
        %4967 = vmatprep.subr.bf16.mxu0 %v3571
        %4968 = vmatpush1.bf16.msra.mxu0 %v3570
        %4969 = vmatprep.subr.bf16.mxu0 %v3573
        %4970 = vmatpush1.bf16.msra.mxu0 %v3572
        %4971 = vmatprep.subr.bf16.mxu0 %v3575
        %4972 = vmatpush1.bf16.msra.mxu0 %v3574
        %4973 = vmatprep.subr.bf16.mxu0 %v3577
        %4974 = vmatpush1.bf16.msra.mxu0 %v3576
        %4975 = vmatprep.mubr.bf16.mxu0 %v1119
        %4976 = vmatmul.mubr.bf16.gmra.mrb[0].mxu0 %v1117
        %v4977 = vpop.f32.mrb[0].mxu0
        %v4978 = vadd.f32 %v4937, %v4977
        %v4979 = vpop.f32.mrb[0].mxu0
        %v4980 = vadd.f32 %v4939, %v4979
        %v4981 = vpop.f32.mrb[0].mxu0
        %v4982 = vpop.f32.mrb[0].mxu0
        %4983 = vdwg.mxu0
        %4984 = vmatprep.subr.bf16.mxu0 %v3579
        %4985 = vmatpush1.bf16.msra.mxu0 %v3578
        %4986 = vmatprep.subr.bf16.mxu0 %v3581
        %4987 = vmatpush1.bf16.msra.mxu0 %v3580
        %4988 = vmatprep.subr.bf16.mxu0 %v3583
        %4989 = vmatpush1.bf16.msra.mxu0 %v3582
        %4990 = vmatprep.subr.bf16.mxu0 %v3585
        %4991 = vmatpush1.bf16.msra.mxu0 %v3584
        %4992 = vmatprep.subr.bf16.mxu0 %v3587
        %4993 = vmatpush1.bf16.msra.mxu0 %v3586
        %4994 = vmatprep.subr.bf16.mxu0 %v3589
        %4995 = vmatpush1.bf16.msra.mxu0 %v3588
        %4996 = vmatprep.subr.bf16.mxu0 %v3591
        %4997 = vmatpush1.bf16.msra.mxu0 %v3590
        %4998 = vmatprep.subr.bf16.mxu0 %v3593
        %4999 = vmatpush1.bf16.msra.mxu0 %v3592
        %5000 = vmatprep.subr.bf16.mxu0 %v3595
        %5001 = vmatpush1.bf16.msra.mxu0 %v3594
        %5002 = vmatprep.subr.bf16.mxu0 %v3597
        %5003 = vmatpush1.bf16.msra.mxu0 %v3596
        %5004 = vmatprep.subr.bf16.mxu0 %v3599
        %5005 = vmatpush1.bf16.msra.mxu0 %v3598
        %5006 = vmatprep.subr.bf16.mxu0 %v3601
        %5007 = vmatpush1.bf16.msra.mxu0 %v3600
        %5008 = vmatprep.subr.bf16.mxu0 %v3603
        %5009 = vmatpush1.bf16.msra.mxu0 %v3602
        %5010 = vmatprep.subr.bf16.mxu0 %v3605
        %5011 = vmatpush1.bf16.msra.mxu0 %v3604
        %5012 = vmatprep.subr.bf16.mxu0 %v3607
        %5013 = vmatpush1.bf16.msra.mxu0 %v3606
        %5014 = vmatprep.subr.bf16.mxu0 %v3609
        %5015 = vmatpush1.bf16.msra.mxu0 %v3608
        %5016 = vmatprep.mubr.bf16.mxu0 %v1116
        %5017 = vmatmul.mubr.bf16.gmra.mrb[0].mxu0 %v1102
        %v5018 = vpop.f32.mrb[0].mxu0
        %v5019 = vadd.f32 %v4978, %v5018
        %v5020 = vpop.f32.mrb[0].mxu0
        %v5021 = vadd.f32 %v4980, %v5020
        %v5022 = vpop.f32.mrb[0].mxu0
        %v5023 = vpop.f32.mrb[0].mxu0
        %5024 = vdwg.mxu0
        %5025 = vmatprep.subr.bf16.mxu0 %v3611
        %5026 = vmatpush1.bf16.msra.mxu0 %v3610
        %5027 = vmatprep.subr.bf16.mxu0 %v3613
        %5028 = vmatpush1.bf16.msra.mxu0 %v3612
        %5029 = vmatprep.subr.bf16.mxu0 %v3615
        %5030 = vmatpush1.bf16.msra.mxu0 %v3614
        %5031 = vmatprep.subr.bf16.mxu0 %v3617
        %5032 = vmatpush1.bf16.msra.mxu0 %v3616
        %5033 = vmatprep.subr.bf16.mxu0 %v3619
        %5034 = vmatpush1.bf16.msra.mxu0 %v3618
        %5035 = vmatprep.subr.bf16.mxu0 %v3621
        %5036 = vmatpush1.bf16.msra.mxu0 %v3620
        %5037 = vmatprep.subr.bf16.mxu0 %v3623
        %5038 = vmatpush1.bf16.msra.mxu0 %v3622
        %5039 = vmatprep.subr.bf16.mxu0 %v3625
        %5040 = vmatpush1.bf16.msra.mxu0 %v3624
        %5041 = vmatprep.subr.bf16.mxu0 %v3627
        %5042 = vmatpush1.bf16.msra.mxu0 %v3626
        %5043 = vmatprep.subr.bf16.mxu0 %v3629
        %5044 = vmatpush1.bf16.msra.mxu0 %v3628
        %5045 = vmatprep.subr.bf16.mxu0 %v3631
        %5046 = vmatpush1.bf16.msra.mxu0 %v3630
        %5047 = vmatprep.subr.bf16.mxu0 %v3633
        %5048 = vmatpush1.bf16.msra.mxu0 %v3632
        %5049 = vmatprep.subr.bf16.mxu0 %v3635
        %5050 = vmatpush1.bf16.msra.mxu0 %v3634
        %5051 = vmatprep.subr.bf16.mxu0 %v3637
        %5052 = vmatpush1.bf16.msra.mxu0 %v3636
        %5053 = vmatprep.subr.bf16.mxu0 %v3639
        %5054 = vmatpush1.bf16.msra.mxu0 %v3638
        %5055 = vmatprep.subr.bf16.mxu0 %v3641
        %5056 = vmatpush1.bf16.msra.mxu0 %v3640
        %5057 = vmatprep.mubr.bf16.mxu0 %v1120
        %5058 = vmatmul.mubr.bf16.gmra.mrb[0].mxu0 %v1118
        %v5059 = vpop.f32.mrb[0].mxu0
        %v5060 = vadd.f32 %v5019, %v5059
        %v5061 = vpop.f32.mrb[0].mxu0
        %v5062 = vadd.f32 %v5021, %v5061
        %v5063 = vpop.f32.mrb[0].mxu0
        %v5064 = vpop.f32.mrb[0].mxu0
        %5065 = vdwg.mxu0
        %5066 = vmatprep.subr.bf16.mxu0 %v3643
        %5067 = vmatpush1.bf16.msra.mxu0 %v3642
        %5068 = vmatprep.subr.bf16.mxu0 %v3645
        %5069 = vmatpush1.bf16.msra.mxu0 %v3644
        %5070 = vmatprep.subr.bf16.mxu0 %v3647
        %5071 = vmatpush1.bf16.msra.mxu0 %v3646
        %5072 = vmatprep.subr.bf16.mxu0 %v3649
        %5073 = vmatpush1.bf16.msra.mxu0 %v3648
        %5074 = vmatprep.subr.bf16.mxu0 %v3651
        %5075 = vmatpush1.bf16.msra.mxu0 %v3650
        %5076 = vmatprep.subr.bf16.mxu0 %v3653
        %5077 = vmatpush1.bf16.msra.mxu0 %v3652
        %5078 = vmatprep.subr.bf16.mxu0 %v3655
        %5079 = vmatpush1.bf16.msra.mxu0 %v3654
        %5080 = vmatprep.subr.bf16.mxu0 %v3657
        %5081 = vmatpush1.bf16.msra.mxu0 %v3656
        %5082 = vmatprep.subr.bf16.mxu0 %v3659
        %5083 = vmatpush1.bf16.msra.mxu0 %v3658
        %5084 = vmatprep.subr.bf16.mxu0 %v3661
        %5085 = vmatpush1.bf16.msra.mxu0 %v3660
        %5086 = vmatprep.subr.bf16.mxu0 %v3663
        %5087 = vmatpush1.bf16.msra.mxu0 %v3662
        %5088 = vmatprep.subr.bf16.mxu0 %v3665
        %5089 = vmatpush1.bf16.msra.mxu0 %v3664
        %5090 = vmatprep.subr.bf16.mxu0 %v3667
        %5091 = vmatpush1.bf16.msra.mxu0 %v3666
        %5092 = vmatprep.subr.bf16.mxu0 %v3669
        %5093 = vmatpush1.bf16.msra.mxu0 %v3668
        %5094 = vmatprep.subr.bf16.mxu0 %v3671
        %5095 = vmatpush1.bf16.msra.mxu0 %v3670
        %5096 = vmatprep.subr.bf16.mxu0 %v3673
        %5097 = vmatpush1.bf16.msra.mxu0 %v3672
        %5098 = vmatprep.mubr.bf16.mxu0 %v1158
        %5099 = vmatmul.mubr.bf16.gmra.mrb[0].mxu0 %v1144
        %v5100 = vpop.f32.mrb[0].mxu0
        %v5101 = vadd.f32 %v5060, %v5100
        %v5102 = vpop.f32.mrb[0].mxu0
        %v5103 = vadd.f32 %v5062, %v5102
        %v5104 = vpop.f32.mrb[0].mxu0
        %v5105 = vpop.f32.mrb[0].mxu0
        %5106 = vdwg.mxu0
        %5107 = vmatprep.subr.bf16.mxu0 %v3675
        %5108 = vmatpush1.bf16.msra.mxu0 %v3674
        %5109 = vmatprep.subr.bf16.mxu0 %v3677
        %5110 = vmatpush1.bf16.msra.mxu0 %v3676
        %5111 = vmatprep.subr.bf16.mxu0 %v3679
        %5112 = vmatpush1.bf16.msra.mxu0 %v3678
        %5113 = vmatprep.subr.bf16.mxu0 %v3681
        %5114 = vmatpush1.bf16.msra.mxu0 %v3680
        %5115 = vmatprep.subr.bf16.mxu0 %v3683
        %5116 = vmatpush1.bf16.msra.mxu0 %v3682
        %5117 = vmatprep.subr.bf16.mxu0 %v3685
        %5118 = vmatpush1.bf16.msra.mxu0 %v3684
        %5119 = vmatprep.subr.bf16.mxu0 %v3687
        %5120 = vmatpush1.bf16.msra.mxu0 %v3686
        %5121 = vmatprep.subr.bf16.mxu0 %v3689
        %5122 = vmatpush1.bf16.msra.mxu0 %v3688
        %5123 = vmatprep.subr.bf16.mxu0 %v3691
        %5124 = vmatpush1.bf16.msra.mxu0 %v3690
        %5125 = vmatprep.subr.bf16.mxu0 %v3693
        %5126 = vmatpush1.bf16.msra.mxu0 %v3692
        %5127 = vmatprep.subr.bf16.mxu0 %v3695
        %5128 = vmatpush1.bf16.msra.mxu0 %v3694
        %5129 = vmatprep.subr.bf16.mxu0 %v3697
        %5130 = vmatpush1.bf16.msra.mxu0 %v3696
        %5131 = vmatprep.subr.bf16.mxu0 %v3699
        %5132 = vmatpush1.bf16.msra.mxu0 %v3698
        %5133 = vmatprep.subr.bf16.mxu0 %v3701
        %5134 = vmatpush1.bf16.msra.mxu0 %v3700
        %5135 = vmatprep.subr.bf16.mxu0 %v3703
        %5136 = vmatpush1.bf16.msra.mxu0 %v3702
        %5137 = vmatprep.subr.bf16.mxu0 %v3705
        %5138 = vmatpush1.bf16.msra.mxu0 %v3704
        %5139 = vmatprep.mubr.bf16.mxu0 %v1168
        %5140 = vmatmul.mubr.bf16.gmra.mrb[0].mxu0 %v1166
        %v5141 = vpop.f32.mrb[0].mxu0
        %v5142 = vadd.f32 %v5101, %v5141
        %v5143 = vpop.f32.mrb[0].mxu0
        %v5144 = vadd.f32 %v5103, %v5143
        %v5145 = vpop.f32.mrb[0].mxu0
        %v5146 = vpop.f32.mrb[0].mxu0
        %5147 = vdwg.mxu0
        %5148 = vmatprep.subr.bf16.mxu0 %v3707
        %5149 = vmatpush1.bf16.msra.mxu0 %v3706
        %5150 = vmatprep.subr.bf16.mxu0 %v3709
        %5151 = vmatpush1.bf16.msra.mxu0 %v3708
        %5152 = vmatprep.subr.bf16.mxu0 %v3711
        %5153 = vmatpush1.bf16.msra.mxu0 %v3710
        %5154 = vmatprep.subr.bf16.mxu0 %v3713
        %5155 = vmatpush1.bf16.msra.mxu0 %v3712
        %5156 = vmatprep.subr.bf16.mxu0 %v3715
        %5157 = vmatpush1.bf16.msra.mxu0 %v3714
        %5158 = vmatprep.subr.bf16.mxu0 %v3717
        %5159 = vmatpush1.bf16.msra.mxu0 %v3716
        %5160 = vmatprep.subr.bf16.mxu0 %v3719
        %5161 = vmatpush1.bf16.msra.mxu0 %v3718
        %5162 = vmatprep.subr.bf16.mxu0 %v3721
        %5163 = vmatpush1.bf16.msra.mxu0 %v3720
        %5164 = vmatprep.subr.bf16.mxu0 %v3723
        %5165 = vmatpush1.bf16.msra.mxu0 %v3722
        %5166 = vmatprep.subr.bf16.mxu0 %v3725
        %5167 = vmatpush1.bf16.msra.mxu0 %v3724
        %5168 = vmatprep.subr.bf16.mxu0 %v3727
        %5169 = vmatpush1.bf16.msra.mxu0 %v3726
        %5170 = vmatprep.subr.bf16.mxu0 %v3729
        %5171 = vmatpush1.bf16.msra.mxu0 %v3728
        %5172 = vmatprep.subr.bf16.mxu0 %v3731
        %5173 = vmatpush1.bf16.msra.mxu0 %v3730
        %5174 = vmatprep.subr.bf16.mxu0 %v3733
        %5175 = vmatpush1.bf16.msra.mxu0 %v3732
        %5176 = vmatprep.subr.bf16.mxu0 %v3735
        %5177 = vmatpush1.bf16.msra.mxu0 %v3734
        %5178 = vmatprep.subr.bf16.mxu0 %v3737
        %5179 = vmatpush1.bf16.msra.mxu0 %v3736
        %5180 = vmatprep.mubr.bf16.mxu0 %v1165
        %5181 = vmatmul.mubr.bf16.gmra.mrb[0].mxu0 %v1151
        %v5182 = vpop.f32.mrb[0].mxu0
        %v5183 = vadd.f32 %v5142, %v5182
        %v5184 = vpop.f32.mrb[0].mxu0
        %v5185 = vadd.f32 %v5144, %v5184
        %v5186 = vpop.f32.mrb[0].mxu0
        %v5187 = vpop.f32.mrb[0].mxu0
        %5188 = vdwg.mxu0
        %5189 = vmatprep.subr.bf16.mxu0 %v3739
        %5190 = vmatpush1.bf16.msra.mxu0 %v3738
        %5191 = vmatprep.subr.bf16.mxu0 %v3741
        %5192 = vmatpush1.bf16.msra.mxu0 %v3740
        %5193 = vmatprep.subr.bf16.mxu0 %v3743
        %5194 = vmatpush1.bf16.msra.mxu0 %v3742
        %5195 = vmatprep.subr.bf16.mxu0 %v3745
        %5196 = vmatpush1.bf16.msra.mxu0 %v3744
        %5197 = vmatprep.subr.bf16.mxu0 %v3747
        %5198 = vmatpush1.bf16.msra.mxu0 %v3746
        %5199 = vmatprep.subr.bf16.mxu0 %v3749
        %5200 = vmatpush1.bf16.msra.mxu0 %v3748
        %5201 = vmatprep.subr.bf16.mxu0 %v3751
        %5202 = vmatpush1.bf16.msra.mxu0 %v3750
        %5203 = vmatprep.subr.bf16.mxu0 %v3753
        %5204 = vmatpush1.bf16.msra.mxu0 %v3752
        %5205 = vmatprep.subr.bf16.mxu0 %v3755
        %5206 = vmatpush1.bf16.msra.mxu0 %v3754
        %5207 = vmatprep.subr.bf16.mxu0 %v3757
        %5208 = vmatpush1.bf16.msra.mxu0 %v3756
        %5209 = vmatprep.subr.bf16.mxu0 %v3759
        %5210 = vmatpush1.bf16.msra.mxu0 %v3758
        %5211 = vmatprep.subr.bf16.mxu0 %v3761
        %5212 = vmatpush1.bf16.msra.mxu0 %v3760
        %5213 = vmatprep.subr.bf16.mxu0 %v3763
        %5214 = vmatpush1.bf16.msra.mxu0 %v3762
        %5215 = vmatprep.subr.bf16.mxu0 %v3765
        %5216 = vmatpush1.bf16.msra.mxu0 %v3764
        %5217 = vmatprep.subr.bf16.mxu0 %v3767
        %5218 = vmatpush1.bf16.msra.mxu0 %v3766
        %5219 = vmatprep.subr.bf16.mxu0 %v3769
        %5220 = vmatpush1.bf16.msra.mxu0 %v3768
        %5221 = vmatprep.mubr.bf16.mxu0 %v1169
        %5222 = vmatmul.mubr.bf16.gmra.mrb[0].mxu0 %v1167
        %v5223 = vpop.f32.mrb[0].mxu0
        %v5224 = vadd.f32 %v5183, %v5223
        %v5225 = vpop.f32.mrb[0].mxu0
        %v5226 = vadd.f32 %v5185, %v5225
        %v5227 = vpop.f32.mrb[0].mxu0
        %v5228 = vpop.f32.mrb[0].mxu0
        %5229 = vdwg.mxu0
        %v5232 = vcombine.low %v5224, %v5226
        %v5234 = vunpack.c.l.s4 1983009808
        %v5235 = vunpack.c.0.s8 %v5234
        %v5236 = vlaneseq
        %v5237 = vshrl.u32 %v5236, 7
        %v5238 = vsub.s32 %v5235, %v5237
        %v5239 = vrot.slane %v5232, %v5238
        %v5241 = vadd.f32 %v274, %v5239
        %5242 = vst [vmem:[#allocation2] sm:$0xf] %v5241
        %p5243 = scmp.eq.s32.totalorder %s25, 1
        // Predicated region
        $region45: #{deep_cnn_forward.3} parent=31 // pred_check
          %p5244 = pneg %p5243
        $region46: #{deep_cnn_forward.3} parent=31 // pred_check_branch
          %5246 = sbr.rel (%p5244) target = $region48
        $region47: #{deep_cnn_forward.3} parent=31 // pred_region
          %v5247 = vld [vmem:[#allocation2] sm:$0xf]
          %v5248 = vld [vmem:[%s223] sm:$0x3]
          %v5250 = vlaneseq
          %v5251 = vshrl.u32 %v5250, 7
          %v5252 = vsub.s32 0, %v5251
          %v5253 = vrot.slane %v5248, %v5252
          %v5254 = vlaneseq
          %v5255 = vshrl.u32 %v5254, 7
          %v5256 = vsub.s32 1, %v5255
          %v5257 = vrot.slane %v5248, %v5256
          %v5258 = vcombine.low %v5253, %v5257
          %v5260 = vunpack.c.l.s4 1983009808
          %v5261 = vunpack.c.0.s8 %v5260
          %v5262 = vlaneseq
          %v5263 = vshrl.u32 %v5262, 7
          %v5264 = vsub.s32 %v5261, %v5263
          %v5265 = vrot.slane %v5258, %v5264
          %v5267 = vadd.f32 %v5247, %v5265
          %v5268 = vmax.f32 %v5267, 0.0
          %5269 = vst [vmem:[%s267] sm:$0xf] %v5268
        $region48: #{deep_cnn_forward.3} parent=31 // pred_fallthru
          _
        %s5270 = smul.u32 2, %s24
        %p5271 = scmp.lt.s32.totalorder %s5270, 3
        %s5272 = scalar_select %p5271, %s5270, 3
        %s5273 = smul.addr %s5272, 2
        %s5274 = scalar_lea.vmem %s3, %s5273
        // Predicated region
        $region49: #{deep_cnn_forward.3} parent=31 // pred_check
          %p5275 = pneg %p130
        $region50: #{deep_cnn_forward.3} parent=31 // pred_check_branch
          %5277 = sbr.rel (%p5275) target = $region52
        $region51: #{deep_cnn_forward.3} parent=31 // pred_region
          %s5278 = smul.u32 2, %s24
        $region52: #{deep_cnn_forward.3} parent=31 // pred_fallthru
          _
      $region32: #{deep_cnn_forward.3} parent=5 // pred_fallthru
        _
      %p5279 = scmp.le.s32.totalorder 2, %s15
      // Predicated region
      $region53: #{deep_cnn_forward.3} parent=5 // pred_check
        %p5280 = pneg %p5279
      $region54: #{deep_cnn_forward.3} parent=5 // pred_check_branch
        %5282 = sbr.rel (%p5280) target = $region56
      $region55: #{deep_cnn_forward.3} parent=5 // pred_region
        %s5283 = ssub.s32 %s15, 2
        // Predicated region
        $region57: #{deep_cnn_forward.3} parent=55 // pred_check
          %p5284 = pneg %p136
        $region58: #{deep_cnn_forward.3} parent=55 // pred_check_branch
          %5286 = sbr.rel (%p5284) target = $region60
        $region59: #{deep_cnn_forward.3} parent=55 // pred_region
          %s5287 = smul.u32 2, %s26
          %p5288 = scmp.lt.s32.totalorder %s5287, 3
          %s5289 = scalar_select %p5288, %s5287, 3
          %s5290 = smul.addr %s5289, 2
          %s5291 = scalar_lea.vmem %s3, %s5290
        $region60: #{deep_cnn_forward.3} parent=55 // pred_fallthru
          _
      $region56: #{deep_cnn_forward.3} parent=5 // pred_fallthru
        _
    $region6: #{deep_cnn_forward.3} parent=1 // loop_footer
      %s19 = sadd.s32 1, %s15
    $region7: #{deep_cnn_forward.3} parent=1 // loop_footer_branch
      %14 = sbr.rel target = $region3
    $region8: #{deep_cnn_forward.3} parent=1 // loop_exit
      _
    %5292 = vsyncpa [#allocation4], 1
    %s5293 = scalar_lea.sflag [#allocation4], 1
    %5294 = vsyncpa %s5293, 1
    %5295 = vsyncpa [#allocation6], 1
    %s5296 = scalar_lea.sflag [#allocation6], 1
    %5297 = vsyncpa %s5296, 1

</llo_original>
